<compile_context>
chip_gen: v7x
topology: tpu7x:2x2x1
jax: 0.10.0
libtpu: 0.0.40
codegen_flags: <defaults>
</compile_context>

<pallas_src>
import functools

import jax
import jax.numpy as jnp
from jax.experimental import pallas as pl
from jax.experimental.pallas import tpu as pltpu


def _round_up(x, m):
    return ((x + m - 1) // m) * m


def _convnext_kernel(x_ref, dww_ref, dwb_ref, w1_ref, b1_ref, w2_ref, b2_ref,
                     out_ref, xpad_ref, *, H, W, K, TH, approximate_gelu):
    """One batch element.

    x_ref    : (1, H, W, Cp)      unpadded input (also the residual)
    dww_ref  : (K, K, Cp)  f32    depthwise weights
    dwb_ref  : (1, Cp)     f32    depthwise bias
    w1_ref   : (Cp, Dp)    bf16   pointwise conv 1 weights
    b1_ref   : (1, Dp)     f32
    w2_ref   : (Dp, Cp)    bf16   pointwise conv 2 weights
    b2_ref   : (1, Cp)     f32
    out_ref  : (1, H, W, Cp)
    xpad_ref : (H+K-1, W+K-1, Cp) f32 VMEM scratch (spatially padded copy)
    """
    Cp = x_ref.shape[3]
    p = K // 2

    # ---- build spatially zero-padded f32 copy in VMEM (no HBM pad pass) ----
    # Cast hoisted here: the K*K tap loop below reads f32 directly.
    xpad_ref[...] = jnp.zeros_like(xpad_ref)
    xpad_ref[p:p + H, p:p + W, :] = x_ref[0].astype(jnp.float32)

    # ---- hoist small parameter loads out of the band loop ------------------
    dww = dww_ref[...]                      # (K, K, Cp) f32 (VPU path)
    dwb = dwb_ref[0, :]                     # (Cp,)      f32
    w1 = w1_ref[...]                        # (Cp, Dp)   bf16 (MXU operand)
    b1 = b1_ref[0, :]                       # (Dp,)      f32
    w2 = w2_ref[...]                        # (Dp, Cp)   bf16 (MXU operand)
    b2 = b2_ref[0, :]                       # (Cp,)      f32

    inv_sqrt2 = jnp.float32(0.7071067811865476)

    # ---- process H in row bands: depthwise -> pw1 -> GELU -> pw2 -> +res ---
    for r0 in range(0, H, TH):
        hb = min(TH, H - r0)

        # depthwise KxK conv, f32 accumulation on the VPU
        acc = jnp.zeros((hb, W, Cp), jnp.float32)
        for i in range(K):
            for j in range(K):
                acc = acc + xpad_ref[r0 + i:r0 + i + hb, j:j + W, :] * dww[i, j, :]
        acc = acc + dwb                                         # (hb, W, Cp)

        # pointwise conv 1 (Cp -> Dp): bf16 operands, f32 accumulation on MXU
        y = acc.reshape(hb * W, Cp).astype(jnp.bfloat16)
        h = jnp.dot(y, w1, preferred_element_type=jnp.float32) + b1

        if approximate_gelu:
            # tanh GELU (routes through the EUP slot; cheaper on v5e/v6e)
            c = jnp.float32(0.7978845608028654)
            h = 0.5 * h * (1.0 + jnp.tanh(c * (h + 0.044715 * h * h * h)))
        else:
            # exact GELU: matches PyTorch nn.GELU() default
            h = 0.5 * h * (1.0 + jax.lax.erf(h * inv_sqrt2))

        # pointwise conv 2 (Dp -> Cp): bf16 operands, f32 accumulation on MXU
        z = jnp.dot(h.astype(jnp.bfloat16), w2,
                    preferred_element_type=jnp.float32) + b2

        # residual add from the resident unpadded input block, then store band
        z = z.reshape(hb, W, Cp) + x_ref[0, r0:r0 + hb, :, :].astype(jnp.float32)
        out_ref[0, r0:r0 + hb, :, :] = z.astype(out_ref.dtype)


def convnext_block(x_nchw, dw_w, dw_b, w1, b1, w2, b2, *,
                   kernel_size=7, approximate_gelu=False):
    """x_nchw: (N, C, H, W). Weights in kernel layout:
       dw_w (K,K,C), dw_b (C,), w1 (C,4C), b1 (4C,), w2 (4C,C), b2 (C,)."""
    N, C, H, W = x_nchw.shape
    K = kernel_size
    D = w1.shape[1]
    assert w2.shape[1] == C, "residual requires out_channels == in_channels"

    LANE = 128
    Cp = _round_up(C, LANE)     # lane-dense channel axis
    Dp = _round_up(D, LANE)     # lane-dense hidden (4C) axis

    # NCHW -> NHWC + channel lane-padding (layout plumbing; padded channels are
    # zero end-to-end so they contribute nothing and are sliced off on exit).
    x = jnp.transpose(x_nchw, (0, 2, 3, 1))                       # (N,H,W,C)
    x_p = jnp.pad(x, ((0, 0), (0, 0), (0, 0), (0, Cp - C)))       # (N,H,W,Cp)

    dw_w_p = jnp.pad(dw_w.astype(jnp.float32), ((0, 0), (0, 0), (0, Cp - C)))
    dw_b_p = jnp.pad(dw_b.astype(jnp.float32), ((0, Cp - C),)).reshape(1, Cp)
    w1_p = jnp.pad(w1, ((0, Cp - C), (0, Dp - D))).astype(jnp.bfloat16)
    b1_p = jnp.pad(b1.astype(jnp.float32), ((0, Dp - D),)).reshape(1, Dp)
    w2_p = jnp.pad(w2, ((0, Dp - D), (0, Cp - C))).astype(jnp.bfloat16)
    b2_p = jnp.pad(b2.astype(jnp.float32), ((0, Cp - C),)).reshape(1, Cp)

    # Row-band height: M-tile of the pointwise matmuls ~ 512 rows.
    TH = max(1, min(H, max(1, 512 // W)))

    Hp, Wp = H + K - 1, W + K - 1
    kernel = functools.partial(_convnext_kernel, H=H, W=W, K=K, TH=TH,
                               approximate_gelu=approximate_gelu)

    out_nhwc = pl.pallas_call(
        kernel,
        out_shape=jax.ShapeDtypeStruct((N, H, W, Cp), x.dtype),
        grid_spec=pltpu.PrefetchScalarGridSpec(
            num_scalar_prefetch=0,
            grid=(N,),
            in_specs=[
                pl.BlockSpec((1, H, W, Cp), lambda n: (n, 0, 0, 0)),   # x (also residual)
                pl.BlockSpec((K, K, Cp), lambda n: (0, 0, 0)),         # depthwise w (f32)
                pl.BlockSpec((1, Cp), lambda n: (0, 0)),               # depthwise b
                pl.BlockSpec((Cp, Dp), lambda n: (0, 0)),              # w1 (bf16)
                pl.BlockSpec((1, Dp), lambda n: (0, 0)),               # b1
                pl.BlockSpec((Dp, Cp), lambda n: (0, 0)),              # w2 (bf16)
                pl.BlockSpec((1, Cp), lambda n: (0, 0)),               # b2
            ],
            out_specs=pl.BlockSpec((1, H, W, Cp), lambda n: (n, 0, 0, 0)),
            scratch_shapes=[pltpu.VMEM((Hp, Wp, Cp), jnp.float32)],    # padded image
        ),
        compiler_params=pltpu.CompilerParams(
            dimension_semantics=("parallel",),
            vmem_limit_bytes=64 * 1024 * 1024),
    )(x_p, dw_w_p, dw_b_p, w1_p, b1_p, w2_p, b2_p)

    # Drop lane padding, NHWC -> NCHW.
    return jnp.transpose(out_nhwc[..., :C], (0, 3, 1, 2))


def _reference(x_nchw, dw_w, dw_b, w1, b1, w2, b2, *, kernel_size=7):
    """Pure-JAX f32 reference (exact module semantics, NHWC math)."""
    N, C, H, W = x_nchw.shape
    K = kernel_size
    p = K // 2
    x = jnp.transpose(x_nchw, (0, 2, 3, 1)).astype(jnp.float32)
    xpad = jnp.pad(x, ((0, 0), (p, p), (p, p), (0, 0)))
    acc = jnp.zeros((N, H, W, C), jnp.float32)
    for i in range(K):
        for j in range(K):
            acc = acc + xpad[:, i:i + H, j:j + W, :] * dw_w[i, j, :]
    acc = acc + dw_b
    h = jnp.einsum('nhwc,cd->nhwd', acc, w1.astype(jnp.float32)) + b1
    h = 0.5 * h * (1.0 + jax.lax.erf(h / jnp.sqrt(2.0)))
    z = jnp.einsum('nhwd,dc->nhwc', h, w2.astype(jnp.float32)) + b2
    z = z + x
    return jnp.transpose(z, (0, 3, 1, 2)).astype(x_nchw.dtype)


if __name__ == "__main__":
    # Small shapes consistent with the module (residual => out_channels == in_channels).
    N, C, H, W = 2, 4, 16, 16
    K = 7

    key = jax.random.PRNGKey(0)
    kx, k1, k2, k3, k4, k5, k6 = jax.random.split(key, 7)

    x = jax.random.normal(kx, (N, C, H, W), jnp.float32)

    # Deterministic synthetic parameters (kernel layout).
    dw_w = jax.random.normal(k1, (K, K, C), jnp.float32) * 0.1   # depthwise (K,K,C)
    dw_b = jax.random.normal(k2, (C,), jnp.float32) * 0.1
    w1 = jax.random.normal(k3, (C, 4 * C), jnp.float32) * 0.1    # pointwise1 (C,4C)
    b1 = jax.random.normal(k4, (4 * C,), jnp.float32) * 0.1
    w2 = jax.random.normal(k5, (4 * C, C), jnp.float32) * 0.1    # pointwise2 (4C,C)
    b2 = jax.random.normal(k6, (C,), jnp.float32) * 0.1

    out = convnext_block(x, dw_w, dw_b, w1, b1, w2, b2, kernel_size=K)
    out = jax.block_until_ready(out)

    ref = _reference(x, dw_w, dw_b, w1, b1, w2, b2, kernel_size=K)
    assert out.shape == (N, C, H, W)
    # Tolerance relaxed vs. pure-f32 because the pointwise matmuls run with
    # bf16 MXU operands (f32 accumulation).
    assert jnp.allclose(out, ref, atol=2e-2, rtol=2e-2), "mismatch vs reference"

    print("KERNEL_OK")
</pallas_src>

<mosaic_0001>
module attributes {stable_mosaic.version = 11 : i64} {
  func.func @_convnext_kernel(%arg0: i32, %arg1: memref<1x16x16x128xf32, #tpu.memory_space<vmem>>, %arg2: memref<7x7x128xf32, #tpu.memory_space<vmem>>, %arg3: memref<1x128xf32, #tpu.memory_space<vmem>>, %arg4: memref<128x128xbf16, #tpu.memory_space<vmem>>, %arg5: memref<1x128xf32, #tpu.memory_space<vmem>>, %arg6: memref<128x128xbf16, #tpu.memory_space<vmem>>, %arg7: memref<1x128xf32, #tpu.memory_space<vmem>>, %arg8: memref<1x16x16x128xf32, #tpu.memory_space<vmem>>, %arg9: memref<22x22x128xf32, #tpu.memory_space<vmem>>) attributes {dimension_semantics = [#tpu.dimension_semantics<parallel>], iteration_bounds = array<i64: 2>, scalar_prefetch = 0 : i64, scratch_operands = 1 : i64, tpu.core_type = #tpu.core_type<tc>, window_params = [{transform_indices = @transform_0, window_bounds = array<i64: 1, 16, 16, 128>}, {pipeline_mode = #tpu.pipeline_mode<synchronous>, transform_indices = @transform_1, window_bounds = array<i64: 7, 7, 128>}, {pipeline_mode = #tpu.pipeline_mode<synchronous>, transform_indices = @transform_2, window_bounds = array<i64: 1, 128>}, {pipeline_mode = #tpu.pipeline_mode<synchronous>, transform_indices = @transform_3, window_bounds = array<i64: 128, 128>}, {pipeline_mode = #tpu.pipeline_mode<synchronous>, transform_indices = @transform_4, window_bounds = array<i64: 1, 128>}, {pipeline_mode = #tpu.pipeline_mode<synchronous>, transform_indices = @transform_5, window_bounds = array<i64: 128, 128>}, {pipeline_mode = #tpu.pipeline_mode<synchronous>, transform_indices = @transform_6, window_bounds = array<i64: 1, 128>}, {transform_indices = @transform_7, window_bounds = array<i64: 1, 16, 16, 128>}]} {
    %cst = arith.constant 0.000000e+00 : f32
    %0 = vector.broadcast %cst : f32 to vector<22x22x128xf32>
    %c0 = arith.constant 0 : index
    %c0_0 = arith.constant 0 : index
    %c0_1 = arith.constant 0 : index
    %1 = vector.load %arg9[%c0, %c0_0, %c0_1] : memref<22x22x128xf32, #tpu.memory_space<vmem>>, vector<22x22x128xf32>
    tpu.vector_store %arg9[%c0, %c0_0, %c0_1], %0 {strides = array<i32>} : memref<22x22x128xf32, #tpu.memory_space<vmem>>, vector<22x22x128xf32>,
    %c0_2 = arith.constant 0 : index
    %c0_3 = arith.constant 0 : index
    %c0_4 = arith.constant 0 : index
    %c0_5 = arith.constant 0 : index
    %2 = vector.load %arg1[%c0_2, %c0_3, %c0_4, %c0_5] : memref<1x16x16x128xf32, #tpu.memory_space<vmem>>, vector<1x16x16x128xf32>
    %3 = vector.shape_cast %2 : vector<1x16x16x128xf32> to vector<16x16x128xf32>
    %c3 = arith.constant 3 : index
    %c3_6 = arith.constant 3 : index
    %c0_7 = arith.constant 0 : index
    %4 = vector.load %arg9[%c3, %c3_6, %c0_7] : memref<22x22x128xf32, #tpu.memory_space<vmem>>, vector<16x16x128xf32>
    tpu.vector_store %arg9[%c3, %c3_6, %c0_7], %3 {strides = array<i32>} : memref<22x22x128xf32, #tpu.memory_space<vmem>>, vector<16x16x128xf32>,
    %c0_8 = arith.constant 0 : index
    %c0_9 = arith.constant 0 : index
    %c0_10 = arith.constant 0 : index
    %5 = vector.load %arg2[%c0_8, %c0_9, %c0_10] : memref<7x7x128xf32, #tpu.memory_space<vmem>>, vector<7x7x128xf32>
    %c0_11 = arith.constant 0 : index
    %c0_12 = arith.constant 0 : index
    %6 = vector.load %arg3[%c0_11, %c0_12] : memref<1x128xf32, #tpu.memory_space<vmem>>, vector<1x128xf32>
    %7 = vector.shape_cast %6 : vector<1x128xf32> to vector<128xf32>
    %c0_13 = arith.constant 0 : index
    %c0_14 = arith.constant 0 : index
    %8 = vector.load %arg4[%c0_13, %c0_14] : memref<128x128xbf16, #tpu.memory_space<vmem>>, vector<128x128xbf16>
    %c0_15 = arith.constant 0 : index
    %c0_16 = arith.constant 0 : index
    %9 = vector.load %arg5[%c0_15, %c0_16] : memref<1x128xf32, #tpu.memory_space<vmem>>, vector<1x128xf32>
    %10 = vector.shape_cast %9 : vector<1x128xf32> to vector<128xf32>
    %c0_17 = arith.constant 0 : index
    %c0_18 = arith.constant 0 : index
    %11 = vector.load %arg6[%c0_17, %c0_18] : memref<128x128xbf16, #tpu.memory_space<vmem>>, vector<128x128xbf16>
    %c0_19 = arith.constant 0 : index
    %c0_20 = arith.constant 0 : index
    %12 = vector.load %arg7[%c0_19, %c0_20] : memref<1x128xf32, #tpu.memory_space<vmem>>, vector<1x128xf32>
    %13 = vector.shape_cast %12 : vector<1x128xf32> to vector<128xf32>
    %cst_21 = arith.constant 0.000000e+00 : f32
    %14 = vector.broadcast %cst_21 : f32 to vector<16x16x128xf32>
    %c0_22 = arith.constant 0 : index
    %c0_23 = arith.constant 0 : index
    %c0_24 = arith.constant 0 : index
    %15 = vector.load %arg9[%c0_22, %c0_23, %c0_24] : memref<22x22x128xf32, #tpu.memory_space<vmem>>, vector<16x16x128xf32>
    %16 = vector.extract_strided_slice %5 {offsets = [0, 0, 0], sizes = [1, 1, 128], strides = [1, 1, 1]} : vector<7x7x128xf32> to vector<1x1x128xf32>
    %17 = vector.shape_cast %16 : vector<1x1x128xf32> to vector<128xf32>
    %18 = vector.shape_cast %17 : vector<128xf32> to vector<1x1x128xf32>
    %19 = vector.broadcast %18 : vector<1x1x128xf32> to vector<16x16x128xf32>
    %20 = arith.mulf %15, %19 : vector<16x16x128xf32>
    %21 = arith.addf %14, %20 : vector<16x16x128xf32>
    %c0_25 = arith.constant 0 : index
    %c1 = arith.constant 1 : index
    %c0_26 = arith.constant 0 : index
    %22 = vector.load %arg9[%c0_25, %c1, %c0_26] : memref<22x22x128xf32, #tpu.memory_space<vmem>>, vector<16x16x128xf32>
    %23 = vector.extract_strided_slice %5 {offsets = [0, 1, 0], sizes = [1, 1, 128], strides = [1, 1, 1]} : vector<7x7x128xf32> to vector<1x1x128xf32>
    %24 = vector.shape_cast %23 : vector<1x1x128xf32> to vector<128xf32>
    %25 = vector.shape_cast %24 : vector<128xf32> to vector<1x1x128xf32>
    %26 = vector.broadcast %25 : vector<1x1x128xf32> to vector<16x16x128xf32>
    %27 = arith.mulf %22, %26 : vector<16x16x128xf32>
    %28 = arith.addf %21, %27 : vector<16x16x128xf32>
    %c0_27 = arith.constant 0 : index
    %c2 = arith.constant 2 : index
    %c0_28 = arith.constant 0 : index
    %29 = vector.load %arg9[%c0_27, %c2, %c0_28] : memref<22x22x128xf32, #tpu.memory_space<vmem>>, vector<16x16x128xf32>
    %30 = vector.extract_strided_slice %5 {offsets = [0, 2, 0], sizes = [1, 1, 128], strides = [1, 1, 1]} : vector<7x7x128xf32> to vector<1x1x128xf32>
    %31 = vector.shape_cast %30 : vector<1x1x128xf32> to vector<128xf32>
    %32 = vector.shape_cast %31 : vector<128xf32> to vector<1x1x128xf32>
    %33 = vector.broadcast %32 : vector<1x1x128xf32> to vector<16x16x128xf32>
    %34 = arith.mulf %29, %33 : vector<16x16x128xf32>
    %35 = arith.addf %28, %34 : vector<16x16x128xf32>
    %c0_29 = arith.constant 0 : index
    %c3_30 = arith.constant 3 : index
    %c0_31 = arith.constant 0 : index
    %36 = vector.load %arg9[%c0_29, %c3_30, %c0_31] : memref<22x22x128xf32, #tpu.memory_space<vmem>>, vector<16x16x128xf32>
    %37 = vector.extract_strided_slice %5 {offsets = [0, 3, 0], sizes = [1, 1, 128], strides = [1, 1, 1]} : vector<7x7x128xf32> to vector<1x1x128xf32>
    %38 = vector.shape_cast %37 : vector<1x1x128xf32> to vector<128xf32>
    %39 = vector.shape_cast %38 : vector<128xf32> to vector<1x1x128xf32>
    %40 = vector.broadcast %39 : vector<1x1x128xf32> to vector<16x16x128xf32>
    %41 = arith.mulf %36, %40 : vector<16x16x128xf32>
    %42 = arith.addf %35, %41 : vector<16x16x128xf32>
    %c0_32 = arith.constant 0 : index
    %c4 = arith.constant 4 : index
    %c0_33 = arith.constant 0 : index
    %43 = vector.load %arg9[%c0_32, %c4, %c0_33] : memref<22x22x128xf32, #tpu.memory_space<vmem>>, vector<16x16x128xf32>
    %44 = vector.extract_strided_slice %5 {offsets = [0, 4, 0], sizes = [1, 1, 128], strides = [1, 1, 1]} : vector<7x7x128xf32> to vector<1x1x128xf32>
    %45 = vector.shape_cast %44 : vector<1x1x128xf32> to vector<128xf32>
    %46 = vector.shape_cast %45 : vector<128xf32> to vector<1x1x128xf32>
    %47 = vector.broadcast %46 : vector<1x1x128xf32> to vector<16x16x128xf32>
    %48 = arith.mulf %43, %47 : vector<16x16x128xf32>
    %49 = arith.addf %42, %48 : vector<16x16x128xf32>
    %c0_34 = arith.constant 0 : index
    %c5 = arith.constant 5 : index
    %c0_35 = arith.constant 0 : index
    %50 = vector.load %arg9[%c0_34, %c5, %c0_35] : memref<22x22x128xf32, #tpu.memory_space<vmem>>, vector<16x16x128xf32>
    %51 = vector.extract_strided_slice %5 {offsets = [0, 5, 0], sizes = [1, 1, 128], strides = [1, 1, 1]} : vector<7x7x128xf32> to vector<1x1x128xf32>
    %52 = vector.shape_cast %51 : vector<1x1x128xf32> to vector<128xf32>
    %53 = vector.shape_cast %52 : vector<128xf32> to vector<1x1x128xf32>
    %54 = vector.broadcast %53 : vector<1x1x128xf32> to vector<16x16x128xf32>
    %55 = arith.mulf %50, %54 : vector<16x16x128xf32>
    %56 = arith.addf %49, %55 : vector<16x16x128xf32>
    %c0_36 = arith.constant 0 : index
    %c6 = arith.constant 6 : index
    %c0_37 = arith.constant 0 : index
    %57 = vector.load %arg9[%c0_36, %c6, %c0_37] : memref<22x22x128xf32, #tpu.memory_space<vmem>>, vector<16x16x128xf32>
    %58 = vector.extract_strided_slice %5 {offsets = [0, 6, 0], sizes = [1, 1, 128], strides = [1, 1, 1]} : vector<7x7x128xf32> to vector<1x1x128xf32>
    %59 = vector.shape_cast %58 : vector<1x1x128xf32> to vector<128xf32>
    %60 = vector.shape_cast %59 : vector<128xf32> to vector<1x1x128xf32>
    %61 = vector.broadcast %60 : vector<1x1x128xf32> to vector<16x16x128xf32>
    %62 = arith.mulf %57, %61 : vector<16x16x128xf32>
    %63 = arith.addf %56, %62 : vector<16x16x128xf32>
    %c1_38 = arith.constant 1 : index
    %c0_39 = arith.constant 0 : index
    %c0_40 = arith.constant 0 : index
    %64 = vector.load %arg9[%c1_38, %c0_39, %c0_40] : memref<22x22x128xf32, #tpu.memory_space<vmem>>, vector<16x16x128xf32>
    %65 = vector.extract_strided_slice %5 {offsets = [1, 0, 0], sizes = [1, 1, 128], strides = [1, 1, 1]} : vector<7x7x128xf32> to vector<1x1x128xf32>
    %66 = vector.shape_cast %65 : vector<1x1x128xf32> to vector<128xf32>
    %67 = vector.shape_cast %66 : vector<128xf32> to vector<1x1x128xf32>
    %68 = vector.broadcast %67 : vector<1x1x128xf32> to vector<16x16x128xf32>
    %69 = arith.mulf %64, %68 : vector<16x16x128xf32>
    %70 = arith.addf %63, %69 : vector<16x16x128xf32>
    %c1_41 = arith.constant 1 : index
    %c1_42 = arith.constant 1 : index
    %c0_43 = arith.constant 0 : index
    %71 = vector.load %arg9[%c1_41, %c1_42, %c0_43] : memref<22x22x128xf32, #tpu.memory_space<vmem>>, vector<16x16x128xf32>
    %72 = vector.extract_strided_slice %5 {offsets = [1, 1, 0], sizes = [1, 1, 128], strides = [1, 1, 1]} : vector<7x7x128xf32> to vector<1x1x128xf32>
    %73 = vector.shape_cast %72 : vector<1x1x128xf32> to vector<128xf32>
    %74 = vector.shape_cast %73 : vector<128xf32> to vector<1x1x128xf32>
    %75 = vector.broadcast %74 : vector<1x1x128xf32> to vector<16x16x128xf32>
    %76 = arith.mulf %71, %75 : vector<16x16x128xf32>
    %77 = arith.addf %70, %76 : vector<16x16x128xf32>
    %c1_44 = arith.constant 1 : index
    %c2_45 = arith.constant 2 : index
    %c0_46 = arith.constant 0 : index
    %78 = vector.load %arg9[%c1_44, %c2_45, %c0_46] : memref<22x22x128xf32, #tpu.memory_space<vmem>>, vector<16x16x128xf32>
    %79 = vector.extract_strided_slice %5 {offsets = [1, 2, 0], sizes = [1, 1, 128], strides = [1, 1, 1]} : vector<7x7x128xf32> to vector<1x1x128xf32>
    %80 = vector.shape_cast %79 : vector<1x1x128xf32> to vector<128xf32>
    %81 = vector.shape_cast %80 : vector<128xf32> to vector<1x1x128xf32>
    %82 = vector.broadcast %81 : vector<1x1x128xf32> to vector<16x16x128xf32>
    %83 = arith.mulf %78, %82 : vector<16x16x128xf32>
    %84 = arith.addf %77, %83 : vector<16x16x128xf32>
    %c1_47 = arith.constant 1 : index
    %c3_48 = arith.constant 3 : index
    %c0_49 = arith.constant 0 : index
    %85 = vector.load %arg9[%c1_47, %c3_48, %c0_49] : memref<22x22x128xf32, #tpu.memory_space<vmem>>, vector<16x16x128xf32>
    %86 = vector.extract_strided_slice %5 {offsets = [1, 3, 0], sizes = [1, 1, 128], strides = [1, 1, 1]} : vector<7x7x128xf32> to vector<1x1x128xf32>
    %87 = vector.shape_cast %86 : vector<1x1x128xf32> to vector<128xf32>
    %88 = vector.shape_cast %87 : vector<128xf32> to vector<1x1x128xf32>
    %89 = vector.broadcast %88 : vector<1x1x128xf32> to vector<16x16x128xf32>
    %90 = arith.mulf %85, %89 : vector<16x16x128xf32>
    %91 = arith.addf %84, %90 : vector<16x16x128xf32>
    %c1_50 = arith.constant 1 : index
    %c4_51 = arith.constant 4 : index
    %c0_52 = arith.constant 0 : index
    %92 = vector.load %arg9[%c1_50, %c4_51, %c0_52] : memref<22x22x128xf32, #tpu.memory_space<vmem>>, vector<16x16x128xf32>
    %93 = vector.extract_strided_slice %5 {offsets = [1, 4, 0], sizes = [1, 1, 128], strides = [1, 1, 1]} : vector<7x7x128xf32> to vector<1x1x128xf32>
    %94 = vector.shape_cast %93 : vector<1x1x128xf32> to vector<128xf32>
    %95 = vector.shape_cast %94 : vector<128xf32> to vector<1x1x128xf32>
    %96 = vector.broadcast %95 : vector<1x1x128xf32> to vector<16x16x128xf32>
    %97 = arith.mulf %92, %96 : vector<16x16x128xf32>
    %98 = arith.addf %91, %97 : vector<16x16x128xf32>
    %c1_53 = arith.constant 1 : index
    %c5_54 = arith.constant 5 : index
    %c0_55 = arith.constant 0 : index
    %99 = vector.load %arg9[%c1_53, %c5_54, %c0_55] : memref<22x22x128xf32, #tpu.memory_space<vmem>>, vector<16x16x128xf32>
    %100 = vector.extract_strided_slice %5 {offsets = [1, 5, 0], sizes = [1, 1, 128], strides = [1, 1, 1]} : vector<7x7x128xf32> to vector<1x1x128xf32>
    %101 = vector.shape_cast %100 : vector<1x1x128xf32> to vector<128xf32>
    %102 = vector.shape_cast %101 : vector<128xf32> to vector<1x1x128xf32>
    %103 = vector.broadcast %102 : vector<1x1x128xf32> to vector<16x16x128xf32>
    %104 = arith.mulf %99, %103 : vector<16x16x128xf32>
    %105 = arith.addf %98, %104 : vector<16x16x128xf32>
    %c1_56 = arith.constant 1 : index
    %c6_57 = arith.constant 6 : index
    %c0_58 = arith.constant 0 : index
    %106 = vector.load %arg9[%c1_56, %c6_57, %c0_58] : memref<22x22x128xf32, #tpu.memory_space<vmem>>, vector<16x16x128xf32>
    %107 = vector.extract_strided_slice %5 {offsets = [1, 6, 0], sizes = [1, 1, 128], strides = [1, 1, 1]} : vector<7x7x128xf32> to vector<1x1x128xf32>
    %108 = vector.shape_cast %107 : vector<1x1x128xf32> to vector<128xf32>
    %109 = vector.shape_cast %108 : vector<128xf32> to vector<1x1x128xf32>
    %110 = vector.broadcast %109 : vector<1x1x128xf32> to vector<16x16x128xf32>
    %111 = arith.mulf %106, %110 : vector<16x16x128xf32>
    %112 = arith.addf %105, %111 : vector<16x16x128xf32>
    %c2_59 = arith.constant 2 : index
    %c0_60 = arith.constant 0 : index
    %c0_61 = arith.constant 0 : index
    %113 = vector.load %arg9[%c2_59, %c0_60, %c0_61] : memref<22x22x128xf32, #tpu.memory_space<vmem>>, vector<16x16x128xf32>
    %114 = vector.extract_strided_slice %5 {offsets = [2, 0, 0], sizes = [1, 1, 128], strides = [1, 1, 1]} : vector<7x7x128xf32> to vector<1x1x128xf32>
    %115 = vector.shape_cast %114 : vector<1x1x128xf32> to vector<128xf32>
    %116 = vector.shape_cast %115 : vector<128xf32> to vector<1x1x128xf32>
    %117 = vector.broadcast %116 : vector<1x1x128xf32> to vector<16x16x128xf32>
    %118 = arith.mulf %113, %117 : vector<16x16x128xf32>
    %119 = arith.addf %112, %118 : vector<16x16x128xf32>
    %c2_62 = arith.constant 2 : index
    %c1_63 = arith.constant 1 : index
    %c0_64 = arith.constant 0 : index
    %120 = vector.load %arg9[%c2_62, %c1_63, %c0_64] : memref<22x22x128xf32, #tpu.memory_space<vmem>>, vector<16x16x128xf32>
    %121 = vector.extract_strided_slice %5 {offsets = [2, 1, 0], sizes = [1, 1, 128], strides = [1, 1, 1]} : vector<7x7x128xf32> to vector<1x1x128xf32>
    %122 = vector.shape_cast %121 : vector<1x1x128xf32> to vector<128xf32>
    %123 = vector.shape_cast %122 : vector<128xf32> to vector<1x1x128xf32>
    %124 = vector.broadcast %123 : vector<1x1x128xf32> to vector<16x16x128xf32>
    %125 = arith.mulf %120, %124 : vector<16x16x128xf32>
    %126 = arith.addf %119, %125 : vector<16x16x128xf32>
    %c2_65 = arith.constant 2 : index
    %c2_66 = arith.constant 2 : index
    %c0_67 = arith.constant 0 : index
    %127 = vector.load %arg9[%c2_65, %c2_66, %c0_67] : memref<22x22x128xf32, #tpu.memory_space<vmem>>, vector<16x16x128xf32>
    %128 = vector.extract_strided_slice %5 {offsets = [2, 2, 0], sizes = [1, 1, 128], strides = [1, 1, 1]} : vector<7x7x128xf32> to vector<1x1x128xf32>
    %129 = vector.shape_cast %128 : vector<1x1x128xf32> to vector<128xf32>
    %130 = vector.shape_cast %129 : vector<128xf32> to vector<1x1x128xf32>
    %131 = vector.broadcast %130 : vector<1x1x128xf32> to vector<16x16x128xf32>
    %132 = arith.mulf %127, %131 : vector<16x16x128xf32>
    %133 = arith.addf %126, %132 : vector<16x16x128xf32>
    %c2_68 = arith.constant 2 : index
    %c3_69 = arith.constant 3 : index
    %c0_70 = arith.constant 0 : index
    %134 = vector.load %arg9[%c2_68, %c3_69, %c0_70] : memref<22x22x128xf32, #tpu.memory_space<vmem>>, vector<16x16x128xf32>
    %135 = vector.extract_strided_slice %5 {offsets = [2, 3, 0], sizes = [1, 1, 128], strides = [1, 1, 1]} : vector<7x7x128xf32> to vector<1x1x128xf32>
    %136 = vector.shape_cast %135 : vector<1x1x128xf32> to vector<128xf32>
    %137 = vector.shape_cast %136 : vector<128xf32> to vector<1x1x128xf32>
    %138 = vector.broadcast %137 : vector<1x1x128xf32> to vector<16x16x128xf32>
    %139 = arith.mulf %134, %138 : vector<16x16x128xf32>
    %140 = arith.addf %133, %139 : vector<16x16x128xf32>
    %c2_71 = arith.constant 2 : index
    %c4_72 = arith.constant 4 : index
    %c0_73 = arith.constant 0 : index
    %141 = vector.load %arg9[%c2_71, %c4_72, %c0_73] : memref<22x22x128xf32, #tpu.memory_space<vmem>>, vector<16x16x128xf32>
    %142 = vector.extract_strided_slice %5 {offsets = [2, 4, 0], sizes = [1, 1, 128], strides = [1, 1, 1]} : vector<7x7x128xf32> to vector<1x1x128xf32>
    %143 = vector.shape_cast %142 : vector<1x1x128xf32> to vector<128xf32>
    %144 = vector.shape_cast %143 : vector<128xf32> to vector<1x1x128xf32>
    %145 = vector.broadcast %144 : vector<1x1x128xf32> to vector<16x16x128xf32>
    %146 = arith.mulf %141, %145 : vector<16x16x128xf32>
    %147 = arith.addf %140, %146 : vector<16x16x128xf32>
    %c2_74 = arith.constant 2 : index
    %c5_75 = arith.constant 5 : index
    %c0_76 = arith.constant 0 : index
    %148 = vector.load %arg9[%c2_74, %c5_75, %c0_76] : memref<22x22x128xf32, #tpu.memory_space<vmem>>, vector<16x16x128xf32>
    %149 = vector.extract_strided_slice %5 {offsets = [2, 5, 0], sizes = [1, 1, 128], strides = [1, 1, 1]} : vector<7x7x128xf32> to vector<1x1x128xf32>
    %150 = vector.shape_cast %149 : vector<1x1x128xf32> to vector<128xf32>
    %151 = vector.shape_cast %150 : vector<128xf32> to vector<1x1x128xf32>
    %152 = vector.broadcast %151 : vector<1x1x128xf32> to vector<16x16x128xf32>
    %153 = arith.mulf %148, %152 : vector<16x16x128xf32>
    %154 = arith.addf %147, %153 : vector<16x16x128xf32>
    %c2_77 = arith.constant 2 : index
    %c6_78 = arith.constant 6 : index
    %c0_79 = arith.constant 0 : index
    %155 = vector.load %arg9[%c2_77, %c6_78, %c0_79] : memref<22x22x128xf32, #tpu.memory_space<vmem>>, vector<16x16x128xf32>
    %156 = vector.extract_strided_slice %5 {offsets = [2, 6, 0], sizes = [1, 1, 128], strides = [1, 1, 1]} : vector<7x7x128xf32> to vector<1x1x128xf32>
    %157 = vector.shape_cast %156 : vector<1x1x128xf32> to vector<128xf32>
    %158 = vector.shape_cast %157 : vector<128xf32> to vector<1x1x128xf32>
    %159 = vector.broadcast %158 : vector<1x1x128xf32> to vector<16x16x128xf32>
    %160 = arith.mulf %155, %159 : vector<16x16x128xf32>
    %161 = arith.addf %154, %160 : vector<16x16x128xf32>
    %c3_80 = arith.constant 3 : index
    %c0_81 = arith.constant 0 : index
    %c0_82 = arith.constant 0 : index
    %162 = vector.load %arg9[%c3_80, %c0_81, %c0_82] : memref<22x22x128xf32, #tpu.memory_space<vmem>>, vector<16x16x128xf32>
    %163 = vector.extract_strided_slice %5 {offsets = [3, 0, 0], sizes = [1, 1, 128], strides = [1, 1, 1]} : vector<7x7x128xf32> to vector<1x1x128xf32>
    %164 = vector.shape_cast %163 : vector<1x1x128xf32> to vector<128xf32>
    %165 = vector.shape_cast %164 : vector<128xf32> to vector<1x1x128xf32>
    %166 = vector.broadcast %165 : vector<1x1x128xf32> to vector<16x16x128xf32>
    %167 = arith.mulf %162, %166 : vector<16x16x128xf32>
    %168 = arith.addf %161, %167 : vector<16x16x128xf32>
    %c3_83 = arith.constant 3 : index
    %c1_84 = arith.constant 1 : index
    %c0_85 = arith.constant 0 : index
    %169 = vector.load %arg9[%c3_83, %c1_84, %c0_85] : memref<22x22x128xf32, #tpu.memory_space<vmem>>, vector<16x16x128xf32>
    %170 = vector.extract_strided_slice %5 {offsets = [3, 1, 0], sizes = [1, 1, 128], strides = [1, 1, 1]} : vector<7x7x128xf32> to vector<1x1x128xf32>
    %171 = vector.shape_cast %170 : vector<1x1x128xf32> to vector<128xf32>
    %172 = vector.shape_cast %171 : vector<128xf32> to vector<1x1x128xf32>
    %173 = vector.broadcast %172 : vector<1x1x128xf32> to vector<16x16x128xf32>
    %174 = arith.mulf %169, %173 : vector<16x16x128xf32>
    %175 = arith.addf %168, %174 : vector<16x16x128xf32>
    %c3_86 = arith.constant 3 : index
    %c2_87 = arith.constant 2 : index
    %c0_88 = arith.constant 0 : index
    %176 = vector.load %arg9[%c3_86, %c2_87, %c0_88] : memref<22x22x128xf32, #tpu.memory_space<vmem>>, vector<16x16x128xf32>
    %177 = vector.extract_strided_slice %5 {offsets = [3, 2, 0], sizes = [1, 1, 128], strides = [1, 1, 1]} : vector<7x7x128xf32> to vector<1x1x128xf32>
    %178 = vector.shape_cast %177 : vector<1x1x128xf32> to vector<128xf32>
    %179 = vector.shape_cast %178 : vector<128xf32> to vector<1x1x128xf32>
    %180 = vector.broadcast %179 : vector<1x1x128xf32> to vector<16x16x128xf32>
    %181 = arith.mulf %176, %180 : vector<16x16x128xf32>
    %182 = arith.addf %175, %181 : vector<16x16x128xf32>
    %c3_89 = arith.constant 3 : index
    %c3_90 = arith.constant 3 : index
    %c0_91 = arith.constant 0 : index
    %183 = vector.load %arg9[%c3_89, %c3_90, %c0_91] : memref<22x22x128xf32, #tpu.memory_space<vmem>>, vector<16x16x128xf32>
    %184 = vector.extract_strided_slice %5 {offsets = [3, 3, 0], sizes = [1, 1, 128], strides = [1, 1, 1]} : vector<7x7x128xf32> to vector<1x1x128xf32>
    %185 = vector.shape_cast %184 : vector<1x1x128xf32> to vector<128xf32>
    %186 = vector.shape_cast %185 : vector<128xf32> to vector<1x1x128xf32>
    %187 = vector.broadcast %186 : vector<1x1x128xf32> to vector<16x16x128xf32>
    %188 = arith.mulf %183, %187 : vector<16x16x128xf32>
    %189 = arith.addf %182, %188 : vector<16x16x128xf32>
    %c3_92 = arith.constant 3 : index
    %c4_93 = arith.constant 4 : index
    %c0_94 = arith.constant 0 : index
    %190 = vector.load %arg9[%c3_92, %c4_93, %c0_94] : memref<22x22x128xf32, #tpu.memory_space<vmem>>, vector<16x16x128xf32>
    %191 = vector.extract_strided_slice %5 {offsets = [3, 4, 0], sizes = [1, 1, 128], strides = [1, 1, 1]} : vector<7x7x128xf32> to vector<1x1x128xf32>
    %192 = vector.shape_cast %191 : vector<1x1x128xf32> to vector<128xf32>
    %193 = vector.shape_cast %192 : vector<128xf32> to vector<1x1x128xf32>
    %194 = vector.broadcast %193 : vector<1x1x128xf32> to vector<16x16x128xf32>
    %195 = arith.mulf %190, %194 : vector<16x16x128xf32>
    %196 = arith.addf %189, %195 : vector<16x16x128xf32>
    %c3_95 = arith.constant 3 : index
    %c5_96 = arith.constant 5 : index
    %c0_97 = arith.constant 0 : index
    %197 = vector.load %arg9[%c3_95, %c5_96, %c0_97] : memref<22x22x128xf32, #tpu.memory_space<vmem>>, vector<16x16x128xf32>
    %198 = vector.extract_strided_slice %5 {offsets = [3, 5, 0], sizes = [1, 1, 128], strides = [1, 1, 1]} : vector<7x7x128xf32> to vector<1x1x128xf32>
    %199 = vector.shape_cast %198 : vector<1x1x128xf32> to vector<128xf32>
    %200 = vector.shape_cast %199 : vector<128xf32> to vector<1x1x128xf32>
    %201 = vector.broadcast %200 : vector<1x1x128xf32> to vector<16x16x128xf32>
    %202 = arith.mulf %197, %201 : vector<16x16x128xf32>
    %203 = arith.addf %196, %202 : vector<16x16x128xf32>
    %c3_98 = arith.constant 3 : index
    %c6_99 = arith.constant 6 : index
    %c0_100 = arith.constant 0 : index
    %204 = vector.load %arg9[%c3_98, %c6_99, %c0_100] : memref<22x22x128xf32, #tpu.memory_space<vmem>>, vector<16x16x128xf32>
    %205 = vector.extract_strided_slice %5 {offsets = [3, 6, 0], sizes = [1, 1, 128], strides = [1, 1, 1]} : vector<7x7x128xf32> to vector<1x1x128xf32>
    %206 = vector.shape_cast %205 : vector<1x1x128xf32> to vector<128xf32>
    %207 = vector.shape_cast %206 : vector<128xf32> to vector<1x1x128xf32>
    %208 = vector.broadcast %207 : vector<1x1x128xf32> to vector<16x16x128xf32>
    %209 = arith.mulf %204, %208 : vector<16x16x128xf32>
    %210 = arith.addf %203, %209 : vector<16x16x128xf32>
    %c4_101 = arith.constant 4 : index
    %c0_102 = arith.constant 0 : index
    %c0_103 = arith.constant 0 : index
    %211 = vector.load %arg9[%c4_101, %c0_102, %c0_103] : memref<22x22x128xf32, #tpu.memory_space<vmem>>, vector<16x16x128xf32>
    %212 = vector.extract_strided_slice %5 {offsets = [4, 0, 0], sizes = [1, 1, 128], strides = [1, 1, 1]} : vector<7x7x128xf32> to vector<1x1x128xf32>
    %213 = vector.shape_cast %212 : vector<1x1x128xf32> to vector<128xf32>
    %214 = vector.shape_cast %213 : vector<128xf32> to vector<1x1x128xf32>
    %215 = vector.broadcast %214 : vector<1x1x128xf32> to vector<16x16x128xf32>
    %216 = arith.mulf %211, %215 : vector<16x16x128xf32>
    %217 = arith.addf %210, %216 : vector<16x16x128xf32>
    %c4_104 = arith.constant 4 : index
    %c1_105 = arith.constant 1 : index
    %c0_106 = arith.constant 0 : index
    %218 = vector.load %arg9[%c4_104, %c1_105, %c0_106] : memref<22x22x128xf32, #tpu.memory_space<vmem>>, vector<16x16x128xf32>
    %219 = vector.extract_strided_slice %5 {offsets = [4, 1, 0], sizes = [1, 1, 128], strides = [1, 1, 1]} : vector<7x7x128xf32> to vector<1x1x128xf32>
    %220 = vector.shape_cast %219 : vector<1x1x128xf32> to vector<128xf32>
    %221 = vector.shape_cast %220 : vector<128xf32> to vector<1x1x128xf32>
    %222 = vector.broadcast %221 : vector<1x1x128xf32> to vector<16x16x128xf32>
    %223 = arith.mulf %218, %222 : vector<16x16x128xf32>
    %224 = arith.addf %217, %223 : vector<16x16x128xf32>
    %c4_107 = arith.constant 4 : index
    %c2_108 = arith.constant 2 : index
    %c0_109 = arith.constant 0 : index
    %225 = vector.load %arg9[%c4_107, %c2_108, %c0_109] : memref<22x22x128xf32, #tpu.memory_space<vmem>>, vector<16x16x128xf32>
    %226 = vector.extract_strided_slice %5 {offsets = [4, 2, 0], sizes = [1, 1, 128], strides = [1, 1, 1]} : vector<7x7x128xf32> to vector<1x1x128xf32>
    %227 = vector.shape_cast %226 : vector<1x1x128xf32> to vector<128xf32>
    %228 = vector.shape_cast %227 : vector<128xf32> to vector<1x1x128xf32>
    %229 = vector.broadcast %228 : vector<1x1x128xf32> to vector<16x16x128xf32>
    %230 = arith.mulf %225, %229 : vector<16x16x128xf32>
    %231 = arith.addf %224, %230 : vector<16x16x128xf32>
    %c4_110 = arith.constant 4 : index
    %c3_111 = arith.constant 3 : index
    %c0_112 = arith.constant 0 : index
    %232 = vector.load %arg9[%c4_110, %c3_111, %c0_112] : memref<22x22x128xf32, #tpu.memory_space<vmem>>, vector<16x16x128xf32>
    %233 = vector.extract_strided_slice %5 {offsets = [4, 3, 0], sizes = [1, 1, 128], strides = [1, 1, 1]} : vector<7x7x128xf32> to vector<1x1x128xf32>
    %234 = vector.shape_cast %233 : vector<1x1x128xf32> to vector<128xf32>
    %235 = vector.shape_cast %234 : vector<128xf32> to vector<1x1x128xf32>
    %236 = vector.broadcast %235 : vector<1x1x128xf32> to vector<16x16x128xf32>
    %237 = arith.mulf %232, %236 : vector<16x16x128xf32>
    %238 = arith.addf %231, %237 : vector<16x16x128xf32>
    %c4_113 = arith.constant 4 : index
    %c4_114 = arith.constant 4 : index
    %c0_115 = arith.constant 0 : index
    %239 = vector.load %arg9[%c4_113, %c4_114, %c0_115] : memref<22x22x128xf32, #tpu.memory_space<vmem>>, vector<16x16x128xf32>
    %240 = vector.extract_strided_slice %5 {offsets = [4, 4, 0], sizes = [1, 1, 128], strides = [1, 1, 1]} : vector<7x7x128xf32> to vector<1x1x128xf32>
    %241 = vector.shape_cast %240 : vector<1x1x128xf32> to vector<128xf32>
    %242 = vector.shape_cast %241 : vector<128xf32> to vector<1x1x128xf32>
    %243 = vector.broadcast %242 : vector<1x1x128xf32> to vector<16x16x128xf32>
    %244 = arith.mulf %239, %243 : vector<16x16x128xf32>
    %245 = arith.addf %238, %244 : vector<16x16x128xf32>
    %c4_116 = arith.constant 4 : index
    %c5_117 = arith.constant 5 : index
    %c0_118 = arith.constant 0 : index
    %246 = vector.load %arg9[%c4_116, %c5_117, %c0_118] : memref<22x22x128xf32, #tpu.memory_space<vmem>>, vector<16x16x128xf32>
    %247 = vector.extract_strided_slice %5 {offsets = [4, 5, 0], sizes = [1, 1, 128], strides = [1, 1, 1]} : vector<7x7x128xf32> to vector<1x1x128xf32>
    %248 = vector.shape_cast %247 : vector<1x1x128xf32> to vector<128xf32>
    %249 = vector.shape_cast %248 : vector<128xf32> to vector<1x1x128xf32>
    %250 = vector.broadcast %249 : vector<1x1x128xf32> to vector<16x16x128xf32>
    %251 = arith.mulf %246, %250 : vector<16x16x128xf32>
    %252 = arith.addf %245, %251 : vector<16x16x128xf32>
    %c4_119 = arith.constant 4 : index
    %c6_120 = arith.constant 6 : index
    %c0_121 = arith.constant 0 : index
    %253 = vector.load %arg9[%c4_119, %c6_120, %c0_121] : memref<22x22x128xf32, #tpu.memory_space<vmem>>, vector<16x16x128xf32>
    %254 = vector.extract_strided_slice %5 {offsets = [4, 6, 0], sizes = [1, 1, 128], strides = [1, 1, 1]} : vector<7x7x128xf32> to vector<1x1x128xf32>
    %255 = vector.shape_cast %254 : vector<1x1x128xf32> to vector<128xf32>
    %256 = vector.shape_cast %255 : vector<128xf32> to vector<1x1x128xf32>
    %257 = vector.broadcast %256 : vector<1x1x128xf32> to vector<16x16x128xf32>
    %258 = arith.mulf %253, %257 : vector<16x16x128xf32>
    %259 = arith.addf %252, %258 : vector<16x16x128xf32>
    %c5_122 = arith.constant 5 : index
    %c0_123 = arith.constant 0 : index
    %c0_124 = arith.constant 0 : index
    %260 = vector.load %arg9[%c5_122, %c0_123, %c0_124] : memref<22x22x128xf32, #tpu.memory_space<vmem>>, vector<16x16x128xf32>
    %261 = vector.extract_strided_slice %5 {offsets = [5, 0, 0], sizes = [1, 1, 128], strides = [1, 1, 1]} : vector<7x7x128xf32> to vector<1x1x128xf32>
    %262 = vector.shape_cast %261 : vector<1x1x128xf32> to vector<128xf32>
    %263 = vector.shape_cast %262 : vector<128xf32> to vector<1x1x128xf32>
    %264 = vector.broadcast %263 : vector<1x1x128xf32> to vector<16x16x128xf32>
    %265 = arith.mulf %260, %264 : vector<16x16x128xf32>
    %266 = arith.addf %259, %265 : vector<16x16x128xf32>
    %c5_125 = arith.constant 5 : index
    %c1_126 = arith.constant 1 : index
    %c0_127 = arith.constant 0 : index
    %267 = vector.load %arg9[%c5_125, %c1_126, %c0_127] : memref<22x22x128xf32, #tpu.memory_space<vmem>>, vector<16x16x128xf32>
    %268 = vector.extract_strided_slice %5 {offsets = [5, 1, 0], sizes = [1, 1, 128], strides = [1, 1, 1]} : vector<7x7x128xf32> to vector<1x1x128xf32>
    %269 = vector.shape_cast %268 : vector<1x1x128xf32> to vector<128xf32>
    %270 = vector.shape_cast %269 : vector<128xf32> to vector<1x1x128xf32>
    %271 = vector.broadcast %270 : vector<1x1x128xf32> to vector<16x16x128xf32>
    %272 = arith.mulf %267, %271 : vector<16x16x128xf32>
    %273 = arith.addf %266, %272 : vector<16x16x128xf32>
    %c5_128 = arith.constant 5 : index
    %c2_129 = arith.constant 2 : index
    %c0_130 = arith.constant 0 : index
    %274 = vector.load %arg9[%c5_128, %c2_129, %c0_130] : memref<22x22x128xf32, #tpu.memory_space<vmem>>, vector<16x16x128xf32>
    %275 = vector.extract_strided_slice %5 {offsets = [5, 2, 0], sizes = [1, 1, 128], strides = [1, 1, 1]} : vector<7x7x128xf32> to vector<1x1x128xf32>
    %276 = vector.shape_cast %275 : vector<1x1x128xf32> to vector<128xf32>
    %277 = vector.shape_cast %276 : vector<128xf32> to vector<1x1x128xf32>
    %278 = vector.broadcast %277 : vector<1x1x128xf32> to vector<16x16x128xf32>
    %279 = arith.mulf %274, %278 : vector<16x16x128xf32>
    %280 = arith.addf %273, %279 : vector<16x16x128xf32>
    %c5_131 = arith.constant 5 : index
    %c3_132 = arith.constant 3 : index
    %c0_133 = arith.constant 0 : index
    %281 = vector.load %arg9[%c5_131, %c3_132, %c0_133] : memref<22x22x128xf32, #tpu.memory_space<vmem>>, vector<16x16x128xf32>
    %282 = vector.extract_strided_slice %5 {offsets = [5, 3, 0], sizes = [1, 1, 128], strides = [1, 1, 1]} : vector<7x7x128xf32> to vector<1x1x128xf32>
    %283 = vector.shape_cast %282 : vector<1x1x128xf32> to vector<128xf32>
    %284 = vector.shape_cast %283 : vector<128xf32> to vector<1x1x128xf32>
    %285 = vector.broadcast %284 : vector<1x1x128xf32> to vector<16x16x128xf32>
    %286 = arith.mulf %281, %285 : vector<16x16x128xf32>
    %287 = arith.addf %280, %286 : vector<16x16x128xf32>
    %c5_134 = arith.constant 5 : index
    %c4_135 = arith.constant 4 : index
    %c0_136 = arith.constant 0 : index
    %288 = vector.load %arg9[%c5_134, %c4_135, %c0_136] : memref<22x22x128xf32, #tpu.memory_space<vmem>>, vector<16x16x128xf32>
    %289 = vector.extract_strided_slice %5 {offsets = [5, 4, 0], sizes = [1, 1, 128], strides = [1, 1, 1]} : vector<7x7x128xf32> to vector<1x1x128xf32>
    %290 = vector.shape_cast %289 : vector<1x1x128xf32> to vector<128xf32>
    %291 = vector.shape_cast %290 : vector<128xf32> to vector<1x1x128xf32>
    %292 = vector.broadcast %291 : vector<1x1x128xf32> to vector<16x16x128xf32>
    %293 = arith.mulf %288, %292 : vector<16x16x128xf32>
    %294 = arith.addf %287, %293 : vector<16x16x128xf32>
    %c5_137 = arith.constant 5 : index
    %c5_138 = arith.constant 5 : index
    %c0_139 = arith.constant 0 : index
    %295 = vector.load %arg9[%c5_137, %c5_138, %c0_139] : memref<22x22x128xf32, #tpu.memory_space<vmem>>, vector<16x16x128xf32>
    %296 = vector.extract_strided_slice %5 {offsets = [5, 5, 0], sizes = [1, 1, 128], strides = [1, 1, 1]} : vector<7x7x128xf32> to vector<1x1x128xf32>
    %297 = vector.shape_cast %296 : vector<1x1x128xf32> to vector<128xf32>
    %298 = vector.shape_cast %297 : vector<128xf32> to vector<1x1x128xf32>
    %299 = vector.broadcast %298 : vector<1x1x128xf32> to vector<16x16x128xf32>
    %300 = arith.mulf %295, %299 : vector<16x16x128xf32>
    %301 = arith.addf %294, %300 : vector<16x16x128xf32>
    %c5_140 = arith.constant 5 : index
    %c6_141 = arith.constant 6 : index
    %c0_142 = arith.constant 0 : index
    %302 = vector.load %arg9[%c5_140, %c6_141, %c0_142] : memref<22x22x128xf32, #tpu.memory_space<vmem>>, vector<16x16x128xf32>
    %303 = vector.extract_strided_slice %5 {offsets = [5, 6, 0], sizes = [1, 1, 128], strides = [1, 1, 1]} : vector<7x7x128xf32> to vector<1x1x128xf32>
    %304 = vector.shape_cast %303 : vector<1x1x128xf32> to vector<128xf32>
    %305 = vector.shape_cast %304 : vector<128xf32> to vector<1x1x128xf32>
    %306 = vector.broadcast %305 : vector<1x1x128xf32> to vector<16x16x128xf32>
    %307 = arith.mulf %302, %306 : vector<16x16x128xf32>
    %308 = arith.addf %301, %307 : vector<16x16x128xf32>
    %c6_143 = arith.constant 6 : index
    %c0_144 = arith.constant 0 : index
    %c0_145 = arith.constant 0 : index
    %309 = vector.load %arg9[%c6_143, %c0_144, %c0_145] : memref<22x22x128xf32, #tpu.memory_space<vmem>>, vector<16x16x128xf32>
    %310 = vector.extract_strided_slice %5 {offsets = [6, 0, 0], sizes = [1, 1, 128], strides = [1, 1, 1]} : vector<7x7x128xf32> to vector<1x1x128xf32>
    %311 = vector.shape_cast %310 : vector<1x1x128xf32> to vector<128xf32>
    %312 = vector.shape_cast %311 : vector<128xf32> to vector<1x1x128xf32>
    %313 = vector.broadcast %312 : vector<1x1x128xf32> to vector<16x16x128xf32>
    %314 = arith.mulf %309, %313 : vector<16x16x128xf32>
    %315 = arith.addf %308, %314 : vector<16x16x128xf32>
    %c6_146 = arith.constant 6 : index
    %c1_147 = arith.constant 1 : index
    %c0_148 = arith.constant 0 : index
    %316 = vector.load %arg9[%c6_146, %c1_147, %c0_148] : memref<22x22x128xf32, #tpu.memory_space<vmem>>, vector<16x16x128xf32>
    %317 = vector.extract_strided_slice %5 {offsets = [6, 1, 0], sizes = [1, 1, 128], strides = [1, 1, 1]} : vector<7x7x128xf32> to vector<1x1x128xf32>
    %318 = vector.shape_cast %317 : vector<1x1x128xf32> to vector<128xf32>
    %319 = vector.shape_cast %318 : vector<128xf32> to vector<1x1x128xf32>
    %320 = vector.broadcast %319 : vector<1x1x128xf32> to vector<16x16x128xf32>
    %321 = arith.mulf %316, %320 : vector<16x16x128xf32>
    %322 = arith.addf %315, %321 : vector<16x16x128xf32>
    %c6_149 = arith.constant 6 : index
    %c2_150 = arith.constant 2 : index
    %c0_151 = arith.constant 0 : index
    %323 = vector.load %arg9[%c6_149, %c2_150, %c0_151] : memref<22x22x128xf32, #tpu.memory_space<vmem>>, vector<16x16x128xf32>
    %324 = vector.extract_strided_slice %5 {offsets = [6, 2, 0], sizes = [1, 1, 128], strides = [1, 1, 1]} : vector<7x7x128xf32> to vector<1x1x128xf32>
    %325 = vector.shape_cast %324 : vector<1x1x128xf32> to vector<128xf32>
    %326 = vector.shape_cast %325 : vector<128xf32> to vector<1x1x128xf32>
    %327 = vector.broadcast %326 : vector<1x1x128xf32> to vector<16x16x128xf32>
    %328 = arith.mulf %323, %327 : vector<16x16x128xf32>
    %329 = arith.addf %322, %328 : vector<16x16x128xf32>
    %c6_152 = arith.constant 6 : index
    %c3_153 = arith.constant 3 : index
    %c0_154 = arith.constant 0 : index
    %330 = vector.load %arg9[%c6_152, %c3_153, %c0_154] : memref<22x22x128xf32, #tpu.memory_space<vmem>>, vector<16x16x128xf32>
    %331 = vector.extract_strided_slice %5 {offsets = [6, 3, 0], sizes = [1, 1, 128], strides = [1, 1, 1]} : vector<7x7x128xf32> to vector<1x1x128xf32>
    %332 = vector.shape_cast %331 : vector<1x1x128xf32> to vector<128xf32>
    %333 = vector.shape_cast %332 : vector<128xf32> to vector<1x1x128xf32>
    %334 = vector.broadcast %333 : vector<1x1x128xf32> to vector<16x16x128xf32>
    %335 = arith.mulf %330, %334 : vector<16x16x128xf32>
    %336 = arith.addf %329, %335 : vector<16x16x128xf32>
    %c6_155 = arith.constant 6 : index
    %c4_156 = arith.constant 4 : index
    %c0_157 = arith.constant 0 : index
    %337 = vector.load %arg9[%c6_155, %c4_156, %c0_157] : memref<22x22x128xf32, #tpu.memory_space<vmem>>, vector<16x16x128xf32>
    %338 = vector.extract_strided_slice %5 {offsets = [6, 4, 0], sizes = [1, 1, 128], strides = [1, 1, 1]} : vector<7x7x128xf32> to vector<1x1x128xf32>
    %339 = vector.shape_cast %338 : vector<1x1x128xf32> to vector<128xf32>
    %340 = vector.shape_cast %339 : vector<128xf32> to vector<1x1x128xf32>
    %341 = vector.broadcast %340 : vector<1x1x128xf32> to vector<16x16x128xf32>
    %342 = arith.mulf %337, %341 : vector<16x16x128xf32>
    %343 = arith.addf %336, %342 : vector<16x16x128xf32>
    %c6_158 = arith.constant 6 : index
    %c5_159 = arith.constant 5 : index
    %c0_160 = arith.constant 0 : index
    %344 = vector.load %arg9[%c6_158, %c5_159, %c0_160] : memref<22x22x128xf32, #tpu.memory_space<vmem>>, vector<16x16x128xf32>
    %345 = vector.extract_strided_slice %5 {offsets = [6, 5, 0], sizes = [1, 1, 128], strides = [1, 1, 1]} : vector<7x7x128xf32> to vector<1x1x128xf32>
    %346 = vector.shape_cast %345 : vector<1x1x128xf32> to vector<128xf32>
    %347 = vector.shape_cast %346 : vector<128xf32> to vector<1x1x128xf32>
    %348 = vector.broadcast %347 : vector<1x1x128xf32> to vector<16x16x128xf32>
    %349 = arith.mulf %344, %348 : vector<16x16x128xf32>
    %350 = arith.addf %343, %349 : vector<16x16x128xf32>
    %c6_161 = arith.constant 6 : index
    %c6_162 = arith.constant 6 : index
    %c0_163 = arith.constant 0 : index
    %351 = vector.load %arg9[%c6_161, %c6_162, %c0_163] : memref<22x22x128xf32, #tpu.memory_space<vmem>>, vector<16x16x128xf32>
    %352 = vector.extract_strided_slice %5 {offsets = [6, 6, 0], sizes = [1, 1, 128], strides = [1, 1, 1]} : vector<7x7x128xf32> to vector<1x1x128xf32>
    %353 = vector.shape_cast %352 : vector<1x1x128xf32> to vector<128xf32>
    %354 = vector.shape_cast %353 : vector<128xf32> to vector<1x1x128xf32>
    %355 = vector.broadcast %354 : vector<1x1x128xf32> to vector<16x16x128xf32>
    %356 = arith.mulf %351, %355 : vector<16x16x128xf32>
    %357 = arith.addf %350, %356 : vector<16x16x128xf32>
    %358 = vector.shape_cast %7 : vector<128xf32> to vector<1x1x128xf32>
    %359 = vector.broadcast %358 : vector<1x1x128xf32> to vector<16x16x128xf32>
    %360 = arith.addf %357, %359 : vector<16x16x128xf32>
    %361 = vector.shape_cast %360 : vector<16x16x128xf32> to vector<256x128xf32>
    %362 = arith.truncf %361 : vector<256x128xf32> to vector<256x128xbf16>
    %cst_164 = arith.constant dense<0.000000e+00> : vector<256x128xf32>
    %363 = tpu.matmul %362, %8, %cst_164 {dimension_numbers = #tpu.dot_dimension_numbers<[1], [0], [0], [1], [0, 0, 1, 1], [], []>} : vector<256x128xbf16>, vector<128x128xbf16>, vector<256x128xf32> -> vector<256x128xf32>
    %364 = vector.shape_cast %10 : vector<128xf32> to vector<1x128xf32>
    %365 = vector.broadcast %364 : vector<1x128xf32> to vector<256x128xf32>
    %366 = arith.addf %363, %365 : vector<256x128xf32>
    %cst_165 = arith.constant 5.000000e-01 : f32
    %367 = vector.broadcast %cst_165 : f32 to vector<256x128xf32>
    %368 = arith.mulf %367, %366 : vector<256x128xf32>
    %cst_166 = arith.constant 0.707106769 : f32
    %369 = vector.broadcast %cst_166 : f32 to vector<256x128xf32>
    %370 = arith.mulf %366, %369 : vector<256x128xf32>
    %371 = math.erf %370 : vector<256x128xf32>
    %cst_167 = arith.constant 1.000000e+00 : f32
    %372 = vector.broadcast %cst_167 : f32 to vector<256x128xf32>
    %373 = arith.addf %372, %371 : vector<256x128xf32>
    %374 = arith.mulf %368, %373 : vector<256x128xf32>
    %375 = arith.truncf %374 : vector<256x128xf32> to vector<256x128xbf16>
    %cst_168 = arith.constant dense<0.000000e+00> : vector<256x128xf32>
    %376 = tpu.matmul %375, %11, %cst_168 {dimension_numbers = #tpu.dot_dimension_numbers<[1], [0], [0], [1], [0, 0, 1, 1], [], []>} : vector<256x128xbf16>, vector<128x128xbf16>, vector<256x128xf32> -> vector<256x128xf32>
    %377 = vector.shape_cast %13 : vector<128xf32> to vector<1x128xf32>
    %378 = vector.broadcast %377 : vector<1x128xf32> to vector<256x128xf32>
    %379 = arith.addf %376, %378 : vector<256x128xf32>
    %380 = vector.shape_cast %379 : vector<256x128xf32> to vector<16x16x128xf32>
    %c0_169 = arith.constant 0 : index
    %c0_170 = arith.constant 0 : index
    %c0_171 = arith.constant 0 : index
    %c0_172 = arith.constant 0 : index
    %381 = vector.load %arg1[%c0_169, %c0_170, %c0_171, %c0_172] : memref<1x16x16x128xf32, #tpu.memory_space<vmem>>, vector<1x16x16x128xf32>
    %382 = vector.shape_cast %381 : vector<1x16x16x128xf32> to vector<16x16x128xf32>
    %383 = arith.addf %380, %382 : vector<16x16x128xf32>
    %c0_173 = arith.constant 0 : index
    %c0_174 = arith.constant 0 : index
    %c0_175 = arith.constant 0 : index
    %c0_176 = arith.constant 0 : index
    %384 = vector.load %arg8[%c0_173, %c0_174, %c0_175, %c0_176] : memref<1x16x16x128xf32, #tpu.memory_space<vmem>>, vector<1x16x16x128xf32>
    %385 = vector.shape_cast %384 : vector<1x16x16x128xf32> to vector<16x16x128xf32>
    %386 = vector.shape_cast %383 : vector<16x16x128xf32> to vector<1x16x16x128xf32>
    tpu.vector_store %arg8[%c0_173, %c0_174, %c0_175, %c0_176], %386 {strides = array<i32>} : memref<1x16x16x128xf32, #tpu.memory_space<vmem>>, vector<1x16x16x128xf32>,
    return
  }
  func.func @transform_0(%arg0: i32) -> (i32, i32, i32, i32) {
    %c0_i32 = arith.constant 0 : i32
    %c0_i32_0 = arith.constant 0 : i32
    %c0_i32_1 = arith.constant 0 : i32
    %c0_i32_2 = arith.constant 0 : i32
    return %arg0, %c0_i32, %c0_i32_0, %c0_i32_1 : i32, i32, i32, i32
  }
  func.func @transform_1(%arg0: i32) -> (i32, i32, i32) {
    %c0_i32 = arith.constant 0 : i32
    %c0_i32_0 = arith.constant 0 : i32
    %c0_i32_1 = arith.constant 0 : i32
    %c0_i32_2 = arith.constant 0 : i32
    return %c0_i32, %c0_i32_0, %c0_i32_1 : i32, i32, i32
  }
  func.func @transform_2(%arg0: i32) -> (i32, i32) {
    %c0_i32 = arith.constant 0 : i32
    %c0_i32_0 = arith.constant 0 : i32
    %c0_i32_1 = arith.constant 0 : i32
    return %c0_i32, %c0_i32_0 : i32, i32
  }
  func.func @transform_3(%arg0: i32) -> (i32, i32) {
    %c0_i32 = arith.constant 0 : i32
    %c0_i32_0 = arith.constant 0 : i32
    %c0_i32_1 = arith.constant 0 : i32
    return %c0_i32, %c0_i32_0 : i32, i32
  }
  func.func @transform_4(%arg0: i32) -> (i32, i32) {
    %c0_i32 = arith.constant 0 : i32
    %c0_i32_0 = arith.constant 0 : i32
    %c0_i32_1 = arith.constant 0 : i32
    return %c0_i32, %c0_i32_0 : i32, i32
  }
  func.func @transform_5(%arg0: i32) -> (i32, i32) {
    %c0_i32 = arith.constant 0 : i32
    %c0_i32_0 = arith.constant 0 : i32
    %c0_i32_1 = arith.constant 0 : i32
    return %c0_i32, %c0_i32_0 : i32, i32
  }
  func.func @transform_6(%arg0: i32) -> (i32, i32) {
    %c0_i32 = arith.constant 0 : i32
    %c0_i32_0 = arith.constant 0 : i32
    %c0_i32_1 = arith.constant 0 : i32
    return %c0_i32, %c0_i32_0 : i32, i32
  }
  func.func @transform_7(%arg0: i32) -> (i32, i32, i32, i32) {
    %c0_i32 = arith.constant 0 : i32
    %c0_i32_0 = arith.constant 0 : i32
    %c0_i32_1 = arith.constant 0 : i32
    %c0_i32_2 = arith.constant 0 : i32
    return %arg0, %c0_i32, %c0_i32_0, %c0_i32_1 : i32, i32, i32, i32
  }
}

</mosaic_0001>

<llo_original>
// kernel: tpu_custom_call.1
$region0: #{tpu_custom_call.1}
  #allocation0 [shape = 'u32[]', space=smem, size = 0x4, offset = 0x4, fixed_abs, tag = 'smem constant byte address 0x4 - core index']
  #allocation1 [shape = 'u32[144,128]{1,0:T(1,128)}', space=vmem, size = 0x12000, scoped, tag = 'internal scratch']
  #allocation2 [shape = 'f32[22,22,128]{2,1,0:T(8,128)}', space=vmem, size = 0x42000, scoped, tag = 'scratch operand']
  %s0 = inlined_call_operand.hbm [shape: f32[2,16,16,128], index: 0, kind: input, shape index: {}]
  %s1 = inlined_call_operand.hbm [shape: f32[7,7,128], index: 1, kind: input, shape index: {}]
  %s2 = inlined_call_operand.hbm [shape: f32[1,128], index: 2, kind: input, shape index: {}]
  %s3 = inlined_call_operand.hbm [shape: bf16[128,128], index: 3, kind: input, shape index: {}]
  %s4 = inlined_call_operand.hbm [shape: f32[1,128], index: 4, kind: input, shape index: {}]
  %s5 = inlined_call_operand.hbm [shape: bf16[128,128], index: 5, kind: input, shape index: {}]
  %s6 = inlined_call_operand.hbm [shape: f32[1,128], index: 6, kind: input, shape index: {}]
  %s7 = inlined_call_operand.hbm [shape: f32[2,16,16,128], index: 7, kind: output, shape index: {}]
  %s8 = sld [smem:[#allocation0]]
  $region89: #{tpu_custom_call.1} parent=0
    _
  %s10 = ssub.s32 1, %s8
  %s11 = scalar_select 0, %s10, %s8
  $region1: #{tpu_custom_call.1} parent=0
    #allocation3 [shape = 'u8[262144]{0}', space=vmem, size = 0x40000, scoped, tag = 'input window, operand 0']
    #allocation4 [shape = 's32[2]{0}', space=sflag, size = 0x8, scoped, tag = 'scoped memory for tpu_custom_call.1']
    #allocation5 [shape = 's32[2]{0}', space=sflag, size = 0x8, scoped, tag = 'scoped memory for tpu_custom_call.1']
    #allocation6 [shape = 'u8[28672]{0}', space=vmem, size = 0x7000, scoped, tag = 'input window, operand 1, single buffered']
    #allocation7 [shape = 's32[1]{0}', space=sflag, size = 0x4, scoped, tag = 'scoped memory for tpu_custom_call.1']
    #allocation8 [shape = 'u8[512]{0}', space=vmem, size = 0x400, scoped, tag = 'input window, operand 2, single buffered']
    #allocation9 [shape = 'u8[32768]{0}', space=vmem, size = 0x8000, scoped, tag = 'input window, operand 3, single buffered']
    #allocation10 [shape = 's32[1]{0}', space=sflag, size = 0x4, scoped, tag = 'scoped memory for tpu_custom_call.1']
    #allocation11 [shape = 'u8[512]{0}', space=vmem, size = 0x400, scoped, tag = 'input window, operand 4, single buffered']
    #allocation12 [shape = 'u8[32768]{0}', space=vmem, size = 0x8000, scoped, tag = 'input window, operand 5, single buffered']
    #allocation13 [shape = 's32[1]{0}', space=sflag, size = 0x4, scoped, tag = 'scoped memory for tpu_custom_call.1']
    #allocation14 [shape = 'u8[512]{0}', space=vmem, size = 0x400, scoped, tag = 'input window, operand 6, single buffered']
    #allocation15 [shape = 'u8[262144]{0}', space=vmem, size = 0x40000, scoped, tag = 'output window, operand 0']
    %12 = vsyncpa [#allocation4], 0
    %s13 = scalar_lea.sflag [#allocation4], 1
    %14 = vsyncpa %s13, 0
    %15 = vsyncpa [#allocation7], 0
    %16 = vsyncpa [#allocation10], 0
    %17 = vsyncpa [#allocation13], 0
    %18 = vsyncpa [#allocation5], 0
    %s19 = scalar_lea.sflag [#allocation5], 1
    %20 = vsyncpa %s19, 0
    loop: start=0, step=1, limit=4
    $region2: #{tpu_custom_call.1} parent=1 // loop_pre_header
      _
    $region3: #{tpu_custom_call.1} parent=1 // loop_header
      %s22 = sphi 0, %s26
      %p23 = scmp.ge.s32.totalorder %s22, 4
      %s32 = sphi 0, %s34
      %s35 = sphi 0, %s32
      %s36 = sphi 0, %s35
      %s52 = sphi 0, %s36
      %s56 = sphi 0, %s56
      %s58 = sphi 0, %s56
      %s59 = sphi 0, %s58
      %s73 = sphi 0, %s59
      %s77 = sphi 0, %s77
      %s79 = sphi 0, %s77
      %s80 = sphi 0, %s79
      %s94 = sphi 0, %s80
      %s98 = sphi 0, %s98
      %s100 = sphi 0, %s98
      %s101 = sphi 0, %s100
      %s115 = sphi 0, %s101
      %s119 = sphi 0, %s119
      %s121 = sphi 0, %s119
      %s122 = sphi 0, %s121
      %s136 = sphi 0, %s122
      %s140 = sphi 0, %s140
      %s142 = sphi 0, %s140
      %s143 = sphi 0, %s142
      %s157 = sphi 0, %s143
      %s161 = sphi 0, %s161
      %s163 = sphi 0, %s161
      %s164 = sphi 0, %s163
      %s178 = sphi 0, %s164
      %s184 = sphi 0, %s186
      %s187 = sphi 0, %s184
      %s188 = sphi 0, %s187
      %s204 = sphi 0, %s188
    $region4: #{tpu_custom_call.1} parent=1 // loop_header_branch
      %25 = sbr.rel (%p23) target = $region8
    $region5: #{tpu_custom_call.1} parent=1 // loop_body
      %s27 = ssub.s32 %s22, 1
      %s28 = ssub.s32 %s22, 2
      %s29 = sadd.s32 %s22, 1
      %s30 = ssub.s32 %s22, %s29
      %p31 = scmp.eq.s32.totalorder %s30, 0
      %s33 = sadd.s32 %s32, 1
      %s34 = scalar_select %p31, %s32, %s33
      %p37 = pneg %p31
      %p38 = scmp.eq.s32.totalorder %s22, 1
      %p39 = por %p37, %p38
      %p40 = scmp.ne.s32.totalorder %s32, %s35
      %p41 = scmp.eq.s32.totalorder %s22, 0
      %p42 = por %p40, %p41
      %p43 = scmp.ne.s32.totalorder %s32, %s35
      %p44 = scmp.eq.s32.totalorder %s27, 1
      %p45 = por %p43, %p44
      %p46 = scmp.ne.s32.totalorder %s35, %s36
      %p47 = scmp.eq.s32.totalorder %s27, 0
      %p48 = por %p46, %p47
      %p49 = scmp.ne.s32.totalorder %s35, %s36
      %p50 = scmp.eq.s32.totalorder %s28, 1
      %p51 = por %p49, %p50
      %p53 = scmp.ne.s32.totalorder %s36, %s52
      %p54 = scmp.eq.s32.totalorder %s28, 0
      %p55 = por %p53, %p54
      %s57 = sadd.s32 %s56, 1
      %p60 = scmp.eq.s32.totalorder %s22, 1
      %p61 = scmp.ne.s32.totalorder %s56, %s58
      %p62 = scmp.eq.s32.totalorder %s22, 0
      %p63 = por %p61, %p62
      %p64 = scmp.ne.s32.totalorder %s56, %s58
      %p65 = scmp.eq.s32.totalorder %s27, 1
      %p66 = por %p64, %p65
      %p67 = scmp.ne.s32.totalorder %s58, %s59
      %p68 = scmp.eq.s32.totalorder %s27, 0
      %p69 = por %p67, %p68
      %p70 = scmp.ne.s32.totalorder %s58, %s59
      %p71 = scmp.eq.s32.totalorder %s28, 1
      %p72 = por %p70, %p71
      %p74 = scmp.ne.s32.totalorder %s59, %s73
      %p75 = scmp.eq.s32.totalorder %s28, 0
      %p76 = por %p74, %p75
      %s78 = sadd.s32 %s77, 1
      %p81 = scmp.eq.s32.totalorder %s22, 1
      %p82 = scmp.ne.s32.totalorder %s77, %s79
      %p83 = scmp.eq.s32.totalorder %s22, 0
      %p84 = por %p82, %p83
      %p85 = scmp.ne.s32.totalorder %s77, %s79
      %p86 = scmp.eq.s32.totalorder %s27, 1
      %p87 = por %p85, %p86
      %p88 = scmp.ne.s32.totalorder %s79, %s80
      %p89 = scmp.eq.s32.totalorder %s27, 0
      %p90 = por %p88, %p89
      %p91 = scmp.ne.s32.totalorder %s79, %s80
      %p92 = scmp.eq.s32.totalorder %s28, 1
      %p93 = por %p91, %p92
      %p95 = scmp.ne.s32.totalorder %s80, %s94
      %p96 = scmp.eq.s32.totalorder %s28, 0
      %p97 = por %p95, %p96
      %s99 = sadd.s32 %s98, 1
      %p102 = scmp.eq.s32.totalorder %s22, 1
      %p103 = scmp.ne.s32.totalorder %s98, %s100
      %p104 = scmp.eq.s32.totalorder %s22, 0
      %p105 = por %p103, %p104
      %p106 = scmp.ne.s32.totalorder %s98, %s100
      %p107 = scmp.eq.s32.totalorder %s27, 1
      %p108 = por %p106, %p107
      %p109 = scmp.ne.s32.totalorder %s100, %s101
      %p110 = scmp.eq.s32.totalorder %s27, 0
      %p111 = por %p109, %p110
      %p112 = scmp.ne.s32.totalorder %s100, %s101
      %p113 = scmp.eq.s32.totalorder %s28, 1
      %p114 = por %p112, %p113
      %p116 = scmp.ne.s32.totalorder %s101, %s115
      %p117 = scmp.eq.s32.totalorder %s28, 0
      %p118 = por %p116, %p117
      %s120 = sadd.s32 %s119, 1
      %p123 = scmp.eq.s32.totalorder %s22, 1
      %p124 = scmp.ne.s32.totalorder %s119, %s121
      %p125 = scmp.eq.s32.totalorder %s22, 0
      %p126 = por %p124, %p125
      %p127 = scmp.ne.s32.totalorder %s119, %s121
      %p128 = scmp.eq.s32.totalorder %s27, 1
      %p129 = por %p127, %p128
      %p130 = scmp.ne.s32.totalorder %s121, %s122
      %p131 = scmp.eq.s32.totalorder %s27, 0
      %p132 = por %p130, %p131
      %p133 = scmp.ne.s32.totalorder %s121, %s122
      %p134 = scmp.eq.s32.totalorder %s28, 1
      %p135 = por %p133, %p134
      %p137 = scmp.ne.s32.totalorder %s122, %s136
      %p138 = scmp.eq.s32.totalorder %s28, 0
      %p139 = por %p137, %p138
      %s141 = sadd.s32 %s140, 1
      %p144 = scmp.eq.s32.totalorder %s22, 1
      %p145 = scmp.ne.s32.totalorder %s140, %s142
      %p146 = scmp.eq.s32.totalorder %s22, 0
      %p147 = por %p145, %p146
      %p148 = scmp.ne.s32.totalorder %s140, %s142
      %p149 = scmp.eq.s32.totalorder %s27, 1
      %p150 = por %p148, %p149
      %p151 = scmp.ne.s32.totalorder %s142, %s143
      %p152 = scmp.eq.s32.totalorder %s27, 0
      %p153 = por %p151, %p152
      %p154 = scmp.ne.s32.totalorder %s142, %s143
      %p155 = scmp.eq.s32.totalorder %s28, 1
      %p156 = por %p154, %p155
      %p158 = scmp.ne.s32.totalorder %s143, %s157
      %p159 = scmp.eq.s32.totalorder %s28, 0
      %p160 = por %p158, %p159
      %s162 = sadd.s32 %s161, 1
      %p165 = scmp.eq.s32.totalorder %s22, 1
      %p166 = scmp.ne.s32.totalorder %s161, %s163
      %p167 = scmp.eq.s32.totalorder %s22, 0
      %p168 = por %p166, %p167
      %p169 = scmp.ne.s32.totalorder %s161, %s163
      %p170 = scmp.eq.s32.totalorder %s27, 1
      %p171 = por %p169, %p170
      %p172 = scmp.ne.s32.totalorder %s163, %s164
      %p173 = scmp.eq.s32.totalorder %s27, 0
      %p174 = por %p172, %p173
      %p175 = scmp.ne.s32.totalorder %s163, %s164
      %p176 = scmp.eq.s32.totalorder %s28, 1
      %p177 = por %p175, %p176
      %p179 = scmp.ne.s32.totalorder %s164, %s178
      %p180 = scmp.eq.s32.totalorder %s28, 0
      %p181 = por %p179, %p180
      %s182 = ssub.s32 %s22, %s29
      %p183 = scmp.eq.s32.totalorder %s182, 0
      %s185 = sadd.s32 %s184, 1
      %s186 = scalar_select %p183, %s184, %s185
      %p189 = pneg %p183
      %p190 = scmp.eq.s32.totalorder %s22, 1
      %p191 = por %p189, %p190
      %p192 = scmp.ne.s32.totalorder %s184, %s187
      %p193 = scmp.eq.s32.totalorder %s22, 0
      %p194 = por %p192, %p193
      %p195 = scmp.ne.s32.totalorder %s184, %s187
      %p196 = scmp.eq.s32.totalorder %s27, 1
      %p197 = por %p195, %p196
      %p198 = scmp.ne.s32.totalorder %s187, %s188
      %p199 = scmp.eq.s32.totalorder %s27, 0
      %p200 = por %p198, %p199
      %p201 = scmp.ne.s32.totalorder %s187, %s188
      %p202 = scmp.eq.s32.totalorder %s28, 1
      %p203 = por %p201, %p202
      %p205 = scmp.ne.s32.totalorder %s188, %s204
      %p206 = scmp.eq.s32.totalorder %s28, 0
      %p207 = por %p205, %p206
      %p208 = scmp.le.s32.totalorder 1, %s22
      %p209 = scmp.lt.s32.totalorder %s22, 3
      %p210 = pnand %p208, %p209
      %p211 = pneg %p210
      // Predicated region
      $region9: #{tpu_custom_call.1} parent=5 // pred_check
        _
      $region10: #{tpu_custom_call.1} parent=5 // pred_check_branch
        %213 = sbr.rel (%p210) target = $region12
      $region11: #{tpu_custom_call.1} parent=5 // pred_region
        %s214 = ssub.s32 %s22, 1
        // Predicated region
        $region13: #{tpu_custom_call.1} parent=11 // pred_check
          %p215 = pneg %p69
        $region14: #{tpu_custom_call.1} parent=11 // pred_check_branch
          %217 = sbr.rel (%p215) target = $region16
        $region15: #{tpu_custom_call.1} parent=11 // pred_region
          %s219 = ssub.s32 896, 896
          %220 = vsyncadd [#allocation7], %s219
          %s221 = sshll.u32 [#allocation6], 4
          %s222 = int_to_ptr.vmem [resolvable:$true] %s221
          %227 = dma.hbm_to_vmem [thread:$0]  %s1, 896, %s222, [#allocation7], 128, 128, 8
        $region16: #{tpu_custom_call.1} parent=11 // pred_fallthru
          _
        // Predicated region
        $region17: #{tpu_custom_call.1} parent=11 // pred_check
          %p228 = pneg %p90
        $region18: #{tpu_custom_call.1} parent=11 // pred_check_branch
          %230 = sbr.rel (%p228) target = $region20
        $region19: #{tpu_custom_call.1} parent=11 // pred_region
          %s232 = ssub.s32 16, 16
          %233 = vsyncadd [#allocation7], %s232
          %s235 = sshll.u32 [#allocation8], 4
          %s236 = int_to_ptr.vmem [resolvable:$true] %s235
          %238 = dma.hbm_to_vmem [thread:$0]  %s2, 16, %s236, [#allocation7]
        $region20: #{tpu_custom_call.1} parent=11 // pred_fallthru
          _
        // Predicated region
        $region21: #{tpu_custom_call.1} parent=11 // pred_check
          %p239 = pneg %p111
        $region22: #{tpu_custom_call.1} parent=11 // pred_check_branch
          %241 = sbr.rel (%p239) target = $region24
        $region23: #{tpu_custom_call.1} parent=11 // pred_region
          %s243 = ssub.s32 1024, 1024
          %244 = vsyncadd [#allocation10], %s243
          %s245 = sshll.u32 [#allocation9], 4
          %s246 = int_to_ptr.vmem [resolvable:$true] %s245
          %251 = dma.hbm_to_vmem [thread:$0]  %s3, 1024, %s246, [#allocation10], 64, 64, 4
        $region24: #{tpu_custom_call.1} parent=11 // pred_fallthru
          _
        // Predicated region
        $region25: #{tpu_custom_call.1} parent=11 // pred_check
          %p252 = pneg %p132
        $region26: #{tpu_custom_call.1} parent=11 // pred_check_branch
          %254 = sbr.rel (%p252) target = $region28
        $region27: #{tpu_custom_call.1} parent=11 // pred_region
          %s256 = ssub.s32 16, 16
          %257 = vsyncadd [#allocation10], %s256
          %s259 = sshll.u32 [#allocation11], 4
          %s260 = int_to_ptr.vmem [resolvable:$true] %s259
          %262 = dma.hbm_to_vmem [thread:$0]  %s4, 16, %s260, [#allocation10]
        $region28: #{tpu_custom_call.1} parent=11 // pred_fallthru
          _
        // Predicated region
        $region29: #{tpu_custom_call.1} parent=11 // pred_check
          %p263 = pneg %p153
        $region30: #{tpu_custom_call.1} parent=11 // pred_check_branch
          %265 = sbr.rel (%p263) target = $region32
        $region31: #{tpu_custom_call.1} parent=11 // pred_region
          %s267 = ssub.s32 1024, 1024
          %268 = vsyncadd [#allocation13], %s267
          %s269 = sshll.u32 [#allocation12], 4
          %s270 = int_to_ptr.vmem [resolvable:$true] %s269
          %275 = dma.hbm_to_vmem [thread:$0]  %s5, 1024, %s270, [#allocation13], 64, 64, 4
        $region32: #{tpu_custom_call.1} parent=11 // pred_fallthru
          _
        // Predicated region
        $region33: #{tpu_custom_call.1} parent=11 // pred_check
          %p276 = pneg %p174
        $region34: #{tpu_custom_call.1} parent=11 // pred_check_branch
          %278 = sbr.rel (%p276) target = $region36
        $region35: #{tpu_custom_call.1} parent=11 // pred_region
          %s280 = ssub.s32 16, 16
          %281 = vsyncadd [#allocation13], %s280
          %s283 = sshll.u32 [#allocation14], 4
          %s284 = int_to_ptr.vmem [resolvable:$true] %s283
          %286 = dma.hbm_to_vmem [thread:$0]  %s6, 16, %s284, [#allocation13]
        $region36: #{tpu_custom_call.1} parent=11 // pred_fallthru
          _
      $region12: #{tpu_custom_call.1} parent=5 // pred_fallthru
        _
      %p287 = scmp.lt.s32.totalorder %s22, 2
      // Predicated region
      $region37: #{tpu_custom_call.1} parent=5 // pred_check
        %p288 = pneg %p287
      $region38: #{tpu_custom_call.1} parent=5 // pred_check_branch
        %290 = sbr.rel (%p288) target = $region40
      $region39: #{tpu_custom_call.1} parent=5 // pred_region
        // Predicated region
        $region41: #{tpu_custom_call.1} parent=39 // pred_check
          %p291 = pneg %p42
        $region42: #{tpu_custom_call.1} parent=39 // pred_check_branch
          %293 = sbr.rel (%p291) target = $region44
        $region43: #{tpu_custom_call.1} parent=39 // pred_region
          %s294 = sand.u32 %s32, 1
          %s295 = scalar_lea.sflag [#allocation4], %s294
          %s296 = sand.u32 %s32, 1
          %s297 = smul.addr %s296, 256
          %s298 = scalar_lea.vmem [#allocation3], %s297
          %s300 = ssub.s32 4096, 4096
          %301 = vsyncadd %s295, %s300
          %s302 = smul.addr %s22, 32
          %s303 = smul.addr %s302, 128
          %s304 = scalar_lea.hbm %s0, %s303
          %s305 = sshll.u32 %s298, 4
          %s306 = int_to_ptr.vmem [resolvable:$true] %s305
          %311 = dma.hbm_to_vmem [thread:$0]  %s304, 4096, %s306, %s295, 128, 128, 8
        $region44: #{tpu_custom_call.1} parent=39 // pred_fallthru
          _
      $region40: #{tpu_custom_call.1} parent=5 // pred_fallthru
        _
      %p312 = scmp.le.s32.totalorder 1, %s22
      %p313 = scmp.lt.s32.totalorder %s22, 3
      %p314 = pnand %p312, %p313
      %p315 = pneg %p314
      // Predicated region
      $region45: #{tpu_custom_call.1} parent=5 // pred_check
        _
      $region46: #{tpu_custom_call.1} parent=5 // pred_check_branch
        %317 = sbr.rel (%p314) target = $region48
      $region47: #{tpu_custom_call.1} parent=5 // pred_region
        %s318 = ssub.s32 %s22, 1
        %s319 = sand.u32 %s35, 1
        %s320 = scalar_lea.sflag [#allocation4], %s319
        %s321 = sand.u32 %s35, 1
        %s322 = smul.addr %s321, 256
        %s323 = scalar_lea.vmem [#allocation3], %s322
        // Predicated region
        $region49: #{tpu_custom_call.1} parent=47 // pred_check
          %p324 = pneg %p48
        $region50: #{tpu_custom_call.1} parent=47 // pred_check_branch
          %326 = sbr.rel (%p324) target = $region52
        $region51: #{tpu_custom_call.1} parent=47 // pred_region
          %327 = dma.done %s320, 4096
        $region52: #{tpu_custom_call.1} parent=47 // pred_fallthru
          _
        // Predicated region
        $region53: #{tpu_custom_call.1} parent=47 // pred_check
          %p328 = pneg %p69
        $region54: #{tpu_custom_call.1} parent=47 // pred_check_branch
          %330 = sbr.rel (%p328) target = $region56
        $region55: #{tpu_custom_call.1} parent=47 // pred_region
          %331 = dma.done [#allocation7], 896
        $region56: #{tpu_custom_call.1} parent=47 // pred_fallthru
          _
        // Predicated region
        $region57: #{tpu_custom_call.1} parent=47 // pred_check
          %p332 = pneg %p90
        $region58: #{tpu_custom_call.1} parent=47 // pred_check_branch
          %334 = sbr.rel (%p332) target = $region60
        $region59: #{tpu_custom_call.1} parent=47 // pred_region
          %335 = dma.done [#allocation7], 16
        $region60: #{tpu_custom_call.1} parent=47 // pred_fallthru
          _
        // Predicated region
        $region61: #{tpu_custom_call.1} parent=47 // pred_check
          %p336 = pneg %p111
        $region62: #{tpu_custom_call.1} parent=47 // pred_check_branch
          %338 = sbr.rel (%p336) target = $region64
        $region63: #{tpu_custom_call.1} parent=47 // pred_region
          %339 = dma.done [#allocation10], 1024
        $region64: #{tpu_custom_call.1} parent=47 // pred_fallthru
          _
        // Predicated region
        $region65: #{tpu_custom_call.1} parent=47 // pred_check
          %p340 = pneg %p132
        $region66: #{tpu_custom_call.1} parent=47 // pred_check_branch
          %342 = sbr.rel (%p340) target = $region68
        $region67: #{tpu_custom_call.1} parent=47 // pred_region
          %343 = dma.done [#allocation10], 16
        $region68: #{tpu_custom_call.1} parent=47 // pred_fallthru
          _
        // Predicated region
        $region69: #{tpu_custom_call.1} parent=47 // pred_check
          %p344 = pneg %p153
        $region70: #{tpu_custom_call.1} parent=47 // pred_check_branch
          %346 = sbr.rel (%p344) target = $region72
        $region71: #{tpu_custom_call.1} parent=47 // pred_region
          %347 = dma.done [#allocation13], 1024
        $region72: #{tpu_custom_call.1} parent=47 // pred_fallthru
          _
        // Predicated region
        $region73: #{tpu_custom_call.1} parent=47 // pred_check
          %p348 = pneg %p174
        $region74: #{tpu_custom_call.1} parent=47 // pred_check_branch
          %350 = sbr.rel (%p348) target = $region76
        $region75: #{tpu_custom_call.1} parent=47 // pred_region
          %351 = dma.done [#allocation13], 16
        $region76: #{tpu_custom_call.1} parent=47 // pred_fallthru
          _
        %s352 = sand.u32 %s35, 1
        %s353 = scalar_lea.sflag [#allocation4], %s352
        %s354 = sand.u32 %s35, 1
        %s355 = smul.addr %s354, 256
        %s356 = scalar_lea.vmem [#allocation3], %s355
        %p357 = pneg %p48
        %p358 = pneg %p45
        %p359 = pneg %p69
        %p360 = pneg %p66
        %p361 = pneg %p90
        %p362 = pneg %p87
        %p363 = pneg %p111
        %p364 = pneg %p108
        %p365 = pneg %p132
        %p366 = pneg %p129
        %p367 = pneg %p153
        %p368 = pneg %p150
        %p369 = pneg %p174
        %p370 = pneg %p171
        %p371 = pneg %p200
        %p372 = pneg %p197
        %s373 = sand.u32 %s187, 1
        %s374 = scalar_lea.sflag [#allocation5], %s373
        %s375 = sand.u32 %s187, 1
        %s376 = smul.addr %s375, 256
        %s377 = scalar_lea.vmem [#allocation15], %s376
        %379 = vst [vmem:[#allocation2] sm:$0xff] 0.0
        %380 = vst [vmem:[#allocation2 + $0x8] sm:$0xff] 0.0
        %381 = vst [vmem:[#allocation2 + $0x10] sm:$0x3f] 0.0
        %382 = vst [vmem:[#allocation2 + $0x18] sm:$0xff] 0.0
        %383 = vst [vmem:[#allocation2 + $0x20] sm:$0xff] 0.0
        %384 = vst [vmem:[#allocation2 + $0x28] sm:$0x3f] 0.0
        %385 = vst [vmem:[#allocation2 + $0x30] sm:$0xff] 0.0
        %386 = vst [vmem:[#allocation2 + $0x38] sm:$0xff] 0.0
        %387 = vst [vmem:[#allocation2 + $0x40] sm:$0x3f] 0.0
        %388 = vst [vmem:[#allocation2 + $0x48] sm:$0xff] 0.0
        %389 = vst [vmem:[#allocation2 + $0x50] sm:$0xff] 0.0
        %390 = vst [vmem:[#allocation2 + $0x58] sm:$0x3f] 0.0
        %391 = vst [vmem:[#allocation2 + $0x60] sm:$0xff] 0.0
        %392 = vst [vmem:[#allocation2 + $0x68] sm:$0xff] 0.0
        %393 = vst [vmem:[#allocation2 + $0x70] sm:$0x3f] 0.0
        %394 = vst [vmem:[#allocation2 + $0x78] sm:$0xff] 0.0
        %395 = vst [vmem:[#allocation2 + $0x80] sm:$0xff] 0.0
        %396 = vst [vmem:[#allocation2 + $0x88] sm:$0x3f] 0.0
        %397 = vst [vmem:[#allocation2 + $0x90] sm:$0xff] 0.0
        %398 = vst [vmem:[#allocation2 + $0x98] sm:$0xff] 0.0
        %399 = vst [vmem:[#allocation2 + $0xa0] sm:$0x3f] 0.0
        %400 = vst [vmem:[#allocation2 + $0xa8] sm:$0xff] 0.0
        %401 = vst [vmem:[#allocation2 + $0xb0] sm:$0xff] 0.0
        %402 = vst [vmem:[#allocation2 + $0xb8] sm:$0x3f] 0.0
        %403 = vst [vmem:[#allocation2 + $0xc0] sm:$0xff] 0.0
        %404 = vst [vmem:[#allocation2 + $0xc8] sm:$0xff] 0.0
        %405 = vst [vmem:[#allocation2 + $0xd0] sm:$0x3f] 0.0
        %406 = vst [vmem:[#allocation2 + $0xd8] sm:$0xff] 0.0
        %407 = vst [vmem:[#allocation2 + $0xe0] sm:$0xff] 0.0
        %408 = vst [vmem:[#allocation2 + $0xe8] sm:$0x3f] 0.0
        %409 = vst [vmem:[#allocation2 + $0xf0] sm:$0xff] 0.0
        %410 = vst [vmem:[#allocation2 + $0xf8] sm:$0xff] 0.0
        %411 = vst [vmem:[#allocation2 + $0x100] sm:$0x3f] 0.0
        %412 = vst [vmem:[#allocation2 + $0x108] sm:$0xff] 0.0
        %413 = vst [vmem:[#allocation2 + $0x110] sm:$0xff] 0.0
        %414 = vst [vmem:[#allocation2 + $0x118] sm:$0x3f] 0.0
        %415 = vst [vmem:[#allocation2 + $0x120] sm:$0xff] 0.0
        %416 = vst [vmem:[#allocation2 + $0x128] sm:$0xff] 0.0
        %417 = vst [vmem:[#allocation2 + $0x130] sm:$0x3f] 0.0
        %418 = vst [vmem:[#allocation2 + $0x138] sm:$0xff] 0.0
        %419 = vst [vmem:[#allocation2 + $0x140] sm:$0xff] 0.0
        %420 = vst [vmem:[#allocation2 + $0x148] sm:$0x3f] 0.0
        %421 = vst [vmem:[#allocation2 + $0x150] sm:$0xff] 0.0
        %422 = vst [vmem:[#allocation2 + $0x158] sm:$0xff] 0.0
        %423 = vst [vmem:[#allocation2 + $0x160] sm:$0x3f] 0.0
        %424 = vst [vmem:[#allocation2 + $0x168] sm:$0xff] 0.0
        %425 = vst [vmem:[#allocation2 + $0x170] sm:$0xff] 0.0
        %426 = vst [vmem:[#allocation2 + $0x178] sm:$0x3f] 0.0
        %427 = vst [vmem:[#allocation2 + $0x180] sm:$0xff] 0.0
        %428 = vst [vmem:[#allocation2 + $0x188] sm:$0xff] 0.0
        %429 = vst [vmem:[#allocation2 + $0x190] sm:$0x3f] 0.0
        %430 = vst [vmem:[#allocation2 + $0x198] sm:$0xff] 0.0
        %431 = vst [vmem:[#allocation2 + $0x1a0] sm:$0xff] 0.0
        %432 = vst [vmem:[#allocation2 + $0x1a8] sm:$0x3f] 0.0
        %433 = vst [vmem:[#allocation2 + $0x1b0] sm:$0xff] 0.0
        %434 = vst [vmem:[#allocation2 + $0x1b8] sm:$0xff] 0.0
        %435 = vst [vmem:[#allocation2 + $0x1c0] sm:$0x3f] 0.0
        %436 = vst [vmem:[#allocation2 + $0x1c8] sm:$0xff] 0.0
        %437 = vst [vmem:[#allocation2 + $0x1d0] sm:$0xff] 0.0
        %438 = vst [vmem:[#allocation2 + $0x1d8] sm:$0x3f] 0.0
        %439 = vst [vmem:[#allocation2 + $0x1e0] sm:$0xff] 0.0
        %440 = vst [vmem:[#allocation2 + $0x1e8] sm:$0xff] 0.0
        %441 = vst [vmem:[#allocation2 + $0x1f0] sm:$0x3f] 0.0
        %442 = vst [vmem:[#allocation2 + $0x1f8] sm:$0xff] 0.0
        %443 = vst [vmem:[#allocation2 + $0x200] sm:$0xff] 0.0
        %444 = vst [vmem:[#allocation2 + $0x208] sm:$0x3f] 0.0
        %v445 = vld [vmem:[%s323] sm:$0xff]
        %v446 = vld [vmem:[%s323 + $0x8] sm:$0xff]
        %v447 = vld [vmem:[%s323 + $0x10] sm:$0xff]
        %v448 = vld [vmem:[%s323 + $0x18] sm:$0xff]
        %v449 = vld [vmem:[%s323 + $0x20] sm:$0xff]
        %v450 = vld [vmem:[%s323 + $0x28] sm:$0xff]
        %v451 = vld [vmem:[%s323 + $0x30] sm:$0xff]
        %v452 = vld [vmem:[%s323 + $0x38] sm:$0xff]
        %v453 = vld [vmem:[%s323 + $0x40] sm:$0xff]
        %v454 = vld [vmem:[%s323 + $0x48] sm:$0xff]
        %v455 = vld [vmem:[%s323 + $0x50] sm:$0xff]
        %v456 = vld [vmem:[%s323 + $0x58] sm:$0xff]
        %v457 = vld [vmem:[%s323 + $0x60] sm:$0xff]
        %v458 = vld [vmem:[%s323 + $0x68] sm:$0xff]
        %v459 = vld [vmem:[%s323 + $0x70] sm:$0xff]
        %v460 = vld [vmem:[%s323 + $0x78] sm:$0xff]
        %v461 = vld [vmem:[%s323 + $0x80] sm:$0xff]
        %v462 = vld [vmem:[%s323 + $0x88] sm:$0xff]
        %v463 = vld [vmem:[%s323 + $0x90] sm:$0xff]
        %v464 = vld [vmem:[%s323 + $0x98] sm:$0xff]
        %v465 = vld [vmem:[%s323 + $0xa0] sm:$0xff]
        %v466 = vld [vmem:[%s323 + $0xa8] sm:$0xff]
        %v467 = vld [vmem:[%s323 + $0xb0] sm:$0xff]
        %v468 = vld [vmem:[%s323 + $0xb8] sm:$0xff]
        %v469 = vld [vmem:[%s323 + $0xc0] sm:$0xff]
        %v470 = vld [vmem:[%s323 + $0xc8] sm:$0xff]
        %v471 = vld [vmem:[%s323 + $0xd0] sm:$0xff]
        %v472 = vld [vmem:[%s323 + $0xd8] sm:$0xff]
        %v473 = vld [vmem:[%s323 + $0xe0] sm:$0xff]
        %v474 = vld [vmem:[%s323 + $0xe8] sm:$0xff]
        %v475 = vld [vmem:[%s323 + $0xf0] sm:$0xff]
        %v476 = vld [vmem:[%s323 + $0xf8] sm:$0xff]
        %s477 = scalar_lea.vmem [#allocation2], 72
        %478 = vst [vmem:[%s477 + $0x3] sm:$0xff] %v445
        %479 = vst [vmem:[%s477 + $0xb] sm:$0xff] %v446
        %480 = vst [vmem:[%s477 + $0x1b] sm:$0xff] %v447
        %481 = vst [vmem:[%s477 + $0x23] sm:$0xff] %v448
        %482 = vst [vmem:[%s477 + $0x33] sm:$0xff] %v449
        %483 = vst [vmem:[%s477 + $0x3b] sm:$0xff] %v450
        %484 = vst [vmem:[%s477 + $0x4b] sm:$0xff] %v451
        %485 = vst [vmem:[%s477 + $0x53] sm:$0xff] %v452
        %486 = vst [vmem:[%s477 + $0x63] sm:$0xff] %v453
        %487 = vst [vmem:[%s477 + $0x6b] sm:$0xff] %v454
        %488 = vst [vmem:[%s477 + $0x7b] sm:$0xff] %v455
        %489 = vst [vmem:[%s477 + $0x83] sm:$0xff] %v456
        %490 = vst [vmem:[%s477 + $0x93] sm:$0xff] %v457
        %491 = vst [vmem:[%s477 + $0x9b] sm:$0xff] %v458
        %492 = vst [vmem:[%s477 + $0xab] sm:$0xff] %v459
        %493 = vst [vmem:[%s477 + $0xb3] sm:$0xff] %v460
        %494 = vst [vmem:[%s477 + $0xc3] sm:$0xff] %v461
        %495 = vst [vmem:[%s477 + $0xcb] sm:$0xff] %v462
        %496 = vst [vmem:[%s477 + $0xdb] sm:$0xff] %v463
        %497 = vst [vmem:[%s477 + $0xe3] sm:$0xff] %v464
        %498 = vst [vmem:[%s477 + $0xf3] sm:$0xff] %v465
        %499 = vst [vmem:[%s477 + $0xfb] sm:$0xff] %v466
        %500 = vst [vmem:[%s477 + $0x10b] sm:$0xff] %v467
        %501 = vst [vmem:[%s477 + $0x113] sm:$0xff] %v468
        %502 = vst [vmem:[%s477 + $0x123] sm:$0xff] %v469
        %503 = vst [vmem:[%s477 + $0x12b] sm:$0xff] %v470
        %504 = vst [vmem:[%s477 + $0x13b] sm:$0xff] %v471
        %505 = vst [vmem:[%s477 + $0x143] sm:$0xff] %v472
        %506 = vst [vmem:[%s477 + $0x153] sm:$0xff] %v473
        %507 = vst [vmem:[%s477 + $0x15b] sm:$0xff] %v474
        %508 = vst [vmem:[%s477 + $0x16b] sm:$0xff] %v475
        %509 = vst [vmem:[%s477 + $0x173] sm:$0xff] %v476
        %v510 = vld [vmem:[#allocation6] sm:$0x7f]
        %v511 = vld [vmem:[#allocation6 + $0x8] sm:$0x7f]
        %v512 = vld [vmem:[#allocation6 + $0x10] sm:$0x7f]
        %v513 = vld [vmem:[#allocation6 + $0x18] sm:$0x7f]
        %v514 = vld [vmem:[#allocation6 + $0x20] sm:$0x7f]
        %v515 = vld [vmem:[#allocation6 + $0x28] sm:$0x7f]
        %v516 = vld [vmem:[#allocation6 + $0x30] sm:$0x7f]
        %v517 = vld [vmem:[#allocation8] sm:$0x1]
        %v518 = vld [vmem:[#allocation9] sm:$0xf]
        %v519 = vld [vmem:[#allocation9 + $0x4] sm:$0xf]
        %v520 = vld [vmem:[#allocation9 + $0x8] sm:$0xf]
        %v521 = vld [vmem:[#allocation9 + $0xc] sm:$0xf]
        %v522 = vld [vmem:[#allocation9 + $0x10] sm:$0xf]
        %v523 = vld [vmem:[#allocation9 + $0x14] sm:$0xf]
        %v524 = vld [vmem:[#allocation9 + $0x18] sm:$0xf]
        %v525 = vld [vmem:[#allocation9 + $0x1c] sm:$0xf]
        %v526 = vld [vmem:[#allocation9 + $0x20] sm:$0xf]
        %v527 = vld [vmem:[#allocation9 + $0x24] sm:$0xf]
        %v528 = vld [vmem:[#allocation9 + $0x28] sm:$0xf]
        %v529 = vld [vmem:[#allocation9 + $0x2c] sm:$0xf]
        %v530 = vld [vmem:[#allocation9 + $0x30] sm:$0xf]
        %v531 = vld [vmem:[#allocation9 + $0x34] sm:$0xf]
        %v532 = vld [vmem:[#allocation9 + $0x38] sm:$0xf]
        %v533 = vld [vmem:[#allocation9 + $0x3c] sm:$0xf]
        %v534 = vld [vmem:[#allocation11] sm:$0x1]
        %v535 = vld [vmem:[#allocation12] sm:$0xf]
        %v536 = vld [vmem:[#allocation12 + $0x4] sm:$0xf]
        %v537 = vld [vmem:[#allocation12 + $0x8] sm:$0xf]
        %v538 = vld [vmem:[#allocation12 + $0xc] sm:$0xf]
        %v539 = vld [vmem:[#allocation12 + $0x10] sm:$0xf]
        %v540 = vld [vmem:[#allocation12 + $0x14] sm:$0xf]
        %v541 = vld [vmem:[#allocation12 + $0x18] sm:$0xf]
        %v542 = vld [vmem:[#allocation12 + $0x1c] sm:$0xf]
        %v543 = vld [vmem:[#allocation12 + $0x20] sm:$0xf]
        %v544 = vld [vmem:[#allocation12 + $0x24] sm:$0xf]
        %v545 = vld [vmem:[#allocation12 + $0x28] sm:$0xf]
        %v546 = vld [vmem:[#allocation12 + $0x2c] sm:$0xf]
        %v547 = vld [vmem:[#allocation12 + $0x30] sm:$0xf]
        %v548 = vld [vmem:[#allocation12 + $0x34] sm:$0xf]
        %v549 = vld [vmem:[#allocation12 + $0x38] sm:$0xf]
        %v550 = vld [vmem:[#allocation12 + $0x3c] sm:$0xf]
        %v551 = vld [vmem:[#allocation14] sm:$0x1]
        %v552 = vld [vmem:[#allocation2] sm:$0xff]
        %v553 = vld [vmem:[#allocation2 + $0x8] sm:$0xff]
        %v554 = vld [vmem:[#allocation2 + $0x18] sm:$0xff]
        %v555 = vld [vmem:[#allocation2 + $0x20] sm:$0xff]
        %v556 = vld [vmem:[#allocation2 + $0x30] sm:$0xff]
        %v557 = vld [vmem:[#allocation2 + $0x38] sm:$0xff]
        %v558 = vld [vmem:[#allocation2 + $0x48] sm:$0xff]
        %v559 = vld [vmem:[#allocation2 + $0x50] sm:$0xff]
        %v560 = vld [vmem:[#allocation2 + $0x60] sm:$0xff]
        %v561 = vld [vmem:[#allocation2 + $0x68] sm:$0xff]
        %v562 = vld [vmem:[#allocation2 + $0x78] sm:$0xff]
        %v563 = vld [vmem:[#allocation2 + $0x80] sm:$0xff]
        %v564 = vld [vmem:[#allocation2 + $0x90] sm:$0xff]
        %v565 = vld [vmem:[#allocation2 + $0x98] sm:$0xff]
        %v566 = vld [vmem:[#allocation2 + $0xa8] sm:$0xff]
        %v567 = vld [vmem:[#allocation2 + $0xb0] sm:$0xff]
        %v568 = vld [vmem:[#allocation2 + $0xc0] sm:$0xff]
        %v569 = vld [vmem:[#allocation2 + $0xc8] sm:$0xff]
        %v570 = vld [vmem:[#allocation2 + $0xd8] sm:$0xff]
        %v571 = vld [vmem:[#allocation2 + $0xe0] sm:$0xff]
        %v572 = vld [vmem:[#allocation2 + $0xf0] sm:$0xff]
        %v573 = vld [vmem:[#allocation2 + $0xf8] sm:$0xff]
        %v574 = vld [vmem:[#allocation2 + $0x108] sm:$0xff]
        %v575 = vld [vmem:[#allocation2 + $0x110] sm:$0xff]
        %v576 = vld [vmem:[#allocation2 + $0x120] sm:$0xff]
        %v577 = vld [vmem:[#allocation2 + $0x128] sm:$0xff]
        %v578 = vld [vmem:[#allocation2 + $0x138] sm:$0xff]
        %v579 = vld [vmem:[#allocation2 + $0x140] sm:$0xff]
        %v580 = vld [vmem:[#allocation2 + $0x150] sm:$0xff]
        %v581 = vld [vmem:[#allocation2 + $0x158] sm:$0xff]
        %v582 = vld [vmem:[#allocation2 + $0x168] sm:$0xff]
        %v583 = vld [vmem:[#allocation2 + $0x170] sm:$0xff]
        %v584 = vlaneseq
        %v585 = vshrl.u32 %v584, 7
        %v586 = vsub.s32 0, %v585
        %v587 = vrot.slane %v510, %v586
        %v588 = vmul.f32 %v552, %v587
        %v589 = vmul.f32 %v553, %v587
        %v590 = vmul.f32 %v554, %v587
        %v591 = vmul.f32 %v555, %v587
        %v592 = vmul.f32 %v556, %v587
        %v593 = vmul.f32 %v557, %v587
        %v594 = vmul.f32 %v558, %v587
        %v595 = vmul.f32 %v559, %v587
        %v596 = vmul.f32 %v560, %v587
        %v597 = vmul.f32 %v561, %v587
        %v598 = vmul.f32 %v562, %v587
        %v599 = vmul.f32 %v563, %v587
        %v600 = vmul.f32 %v564, %v587
        %v601 = vmul.f32 %v565, %v587
        %v602 = vmul.f32 %v566, %v587
        %v603 = vmul.f32 %v567, %v587
        %v604 = vmul.f32 %v568, %v587
        %v605 = vmul.f32 %v569, %v587
        %v606 = vmul.f32 %v570, %v587
        %v607 = vmul.f32 %v571, %v587
        %v608 = vmul.f32 %v572, %v587
        %v609 = vmul.f32 %v573, %v587
        %v610 = vmul.f32 %v574, %v587
        %v611 = vmul.f32 %v575, %v587
        %v612 = vmul.f32 %v576, %v587
        %v613 = vmul.f32 %v577, %v587
        %v614 = vmul.f32 %v578, %v587
        %v615 = vmul.f32 %v579, %v587
        %v616 = vmul.f32 %v580, %v587
        %v617 = vmul.f32 %v581, %v587
        %v618 = vmul.f32 %v582, %v587
        %v619 = vmul.f32 %v583, %v587
        %v620 = vadd.f32 %v588, 0.0
        %v621 = vadd.f32 %v589, 0.0
        %v622 = vadd.f32 %v590, 0.0
        %v623 = vadd.f32 %v591, 0.0
        %v624 = vadd.f32 %v592, 0.0
        %v625 = vadd.f32 %v593, 0.0
        %v626 = vadd.f32 %v594, 0.0
        %v627 = vadd.f32 %v595, 0.0
        %v628 = vadd.f32 %v596, 0.0
        %v629 = vadd.f32 %v597, 0.0
        %v630 = vadd.f32 %v598, 0.0
        %v631 = vadd.f32 %v599, 0.0
        %v632 = vadd.f32 %v600, 0.0
        %v633 = vadd.f32 %v601, 0.0
        %v634 = vadd.f32 %v602, 0.0
        %v635 = vadd.f32 %v603, 0.0
        %v636 = vadd.f32 %v604, 0.0
        %v637 = vadd.f32 %v605, 0.0
        %v638 = vadd.f32 %v606, 0.0
        %v639 = vadd.f32 %v607, 0.0
        %v640 = vadd.f32 %v608, 0.0
        %v641 = vadd.f32 %v609, 0.0
        %v642 = vadd.f32 %v610, 0.0
        %v643 = vadd.f32 %v611, 0.0
        %v644 = vadd.f32 %v612, 0.0
        %v645 = vadd.f32 %v613, 0.0
        %v646 = vadd.f32 %v614, 0.0
        %v647 = vadd.f32 %v615, 0.0
        %v648 = vadd.f32 %v616, 0.0
        %v649 = vadd.f32 %v617, 0.0
        %v650 = vadd.f32 %v618, 0.0
        %v651 = vadd.f32 %v619, 0.0
        %v652 = vld [vmem:[#allocation2 + $0x1] sm:$0xff]
        %v653 = vld [vmem:[#allocation2 + $0x9] sm:$0xff]
        %v654 = vld [vmem:[#allocation2 + $0x19] sm:$0xff]
        %v655 = vld [vmem:[#allocation2 + $0x21] sm:$0xff]
        %v656 = vld [vmem:[#allocation2 + $0x31] sm:$0xff]
        %v657 = vld [vmem:[#allocation2 + $0x39] sm:$0xff]
        %v658 = vld [vmem:[#allocation2 + $0x49] sm:$0xff]
        %v659 = vld [vmem:[#allocation2 + $0x51] sm:$0xff]
        %v660 = vld [vmem:[#allocation2 + $0x61] sm:$0xff]
        %v661 = vld [vmem:[#allocation2 + $0x69] sm:$0xff]
        %v662 = vld [vmem:[#allocation2 + $0x79] sm:$0xff]
        %v663 = vld [vmem:[#allocation2 + $0x81] sm:$0xff]
        %v664 = vld [vmem:[#allocation2 + $0x91] sm:$0xff]
        %v665 = vld [vmem:[#allocation2 + $0x99] sm:$0xff]
        %v666 = vld [vmem:[#allocation2 + $0xa9] sm:$0xff]
        %v667 = vld [vmem:[#allocation2 + $0xb1] sm:$0xff]
        %v668 = vld [vmem:[#allocation2 + $0xc1] sm:$0xff]
        %v669 = vld [vmem:[#allocation2 + $0xc9] sm:$0xff]
        %v670 = vld [vmem:[#allocation2 + $0xd9] sm:$0xff]
        %v671 = vld [vmem:[#allocation2 + $0xe1] sm:$0xff]
        %v672 = vld [vmem:[#allocation2 + $0xf1] sm:$0xff]
        %v673 = vld [vmem:[#allocation2 + $0xf9] sm:$0xff]
        %v674 = vld [vmem:[#allocation2 + $0x109] sm:$0xff]
        %v675 = vld [vmem:[#allocation2 + $0x111] sm:$0xff]
        %v676 = vld [vmem:[#allocation2 + $0x121] sm:$0xff]
        %v677 = vld [vmem:[#allocation2 + $0x129] sm:$0xff]
        %v678 = vld [vmem:[#allocation2 + $0x139] sm:$0xff]
        %v679 = vld [vmem:[#allocation2 + $0x141] sm:$0xff]
        %v680 = vld [vmem:[#allocation2 + $0x151] sm:$0xff]
        %v681 = vld [vmem:[#allocation2 + $0x159] sm:$0xff]
        %v682 = vld [vmem:[#allocation2 + $0x169] sm:$0xff]
        %v683 = vld [vmem:[#allocation2 + $0x171] sm:$0xff]
        %v684 = vlaneseq
        %v685 = vshrl.u32 %v684, 7
        %v686 = vsub.s32 1, %v685
        %v687 = vrot.slane %v510, %v686
        %v688 = vmul.f32 %v652, %v687
        %v689 = vmul.f32 %v653, %v687
        %v690 = vmul.f32 %v654, %v687
        %v691 = vmul.f32 %v655, %v687
        %v692 = vmul.f32 %v656, %v687
        %v693 = vmul.f32 %v657, %v687
        %v694 = vmul.f32 %v658, %v687
        %v695 = vmul.f32 %v659, %v687
        %v696 = vmul.f32 %v660, %v687
        %v697 = vmul.f32 %v661, %v687
        %v698 = vmul.f32 %v662, %v687
        %v699 = vmul.f32 %v663, %v687
        %v700 = vmul.f32 %v664, %v687
        %v701 = vmul.f32 %v665, %v687
        %v702 = vmul.f32 %v666, %v687
        %v703 = vmul.f32 %v667, %v687
        %v704 = vmul.f32 %v668, %v687
        %v705 = vmul.f32 %v669, %v687
        %v706 = vmul.f32 %v670, %v687
        %v707 = vmul.f32 %v671, %v687
        %v708 = vmul.f32 %v672, %v687
        %v709 = vmul.f32 %v673, %v687
        %v710 = vmul.f32 %v674, %v687
        %v711 = vmul.f32 %v675, %v687
        %v712 = vmul.f32 %v676, %v687
        %v713 = vmul.f32 %v677, %v687
        %v714 = vmul.f32 %v678, %v687
        %v715 = vmul.f32 %v679, %v687
        %v716 = vmul.f32 %v680, %v687
        %v717 = vmul.f32 %v681, %v687
        %v718 = vmul.f32 %v682, %v687
        %v719 = vmul.f32 %v683, %v687
        %v720 = vadd.f32 %v620, %v688
        %v721 = vadd.f32 %v621, %v689
        %v722 = vadd.f32 %v622, %v690
        %v723 = vadd.f32 %v623, %v691
        %v724 = vadd.f32 %v624, %v692
        %v725 = vadd.f32 %v625, %v693
        %v726 = vadd.f32 %v626, %v694
        %v727 = vadd.f32 %v627, %v695
        %v728 = vadd.f32 %v628, %v696
        %v729 = vadd.f32 %v629, %v697
        %v730 = vadd.f32 %v630, %v698
        %v731 = vadd.f32 %v631, %v699
        %v732 = vadd.f32 %v632, %v700
        %v733 = vadd.f32 %v633, %v701
        %v734 = vadd.f32 %v634, %v702
        %v735 = vadd.f32 %v635, %v703
        %v736 = vadd.f32 %v636, %v704
        %v737 = vadd.f32 %v637, %v705
        %v738 = vadd.f32 %v638, %v706
        %v739 = vadd.f32 %v639, %v707
        %v740 = vadd.f32 %v640, %v708
        %v741 = vadd.f32 %v641, %v709
        %v742 = vadd.f32 %v642, %v710
        %v743 = vadd.f32 %v643, %v711
        %v744 = vadd.f32 %v644, %v712
        %v745 = vadd.f32 %v645, %v713
        %v746 = vadd.f32 %v646, %v714
        %v747 = vadd.f32 %v647, %v715
        %v748 = vadd.f32 %v648, %v716
        %v749 = vadd.f32 %v649, %v717
        %v750 = vadd.f32 %v650, %v718
        %v751 = vadd.f32 %v651, %v719
        %v752 = vld [vmem:[#allocation2 + $0x2] sm:$0xff]
        %v753 = vld [vmem:[#allocation2 + $0xa] sm:$0xff]
        %v754 = vld [vmem:[#allocation2 + $0x1a] sm:$0xff]
        %v755 = vld [vmem:[#allocation2 + $0x22] sm:$0xff]
        %v756 = vld [vmem:[#allocation2 + $0x32] sm:$0xff]
        %v757 = vld [vmem:[#allocation2 + $0x3a] sm:$0xff]
        %v758 = vld [vmem:[#allocation2 + $0x4a] sm:$0xff]
        %v759 = vld [vmem:[#allocation2 + $0x52] sm:$0xff]
        %v760 = vld [vmem:[#allocation2 + $0x62] sm:$0xff]
        %v761 = vld [vmem:[#allocation2 + $0x6a] sm:$0xff]
        %v762 = vld [vmem:[#allocation2 + $0x7a] sm:$0xff]
        %v763 = vld [vmem:[#allocation2 + $0x82] sm:$0xff]
        %v764 = vld [vmem:[#allocation2 + $0x92] sm:$0xff]
        %v765 = vld [vmem:[#allocation2 + $0x9a] sm:$0xff]
        %v766 = vld [vmem:[#allocation2 + $0xaa] sm:$0xff]
        %v767 = vld [vmem:[#allocation2 + $0xb2] sm:$0xff]
        %v768 = vld [vmem:[#allocation2 + $0xc2] sm:$0xff]
        %v769 = vld [vmem:[#allocation2 + $0xca] sm:$0xff]
        %v770 = vld [vmem:[#allocation2 + $0xda] sm:$0xff]
        %v771 = vld [vmem:[#allocation2 + $0xe2] sm:$0xff]
        %v772 = vld [vmem:[#allocation2 + $0xf2] sm:$0xff]
        %v773 = vld [vmem:[#allocation2 + $0xfa] sm:$0xff]
        %v774 = vld [vmem:[#allocation2 + $0x10a] sm:$0xff]
        %v775 = vld [vmem:[#allocation2 + $0x112] sm:$0xff]
        %v776 = vld [vmem:[#allocation2 + $0x122] sm:$0xff]
        %v777 = vld [vmem:[#allocation2 + $0x12a] sm:$0xff]
        %v778 = vld [vmem:[#allocation2 + $0x13a] sm:$0xff]
        %v779 = vld [vmem:[#allocation2 + $0x142] sm:$0xff]
        %v780 = vld [vmem:[#allocation2 + $0x152] sm:$0xff]
        %v781 = vld [vmem:[#allocation2 + $0x15a] sm:$0xff]
        %v782 = vld [vmem:[#allocation2 + $0x16a] sm:$0xff]
        %v783 = vld [vmem:[#allocation2 + $0x172] sm:$0xff]
        %v784 = vlaneseq
        %v785 = vshrl.u32 %v784, 7
        %v786 = vsub.s32 2, %v785
        %v787 = vrot.slane %v510, %v786
        %v788 = vmul.f32 %v752, %v787
        %v789 = vmul.f32 %v753, %v787
        %v790 = vmul.f32 %v754, %v787
        %v791 = vmul.f32 %v755, %v787
        %v792 = vmul.f32 %v756, %v787
        %v793 = vmul.f32 %v757, %v787
        %v794 = vmul.f32 %v758, %v787
        %v795 = vmul.f32 %v759, %v787
        %v796 = vmul.f32 %v760, %v787
        %v797 = vmul.f32 %v761, %v787
        %v798 = vmul.f32 %v762, %v787
        %v799 = vmul.f32 %v763, %v787
        %v800 = vmul.f32 %v764, %v787
        %v801 = vmul.f32 %v765, %v787
        %v802 = vmul.f32 %v766, %v787
        %v803 = vmul.f32 %v767, %v787
        %v804 = vmul.f32 %v768, %v787
        %v805 = vmul.f32 %v769, %v787
        %v806 = vmul.f32 %v770, %v787
        %v807 = vmul.f32 %v771, %v787
        %v808 = vmul.f32 %v772, %v787
        %v809 = vmul.f32 %v773, %v787
        %v810 = vmul.f32 %v774, %v787
        %v811 = vmul.f32 %v775, %v787
        %v812 = vmul.f32 %v776, %v787
        %v813 = vmul.f32 %v777, %v787
        %v814 = vmul.f32 %v778, %v787
        %v815 = vmul.f32 %v779, %v787
        %v816 = vmul.f32 %v780, %v787
        %v817 = vmul.f32 %v781, %v787
        %v818 = vmul.f32 %v782, %v787
        %v819 = vmul.f32 %v783, %v787
        %v820 = vadd.f32 %v720, %v788
        %v821 = vadd.f32 %v721, %v789
        %v822 = vadd.f32 %v722, %v790
        %v823 = vadd.f32 %v723, %v791
        %v824 = vadd.f32 %v724, %v792
        %v825 = vadd.f32 %v725, %v793
        %v826 = vadd.f32 %v726, %v794
        %v827 = vadd.f32 %v727, %v795
        %v828 = vadd.f32 %v728, %v796
        %v829 = vadd.f32 %v729, %v797
        %v830 = vadd.f32 %v730, %v798
        %v831 = vadd.f32 %v731, %v799
        %v832 = vadd.f32 %v732, %v800
        %v833 = vadd.f32 %v733, %v801
        %v834 = vadd.f32 %v734, %v802
        %v835 = vadd.f32 %v735, %v803
        %v836 = vadd.f32 %v736, %v804
        %v837 = vadd.f32 %v737, %v805
        %v838 = vadd.f32 %v738, %v806
        %v839 = vadd.f32 %v739, %v807
        %v840 = vadd.f32 %v740, %v808
        %v841 = vadd.f32 %v741, %v809
        %v842 = vadd.f32 %v742, %v810
        %v843 = vadd.f32 %v743, %v811
        %v844 = vadd.f32 %v744, %v812
        %v845 = vadd.f32 %v745, %v813
        %v846 = vadd.f32 %v746, %v814
        %v847 = vadd.f32 %v747, %v815
        %v848 = vadd.f32 %v748, %v816
        %v849 = vadd.f32 %v749, %v817
        %v850 = vadd.f32 %v750, %v818
        %v851 = vadd.f32 %v751, %v819
        %v852 = vld [vmem:[#allocation2 + $0x3] sm:$0xff]
        %v853 = vld [vmem:[#allocation2 + $0xb] sm:$0xff]
        %v854 = vld [vmem:[#allocation2 + $0x1b] sm:$0xff]
        %v855 = vld [vmem:[#allocation2 + $0x23] sm:$0xff]
        %v856 = vld [vmem:[#allocation2 + $0x33] sm:$0xff]
        %v857 = vld [vmem:[#allocation2 + $0x3b] sm:$0xff]
        %v858 = vld [vmem:[#allocation2 + $0x4b] sm:$0xff]
        %v859 = vld [vmem:[#allocation2 + $0x53] sm:$0xff]
        %v860 = vld [vmem:[#allocation2 + $0x63] sm:$0xff]
        %v861 = vld [vmem:[#allocation2 + $0x6b] sm:$0xff]
        %v862 = vld [vmem:[#allocation2 + $0x7b] sm:$0xff]
        %v863 = vld [vmem:[#allocation2 + $0x83] sm:$0xff]
        %v864 = vld [vmem:[#allocation2 + $0x93] sm:$0xff]
        %v865 = vld [vmem:[#allocation2 + $0x9b] sm:$0xff]
        %v866 = vld [vmem:[#allocation2 + $0xab] sm:$0xff]
        %v867 = vld [vmem:[#allocation2 + $0xb3] sm:$0xff]
        %v868 = vld [vmem:[#allocation2 + $0xc3] sm:$0xff]
        %v869 = vld [vmem:[#allocation2 + $0xcb] sm:$0xff]
        %v870 = vld [vmem:[#allocation2 + $0xdb] sm:$0xff]
        %v871 = vld [vmem:[#allocation2 + $0xe3] sm:$0xff]
        %v872 = vld [vmem:[#allocation2 + $0xf3] sm:$0xff]
        %v873 = vld [vmem:[#allocation2 + $0xfb] sm:$0xff]
        %v874 = vld [vmem:[#allocation2 + $0x10b] sm:$0xff]
        %v875 = vld [vmem:[#allocation2 + $0x113] sm:$0xff]
        %v876 = vld [vmem:[#allocation2 + $0x123] sm:$0xff]
        %v877 = vld [vmem:[#allocation2 + $0x12b] sm:$0xff]
        %v878 = vld [vmem:[#allocation2 + $0x13b] sm:$0xff]
        %v879 = vld [vmem:[#allocation2 + $0x143] sm:$0xff]
        %v880 = vld [vmem:[#allocation2 + $0x153] sm:$0xff]
        %v881 = vld [vmem:[#allocation2 + $0x15b] sm:$0xff]
        %v882 = vld [vmem:[#allocation2 + $0x16b] sm:$0xff]
        %v883 = vld [vmem:[#allocation2 + $0x173] sm:$0xff]
        %v884 = vlaneseq
        %v885 = vshrl.u32 %v884, 7
        %v886 = vsub.s32 3, %v885
        %v887 = vrot.slane %v510, %v886
        %v888 = vmul.f32 %v852, %v887
        %v889 = vmul.f32 %v853, %v887
        %v890 = vmul.f32 %v854, %v887
        %v891 = vmul.f32 %v855, %v887
        %v892 = vmul.f32 %v856, %v887
        %v893 = vmul.f32 %v857, %v887
        %v894 = vmul.f32 %v858, %v887
        %v895 = vmul.f32 %v859, %v887
        %v896 = vmul.f32 %v860, %v887
        %v897 = vmul.f32 %v861, %v887
        %v898 = vmul.f32 %v862, %v887
        %v899 = vmul.f32 %v863, %v887
        %v900 = vmul.f32 %v864, %v887
        %v901 = vmul.f32 %v865, %v887
        %v902 = vmul.f32 %v866, %v887
        %v903 = vmul.f32 %v867, %v887
        %v904 = vmul.f32 %v868, %v887
        %v905 = vmul.f32 %v869, %v887
        %v906 = vmul.f32 %v870, %v887
        %v907 = vmul.f32 %v871, %v887
        %v908 = vmul.f32 %v872, %v887
        %v909 = vmul.f32 %v873, %v887
        %v910 = vmul.f32 %v874, %v887
        %v911 = vmul.f32 %v875, %v887
        %v912 = vmul.f32 %v876, %v887
        %v913 = vmul.f32 %v877, %v887
        %v914 = vmul.f32 %v878, %v887
        %v915 = vmul.f32 %v879, %v887
        %v916 = vmul.f32 %v880, %v887
        %v917 = vmul.f32 %v881, %v887
        %v918 = vmul.f32 %v882, %v887
        %v919 = vmul.f32 %v883, %v887
        %v920 = vadd.f32 %v820, %v888
        %v921 = vadd.f32 %v821, %v889
        %v922 = vadd.f32 %v822, %v890
        %v923 = vadd.f32 %v823, %v891
        %v924 = vadd.f32 %v824, %v892
        %v925 = vadd.f32 %v825, %v893
        %v926 = vadd.f32 %v826, %v894
        %v927 = vadd.f32 %v827, %v895
        %v928 = vadd.f32 %v828, %v896
        %v929 = vadd.f32 %v829, %v897
        %v930 = vadd.f32 %v830, %v898
        %v931 = vadd.f32 %v831, %v899
        %v932 = vadd.f32 %v832, %v900
        %v933 = vadd.f32 %v833, %v901
        %v934 = vadd.f32 %v834, %v902
        %v935 = vadd.f32 %v835, %v903
        %v936 = vadd.f32 %v836, %v904
        %v937 = vadd.f32 %v837, %v905
        %v938 = vadd.f32 %v838, %v906
        %v939 = vadd.f32 %v839, %v907
        %v940 = vadd.f32 %v840, %v908
        %v941 = vadd.f32 %v841, %v909
        %v942 = vadd.f32 %v842, %v910
        %v943 = vadd.f32 %v843, %v911
        %v944 = vadd.f32 %v844, %v912
        %v945 = vadd.f32 %v845, %v913
        %v946 = vadd.f32 %v846, %v914
        %v947 = vadd.f32 %v847, %v915
        %v948 = vadd.f32 %v848, %v916
        %v949 = vadd.f32 %v849, %v917
        %v950 = vadd.f32 %v850, %v918
        %v951 = vadd.f32 %v851, %v919
        %v952 = vld [vmem:[#allocation2 + $0x4] sm:$0xff]
        %v953 = vld [vmem:[#allocation2 + $0xc] sm:$0xff]
        %v954 = vld [vmem:[#allocation2 + $0x1c] sm:$0xff]
        %v955 = vld [vmem:[#allocation2 + $0x24] sm:$0xff]
        %v956 = vld [vmem:[#allocation2 + $0x34] sm:$0xff]
        %v957 = vld [vmem:[#allocation2 + $0x3c] sm:$0xff]
        %v958 = vld [vmem:[#allocation2 + $0x4c] sm:$0xff]
        %v959 = vld [vmem:[#allocation2 + $0x54] sm:$0xff]
        %v960 = vld [vmem:[#allocation2 + $0x64] sm:$0xff]
        %v961 = vld [vmem:[#allocation2 + $0x6c] sm:$0xff]
        %v962 = vld [vmem:[#allocation2 + $0x7c] sm:$0xff]
        %v963 = vld [vmem:[#allocation2 + $0x84] sm:$0xff]
        %v964 = vld [vmem:[#allocation2 + $0x94] sm:$0xff]
        %v965 = vld [vmem:[#allocation2 + $0x9c] sm:$0xff]
        %v966 = vld [vmem:[#allocation2 + $0xac] sm:$0xff]
        %v967 = vld [vmem:[#allocation2 + $0xb4] sm:$0xff]
        %v968 = vld [vmem:[#allocation2 + $0xc4] sm:$0xff]
        %v969 = vld [vmem:[#allocation2 + $0xcc] sm:$0xff]
        %v970 = vld [vmem:[#allocation2 + $0xdc] sm:$0xff]
        %v971 = vld [vmem:[#allocation2 + $0xe4] sm:$0xff]
        %v972 = vld [vmem:[#allocation2 + $0xf4] sm:$0xff]
        %v973 = vld [vmem:[#allocation2 + $0xfc] sm:$0xff]
        %v974 = vld [vmem:[#allocation2 + $0x10c] sm:$0xff]
        %v975 = vld [vmem:[#allocation2 + $0x114] sm:$0xff]
        %v976 = vld [vmem:[#allocation2 + $0x124] sm:$0xff]
        %v977 = vld [vmem:[#allocation2 + $0x12c] sm:$0xff]
        %v978 = vld [vmem:[#allocation2 + $0x13c] sm:$0xff]
        %v979 = vld [vmem:[#allocation2 + $0x144] sm:$0xff]
        %v980 = vld [vmem:[#allocation2 + $0x154] sm:$0xff]
        %v981 = vld [vmem:[#allocation2 + $0x15c] sm:$0xff]
        %v982 = vld [vmem:[#allocation2 + $0x16c] sm:$0xff]
        %v983 = vld [vmem:[#allocation2 + $0x174] sm:$0xff]
        %v984 = vlaneseq
        %v985 = vshrl.u32 %v984, 7
        %v986 = vsub.s32 4, %v985
        %v987 = vrot.slane %v510, %v986
        %v988 = vmul.f32 %v952, %v987
        %v989 = vmul.f32 %v953, %v987
        %v990 = vmul.f32 %v954, %v987
        %v991 = vmul.f32 %v955, %v987
        %v992 = vmul.f32 %v956, %v987
        %v993 = vmul.f32 %v957, %v987
        %v994 = vmul.f32 %v958, %v987
        %v995 = vmul.f32 %v959, %v987
        %v996 = vmul.f32 %v960, %v987
        %v997 = vmul.f32 %v961, %v987
        %v998 = vmul.f32 %v962, %v987
        %v999 = vmul.f32 %v963, %v987
        %v1000 = vmul.f32 %v964, %v987
        %v1001 = vmul.f32 %v965, %v987
        %v1002 = vmul.f32 %v966, %v987
        %v1003 = vmul.f32 %v967, %v987
        %v1004 = vmul.f32 %v968, %v987
        %v1005 = vmul.f32 %v969, %v987
        %v1006 = vmul.f32 %v970, %v987
        %v1007 = vmul.f32 %v971, %v987
        %v1008 = vmul.f32 %v972, %v987
        %v1009 = vmul.f32 %v973, %v987
        %v1010 = vmul.f32 %v974, %v987
        %v1011 = vmul.f32 %v975, %v987
        %v1012 = vmul.f32 %v976, %v987
        %v1013 = vmul.f32 %v977, %v987
        %v1014 = vmul.f32 %v978, %v987
        %v1015 = vmul.f32 %v979, %v987
        %v1016 = vmul.f32 %v980, %v987
        %v1017 = vmul.f32 %v981, %v987
        %v1018 = vmul.f32 %v982, %v987
        %v1019 = vmul.f32 %v983, %v987
        %v1020 = vadd.f32 %v920, %v988
        %v1021 = vadd.f32 %v921, %v989
        %v1022 = vadd.f32 %v922, %v990
        %v1023 = vadd.f32 %v923, %v991
        %v1024 = vadd.f32 %v924, %v992
        %v1025 = vadd.f32 %v925, %v993
        %v1026 = vadd.f32 %v926, %v994
        %v1027 = vadd.f32 %v927, %v995
        %v1028 = vadd.f32 %v928, %v996
        %v1029 = vadd.f32 %v929, %v997
        %v1030 = vadd.f32 %v930, %v998
        %v1031 = vadd.f32 %v931, %v999
        %v1032 = vadd.f32 %v932, %v1000
        %v1033 = vadd.f32 %v933, %v1001
        %v1034 = vadd.f32 %v934, %v1002
        %v1035 = vadd.f32 %v935, %v1003
        %v1036 = vadd.f32 %v936, %v1004
        %v1037 = vadd.f32 %v937, %v1005
        %v1038 = vadd.f32 %v938, %v1006
        %v1039 = vadd.f32 %v939, %v1007
        %v1040 = vadd.f32 %v940, %v1008
        %v1041 = vadd.f32 %v941, %v1009
        %v1042 = vadd.f32 %v942, %v1010
        %v1043 = vadd.f32 %v943, %v1011
        %v1044 = vadd.f32 %v944, %v1012
        %v1045 = vadd.f32 %v945, %v1013
        %v1046 = vadd.f32 %v946, %v1014
        %v1047 = vadd.f32 %v947, %v1015
        %v1048 = vadd.f32 %v948, %v1016
        %v1049 = vadd.f32 %v949, %v1017
        %v1050 = vadd.f32 %v950, %v1018
        %v1051 = vadd.f32 %v951, %v1019
        %v1052 = vld [vmem:[#allocation2 + $0x5] sm:$0xff]
        %v1053 = vld [vmem:[#allocation2 + $0xd] sm:$0xff]
        %v1054 = vld [vmem:[#allocation2 + $0x1d] sm:$0xff]
        %v1055 = vld [vmem:[#allocation2 + $0x25] sm:$0xff]
        %v1056 = vld [vmem:[#allocation2 + $0x35] sm:$0xff]
        %v1057 = vld [vmem:[#allocation2 + $0x3d] sm:$0xff]
        %v1058 = vld [vmem:[#allocation2 + $0x4d] sm:$0xff]
        %v1059 = vld [vmem:[#allocation2 + $0x55] sm:$0xff]
        %v1060 = vld [vmem:[#allocation2 + $0x65] sm:$0xff]
        %v1061 = vld [vmem:[#allocation2 + $0x6d] sm:$0xff]
        %v1062 = vld [vmem:[#allocation2 + $0x7d] sm:$0xff]
        %v1063 = vld [vmem:[#allocation2 + $0x85] sm:$0xff]
        %v1064 = vld [vmem:[#allocation2 + $0x95] sm:$0xff]
        %v1065 = vld [vmem:[#allocation2 + $0x9d] sm:$0xff]
        %v1066 = vld [vmem:[#allocation2 + $0xad] sm:$0xff]
        %v1067 = vld [vmem:[#allocation2 + $0xb5] sm:$0xff]
        %v1068 = vld [vmem:[#allocation2 + $0xc5] sm:$0xff]
        %v1069 = vld [vmem:[#allocation2 + $0xcd] sm:$0xff]
        %v1070 = vld [vmem:[#allocation2 + $0xdd] sm:$0xff]
        %v1071 = vld [vmem:[#allocation2 + $0xe5] sm:$0xff]
        %v1072 = vld [vmem:[#allocation2 + $0xf5] sm:$0xff]
        %v1073 = vld [vmem:[#allocation2 + $0xfd] sm:$0xff]
        %v1074 = vld [vmem:[#allocation2 + $0x10d] sm:$0xff]
        %v1075 = vld [vmem:[#allocation2 + $0x115] sm:$0xff]
        %v1076 = vld [vmem:[#allocation2 + $0x125] sm:$0xff]
        %v1077 = vld [vmem:[#allocation2 + $0x12d] sm:$0xff]
        %v1078 = vld [vmem:[#allocation2 + $0x13d] sm:$0xff]
        %v1079 = vld [vmem:[#allocation2 + $0x145] sm:$0xff]
        %v1080 = vld [vmem:[#allocation2 + $0x155] sm:$0xff]
        %v1081 = vld [vmem:[#allocation2 + $0x15d] sm:$0xff]
        %v1082 = vld [vmem:[#allocation2 + $0x16d] sm:$0xff]
        %v1083 = vld [vmem:[#allocation2 + $0x175] sm:$0xff]
        %v1084 = vlaneseq
        %v1085 = vshrl.u32 %v1084, 7
        %v1086 = vsub.s32 5, %v1085
        %v1087 = vrot.slane %v510, %v1086
        %v1088 = vmul.f32 %v1052, %v1087
        %v1089 = vmul.f32 %v1053, %v1087
        %v1090 = vmul.f32 %v1054, %v1087
        %v1091 = vmul.f32 %v1055, %v1087
        %v1092 = vmul.f32 %v1056, %v1087
        %v1093 = vmul.f32 %v1057, %v1087
        %v1094 = vmul.f32 %v1058, %v1087
        %v1095 = vmul.f32 %v1059, %v1087
        %v1096 = vmul.f32 %v1060, %v1087
        %v1097 = vmul.f32 %v1061, %v1087
        %v1098 = vmul.f32 %v1062, %v1087
        %v1099 = vmul.f32 %v1063, %v1087
        %v1100 = vmul.f32 %v1064, %v1087
        %v1101 = vmul.f32 %v1065, %v1087
        %v1102 = vmul.f32 %v1066, %v1087
        %v1103 = vmul.f32 %v1067, %v1087
        %v1104 = vmul.f32 %v1068, %v1087
        %v1105 = vmul.f32 %v1069, %v1087
        %v1106 = vmul.f32 %v1070, %v1087
        %v1107 = vmul.f32 %v1071, %v1087
        %v1108 = vmul.f32 %v1072, %v1087
        %v1109 = vmul.f32 %v1073, %v1087
        %v1110 = vmul.f32 %v1074, %v1087
        %v1111 = vmul.f32 %v1075, %v1087
        %v1112 = vmul.f32 %v1076, %v1087
        %v1113 = vmul.f32 %v1077, %v1087
        %v1114 = vmul.f32 %v1078, %v1087
        %v1115 = vmul.f32 %v1079, %v1087
        %v1116 = vmul.f32 %v1080, %v1087
        %v1117 = vmul.f32 %v1081, %v1087
        %v1118 = vmul.f32 %v1082, %v1087
        %v1119 = vmul.f32 %v1083, %v1087
        %v1120 = vadd.f32 %v1020, %v1088
        %v1121 = vadd.f32 %v1021, %v1089
        %v1122 = vadd.f32 %v1022, %v1090
        %v1123 = vadd.f32 %v1023, %v1091
        %v1124 = vadd.f32 %v1024, %v1092
        %v1125 = vadd.f32 %v1025, %v1093
        %v1126 = vadd.f32 %v1026, %v1094
        %v1127 = vadd.f32 %v1027, %v1095
        %v1128 = vadd.f32 %v1028, %v1096
        %v1129 = vadd.f32 %v1029, %v1097
        %v1130 = vadd.f32 %v1030, %v1098
        %v1131 = vadd.f32 %v1031, %v1099
        %v1132 = vadd.f32 %v1032, %v1100
        %v1133 = vadd.f32 %v1033, %v1101
        %v1134 = vadd.f32 %v1034, %v1102
        %v1135 = vadd.f32 %v1035, %v1103
        %v1136 = vadd.f32 %v1036, %v1104
        %v1137 = vadd.f32 %v1037, %v1105
        %v1138 = vadd.f32 %v1038, %v1106
        %v1139 = vadd.f32 %v1039, %v1107
        %v1140 = vadd.f32 %v1040, %v1108
        %v1141 = vadd.f32 %v1041, %v1109
        %v1142 = vadd.f32 %v1042, %v1110
        %v1143 = vadd.f32 %v1043, %v1111
        %v1144 = vadd.f32 %v1044, %v1112
        %v1145 = vadd.f32 %v1045, %v1113
        %v1146 = vadd.f32 %v1046, %v1114
        %v1147 = vadd.f32 %v1047, %v1115
        %v1148 = vadd.f32 %v1048, %v1116
        %v1149 = vadd.f32 %v1049, %v1117
        %v1150 = vadd.f32 %v1050, %v1118
        %v1151 = vadd.f32 %v1051, %v1119
        %v1152 = vld [vmem:[#allocation2 + $0x6] sm:$0xff]
        %v1153 = vld [vmem:[#allocation2 + $0xe] sm:$0xff]
        %v1154 = vld [vmem:[#allocation2 + $0x1e] sm:$0xff]
        %v1155 = vld [vmem:[#allocation2 + $0x26] sm:$0xff]
        %v1156 = vld [vmem:[#allocation2 + $0x36] sm:$0xff]
        %v1157 = vld [vmem:[#allocation2 + $0x3e] sm:$0xff]
        %v1158 = vld [vmem:[#allocation2 + $0x4e] sm:$0xff]
        %v1159 = vld [vmem:[#allocation2 + $0x56] sm:$0xff]
        %v1160 = vld [vmem:[#allocation2 + $0x66] sm:$0xff]
        %v1161 = vld [vmem:[#allocation2 + $0x6e] sm:$0xff]
        %v1162 = vld [vmem:[#allocation2 + $0x7e] sm:$0xff]
        %v1163 = vld [vmem:[#allocation2 + $0x86] sm:$0xff]
        %v1164 = vld [vmem:[#allocation2 + $0x96] sm:$0xff]
        %v1165 = vld [vmem:[#allocation2 + $0x9e] sm:$0xff]
        %v1166 = vld [vmem:[#allocation2 + $0xae] sm:$0xff]
        %v1167 = vld [vmem:[#allocation2 + $0xb6] sm:$0xff]
        %v1168 = vld [vmem:[#allocation2 + $0xc6] sm:$0xff]
        %v1169 = vld [vmem:[#allocation2 + $0xce] sm:$0xff]
        %v1170 = vld [vmem:[#allocation2 + $0xde] sm:$0xff]
        %v1171 = vld [vmem:[#allocation2 + $0xe6] sm:$0xff]
        %v1172 = vld [vmem:[#allocation2 + $0xf6] sm:$0xff]
        %v1173 = vld [vmem:[#allocation2 + $0xfe] sm:$0xff]
        %v1174 = vld [vmem:[#allocation2 + $0x10e] sm:$0xff]
        %v1175 = vld [vmem:[#allocation2 + $0x116] sm:$0xff]
        %v1176 = vld [vmem:[#allocation2 + $0x126] sm:$0xff]
        %v1177 = vld [vmem:[#allocation2 + $0x12e] sm:$0xff]
        %v1178 = vld [vmem:[#allocation2 + $0x13e] sm:$0xff]
        %v1179 = vld [vmem:[#allocation2 + $0x146] sm:$0xff]
        %v1180 = vld [vmem:[#allocation2 + $0x156] sm:$0xff]
        %v1181 = vld [vmem:[#allocation2 + $0x15e] sm:$0xff]
        %v1182 = vld [vmem:[#allocation2 + $0x16e] sm:$0xff]
        %v1183 = vld [vmem:[#allocation2 + $0x176] sm:$0xff]
        %v1184 = vlaneseq
        %v1185 = vshrl.u32 %v1184, 7
        %v1186 = vsub.s32 6, %v1185
        %v1187 = vrot.slane %v510, %v1186
        %v1188 = vmul.f32 %v1152, %v1187
        %v1189 = vmul.f32 %v1153, %v1187
        %v1190 = vmul.f32 %v1154, %v1187
        %v1191 = vmul.f32 %v1155, %v1187
        %v1192 = vmul.f32 %v1156, %v1187
        %v1193 = vmul.f32 %v1157, %v1187
        %v1194 = vmul.f32 %v1158, %v1187
        %v1195 = vmul.f32 %v1159, %v1187
        %v1196 = vmul.f32 %v1160, %v1187
        %v1197 = vmul.f32 %v1161, %v1187
        %v1198 = vmul.f32 %v1162, %v1187
        %v1199 = vmul.f32 %v1163, %v1187
        %v1200 = vmul.f32 %v1164, %v1187
        %v1201 = vmul.f32 %v1165, %v1187
        %v1202 = vmul.f32 %v1166, %v1187
        %v1203 = vmul.f32 %v1167, %v1187
        %v1204 = vmul.f32 %v1168, %v1187
        %v1205 = vmul.f32 %v1169, %v1187
        %v1206 = vmul.f32 %v1170, %v1187
        %v1207 = vmul.f32 %v1171, %v1187
        %v1208 = vmul.f32 %v1172, %v1187
        %v1209 = vmul.f32 %v1173, %v1187
        %v1210 = vmul.f32 %v1174, %v1187
        %v1211 = vmul.f32 %v1175, %v1187
        %v1212 = vmul.f32 %v1176, %v1187
        %v1213 = vmul.f32 %v1177, %v1187
        %v1214 = vmul.f32 %v1178, %v1187
        %v1215 = vmul.f32 %v1179, %v1187
        %v1216 = vmul.f32 %v1180, %v1187
        %v1217 = vmul.f32 %v1181, %v1187
        %v1218 = vmul.f32 %v1182, %v1187
        %v1219 = vmul.f32 %v1183, %v1187
        %v1220 = vadd.f32 %v1120, %v1188
        %v1221 = vadd.f32 %v1121, %v1189
        %v1222 = vadd.f32 %v1122, %v1190
        %v1223 = vadd.f32 %v1123, %v1191
        %v1224 = vadd.f32 %v1124, %v1192
        %v1225 = vadd.f32 %v1125, %v1193
        %v1226 = vadd.f32 %v1126, %v1194
        %v1227 = vadd.f32 %v1127, %v1195
        %v1228 = vadd.f32 %v1128, %v1196
        %v1229 = vadd.f32 %v1129, %v1197
        %v1230 = vadd.f32 %v1130, %v1198
        %v1231 = vadd.f32 %v1131, %v1199
        %v1232 = vadd.f32 %v1132, %v1200
        %v1233 = vadd.f32 %v1133, %v1201
        %v1234 = vadd.f32 %v1134, %v1202
        %v1235 = vadd.f32 %v1135, %v1203
        %v1236 = vadd.f32 %v1136, %v1204
        %v1237 = vadd.f32 %v1137, %v1205
        %v1238 = vadd.f32 %v1138, %v1206
        %v1239 = vadd.f32 %v1139, %v1207
        %v1240 = vadd.f32 %v1140, %v1208
        %v1241 = vadd.f32 %v1141, %v1209
        %v1242 = vadd.f32 %v1142, %v1210
        %v1243 = vadd.f32 %v1143, %v1211
        %v1244 = vadd.f32 %v1144, %v1212
        %v1245 = vadd.f32 %v1145, %v1213
        %v1246 = vadd.f32 %v1146, %v1214
        %v1247 = vadd.f32 %v1147, %v1215
        %v1248 = vadd.f32 %v1148, %v1216
        %v1249 = vadd.f32 %v1149, %v1217
        %v1250 = vadd.f32 %v1150, %v1218
        %v1251 = vadd.f32 %v1151, %v1219
        %s1252 = scalar_lea.vmem [#allocation2], 24
        %v1253 = vld [vmem:[%s1252] sm:$0xff]
        %v1254 = vld [vmem:[%s1252 + $0x8] sm:$0xff]
        %v1255 = vld [vmem:[%s1252 + $0x18] sm:$0xff]
        %v1256 = vld [vmem:[%s1252 + $0x20] sm:$0xff]
        %v1257 = vld [vmem:[%s1252 + $0x30] sm:$0xff]
        %v1258 = vld [vmem:[%s1252 + $0x38] sm:$0xff]
        %v1259 = vld [vmem:[%s1252 + $0x48] sm:$0xff]
        %v1260 = vld [vmem:[%s1252 + $0x50] sm:$0xff]
        %v1261 = vld [vmem:[%s1252 + $0x60] sm:$0xff]
        %v1262 = vld [vmem:[%s1252 + $0x68] sm:$0xff]
        %v1263 = vld [vmem:[%s1252 + $0x78] sm:$0xff]
        %v1264 = vld [vmem:[%s1252 + $0x80] sm:$0xff]
        %v1265 = vld [vmem:[%s1252 + $0x90] sm:$0xff]
        %v1266 = vld [vmem:[%s1252 + $0x98] sm:$0xff]
        %v1267 = vld [vmem:[%s1252 + $0xa8] sm:$0xff]
        %v1268 = vld [vmem:[%s1252 + $0xb0] sm:$0xff]
        %v1269 = vld [vmem:[%s1252 + $0xc0] sm:$0xff]
        %v1270 = vld [vmem:[%s1252 + $0xc8] sm:$0xff]
        %v1271 = vld [vmem:[%s1252 + $0xd8] sm:$0xff]
        %v1272 = vld [vmem:[%s1252 + $0xe0] sm:$0xff]
        %v1273 = vld [vmem:[%s1252 + $0xf0] sm:$0xff]
        %v1274 = vld [vmem:[%s1252 + $0xf8] sm:$0xff]
        %v1275 = vld [vmem:[%s1252 + $0x108] sm:$0xff]
        %v1276 = vld [vmem:[%s1252 + $0x110] sm:$0xff]
        %v1277 = vld [vmem:[%s1252 + $0x120] sm:$0xff]
        %v1278 = vld [vmem:[%s1252 + $0x128] sm:$0xff]
        %v1279 = vld [vmem:[%s1252 + $0x138] sm:$0xff]
        %v1280 = vld [vmem:[%s1252 + $0x140] sm:$0xff]
        %v1281 = vld [vmem:[%s1252 + $0x150] sm:$0xff]
        %v1282 = vld [vmem:[%s1252 + $0x158] sm:$0xff]
        %v1283 = vld [vmem:[%s1252 + $0x168] sm:$0xff]
        %v1284 = vld [vmem:[%s1252 + $0x170] sm:$0xff]
        %v1285 = vlaneseq
        %v1286 = vshrl.u32 %v1285, 7
        %v1287 = vsub.s32 0, %v1286
        %v1288 = vrot.slane %v511, %v1287
        %v1289 = vmul.f32 %v1253, %v1288
        %v1290 = vmul.f32 %v1254, %v1288
        %v1291 = vmul.f32 %v1255, %v1288
        %v1292 = vmul.f32 %v1256, %v1288
        %v1293 = vmul.f32 %v1257, %v1288
        %v1294 = vmul.f32 %v1258, %v1288
        %v1295 = vmul.f32 %v1259, %v1288
        %v1296 = vmul.f32 %v1260, %v1288
        %v1297 = vmul.f32 %v1261, %v1288
        %v1298 = vmul.f32 %v1262, %v1288
        %v1299 = vmul.f32 %v1263, %v1288
        %v1300 = vmul.f32 %v1264, %v1288
        %v1301 = vmul.f32 %v1265, %v1288
        %v1302 = vmul.f32 %v1266, %v1288
        %v1303 = vmul.f32 %v1267, %v1288
        %v1304 = vmul.f32 %v1268, %v1288
        %v1305 = vmul.f32 %v1269, %v1288
        %v1306 = vmul.f32 %v1270, %v1288
        %v1307 = vmul.f32 %v1271, %v1288
        %v1308 = vmul.f32 %v1272, %v1288
        %v1309 = vmul.f32 %v1273, %v1288
        %v1310 = vmul.f32 %v1274, %v1288
        %v1311 = vmul.f32 %v1275, %v1288
        %v1312 = vmul.f32 %v1276, %v1288
        %v1313 = vmul.f32 %v1277, %v1288
        %v1314 = vmul.f32 %v1278, %v1288
        %v1315 = vmul.f32 %v1279, %v1288
        %v1316 = vmul.f32 %v1280, %v1288
        %v1317 = vmul.f32 %v1281, %v1288
        %v1318 = vmul.f32 %v1282, %v1288
        %v1319 = vmul.f32 %v1283, %v1288
        %v1320 = vmul.f32 %v1284, %v1288
        %v1321 = vadd.f32 %v1220, %v1289
        %v1322 = vadd.f32 %v1221, %v1290
        %v1323 = vadd.f32 %v1222, %v1291
        %v1324 = vadd.f32 %v1223, %v1292
        %v1325 = vadd.f32 %v1224, %v1293
        %v1326 = vadd.f32 %v1225, %v1294
        %v1327 = vadd.f32 %v1226, %v1295
        %v1328 = vadd.f32 %v1227, %v1296
        %v1329 = vadd.f32 %v1228, %v1297
        %v1330 = vadd.f32 %v1229, %v1298
        %v1331 = vadd.f32 %v1230, %v1299
        %v1332 = vadd.f32 %v1231, %v1300
        %v1333 = vadd.f32 %v1232, %v1301
        %v1334 = vadd.f32 %v1233, %v1302
        %v1335 = vadd.f32 %v1234, %v1303
        %v1336 = vadd.f32 %v1235, %v1304
        %v1337 = vadd.f32 %v1236, %v1305
        %v1338 = vadd.f32 %v1237, %v1306
        %v1339 = vadd.f32 %v1238, %v1307
        %v1340 = vadd.f32 %v1239, %v1308
        %v1341 = vadd.f32 %v1240, %v1309
        %v1342 = vadd.f32 %v1241, %v1310
        %v1343 = vadd.f32 %v1242, %v1311
        %v1344 = vadd.f32 %v1243, %v1312
        %v1345 = vadd.f32 %v1244, %v1313
        %v1346 = vadd.f32 %v1245, %v1314
        %v1347 = vadd.f32 %v1246, %v1315
        %v1348 = vadd.f32 %v1247, %v1316
        %v1349 = vadd.f32 %v1248, %v1317
        %v1350 = vadd.f32 %v1249, %v1318
        %v1351 = vadd.f32 %v1250, %v1319
        %v1352 = vadd.f32 %v1251, %v1320
        %v1353 = vld [vmem:[%s1252 + $0x1] sm:$0xff]
        %v1354 = vld [vmem:[%s1252 + $0x9] sm:$0xff]
        %v1355 = vld [vmem:[%s1252 + $0x19] sm:$0xff]
        %v1356 = vld [vmem:[%s1252 + $0x21] sm:$0xff]
        %v1357 = vld [vmem:[%s1252 + $0x31] sm:$0xff]
        %v1358 = vld [vmem:[%s1252 + $0x39] sm:$0xff]
        %v1359 = vld [vmem:[%s1252 + $0x49] sm:$0xff]
        %v1360 = vld [vmem:[%s1252 + $0x51] sm:$0xff]
        %v1361 = vld [vmem:[%s1252 + $0x61] sm:$0xff]
        %v1362 = vld [vmem:[%s1252 + $0x69] sm:$0xff]
        %v1363 = vld [vmem:[%s1252 + $0x79] sm:$0xff]
        %v1364 = vld [vmem:[%s1252 + $0x81] sm:$0xff]
        %v1365 = vld [vmem:[%s1252 + $0x91] sm:$0xff]
        %v1366 = vld [vmem:[%s1252 + $0x99] sm:$0xff]
        %v1367 = vld [vmem:[%s1252 + $0xa9] sm:$0xff]
        %v1368 = vld [vmem:[%s1252 + $0xb1] sm:$0xff]
        %v1369 = vld [vmem:[%s1252 + $0xc1] sm:$0xff]
        %v1370 = vld [vmem:[%s1252 + $0xc9] sm:$0xff]
        %v1371 = vld [vmem:[%s1252 + $0xd9] sm:$0xff]
        %v1372 = vld [vmem:[%s1252 + $0xe1] sm:$0xff]
        %v1373 = vld [vmem:[%s1252 + $0xf1] sm:$0xff]
        %v1374 = vld [vmem:[%s1252 + $0xf9] sm:$0xff]
        %v1375 = vld [vmem:[%s1252 + $0x109] sm:$0xff]
        %v1376 = vld [vmem:[%s1252 + $0x111] sm:$0xff]
        %v1377 = vld [vmem:[%s1252 + $0x121] sm:$0xff]
        %v1378 = vld [vmem:[%s1252 + $0x129] sm:$0xff]
        %v1379 = vld [vmem:[%s1252 + $0x139] sm:$0xff]
        %v1380 = vld [vmem:[%s1252 + $0x141] sm:$0xff]
        %v1381 = vld [vmem:[%s1252 + $0x151] sm:$0xff]
        %v1382 = vld [vmem:[%s1252 + $0x159] sm:$0xff]
        %v1383 = vld [vmem:[%s1252 + $0x169] sm:$0xff]
        %v1384 = vld [vmem:[%s1252 + $0x171] sm:$0xff]
        %v1385 = vlaneseq
        %v1386 = vshrl.u32 %v1385, 7
        %v1387 = vsub.s32 1, %v1386
        %v1388 = vrot.slane %v511, %v1387
        %v1389 = vmul.f32 %v1353, %v1388
        %v1390 = vmul.f32 %v1354, %v1388
        %v1391 = vmul.f32 %v1355, %v1388
        %v1392 = vmul.f32 %v1356, %v1388
        %v1393 = vmul.f32 %v1357, %v1388
        %v1394 = vmul.f32 %v1358, %v1388
        %v1395 = vmul.f32 %v1359, %v1388
        %v1396 = vmul.f32 %v1360, %v1388
        %v1397 = vmul.f32 %v1361, %v1388
        %v1398 = vmul.f32 %v1362, %v1388
        %v1399 = vmul.f32 %v1363, %v1388
        %v1400 = vmul.f32 %v1364, %v1388
        %v1401 = vmul.f32 %v1365, %v1388
        %v1402 = vmul.f32 %v1366, %v1388
        %v1403 = vmul.f32 %v1367, %v1388
        %v1404 = vmul.f32 %v1368, %v1388
        %v1405 = vmul.f32 %v1369, %v1388
        %v1406 = vmul.f32 %v1370, %v1388
        %v1407 = vmul.f32 %v1371, %v1388
        %v1408 = vmul.f32 %v1372, %v1388
        %v1409 = vmul.f32 %v1373, %v1388
        %v1410 = vmul.f32 %v1374, %v1388
        %v1411 = vmul.f32 %v1375, %v1388
        %v1412 = vmul.f32 %v1376, %v1388
        %v1413 = vmul.f32 %v1377, %v1388
        %v1414 = vmul.f32 %v1378, %v1388
        %v1415 = vmul.f32 %v1379, %v1388
        %v1416 = vmul.f32 %v1380, %v1388
        %v1417 = vmul.f32 %v1381, %v1388
        %v1418 = vmul.f32 %v1382, %v1388
        %v1419 = vmul.f32 %v1383, %v1388
        %v1420 = vmul.f32 %v1384, %v1388
        %v1421 = vadd.f32 %v1321, %v1389
        %v1422 = vadd.f32 %v1322, %v1390
        %v1423 = vadd.f32 %v1323, %v1391
        %v1424 = vadd.f32 %v1324, %v1392
        %v1425 = vadd.f32 %v1325, %v1393
        %v1426 = vadd.f32 %v1326, %v1394
        %v1427 = vadd.f32 %v1327, %v1395
        %v1428 = vadd.f32 %v1328, %v1396
        %v1429 = vadd.f32 %v1329, %v1397
        %v1430 = vadd.f32 %v1330, %v1398
        %v1431 = vadd.f32 %v1331, %v1399
        %v1432 = vadd.f32 %v1332, %v1400
        %v1433 = vadd.f32 %v1333, %v1401
        %v1434 = vadd.f32 %v1334, %v1402
        %v1435 = vadd.f32 %v1335, %v1403
        %v1436 = vadd.f32 %v1336, %v1404
        %v1437 = vadd.f32 %v1337, %v1405
        %v1438 = vadd.f32 %v1338, %v1406
        %v1439 = vadd.f32 %v1339, %v1407
        %v1440 = vadd.f32 %v1340, %v1408
        %v1441 = vadd.f32 %v1341, %v1409
        %v1442 = vadd.f32 %v1342, %v1410
        %v1443 = vadd.f32 %v1343, %v1411
        %v1444 = vadd.f32 %v1344, %v1412
        %v1445 = vadd.f32 %v1345, %v1413
        %v1446 = vadd.f32 %v1346, %v1414
        %v1447 = vadd.f32 %v1347, %v1415
        %v1448 = vadd.f32 %v1348, %v1416
        %v1449 = vadd.f32 %v1349, %v1417
        %v1450 = vadd.f32 %v1350, %v1418
        %v1451 = vadd.f32 %v1351, %v1419
        %v1452 = vadd.f32 %v1352, %v1420
        %v1453 = vld [vmem:[%s1252 + $0x2] sm:$0xff]
        %v1454 = vld [vmem:[%s1252 + $0xa] sm:$0xff]
        %v1455 = vld [vmem:[%s1252 + $0x1a] sm:$0xff]
        %v1456 = vld [vmem:[%s1252 + $0x22] sm:$0xff]
        %v1457 = vld [vmem:[%s1252 + $0x32] sm:$0xff]
        %v1458 = vld [vmem:[%s1252 + $0x3a] sm:$0xff]
        %v1459 = vld [vmem:[%s1252 + $0x4a] sm:$0xff]
        %v1460 = vld [vmem:[%s1252 + $0x52] sm:$0xff]
        %v1461 = vld [vmem:[%s1252 + $0x62] sm:$0xff]
        %v1462 = vld [vmem:[%s1252 + $0x6a] sm:$0xff]
        %v1463 = vld [vmem:[%s1252 + $0x7a] sm:$0xff]
        %v1464 = vld [vmem:[%s1252 + $0x82] sm:$0xff]
        %v1465 = vld [vmem:[%s1252 + $0x92] sm:$0xff]
        %v1466 = vld [vmem:[%s1252 + $0x9a] sm:$0xff]
        %v1467 = vld [vmem:[%s1252 + $0xaa] sm:$0xff]
        %v1468 = vld [vmem:[%s1252 + $0xb2] sm:$0xff]
        %v1469 = vld [vmem:[%s1252 + $0xc2] sm:$0xff]
        %v1470 = vld [vmem:[%s1252 + $0xca] sm:$0xff]
        %v1471 = vld [vmem:[%s1252 + $0xda] sm:$0xff]
        %v1472 = vld [vmem:[%s1252 + $0xe2] sm:$0xff]
        %v1473 = vld [vmem:[%s1252 + $0xf2] sm:$0xff]
        %v1474 = vld [vmem:[%s1252 + $0xfa] sm:$0xff]
        %v1475 = vld [vmem:[%s1252 + $0x10a] sm:$0xff]
        %v1476 = vld [vmem:[%s1252 + $0x112] sm:$0xff]
        %v1477 = vld [vmem:[%s1252 + $0x122] sm:$0xff]
        %v1478 = vld [vmem:[%s1252 + $0x12a] sm:$0xff]
        %v1479 = vld [vmem:[%s1252 + $0x13a] sm:$0xff]
        %v1480 = vld [vmem:[%s1252 + $0x142] sm:$0xff]
        %v1481 = vld [vmem:[%s1252 + $0x152] sm:$0xff]
        %v1482 = vld [vmem:[%s1252 + $0x15a] sm:$0xff]
        %v1483 = vld [vmem:[%s1252 + $0x16a] sm:$0xff]
        %v1484 = vld [vmem:[%s1252 + $0x172] sm:$0xff]
        %v1485 = vlaneseq
        %v1486 = vshrl.u32 %v1485, 7
        %v1487 = vsub.s32 2, %v1486
        %v1488 = vrot.slane %v511, %v1487
        %v1489 = vmul.f32 %v1453, %v1488
        %v1490 = vmul.f32 %v1454, %v1488
        %v1491 = vmul.f32 %v1455, %v1488
        %v1492 = vmul.f32 %v1456, %v1488
        %v1493 = vmul.f32 %v1457, %v1488
        %v1494 = vmul.f32 %v1458, %v1488
        %v1495 = vmul.f32 %v1459, %v1488
        %v1496 = vmul.f32 %v1460, %v1488
        %v1497 = vmul.f32 %v1461, %v1488
        %v1498 = vmul.f32 %v1462, %v1488
        %v1499 = vmul.f32 %v1463, %v1488
        %v1500 = vmul.f32 %v1464, %v1488
        %v1501 = vmul.f32 %v1465, %v1488
        %v1502 = vmul.f32 %v1466, %v1488
        %v1503 = vmul.f32 %v1467, %v1488
        %v1504 = vmul.f32 %v1468, %v1488
        %v1505 = vmul.f32 %v1469, %v1488
        %v1506 = vmul.f32 %v1470, %v1488
        %v1507 = vmul.f32 %v1471, %v1488
        %v1508 = vmul.f32 %v1472, %v1488
        %v1509 = vmul.f32 %v1473, %v1488
        %v1510 = vmul.f32 %v1474, %v1488
        %v1511 = vmul.f32 %v1475, %v1488
        %v1512 = vmul.f32 %v1476, %v1488
        %v1513 = vmul.f32 %v1477, %v1488
        %v1514 = vmul.f32 %v1478, %v1488
        %v1515 = vmul.f32 %v1479, %v1488
        %v1516 = vmul.f32 %v1480, %v1488
        %v1517 = vmul.f32 %v1481, %v1488
        %v1518 = vmul.f32 %v1482, %v1488
        %v1519 = vmul.f32 %v1483, %v1488
        %v1520 = vmul.f32 %v1484, %v1488
        %v1521 = vadd.f32 %v1421, %v1489
        %v1522 = vadd.f32 %v1422, %v1490
        %v1523 = vadd.f32 %v1423, %v1491
        %v1524 = vadd.f32 %v1424, %v1492
        %v1525 = vadd.f32 %v1425, %v1493
        %v1526 = vadd.f32 %v1426, %v1494
        %v1527 = vadd.f32 %v1427, %v1495
        %v1528 = vadd.f32 %v1428, %v1496
        %v1529 = vadd.f32 %v1429, %v1497
        %v1530 = vadd.f32 %v1430, %v1498
        %v1531 = vadd.f32 %v1431, %v1499
        %v1532 = vadd.f32 %v1432, %v1500
        %v1533 = vadd.f32 %v1433, %v1501
        %v1534 = vadd.f32 %v1434, %v1502
        %v1535 = vadd.f32 %v1435, %v1503
        %v1536 = vadd.f32 %v1436, %v1504
        %v1537 = vadd.f32 %v1437, %v1505
        %v1538 = vadd.f32 %v1438, %v1506
        %v1539 = vadd.f32 %v1439, %v1507
        %v1540 = vadd.f32 %v1440, %v1508
        %v1541 = vadd.f32 %v1441, %v1509
        %v1542 = vadd.f32 %v1442, %v1510
        %v1543 = vadd.f32 %v1443, %v1511
        %v1544 = vadd.f32 %v1444, %v1512
        %v1545 = vadd.f32 %v1445, %v1513
        %v1546 = vadd.f32 %v1446, %v1514
        %v1547 = vadd.f32 %v1447, %v1515
        %v1548 = vadd.f32 %v1448, %v1516
        %v1549 = vadd.f32 %v1449, %v1517
        %v1550 = vadd.f32 %v1450, %v1518
        %v1551 = vadd.f32 %v1451, %v1519
        %v1552 = vadd.f32 %v1452, %v1520
        %v1553 = vld [vmem:[%s1252 + $0x3] sm:$0xff]
        %v1554 = vld [vmem:[%s1252 + $0xb] sm:$0xff]
        %v1555 = vld [vmem:[%s1252 + $0x1b] sm:$0xff]
        %v1556 = vld [vmem:[%s1252 + $0x23] sm:$0xff]
        %v1557 = vld [vmem:[%s1252 + $0x33] sm:$0xff]
        %v1558 = vld [vmem:[%s1252 + $0x3b] sm:$0xff]
        %v1559 = vld [vmem:[%s1252 + $0x4b] sm:$0xff]
        %v1560 = vld [vmem:[%s1252 + $0x53] sm:$0xff]
        %v1561 = vld [vmem:[%s1252 + $0x63] sm:$0xff]
        %v1562 = vld [vmem:[%s1252 + $0x6b] sm:$0xff]
        %v1563 = vld [vmem:[%s1252 + $0x7b] sm:$0xff]
        %v1564 = vld [vmem:[%s1252 + $0x83] sm:$0xff]
        %v1565 = vld [vmem:[%s1252 + $0x93] sm:$0xff]
        %v1566 = vld [vmem:[%s1252 + $0x9b] sm:$0xff]
        %v1567 = vld [vmem:[%s1252 + $0xab] sm:$0xff]
        %v1568 = vld [vmem:[%s1252 + $0xb3] sm:$0xff]
        %v1569 = vld [vmem:[%s1252 + $0xc3] sm:$0xff]
        %v1570 = vld [vmem:[%s1252 + $0xcb] sm:$0xff]
        %v1571 = vld [vmem:[%s1252 + $0xdb] sm:$0xff]
        %v1572 = vld [vmem:[%s1252 + $0xe3] sm:$0xff]
        %v1573 = vld [vmem:[%s1252 + $0xf3] sm:$0xff]
        %v1574 = vld [vmem:[%s1252 + $0xfb] sm:$0xff]
        %v1575 = vld [vmem:[%s1252 + $0x10b] sm:$0xff]
        %v1576 = vld [vmem:[%s1252 + $0x113] sm:$0xff]
        %v1577 = vld [vmem:[%s1252 + $0x123] sm:$0xff]
        %v1578 = vld [vmem:[%s1252 + $0x12b] sm:$0xff]
        %v1579 = vld [vmem:[%s1252 + $0x13b] sm:$0xff]
        %v1580 = vld [vmem:[%s1252 + $0x143] sm:$0xff]
        %v1581 = vld [vmem:[%s1252 + $0x153] sm:$0xff]
        %v1582 = vld [vmem:[%s1252 + $0x15b] sm:$0xff]
        %v1583 = vld [vmem:[%s1252 + $0x16b] sm:$0xff]
        %v1584 = vld [vmem:[%s1252 + $0x173] sm:$0xff]
        %v1585 = vlaneseq
        %v1586 = vshrl.u32 %v1585, 7
        %v1587 = vsub.s32 3, %v1586
        %v1588 = vrot.slane %v511, %v1587
        %v1589 = vmul.f32 %v1553, %v1588
        %v1590 = vmul.f32 %v1554, %v1588
        %v1591 = vmul.f32 %v1555, %v1588
        %v1592 = vmul.f32 %v1556, %v1588
        %v1593 = vmul.f32 %v1557, %v1588
        %v1594 = vmul.f32 %v1558, %v1588
        %v1595 = vmul.f32 %v1559, %v1588
        %v1596 = vmul.f32 %v1560, %v1588
        %v1597 = vmul.f32 %v1561, %v1588
        %v1598 = vmul.f32 %v1562, %v1588
        %v1599 = vmul.f32 %v1563, %v1588
        %v1600 = vmul.f32 %v1564, %v1588
        %v1601 = vmul.f32 %v1565, %v1588
        %v1602 = vmul.f32 %v1566, %v1588
        %v1603 = vmul.f32 %v1567, %v1588
        %v1604 = vmul.f32 %v1568, %v1588
        %v1605 = vmul.f32 %v1569, %v1588
        %v1606 = vmul.f32 %v1570, %v1588
        %v1607 = vmul.f32 %v1571, %v1588
        %v1608 = vmul.f32 %v1572, %v1588
        %v1609 = vmul.f32 %v1573, %v1588
        %v1610 = vmul.f32 %v1574, %v1588
        %v1611 = vmul.f32 %v1575, %v1588
        %v1612 = vmul.f32 %v1576, %v1588
        %v1613 = vmul.f32 %v1577, %v1588
        %v1614 = vmul.f32 %v1578, %v1588
        %v1615 = vmul.f32 %v1579, %v1588
        %v1616 = vmul.f32 %v1580, %v1588
        %v1617 = vmul.f32 %v1581, %v1588
        %v1618 = vmul.f32 %v1582, %v1588
        %v1619 = vmul.f32 %v1583, %v1588
        %v1620 = vmul.f32 %v1584, %v1588
        %v1621 = vadd.f32 %v1521, %v1589
        %v1622 = vadd.f32 %v1522, %v1590
        %v1623 = vadd.f32 %v1523, %v1591
        %v1624 = vadd.f32 %v1524, %v1592
        %v1625 = vadd.f32 %v1525, %v1593
        %v1626 = vadd.f32 %v1526, %v1594
        %v1627 = vadd.f32 %v1527, %v1595
        %v1628 = vadd.f32 %v1528, %v1596
        %v1629 = vadd.f32 %v1529, %v1597
        %v1630 = vadd.f32 %v1530, %v1598
        %v1631 = vadd.f32 %v1531, %v1599
        %v1632 = vadd.f32 %v1532, %v1600
        %v1633 = vadd.f32 %v1533, %v1601
        %v1634 = vadd.f32 %v1534, %v1602
        %v1635 = vadd.f32 %v1535, %v1603
        %v1636 = vadd.f32 %v1536, %v1604
        %v1637 = vadd.f32 %v1537, %v1605
        %v1638 = vadd.f32 %v1538, %v1606
        %v1639 = vadd.f32 %v1539, %v1607
        %v1640 = vadd.f32 %v1540, %v1608
        %v1641 = vadd.f32 %v1541, %v1609
        %v1642 = vadd.f32 %v1542, %v1610
        %v1643 = vadd.f32 %v1543, %v1611
        %v1644 = vadd.f32 %v1544, %v1612
        %v1645 = vadd.f32 %v1545, %v1613
        %v1646 = vadd.f32 %v1546, %v1614
        %v1647 = vadd.f32 %v1547, %v1615
        %v1648 = vadd.f32 %v1548, %v1616
        %v1649 = vadd.f32 %v1549, %v1617
        %v1650 = vadd.f32 %v1550, %v1618
        %v1651 = vadd.f32 %v1551, %v1619
        %v1652 = vadd.f32 %v1552, %v1620
        %v1653 = vld [vmem:[%s1252 + $0x4] sm:$0xff]
        %v1654 = vld [vmem:[%s1252 + $0xc] sm:$0xff]
        %v1655 = vld [vmem:[%s1252 + $0x1c] sm:$0xff]
        %v1656 = vld [vmem:[%s1252 + $0x24] sm:$0xff]
        %v1657 = vld [vmem:[%s1252 + $0x34] sm:$0xff]
        %v1658 = vld [vmem:[%s1252 + $0x3c] sm:$0xff]
        %v1659 = vld [vmem:[%s1252 + $0x4c] sm:$0xff]
        %v1660 = vld [vmem:[%s1252 + $0x54] sm:$0xff]
        %v1661 = vld [vmem:[%s1252 + $0x64] sm:$0xff]
        %v1662 = vld [vmem:[%s1252 + $0x6c] sm:$0xff]
        %v1663 = vld [vmem:[%s1252 + $0x7c] sm:$0xff]
        %v1664 = vld [vmem:[%s1252 + $0x84] sm:$0xff]
        %v1665 = vld [vmem:[%s1252 + $0x94] sm:$0xff]
        %v1666 = vld [vmem:[%s1252 + $0x9c] sm:$0xff]
        %v1667 = vld [vmem:[%s1252 + $0xac] sm:$0xff]
        %v1668 = vld [vmem:[%s1252 + $0xb4] sm:$0xff]
        %v1669 = vld [vmem:[%s1252 + $0xc4] sm:$0xff]
        %v1670 = vld [vmem:[%s1252 + $0xcc] sm:$0xff]
        %v1671 = vld [vmem:[%s1252 + $0xdc] sm:$0xff]
        %v1672 = vld [vmem:[%s1252 + $0xe4] sm:$0xff]
        %v1673 = vld [vmem:[%s1252 + $0xf4] sm:$0xff]
        %v1674 = vld [vmem:[%s1252 + $0xfc] sm:$0xff]
        %v1675 = vld [vmem:[%s1252 + $0x10c] sm:$0xff]
        %v1676 = vld [vmem:[%s1252 + $0x114] sm:$0xff]
        %v1677 = vld [vmem:[%s1252 + $0x124] sm:$0xff]
        %v1678 = vld [vmem:[%s1252 + $0x12c] sm:$0xff]
        %v1679 = vld [vmem:[%s1252 + $0x13c] sm:$0xff]
        %v1680 = vld [vmem:[%s1252 + $0x144] sm:$0xff]
        %v1681 = vld [vmem:[%s1252 + $0x154] sm:$0xff]
        %v1682 = vld [vmem:[%s1252 + $0x15c] sm:$0xff]
        %v1683 = vld [vmem:[%s1252 + $0x16c] sm:$0xff]
        %v1684 = vld [vmem:[%s1252 + $0x174] sm:$0xff]
        %v1685 = vlaneseq
        %v1686 = vshrl.u32 %v1685, 7
        %v1687 = vsub.s32 4, %v1686
        %v1688 = vrot.slane %v511, %v1687
        %v1689 = vmul.f32 %v1653, %v1688
        %v1690 = vmul.f32 %v1654, %v1688
        %v1691 = vmul.f32 %v1655, %v1688
        %v1692 = vmul.f32 %v1656, %v1688
        %v1693 = vmul.f32 %v1657, %v1688
        %v1694 = vmul.f32 %v1658, %v1688
        %v1695 = vmul.f32 %v1659, %v1688
        %v1696 = vmul.f32 %v1660, %v1688
        %v1697 = vmul.f32 %v1661, %v1688
        %v1698 = vmul.f32 %v1662, %v1688
        %v1699 = vmul.f32 %v1663, %v1688
        %v1700 = vmul.f32 %v1664, %v1688
        %v1701 = vmul.f32 %v1665, %v1688
        %v1702 = vmul.f32 %v1666, %v1688
        %v1703 = vmul.f32 %v1667, %v1688
        %v1704 = vmul.f32 %v1668, %v1688
        %v1705 = vmul.f32 %v1669, %v1688
        %v1706 = vmul.f32 %v1670, %v1688
        %v1707 = vmul.f32 %v1671, %v1688
        %v1708 = vmul.f32 %v1672, %v1688
        %v1709 = vmul.f32 %v1673, %v1688
        %v1710 = vmul.f32 %v1674, %v1688
        %v1711 = vmul.f32 %v1675, %v1688
        %v1712 = vmul.f32 %v1676, %v1688
        %v1713 = vmul.f32 %v1677, %v1688
        %v1714 = vmul.f32 %v1678, %v1688
        %v1715 = vmul.f32 %v1679, %v1688
        %v1716 = vmul.f32 %v1680, %v1688
        %v1717 = vmul.f32 %v1681, %v1688
        %v1718 = vmul.f32 %v1682, %v1688
        %v1719 = vmul.f32 %v1683, %v1688
        %v1720 = vmul.f32 %v1684, %v1688
        %v1721 = vadd.f32 %v1621, %v1689
        %v1722 = vadd.f32 %v1622, %v1690
        %v1723 = vadd.f32 %v1623, %v1691
        %v1724 = vadd.f32 %v1624, %v1692
        %v1725 = vadd.f32 %v1625, %v1693
        %v1726 = vadd.f32 %v1626, %v1694
        %v1727 = vadd.f32 %v1627, %v1695
        %v1728 = vadd.f32 %v1628, %v1696
        %v1729 = vadd.f32 %v1629, %v1697
        %v1730 = vadd.f32 %v1630, %v1698
        %v1731 = vadd.f32 %v1631, %v1699
        %v1732 = vadd.f32 %v1632, %v1700
        %v1733 = vadd.f32 %v1633, %v1701
        %v1734 = vadd.f32 %v1634, %v1702
        %v1735 = vadd.f32 %v1635, %v1703
        %v1736 = vadd.f32 %v1636, %v1704
        %v1737 = vadd.f32 %v1637, %v1705
        %v1738 = vadd.f32 %v1638, %v1706
        %v1739 = vadd.f32 %v1639, %v1707
        %v1740 = vadd.f32 %v1640, %v1708
        %v1741 = vadd.f32 %v1641, %v1709
        %v1742 = vadd.f32 %v1642, %v1710
        %v1743 = vadd.f32 %v1643, %v1711
        %v1744 = vadd.f32 %v1644, %v1712
        %v1745 = vadd.f32 %v1645, %v1713
        %v1746 = vadd.f32 %v1646, %v1714
        %v1747 = vadd.f32 %v1647, %v1715
        %v1748 = vadd.f32 %v1648, %v1716
        %v1749 = vadd.f32 %v1649, %v1717
        %v1750 = vadd.f32 %v1650, %v1718
        %v1751 = vadd.f32 %v1651, %v1719
        %v1752 = vadd.f32 %v1652, %v1720
        %v1753 = vld [vmem:[%s1252 + $0x5] sm:$0xff]
        %v1754 = vld [vmem:[%s1252 + $0xd] sm:$0xff]
        %v1755 = vld [vmem:[%s1252 + $0x1d] sm:$0xff]
        %v1756 = vld [vmem:[%s1252 + $0x25] sm:$0xff]
        %v1757 = vld [vmem:[%s1252 + $0x35] sm:$0xff]
        %v1758 = vld [vmem:[%s1252 + $0x3d] sm:$0xff]
        %v1759 = vld [vmem:[%s1252 + $0x4d] sm:$0xff]
        %v1760 = vld [vmem:[%s1252 + $0x55] sm:$0xff]
        %v1761 = vld [vmem:[%s1252 + $0x65] sm:$0xff]
        %v1762 = vld [vmem:[%s1252 + $0x6d] sm:$0xff]
        %v1763 = vld [vmem:[%s1252 + $0x7d] sm:$0xff]
        %v1764 = vld [vmem:[%s1252 + $0x85] sm:$0xff]
        %v1765 = vld [vmem:[%s1252 + $0x95] sm:$0xff]
        %v1766 = vld [vmem:[%s1252 + $0x9d] sm:$0xff]
        %v1767 = vld [vmem:[%s1252 + $0xad] sm:$0xff]
        %v1768 = vld [vmem:[%s1252 + $0xb5] sm:$0xff]
        %v1769 = vld [vmem:[%s1252 + $0xc5] sm:$0xff]
        %v1770 = vld [vmem:[%s1252 + $0xcd] sm:$0xff]
        %v1771 = vld [vmem:[%s1252 + $0xdd] sm:$0xff]
        %v1772 = vld [vmem:[%s1252 + $0xe5] sm:$0xff]
        %v1773 = vld [vmem:[%s1252 + $0xf5] sm:$0xff]
        %v1774 = vld [vmem:[%s1252 + $0xfd] sm:$0xff]
        %v1775 = vld [vmem:[%s1252 + $0x10d] sm:$0xff]
        %v1776 = vld [vmem:[%s1252 + $0x115] sm:$0xff]
        %v1777 = vld [vmem:[%s1252 + $0x125] sm:$0xff]
        %v1778 = vld [vmem:[%s1252 + $0x12d] sm:$0xff]
        %v1779 = vld [vmem:[%s1252 + $0x13d] sm:$0xff]
        %v1780 = vld [vmem:[%s1252 + $0x145] sm:$0xff]
        %v1781 = vld [vmem:[%s1252 + $0x155] sm:$0xff]
        %v1782 = vld [vmem:[%s1252 + $0x15d] sm:$0xff]
        %v1783 = vld [vmem:[%s1252 + $0x16d] sm:$0xff]
        %v1784 = vld [vmem:[%s1252 + $0x175] sm:$0xff]
        %v1785 = vlaneseq
        %v1786 = vshrl.u32 %v1785, 7
        %v1787 = vsub.s32 5, %v1786
        %v1788 = vrot.slane %v511, %v1787
        %v1789 = vmul.f32 %v1753, %v1788
        %v1790 = vmul.f32 %v1754, %v1788
        %v1791 = vmul.f32 %v1755, %v1788
        %v1792 = vmul.f32 %v1756, %v1788
        %v1793 = vmul.f32 %v1757, %v1788
        %v1794 = vmul.f32 %v1758, %v1788
        %v1795 = vmul.f32 %v1759, %v1788
        %v1796 = vmul.f32 %v1760, %v1788
        %v1797 = vmul.f32 %v1761, %v1788
        %v1798 = vmul.f32 %v1762, %v1788
        %v1799 = vmul.f32 %v1763, %v1788
        %v1800 = vmul.f32 %v1764, %v1788
        %v1801 = vmul.f32 %v1765, %v1788
        %v1802 = vmul.f32 %v1766, %v1788
        %v1803 = vmul.f32 %v1767, %v1788
        %v1804 = vmul.f32 %v1768, %v1788
        %v1805 = vmul.f32 %v1769, %v1788
        %v1806 = vmul.f32 %v1770, %v1788
        %v1807 = vmul.f32 %v1771, %v1788
        %v1808 = vmul.f32 %v1772, %v1788
        %v1809 = vmul.f32 %v1773, %v1788
        %v1810 = vmul.f32 %v1774, %v1788
        %v1811 = vmul.f32 %v1775, %v1788
        %v1812 = vmul.f32 %v1776, %v1788
        %v1813 = vmul.f32 %v1777, %v1788
        %v1814 = vmul.f32 %v1778, %v1788
        %v1815 = vmul.f32 %v1779, %v1788
        %v1816 = vmul.f32 %v1780, %v1788
        %v1817 = vmul.f32 %v1781, %v1788
        %v1818 = vmul.f32 %v1782, %v1788
        %v1819 = vmul.f32 %v1783, %v1788
        %v1820 = vmul.f32 %v1784, %v1788
        %v1821 = vadd.f32 %v1721, %v1789
        %v1822 = vadd.f32 %v1722, %v1790
        %v1823 = vadd.f32 %v1723, %v1791
        %v1824 = vadd.f32 %v1724, %v1792
        %v1825 = vadd.f32 %v1725, %v1793
        %v1826 = vadd.f32 %v1726, %v1794
        %v1827 = vadd.f32 %v1727, %v1795
        %v1828 = vadd.f32 %v1728, %v1796
        %v1829 = vadd.f32 %v1729, %v1797
        %v1830 = vadd.f32 %v1730, %v1798
        %v1831 = vadd.f32 %v1731, %v1799
        %v1832 = vadd.f32 %v1732, %v1800
        %v1833 = vadd.f32 %v1733, %v1801
        %v1834 = vadd.f32 %v1734, %v1802
        %v1835 = vadd.f32 %v1735, %v1803
        %v1836 = vadd.f32 %v1736, %v1804
        %v1837 = vadd.f32 %v1737, %v1805
        %v1838 = vadd.f32 %v1738, %v1806
        %v1839 = vadd.f32 %v1739, %v1807
        %v1840 = vadd.f32 %v1740, %v1808
        %v1841 = vadd.f32 %v1741, %v1809
        %v1842 = vadd.f32 %v1742, %v1810
        %v1843 = vadd.f32 %v1743, %v1811
        %v1844 = vadd.f32 %v1744, %v1812
        %v1845 = vadd.f32 %v1745, %v1813
        %v1846 = vadd.f32 %v1746, %v1814
        %v1847 = vadd.f32 %v1747, %v1815
        %v1848 = vadd.f32 %v1748, %v1816
        %v1849 = vadd.f32 %v1749, %v1817
        %v1850 = vadd.f32 %v1750, %v1818
        %v1851 = vadd.f32 %v1751, %v1819
        %v1852 = vadd.f32 %v1752, %v1820
        %v1853 = vld [vmem:[%s1252 + $0x6] sm:$0xff]
        %v1854 = vld [vmem:[%s1252 + $0xe] sm:$0xff]
        %v1855 = vld [vmem:[%s1252 + $0x1e] sm:$0xff]
        %v1856 = vld [vmem:[%s1252 + $0x26] sm:$0xff]
        %v1857 = vld [vmem:[%s1252 + $0x36] sm:$0xff]
        %v1858 = vld [vmem:[%s1252 + $0x3e] sm:$0xff]
        %v1859 = vld [vmem:[%s1252 + $0x4e] sm:$0xff]
        %v1860 = vld [vmem:[%s1252 + $0x56] sm:$0xff]
        %v1861 = vld [vmem:[%s1252 + $0x66] sm:$0xff]
        %v1862 = vld [vmem:[%s1252 + $0x6e] sm:$0xff]
        %v1863 = vld [vmem:[%s1252 + $0x7e] sm:$0xff]
        %v1864 = vld [vmem:[%s1252 + $0x86] sm:$0xff]
        %v1865 = vld [vmem:[%s1252 + $0x96] sm:$0xff]
        %v1866 = vld [vmem:[%s1252 + $0x9e] sm:$0xff]
        %v1867 = vld [vmem:[%s1252 + $0xae] sm:$0xff]
        %v1868 = vld [vmem:[%s1252 + $0xb6] sm:$0xff]
        %v1869 = vld [vmem:[%s1252 + $0xc6] sm:$0xff]
        %v1870 = vld [vmem:[%s1252 + $0xce] sm:$0xff]
        %v1871 = vld [vmem:[%s1252 + $0xde] sm:$0xff]
        %v1872 = vld [vmem:[%s1252 + $0xe6] sm:$0xff]
        %v1873 = vld [vmem:[%s1252 + $0xf6] sm:$0xff]
        %v1874 = vld [vmem:[%s1252 + $0xfe] sm:$0xff]
        %v1875 = vld [vmem:[%s1252 + $0x10e] sm:$0xff]
        %v1876 = vld [vmem:[%s1252 + $0x116] sm:$0xff]
        %v1877 = vld [vmem:[%s1252 + $0x126] sm:$0xff]
        %v1878 = vld [vmem:[%s1252 + $0x12e] sm:$0xff]
        %v1879 = vld [vmem:[%s1252 + $0x13e] sm:$0xff]
        %v1880 = vld [vmem:[%s1252 + $0x146] sm:$0xff]
        %v1881 = vld [vmem:[%s1252 + $0x156] sm:$0xff]
        %v1882 = vld [vmem:[%s1252 + $0x15e] sm:$0xff]
        %v1883 = vld [vmem:[%s1252 + $0x16e] sm:$0xff]
        %v1884 = vld [vmem:[%s1252 + $0x176] sm:$0xff]
        %v1885 = vlaneseq
        %v1886 = vshrl.u32 %v1885, 7
        %v1887 = vsub.s32 6, %v1886
        %v1888 = vrot.slane %v511, %v1887
        %v1889 = vmul.f32 %v1853, %v1888
        %v1890 = vmul.f32 %v1854, %v1888
        %v1891 = vmul.f32 %v1855, %v1888
        %v1892 = vmul.f32 %v1856, %v1888
        %v1893 = vmul.f32 %v1857, %v1888
        %v1894 = vmul.f32 %v1858, %v1888
        %v1895 = vmul.f32 %v1859, %v1888
        %v1896 = vmul.f32 %v1860, %v1888
        %v1897 = vmul.f32 %v1861, %v1888
        %v1898 = vmul.f32 %v1862, %v1888
        %v1899 = vmul.f32 %v1863, %v1888
        %v1900 = vmul.f32 %v1864, %v1888
        %v1901 = vmul.f32 %v1865, %v1888
        %v1902 = vmul.f32 %v1866, %v1888
        %v1903 = vmul.f32 %v1867, %v1888
        %v1904 = vmul.f32 %v1868, %v1888
        %v1905 = vmul.f32 %v1869, %v1888
        %v1906 = vmul.f32 %v1870, %v1888
        %v1907 = vmul.f32 %v1871, %v1888
        %v1908 = vmul.f32 %v1872, %v1888
        %v1909 = vmul.f32 %v1873, %v1888
        %v1910 = vmul.f32 %v1874, %v1888
        %v1911 = vmul.f32 %v1875, %v1888
        %v1912 = vmul.f32 %v1876, %v1888
        %v1913 = vmul.f32 %v1877, %v1888
        %v1914 = vmul.f32 %v1878, %v1888
        %v1915 = vmul.f32 %v1879, %v1888
        %v1916 = vmul.f32 %v1880, %v1888
        %v1917 = vmul.f32 %v1881, %v1888
        %v1918 = vmul.f32 %v1882, %v1888
        %v1919 = vmul.f32 %v1883, %v1888
        %v1920 = vmul.f32 %v1884, %v1888
        %v1921 = vadd.f32 %v1821, %v1889
        %v1922 = vadd.f32 %v1822, %v1890
        %v1923 = vadd.f32 %v1823, %v1891
        %v1924 = vadd.f32 %v1824, %v1892
        %v1925 = vadd.f32 %v1825, %v1893
        %v1926 = vadd.f32 %v1826, %v1894
        %v1927 = vadd.f32 %v1827, %v1895
        %v1928 = vadd.f32 %v1828, %v1896
        %v1929 = vadd.f32 %v1829, %v1897
        %v1930 = vadd.f32 %v1830, %v1898
        %v1931 = vadd.f32 %v1831, %v1899
        %v1932 = vadd.f32 %v1832, %v1900
        %v1933 = vadd.f32 %v1833, %v1901
        %v1934 = vadd.f32 %v1834, %v1902
        %v1935 = vadd.f32 %v1835, %v1903
        %v1936 = vadd.f32 %v1836, %v1904
        %v1937 = vadd.f32 %v1837, %v1905
        %v1938 = vadd.f32 %v1838, %v1906
        %v1939 = vadd.f32 %v1839, %v1907
        %v1940 = vadd.f32 %v1840, %v1908
        %v1941 = vadd.f32 %v1841, %v1909
        %v1942 = vadd.f32 %v1842, %v1910
        %v1943 = vadd.f32 %v1843, %v1911
        %v1944 = vadd.f32 %v1844, %v1912
        %v1945 = vadd.f32 %v1845, %v1913
        %v1946 = vadd.f32 %v1846, %v1914
        %v1947 = vadd.f32 %v1847, %v1915
        %v1948 = vadd.f32 %v1848, %v1916
        %v1949 = vadd.f32 %v1849, %v1917
        %v1950 = vadd.f32 %v1850, %v1918
        %v1951 = vadd.f32 %v1851, %v1919
        %v1952 = vadd.f32 %v1852, %v1920
        %s1953 = scalar_lea.vmem [#allocation2], 48
        %v1954 = vld [vmem:[%s1953] sm:$0xff]
        %v1955 = vld [vmem:[%s1953 + $0x8] sm:$0xff]
        %v1956 = vld [vmem:[%s1953 + $0x18] sm:$0xff]
        %v1957 = vld [vmem:[%s1953 + $0x20] sm:$0xff]
        %v1958 = vld [vmem:[%s1953 + $0x30] sm:$0xff]
        %v1959 = vld [vmem:[%s1953 + $0x38] sm:$0xff]
        %v1960 = vld [vmem:[%s1953 + $0x48] sm:$0xff]
        %v1961 = vld [vmem:[%s1953 + $0x50] sm:$0xff]
        %v1962 = vld [vmem:[%s1953 + $0x60] sm:$0xff]
        %v1963 = vld [vmem:[%s1953 + $0x68] sm:$0xff]
        %v1964 = vld [vmem:[%s1953 + $0x78] sm:$0xff]
        %v1965 = vld [vmem:[%s1953 + $0x80] sm:$0xff]
        %v1966 = vld [vmem:[%s1953 + $0x90] sm:$0xff]
        %v1967 = vld [vmem:[%s1953 + $0x98] sm:$0xff]
        %v1968 = vld [vmem:[%s1953 + $0xa8] sm:$0xff]
        %v1969 = vld [vmem:[%s1953 + $0xb0] sm:$0xff]
        %v1970 = vld [vmem:[%s1953 + $0xc0] sm:$0xff]
        %v1971 = vld [vmem:[%s1953 + $0xc8] sm:$0xff]
        %v1972 = vld [vmem:[%s1953 + $0xd8] sm:$0xff]
        %v1973 = vld [vmem:[%s1953 + $0xe0] sm:$0xff]
        %v1974 = vld [vmem:[%s1953 + $0xf0] sm:$0xff]
        %v1975 = vld [vmem:[%s1953 + $0xf8] sm:$0xff]
        %v1976 = vld [vmem:[%s1953 + $0x108] sm:$0xff]
        %v1977 = vld [vmem:[%s1953 + $0x110] sm:$0xff]
        %v1978 = vld [vmem:[%s1953 + $0x120] sm:$0xff]
        %v1979 = vld [vmem:[%s1953 + $0x128] sm:$0xff]
        %v1980 = vld [vmem:[%s1953 + $0x138] sm:$0xff]
        %v1981 = vld [vmem:[%s1953 + $0x140] sm:$0xff]
        %v1982 = vld [vmem:[%s1953 + $0x150] sm:$0xff]
        %v1983 = vld [vmem:[%s1953 + $0x158] sm:$0xff]
        %v1984 = vld [vmem:[%s1953 + $0x168] sm:$0xff]
        %v1985 = vld [vmem:[%s1953 + $0x170] sm:$0xff]
        %v1986 = vlaneseq
        %v1987 = vshrl.u32 %v1986, 7
        %v1988 = vsub.s32 0, %v1987
        %v1989 = vrot.slane %v512, %v1988
        %v1990 = vmul.f32 %v1954, %v1989
        %v1991 = vmul.f32 %v1955, %v1989
        %v1992 = vmul.f32 %v1956, %v1989
        %v1993 = vmul.f32 %v1957, %v1989
        %v1994 = vmul.f32 %v1958, %v1989
        %v1995 = vmul.f32 %v1959, %v1989
        %v1996 = vmul.f32 %v1960, %v1989
        %v1997 = vmul.f32 %v1961, %v1989
        %v1998 = vmul.f32 %v1962, %v1989
        %v1999 = vmul.f32 %v1963, %v1989
        %v2000 = vmul.f32 %v1964, %v1989
        %v2001 = vmul.f32 %v1965, %v1989
        %v2002 = vmul.f32 %v1966, %v1989
        %v2003 = vmul.f32 %v1967, %v1989
        %v2004 = vmul.f32 %v1968, %v1989
        %v2005 = vmul.f32 %v1969, %v1989
        %v2006 = vmul.f32 %v1970, %v1989
        %v2007 = vmul.f32 %v1971, %v1989
        %v2008 = vmul.f32 %v1972, %v1989
        %v2009 = vmul.f32 %v1973, %v1989
        %v2010 = vmul.f32 %v1974, %v1989
        %v2011 = vmul.f32 %v1975, %v1989
        %v2012 = vmul.f32 %v1976, %v1989
        %v2013 = vmul.f32 %v1977, %v1989
        %v2014 = vmul.f32 %v1978, %v1989
        %v2015 = vmul.f32 %v1979, %v1989
        %v2016 = vmul.f32 %v1980, %v1989
        %v2017 = vmul.f32 %v1981, %v1989
        %v2018 = vmul.f32 %v1982, %v1989
        %v2019 = vmul.f32 %v1983, %v1989
        %v2020 = vmul.f32 %v1984, %v1989
        %v2021 = vmul.f32 %v1985, %v1989
        %v2022 = vadd.f32 %v1921, %v1990
        %v2023 = vadd.f32 %v1922, %v1991
        %v2024 = vadd.f32 %v1923, %v1992
        %v2025 = vadd.f32 %v1924, %v1993
        %v2026 = vadd.f32 %v1925, %v1994
        %v2027 = vadd.f32 %v1926, %v1995
        %v2028 = vadd.f32 %v1927, %v1996
        %v2029 = vadd.f32 %v1928, %v1997
        %v2030 = vadd.f32 %v1929, %v1998
        %v2031 = vadd.f32 %v1930, %v1999
        %v2032 = vadd.f32 %v1931, %v2000
        %v2033 = vadd.f32 %v1932, %v2001
        %v2034 = vadd.f32 %v1933, %v2002
        %v2035 = vadd.f32 %v1934, %v2003
        %v2036 = vadd.f32 %v1935, %v2004
        %v2037 = vadd.f32 %v1936, %v2005
        %v2038 = vadd.f32 %v1937, %v2006
        %v2039 = vadd.f32 %v1938, %v2007
        %v2040 = vadd.f32 %v1939, %v2008
        %v2041 = vadd.f32 %v1940, %v2009
        %v2042 = vadd.f32 %v1941, %v2010
        %v2043 = vadd.f32 %v1942, %v2011
        %v2044 = vadd.f32 %v1943, %v2012
        %v2045 = vadd.f32 %v1944, %v2013
        %v2046 = vadd.f32 %v1945, %v2014
        %v2047 = vadd.f32 %v1946, %v2015
        %v2048 = vadd.f32 %v1947, %v2016
        %v2049 = vadd.f32 %v1948, %v2017
        %v2050 = vadd.f32 %v1949, %v2018
        %v2051 = vadd.f32 %v1950, %v2019
        %v2052 = vadd.f32 %v1951, %v2020
        %v2053 = vadd.f32 %v1952, %v2021
        %v2054 = vld [vmem:[%s1953 + $0x1] sm:$0xff]
        %v2055 = vld [vmem:[%s1953 + $0x9] sm:$0xff]
        %v2056 = vld [vmem:[%s1953 + $0x19] sm:$0xff]
        %v2057 = vld [vmem:[%s1953 + $0x21] sm:$0xff]
        %v2058 = vld [vmem:[%s1953 + $0x31] sm:$0xff]
        %v2059 = vld [vmem:[%s1953 + $0x39] sm:$0xff]
        %v2060 = vld [vmem:[%s1953 + $0x49] sm:$0xff]
        %v2061 = vld [vmem:[%s1953 + $0x51] sm:$0xff]
        %v2062 = vld [vmem:[%s1953 + $0x61] sm:$0xff]
        %v2063 = vld [vmem:[%s1953 + $0x69] sm:$0xff]
        %v2064 = vld [vmem:[%s1953 + $0x79] sm:$0xff]
        %v2065 = vld [vmem:[%s1953 + $0x81] sm:$0xff]
        %v2066 = vld [vmem:[%s1953 + $0x91] sm:$0xff]
        %v2067 = vld [vmem:[%s1953 + $0x99] sm:$0xff]
        %v2068 = vld [vmem:[%s1953 + $0xa9] sm:$0xff]
        %v2069 = vld [vmem:[%s1953 + $0xb1] sm:$0xff]
        %v2070 = vld [vmem:[%s1953 + $0xc1] sm:$0xff]
        %v2071 = vld [vmem:[%s1953 + $0xc9] sm:$0xff]
        %v2072 = vld [vmem:[%s1953 + $0xd9] sm:$0xff]
        %v2073 = vld [vmem:[%s1953 + $0xe1] sm:$0xff]
        %v2074 = vld [vmem:[%s1953 + $0xf1] sm:$0xff]
        %v2075 = vld [vmem:[%s1953 + $0xf9] sm:$0xff]
        %v2076 = vld [vmem:[%s1953 + $0x109] sm:$0xff]
        %v2077 = vld [vmem:[%s1953 + $0x111] sm:$0xff]
        %v2078 = vld [vmem:[%s1953 + $0x121] sm:$0xff]
        %v2079 = vld [vmem:[%s1953 + $0x129] sm:$0xff]
        %v2080 = vld [vmem:[%s1953 + $0x139] sm:$0xff]
        %v2081 = vld [vmem:[%s1953 + $0x141] sm:$0xff]
        %v2082 = vld [vmem:[%s1953 + $0x151] sm:$0xff]
        %v2083 = vld [vmem:[%s1953 + $0x159] sm:$0xff]
        %v2084 = vld [vmem:[%s1953 + $0x169] sm:$0xff]
        %v2085 = vld [vmem:[%s1953 + $0x171] sm:$0xff]
        %v2086 = vlaneseq
        %v2087 = vshrl.u32 %v2086, 7
        %v2088 = vsub.s32 1, %v2087
        %v2089 = vrot.slane %v512, %v2088
        %v2090 = vmul.f32 %v2054, %v2089
        %v2091 = vmul.f32 %v2055, %v2089
        %v2092 = vmul.f32 %v2056, %v2089
        %v2093 = vmul.f32 %v2057, %v2089
        %v2094 = vmul.f32 %v2058, %v2089
        %v2095 = vmul.f32 %v2059, %v2089
        %v2096 = vmul.f32 %v2060, %v2089
        %v2097 = vmul.f32 %v2061, %v2089
        %v2098 = vmul.f32 %v2062, %v2089
        %v2099 = vmul.f32 %v2063, %v2089
        %v2100 = vmul.f32 %v2064, %v2089
        %v2101 = vmul.f32 %v2065, %v2089
        %v2102 = vmul.f32 %v2066, %v2089
        %v2103 = vmul.f32 %v2067, %v2089
        %v2104 = vmul.f32 %v2068, %v2089
        %v2105 = vmul.f32 %v2069, %v2089
        %v2106 = vmul.f32 %v2070, %v2089
        %v2107 = vmul.f32 %v2071, %v2089
        %v2108 = vmul.f32 %v2072, %v2089
        %v2109 = vmul.f32 %v2073, %v2089
        %v2110 = vmul.f32 %v2074, %v2089
        %v2111 = vmul.f32 %v2075, %v2089
        %v2112 = vmul.f32 %v2076, %v2089
        %v2113 = vmul.f32 %v2077, %v2089
        %v2114 = vmul.f32 %v2078, %v2089
        %v2115 = vmul.f32 %v2079, %v2089
        %v2116 = vmul.f32 %v2080, %v2089
        %v2117 = vmul.f32 %v2081, %v2089
        %v2118 = vmul.f32 %v2082, %v2089
        %v2119 = vmul.f32 %v2083, %v2089
        %v2120 = vmul.f32 %v2084, %v2089
        %v2121 = vmul.f32 %v2085, %v2089
        %v2122 = vadd.f32 %v2022, %v2090
        %v2123 = vadd.f32 %v2023, %v2091
        %v2124 = vadd.f32 %v2024, %v2092
        %v2125 = vadd.f32 %v2025, %v2093
        %v2126 = vadd.f32 %v2026, %v2094
        %v2127 = vadd.f32 %v2027, %v2095
        %v2128 = vadd.f32 %v2028, %v2096
        %v2129 = vadd.f32 %v2029, %v2097
        %v2130 = vadd.f32 %v2030, %v2098
        %v2131 = vadd.f32 %v2031, %v2099
        %v2132 = vadd.f32 %v2032, %v2100
        %v2133 = vadd.f32 %v2033, %v2101
        %v2134 = vadd.f32 %v2034, %v2102
        %v2135 = vadd.f32 %v2035, %v2103
        %v2136 = vadd.f32 %v2036, %v2104
        %v2137 = vadd.f32 %v2037, %v2105
        %v2138 = vadd.f32 %v2038, %v2106
        %v2139 = vadd.f32 %v2039, %v2107
        %v2140 = vadd.f32 %v2040, %v2108
        %v2141 = vadd.f32 %v2041, %v2109
        %v2142 = vadd.f32 %v2042, %v2110
        %v2143 = vadd.f32 %v2043, %v2111
        %v2144 = vadd.f32 %v2044, %v2112
        %v2145 = vadd.f32 %v2045, %v2113
        %v2146 = vadd.f32 %v2046, %v2114
        %v2147 = vadd.f32 %v2047, %v2115
        %v2148 = vadd.f32 %v2048, %v2116
        %v2149 = vadd.f32 %v2049, %v2117
        %v2150 = vadd.f32 %v2050, %v2118
        %v2151 = vadd.f32 %v2051, %v2119
        %v2152 = vadd.f32 %v2052, %v2120
        %v2153 = vadd.f32 %v2053, %v2121
        %v2154 = vld [vmem:[%s1953 + $0x2] sm:$0xff]
        %v2155 = vld [vmem:[%s1953 + $0xa] sm:$0xff]
        %v2156 = vld [vmem:[%s1953 + $0x1a] sm:$0xff]
        %v2157 = vld [vmem:[%s1953 + $0x22] sm:$0xff]
        %v2158 = vld [vmem:[%s1953 + $0x32] sm:$0xff]
        %v2159 = vld [vmem:[%s1953 + $0x3a] sm:$0xff]
        %v2160 = vld [vmem:[%s1953 + $0x4a] sm:$0xff]
        %v2161 = vld [vmem:[%s1953 + $0x52] sm:$0xff]
        %v2162 = vld [vmem:[%s1953 + $0x62] sm:$0xff]
        %v2163 = vld [vmem:[%s1953 + $0x6a] sm:$0xff]
        %v2164 = vld [vmem:[%s1953 + $0x7a] sm:$0xff]
        %v2165 = vld [vmem:[%s1953 + $0x82] sm:$0xff]
        %v2166 = vld [vmem:[%s1953 + $0x92] sm:$0xff]
        %v2167 = vld [vmem:[%s1953 + $0x9a] sm:$0xff]
        %v2168 = vld [vmem:[%s1953 + $0xaa] sm:$0xff]
        %v2169 = vld [vmem:[%s1953 + $0xb2] sm:$0xff]
        %v2170 = vld [vmem:[%s1953 + $0xc2] sm:$0xff]
        %v2171 = vld [vmem:[%s1953 + $0xca] sm:$0xff]
        %v2172 = vld [vmem:[%s1953 + $0xda] sm:$0xff]
        %v2173 = vld [vmem:[%s1953 + $0xe2] sm:$0xff]
        %v2174 = vld [vmem:[%s1953 + $0xf2] sm:$0xff]
        %v2175 = vld [vmem:[%s1953 + $0xfa] sm:$0xff]
        %v2176 = vld [vmem:[%s1953 + $0x10a] sm:$0xff]
        %v2177 = vld [vmem:[%s1953 + $0x112] sm:$0xff]
        %v2178 = vld [vmem:[%s1953 + $0x122] sm:$0xff]
        %v2179 = vld [vmem:[%s1953 + $0x12a] sm:$0xff]
        %v2180 = vld [vmem:[%s1953 + $0x13a] sm:$0xff]
        %v2181 = vld [vmem:[%s1953 + $0x142] sm:$0xff]
        %v2182 = vld [vmem:[%s1953 + $0x152] sm:$0xff]
        %v2183 = vld [vmem:[%s1953 + $0x15a] sm:$0xff]
        %v2184 = vld [vmem:[%s1953 + $0x16a] sm:$0xff]
        %v2185 = vld [vmem:[%s1953 + $0x172] sm:$0xff]
        %v2186 = vlaneseq
        %v2187 = vshrl.u32 %v2186, 7
        %v2188 = vsub.s32 2, %v2187
        %v2189 = vrot.slane %v512, %v2188
        %v2190 = vmul.f32 %v2154, %v2189
        %v2191 = vmul.f32 %v2155, %v2189
        %v2192 = vmul.f32 %v2156, %v2189
        %v2193 = vmul.f32 %v2157, %v2189
        %v2194 = vmul.f32 %v2158, %v2189
        %v2195 = vmul.f32 %v2159, %v2189
        %v2196 = vmul.f32 %v2160, %v2189
        %v2197 = vmul.f32 %v2161, %v2189
        %v2198 = vmul.f32 %v2162, %v2189
        %v2199 = vmul.f32 %v2163, %v2189
        %v2200 = vmul.f32 %v2164, %v2189
        %v2201 = vmul.f32 %v2165, %v2189
        %v2202 = vmul.f32 %v2166, %v2189
        %v2203 = vmul.f32 %v2167, %v2189
        %v2204 = vmul.f32 %v2168, %v2189
        %v2205 = vmul.f32 %v2169, %v2189
        %v2206 = vmul.f32 %v2170, %v2189
        %v2207 = vmul.f32 %v2171, %v2189
        %v2208 = vmul.f32 %v2172, %v2189
        %v2209 = vmul.f32 %v2173, %v2189
        %v2210 = vmul.f32 %v2174, %v2189
        %v2211 = vmul.f32 %v2175, %v2189
        %v2212 = vmul.f32 %v2176, %v2189
        %v2213 = vmul.f32 %v2177, %v2189
        %v2214 = vmul.f32 %v2178, %v2189
        %v2215 = vmul.f32 %v2179, %v2189
        %v2216 = vmul.f32 %v2180, %v2189
        %v2217 = vmul.f32 %v2181, %v2189
        %v2218 = vmul.f32 %v2182, %v2189
        %v2219 = vmul.f32 %v2183, %v2189
        %v2220 = vmul.f32 %v2184, %v2189
        %v2221 = vmul.f32 %v2185, %v2189
        %v2222 = vadd.f32 %v2122, %v2190
        %v2223 = vadd.f32 %v2123, %v2191
        %v2224 = vadd.f32 %v2124, %v2192
        %v2225 = vadd.f32 %v2125, %v2193
        %v2226 = vadd.f32 %v2126, %v2194
        %v2227 = vadd.f32 %v2127, %v2195
        %v2228 = vadd.f32 %v2128, %v2196
        %v2229 = vadd.f32 %v2129, %v2197
        %v2230 = vadd.f32 %v2130, %v2198
        %v2231 = vadd.f32 %v2131, %v2199
        %v2232 = vadd.f32 %v2132, %v2200
        %v2233 = vadd.f32 %v2133, %v2201
        %v2234 = vadd.f32 %v2134, %v2202
        %v2235 = vadd.f32 %v2135, %v2203
        %v2236 = vadd.f32 %v2136, %v2204
        %v2237 = vadd.f32 %v2137, %v2205
        %v2238 = vadd.f32 %v2138, %v2206
        %v2239 = vadd.f32 %v2139, %v2207
        %v2240 = vadd.f32 %v2140, %v2208
        %v2241 = vadd.f32 %v2141, %v2209
        %v2242 = vadd.f32 %v2142, %v2210
        %v2243 = vadd.f32 %v2143, %v2211
        %v2244 = vadd.f32 %v2144, %v2212
        %v2245 = vadd.f32 %v2145, %v2213
        %v2246 = vadd.f32 %v2146, %v2214
        %v2247 = vadd.f32 %v2147, %v2215
        %v2248 = vadd.f32 %v2148, %v2216
        %v2249 = vadd.f32 %v2149, %v2217
        %v2250 = vadd.f32 %v2150, %v2218
        %v2251 = vadd.f32 %v2151, %v2219
        %v2252 = vadd.f32 %v2152, %v2220
        %v2253 = vadd.f32 %v2153, %v2221
        %v2254 = vld [vmem:[%s1953 + $0x3] sm:$0xff]
        %v2255 = vld [vmem:[%s1953 + $0xb] sm:$0xff]
        %v2256 = vld [vmem:[%s1953 + $0x1b] sm:$0xff]
        %v2257 = vld [vmem:[%s1953 + $0x23] sm:$0xff]
        %v2258 = vld [vmem:[%s1953 + $0x33] sm:$0xff]
        %v2259 = vld [vmem:[%s1953 + $0x3b] sm:$0xff]
        %v2260 = vld [vmem:[%s1953 + $0x4b] sm:$0xff]
        %v2261 = vld [vmem:[%s1953 + $0x53] sm:$0xff]
        %v2262 = vld [vmem:[%s1953 + $0x63] sm:$0xff]
        %v2263 = vld [vmem:[%s1953 + $0x6b] sm:$0xff]
        %v2264 = vld [vmem:[%s1953 + $0x7b] sm:$0xff]
        %v2265 = vld [vmem:[%s1953 + $0x83] sm:$0xff]
        %v2266 = vld [vmem:[%s1953 + $0x93] sm:$0xff]
        %v2267 = vld [vmem:[%s1953 + $0x9b] sm:$0xff]
        %v2268 = vld [vmem:[%s1953 + $0xab] sm:$0xff]
        %v2269 = vld [vmem:[%s1953 + $0xb3] sm:$0xff]
        %v2270 = vld [vmem:[%s1953 + $0xc3] sm:$0xff]
        %v2271 = vld [vmem:[%s1953 + $0xcb] sm:$0xff]
        %v2272 = vld [vmem:[%s1953 + $0xdb] sm:$0xff]
        %v2273 = vld [vmem:[%s1953 + $0xe3] sm:$0xff]
        %v2274 = vld [vmem:[%s1953 + $0xf3] sm:$0xff]
        %v2275 = vld [vmem:[%s1953 + $0xfb] sm:$0xff]
        %v2276 = vld [vmem:[%s1953 + $0x10b] sm:$0xff]
        %v2277 = vld [vmem:[%s1953 + $0x113] sm:$0xff]
        %v2278 = vld [vmem:[%s1953 + $0x123] sm:$0xff]
        %v2279 = vld [vmem:[%s1953 + $0x12b] sm:$0xff]
        %v2280 = vld [vmem:[%s1953 + $0x13b] sm:$0xff]
        %v2281 = vld [vmem:[%s1953 + $0x143] sm:$0xff]
        %v2282 = vld [vmem:[%s1953 + $0x153] sm:$0xff]
        %v2283 = vld [vmem:[%s1953 + $0x15b] sm:$0xff]
        %v2284 = vld [vmem:[%s1953 + $0x16b] sm:$0xff]
        %v2285 = vld [vmem:[%s1953 + $0x173] sm:$0xff]
        %v2286 = vlaneseq
        %v2287 = vshrl.u32 %v2286, 7
        %v2288 = vsub.s32 3, %v2287
        %v2289 = vrot.slane %v512, %v2288
        %v2290 = vmul.f32 %v2254, %v2289
        %v2291 = vmul.f32 %v2255, %v2289
        %v2292 = vmul.f32 %v2256, %v2289
        %v2293 = vmul.f32 %v2257, %v2289
        %v2294 = vmul.f32 %v2258, %v2289
        %v2295 = vmul.f32 %v2259, %v2289
        %v2296 = vmul.f32 %v2260, %v2289
        %v2297 = vmul.f32 %v2261, %v2289
        %v2298 = vmul.f32 %v2262, %v2289
        %v2299 = vmul.f32 %v2263, %v2289
        %v2300 = vmul.f32 %v2264, %v2289
        %v2301 = vmul.f32 %v2265, %v2289
        %v2302 = vmul.f32 %v2266, %v2289
        %v2303 = vmul.f32 %v2267, %v2289
        %v2304 = vmul.f32 %v2268, %v2289
        %v2305 = vmul.f32 %v2269, %v2289
        %v2306 = vmul.f32 %v2270, %v2289
        %v2307 = vmul.f32 %v2271, %v2289
        %v2308 = vmul.f32 %v2272, %v2289
        %v2309 = vmul.f32 %v2273, %v2289
        %v2310 = vmul.f32 %v2274, %v2289
        %v2311 = vmul.f32 %v2275, %v2289
        %v2312 = vmul.f32 %v2276, %v2289
        %v2313 = vmul.f32 %v2277, %v2289
        %v2314 = vmul.f32 %v2278, %v2289
        %v2315 = vmul.f32 %v2279, %v2289
        %v2316 = vmul.f32 %v2280, %v2289
        %v2317 = vmul.f32 %v2281, %v2289
        %v2318 = vmul.f32 %v2282, %v2289
        %v2319 = vmul.f32 %v2283, %v2289
        %v2320 = vmul.f32 %v2284, %v2289
        %v2321 = vmul.f32 %v2285, %v2289
        %v2322 = vadd.f32 %v2222, %v2290
        %v2323 = vadd.f32 %v2223, %v2291
        %v2324 = vadd.f32 %v2224, %v2292
        %v2325 = vadd.f32 %v2225, %v2293
        %v2326 = vadd.f32 %v2226, %v2294
        %v2327 = vadd.f32 %v2227, %v2295
        %v2328 = vadd.f32 %v2228, %v2296
        %v2329 = vadd.f32 %v2229, %v2297
        %v2330 = vadd.f32 %v2230, %v2298
        %v2331 = vadd.f32 %v2231, %v2299
        %v2332 = vadd.f32 %v2232, %v2300
        %v2333 = vadd.f32 %v2233, %v2301
        %v2334 = vadd.f32 %v2234, %v2302
        %v2335 = vadd.f32 %v2235, %v2303
        %v2336 = vadd.f32 %v2236, %v2304
        %v2337 = vadd.f32 %v2237, %v2305
        %v2338 = vadd.f32 %v2238, %v2306
        %v2339 = vadd.f32 %v2239, %v2307
        %v2340 = vadd.f32 %v2240, %v2308
        %v2341 = vadd.f32 %v2241, %v2309
        %v2342 = vadd.f32 %v2242, %v2310
        %v2343 = vadd.f32 %v2243, %v2311
        %v2344 = vadd.f32 %v2244, %v2312
        %v2345 = vadd.f32 %v2245, %v2313
        %v2346 = vadd.f32 %v2246, %v2314
        %v2347 = vadd.f32 %v2247, %v2315
        %v2348 = vadd.f32 %v2248, %v2316
        %v2349 = vadd.f32 %v2249, %v2317
        %v2350 = vadd.f32 %v2250, %v2318
        %v2351 = vadd.f32 %v2251, %v2319
        %v2352 = vadd.f32 %v2252, %v2320
        %v2353 = vadd.f32 %v2253, %v2321
        %v2354 = vld [vmem:[%s1953 + $0x4] sm:$0xff]
        %v2355 = vld [vmem:[%s1953 + $0xc] sm:$0xff]
        %v2356 = vld [vmem:[%s1953 + $0x1c] sm:$0xff]
        %v2357 = vld [vmem:[%s1953 + $0x24] sm:$0xff]
        %v2358 = vld [vmem:[%s1953 + $0x34] sm:$0xff]
        %v2359 = vld [vmem:[%s1953 + $0x3c] sm:$0xff]
        %v2360 = vld [vmem:[%s1953 + $0x4c] sm:$0xff]
        %v2361 = vld [vmem:[%s1953 + $0x54] sm:$0xff]
        %v2362 = vld [vmem:[%s1953 + $0x64] sm:$0xff]
        %v2363 = vld [vmem:[%s1953 + $0x6c] sm:$0xff]
        %v2364 = vld [vmem:[%s1953 + $0x7c] sm:$0xff]
        %v2365 = vld [vmem:[%s1953 + $0x84] sm:$0xff]
        %v2366 = vld [vmem:[%s1953 + $0x94] sm:$0xff]
        %v2367 = vld [vmem:[%s1953 + $0x9c] sm:$0xff]
        %v2368 = vld [vmem:[%s1953 + $0xac] sm:$0xff]
        %v2369 = vld [vmem:[%s1953 + $0xb4] sm:$0xff]
        %v2370 = vld [vmem:[%s1953 + $0xc4] sm:$0xff]
        %v2371 = vld [vmem:[%s1953 + $0xcc] sm:$0xff]
        %v2372 = vld [vmem:[%s1953 + $0xdc] sm:$0xff]
        %v2373 = vld [vmem:[%s1953 + $0xe4] sm:$0xff]
        %v2374 = vld [vmem:[%s1953 + $0xf4] sm:$0xff]
        %v2375 = vld [vmem:[%s1953 + $0xfc] sm:$0xff]
        %v2376 = vld [vmem:[%s1953 + $0x10c] sm:$0xff]
        %v2377 = vld [vmem:[%s1953 + $0x114] sm:$0xff]
        %v2378 = vld [vmem:[%s1953 + $0x124] sm:$0xff]
        %v2379 = vld [vmem:[%s1953 + $0x12c] sm:$0xff]
        %v2380 = vld [vmem:[%s1953 + $0x13c] sm:$0xff]
        %v2381 = vld [vmem:[%s1953 + $0x144] sm:$0xff]
        %v2382 = vld [vmem:[%s1953 + $0x154] sm:$0xff]
        %v2383 = vld [vmem:[%s1953 + $0x15c] sm:$0xff]
        %v2384 = vld [vmem:[%s1953 + $0x16c] sm:$0xff]
        %v2385 = vld [vmem:[%s1953 + $0x174] sm:$0xff]
        %v2386 = vlaneseq
        %v2387 = vshrl.u32 %v2386, 7
        %v2388 = vsub.s32 4, %v2387
        %v2389 = vrot.slane %v512, %v2388
        %v2390 = vmul.f32 %v2354, %v2389
        %v2391 = vmul.f32 %v2355, %v2389
        %v2392 = vmul.f32 %v2356, %v2389
        %v2393 = vmul.f32 %v2357, %v2389
        %v2394 = vmul.f32 %v2358, %v2389
        %v2395 = vmul.f32 %v2359, %v2389
        %v2396 = vmul.f32 %v2360, %v2389
        %v2397 = vmul.f32 %v2361, %v2389
        %v2398 = vmul.f32 %v2362, %v2389
        %v2399 = vmul.f32 %v2363, %v2389
        %v2400 = vmul.f32 %v2364, %v2389
        %v2401 = vmul.f32 %v2365, %v2389
        %v2402 = vmul.f32 %v2366, %v2389
        %v2403 = vmul.f32 %v2367, %v2389
        %v2404 = vmul.f32 %v2368, %v2389
        %v2405 = vmul.f32 %v2369, %v2389
        %v2406 = vmul.f32 %v2370, %v2389
        %v2407 = vmul.f32 %v2371, %v2389
        %v2408 = vmul.f32 %v2372, %v2389
        %v2409 = vmul.f32 %v2373, %v2389
        %v2410 = vmul.f32 %v2374, %v2389
        %v2411 = vmul.f32 %v2375, %v2389
        %v2412 = vmul.f32 %v2376, %v2389
        %v2413 = vmul.f32 %v2377, %v2389
        %v2414 = vmul.f32 %v2378, %v2389
        %v2415 = vmul.f32 %v2379, %v2389
        %v2416 = vmul.f32 %v2380, %v2389
        %v2417 = vmul.f32 %v2381, %v2389
        %v2418 = vmul.f32 %v2382, %v2389
        %v2419 = vmul.f32 %v2383, %v2389
        %v2420 = vmul.f32 %v2384, %v2389
        %v2421 = vmul.f32 %v2385, %v2389
        %v2422 = vadd.f32 %v2322, %v2390
        %v2423 = vadd.f32 %v2323, %v2391
        %v2424 = vadd.f32 %v2324, %v2392
        %v2425 = vadd.f32 %v2325, %v2393
        %v2426 = vadd.f32 %v2326, %v2394
        %v2427 = vadd.f32 %v2327, %v2395
        %v2428 = vadd.f32 %v2328, %v2396
        %v2429 = vadd.f32 %v2329, %v2397
        %v2430 = vadd.f32 %v2330, %v2398
        %v2431 = vadd.f32 %v2331, %v2399
        %v2432 = vadd.f32 %v2332, %v2400
        %v2433 = vadd.f32 %v2333, %v2401
        %v2434 = vadd.f32 %v2334, %v2402
        %v2435 = vadd.f32 %v2335, %v2403
        %v2436 = vadd.f32 %v2336, %v2404
        %v2437 = vadd.f32 %v2337, %v2405
        %v2438 = vadd.f32 %v2338, %v2406
        %v2439 = vadd.f32 %v2339, %v2407
        %v2440 = vadd.f32 %v2340, %v2408
        %v2441 = vadd.f32 %v2341, %v2409
        %v2442 = vadd.f32 %v2342, %v2410
        %v2443 = vadd.f32 %v2343, %v2411
        %v2444 = vadd.f32 %v2344, %v2412
        %v2445 = vadd.f32 %v2345, %v2413
        %v2446 = vadd.f32 %v2346, %v2414
        %v2447 = vadd.f32 %v2347, %v2415
        %v2448 = vadd.f32 %v2348, %v2416
        %v2449 = vadd.f32 %v2349, %v2417
        %v2450 = vadd.f32 %v2350, %v2418
        %v2451 = vadd.f32 %v2351, %v2419
        %v2452 = vadd.f32 %v2352, %v2420
        %v2453 = vadd.f32 %v2353, %v2421
        %v2454 = vld [vmem:[%s1953 + $0x5] sm:$0xff]
        %v2455 = vld [vmem:[%s1953 + $0xd] sm:$0xff]
        %v2456 = vld [vmem:[%s1953 + $0x1d] sm:$0xff]
        %v2457 = vld [vmem:[%s1953 + $0x25] sm:$0xff]
        %v2458 = vld [vmem:[%s1953 + $0x35] sm:$0xff]
        %v2459 = vld [vmem:[%s1953 + $0x3d] sm:$0xff]
        %v2460 = vld [vmem:[%s1953 + $0x4d] sm:$0xff]
        %v2461 = vld [vmem:[%s1953 + $0x55] sm:$0xff]
        %v2462 = vld [vmem:[%s1953 + $0x65] sm:$0xff]
        %v2463 = vld [vmem:[%s1953 + $0x6d] sm:$0xff]
        %v2464 = vld [vmem:[%s1953 + $0x7d] sm:$0xff]
        %v2465 = vld [vmem:[%s1953 + $0x85] sm:$0xff]
        %v2466 = vld [vmem:[%s1953 + $0x95] sm:$0xff]
        %v2467 = vld [vmem:[%s1953 + $0x9d] sm:$0xff]
        %v2468 = vld [vmem:[%s1953 + $0xad] sm:$0xff]
        %v2469 = vld [vmem:[%s1953 + $0xb5] sm:$0xff]
        %v2470 = vld [vmem:[%s1953 + $0xc5] sm:$0xff]
        %v2471 = vld [vmem:[%s1953 + $0xcd] sm:$0xff]
        %v2472 = vld [vmem:[%s1953 + $0xdd] sm:$0xff]
        %v2473 = vld [vmem:[%s1953 + $0xe5] sm:$0xff]
        %v2474 = vld [vmem:[%s1953 + $0xf5] sm:$0xff]
        %v2475 = vld [vmem:[%s1953 + $0xfd] sm:$0xff]
        %v2476 = vld [vmem:[%s1953 + $0x10d] sm:$0xff]
        %v2477 = vld [vmem:[%s1953 + $0x115] sm:$0xff]
        %v2478 = vld [vmem:[%s1953 + $0x125] sm:$0xff]
        %v2479 = vld [vmem:[%s1953 + $0x12d] sm:$0xff]
        %v2480 = vld [vmem:[%s1953 + $0x13d] sm:$0xff]
        %v2481 = vld [vmem:[%s1953 + $0x145] sm:$0xff]
        %v2482 = vld [vmem:[%s1953 + $0x155] sm:$0xff]
        %v2483 = vld [vmem:[%s1953 + $0x15d] sm:$0xff]
        %v2484 = vld [vmem:[%s1953 + $0x16d] sm:$0xff]
        %v2485 = vld [vmem:[%s1953 + $0x175] sm:$0xff]
        %v2486 = vlaneseq
        %v2487 = vshrl.u32 %v2486, 7
        %v2488 = vsub.s32 5, %v2487
        %v2489 = vrot.slane %v512, %v2488
        %v2490 = vmul.f32 %v2454, %v2489
        %v2491 = vmul.f32 %v2455, %v2489
        %v2492 = vmul.f32 %v2456, %v2489
        %v2493 = vmul.f32 %v2457, %v2489
        %v2494 = vmul.f32 %v2458, %v2489
        %v2495 = vmul.f32 %v2459, %v2489
        %v2496 = vmul.f32 %v2460, %v2489
        %v2497 = vmul.f32 %v2461, %v2489
        %v2498 = vmul.f32 %v2462, %v2489
        %v2499 = vmul.f32 %v2463, %v2489
        %v2500 = vmul.f32 %v2464, %v2489
        %v2501 = vmul.f32 %v2465, %v2489
        %v2502 = vmul.f32 %v2466, %v2489
        %v2503 = vmul.f32 %v2467, %v2489
        %v2504 = vmul.f32 %v2468, %v2489
        %v2505 = vmul.f32 %v2469, %v2489
        %v2506 = vmul.f32 %v2470, %v2489
        %v2507 = vmul.f32 %v2471, %v2489
        %v2508 = vmul.f32 %v2472, %v2489
        %v2509 = vmul.f32 %v2473, %v2489
        %v2510 = vmul.f32 %v2474, %v2489
        %v2511 = vmul.f32 %v2475, %v2489
        %v2512 = vmul.f32 %v2476, %v2489
        %v2513 = vmul.f32 %v2477, %v2489
        %v2514 = vmul.f32 %v2478, %v2489
        %v2515 = vmul.f32 %v2479, %v2489
        %v2516 = vmul.f32 %v2480, %v2489
        %v2517 = vmul.f32 %v2481, %v2489
        %v2518 = vmul.f32 %v2482, %v2489
        %v2519 = vmul.f32 %v2483, %v2489
        %v2520 = vmul.f32 %v2484, %v2489
        %v2521 = vmul.f32 %v2485, %v2489
        %v2522 = vadd.f32 %v2422, %v2490
        %v2523 = vadd.f32 %v2423, %v2491
        %v2524 = vadd.f32 %v2424, %v2492
        %v2525 = vadd.f32 %v2425, %v2493
        %v2526 = vadd.f32 %v2426, %v2494
        %v2527 = vadd.f32 %v2427, %v2495
        %v2528 = vadd.f32 %v2428, %v2496
        %v2529 = vadd.f32 %v2429, %v2497
        %v2530 = vadd.f32 %v2430, %v2498
        %v2531 = vadd.f32 %v2431, %v2499
        %v2532 = vadd.f32 %v2432, %v2500
        %v2533 = vadd.f32 %v2433, %v2501
        %v2534 = vadd.f32 %v2434, %v2502
        %v2535 = vadd.f32 %v2435, %v2503
        %v2536 = vadd.f32 %v2436, %v2504
        %v2537 = vadd.f32 %v2437, %v2505
        %v2538 = vadd.f32 %v2438, %v2506
        %v2539 = vadd.f32 %v2439, %v2507
        %v2540 = vadd.f32 %v2440, %v2508
        %v2541 = vadd.f32 %v2441, %v2509
        %v2542 = vadd.f32 %v2442, %v2510
        %v2543 = vadd.f32 %v2443, %v2511
        %v2544 = vadd.f32 %v2444, %v2512
        %v2545 = vadd.f32 %v2445, %v2513
        %v2546 = vadd.f32 %v2446, %v2514
        %v2547 = vadd.f32 %v2447, %v2515
        %v2548 = vadd.f32 %v2448, %v2516
        %v2549 = vadd.f32 %v2449, %v2517
        %v2550 = vadd.f32 %v2450, %v2518
        %v2551 = vadd.f32 %v2451, %v2519
        %v2552 = vadd.f32 %v2452, %v2520
        %v2553 = vadd.f32 %v2453, %v2521
        %v2554 = vld [vmem:[%s1953 + $0x6] sm:$0xff]
        %v2555 = vld [vmem:[%s1953 + $0xe] sm:$0xff]
        %v2556 = vld [vmem:[%s1953 + $0x1e] sm:$0xff]
        %v2557 = vld [vmem:[%s1953 + $0x26] sm:$0xff]
        %v2558 = vld [vmem:[%s1953 + $0x36] sm:$0xff]
        %v2559 = vld [vmem:[%s1953 + $0x3e] sm:$0xff]
        %v2560 = vld [vmem:[%s1953 + $0x4e] sm:$0xff]
        %v2561 = vld [vmem:[%s1953 + $0x56] sm:$0xff]
        %v2562 = vld [vmem:[%s1953 + $0x66] sm:$0xff]
        %v2563 = vld [vmem:[%s1953 + $0x6e] sm:$0xff]
        %v2564 = vld [vmem:[%s1953 + $0x7e] sm:$0xff]
        %v2565 = vld [vmem:[%s1953 + $0x86] sm:$0xff]
        %v2566 = vld [vmem:[%s1953 + $0x96] sm:$0xff]
        %v2567 = vld [vmem:[%s1953 + $0x9e] sm:$0xff]
        %v2568 = vld [vmem:[%s1953 + $0xae] sm:$0xff]
        %v2569 = vld [vmem:[%s1953 + $0xb6] sm:$0xff]
        %v2570 = vld [vmem:[%s1953 + $0xc6] sm:$0xff]
        %v2571 = vld [vmem:[%s1953 + $0xce] sm:$0xff]
        %v2572 = vld [vmem:[%s1953 + $0xde] sm:$0xff]
        %v2573 = vld [vmem:[%s1953 + $0xe6] sm:$0xff]
        %v2574 = vld [vmem:[%s1953 + $0xf6] sm:$0xff]
        %v2575 = vld [vmem:[%s1953 + $0xfe] sm:$0xff]
        %v2576 = vld [vmem:[%s1953 + $0x10e] sm:$0xff]
        %v2577 = vld [vmem:[%s1953 + $0x116] sm:$0xff]
        %v2578 = vld [vmem:[%s1953 + $0x126] sm:$0xff]
        %v2579 = vld [vmem:[%s1953 + $0x12e] sm:$0xff]
        %v2580 = vld [vmem:[%s1953 + $0x13e] sm:$0xff]
        %v2581 = vld [vmem:[%s1953 + $0x146] sm:$0xff]
        %v2582 = vld [vmem:[%s1953 + $0x156] sm:$0xff]
        %v2583 = vld [vmem:[%s1953 + $0x15e] sm:$0xff]
        %v2584 = vld [vmem:[%s1953 + $0x16e] sm:$0xff]
        %v2585 = vld [vmem:[%s1953 + $0x176] sm:$0xff]
        %v2586 = vlaneseq
        %v2587 = vshrl.u32 %v2586, 7
        %v2588 = vsub.s32 6, %v2587
        %v2589 = vrot.slane %v512, %v2588
        %v2590 = vmul.f32 %v2554, %v2589
        %v2591 = vmul.f32 %v2555, %v2589
        %v2592 = vmul.f32 %v2556, %v2589
        %v2593 = vmul.f32 %v2557, %v2589
        %v2594 = vmul.f32 %v2558, %v2589
        %v2595 = vmul.f32 %v2559, %v2589
        %v2596 = vmul.f32 %v2560, %v2589
        %v2597 = vmul.f32 %v2561, %v2589
        %v2598 = vmul.f32 %v2562, %v2589
        %v2599 = vmul.f32 %v2563, %v2589
        %v2600 = vmul.f32 %v2564, %v2589
        %v2601 = vmul.f32 %v2565, %v2589
        %v2602 = vmul.f32 %v2566, %v2589
        %v2603 = vmul.f32 %v2567, %v2589
        %v2604 = vmul.f32 %v2568, %v2589
        %v2605 = vmul.f32 %v2569, %v2589
        %v2606 = vmul.f32 %v2570, %v2589
        %v2607 = vmul.f32 %v2571, %v2589
        %v2608 = vmul.f32 %v2572, %v2589
        %v2609 = vmul.f32 %v2573, %v2589
        %v2610 = vmul.f32 %v2574, %v2589
        %v2611 = vmul.f32 %v2575, %v2589
        %v2612 = vmul.f32 %v2576, %v2589
        %v2613 = vmul.f32 %v2577, %v2589
        %v2614 = vmul.f32 %v2578, %v2589
        %v2615 = vmul.f32 %v2579, %v2589
        %v2616 = vmul.f32 %v2580, %v2589
        %v2617 = vmul.f32 %v2581, %v2589
        %v2618 = vmul.f32 %v2582, %v2589
        %v2619 = vmul.f32 %v2583, %v2589
        %v2620 = vmul.f32 %v2584, %v2589
        %v2621 = vmul.f32 %v2585, %v2589
        %v2622 = vadd.f32 %v2522, %v2590
        %v2623 = vadd.f32 %v2523, %v2591
        %v2624 = vadd.f32 %v2524, %v2592
        %v2625 = vadd.f32 %v2525, %v2593
        %v2626 = vadd.f32 %v2526, %v2594
        %v2627 = vadd.f32 %v2527, %v2595
        %v2628 = vadd.f32 %v2528, %v2596
        %v2629 = vadd.f32 %v2529, %v2597
        %v2630 = vadd.f32 %v2530, %v2598
        %v2631 = vadd.f32 %v2531, %v2599
        %v2632 = vadd.f32 %v2532, %v2600
        %v2633 = vadd.f32 %v2533, %v2601
        %v2634 = vadd.f32 %v2534, %v2602
        %v2635 = vadd.f32 %v2535, %v2603
        %v2636 = vadd.f32 %v2536, %v2604
        %v2637 = vadd.f32 %v2537, %v2605
        %v2638 = vadd.f32 %v2538, %v2606
        %v2639 = vadd.f32 %v2539, %v2607
        %v2640 = vadd.f32 %v2540, %v2608
        %v2641 = vadd.f32 %v2541, %v2609
        %v2642 = vadd.f32 %v2542, %v2610
        %v2643 = vadd.f32 %v2543, %v2611
        %v2644 = vadd.f32 %v2544, %v2612
        %v2645 = vadd.f32 %v2545, %v2613
        %v2646 = vadd.f32 %v2546, %v2614
        %v2647 = vadd.f32 %v2547, %v2615
        %v2648 = vadd.f32 %v2548, %v2616
        %v2649 = vadd.f32 %v2549, %v2617
        %v2650 = vadd.f32 %v2550, %v2618
        %v2651 = vadd.f32 %v2551, %v2619
        %v2652 = vadd.f32 %v2552, %v2620
        %v2653 = vadd.f32 %v2553, %v2621
        %v2654 = vld [vmem:[%s477] sm:$0xff]
        %v2655 = vld [vmem:[%s477 + $0x8] sm:$0xff]
        %v2656 = vld [vmem:[%s477 + $0x18] sm:$0xff]
        %v2657 = vld [vmem:[%s477 + $0x20] sm:$0xff]
        %v2658 = vld [vmem:[%s477 + $0x30] sm:$0xff]
        %v2659 = vld [vmem:[%s477 + $0x38] sm:$0xff]
        %v2660 = vld [vmem:[%s477 + $0x48] sm:$0xff]
        %v2661 = vld [vmem:[%s477 + $0x50] sm:$0xff]
        %v2662 = vld [vmem:[%s477 + $0x60] sm:$0xff]
        %v2663 = vld [vmem:[%s477 + $0x68] sm:$0xff]
        %v2664 = vld [vmem:[%s477 + $0x78] sm:$0xff]
        %v2665 = vld [vmem:[%s477 + $0x80] sm:$0xff]
        %v2666 = vld [vmem:[%s477 + $0x90] sm:$0xff]
        %v2667 = vld [vmem:[%s477 + $0x98] sm:$0xff]
        %v2668 = vld [vmem:[%s477 + $0xa8] sm:$0xff]
        %v2669 = vld [vmem:[%s477 + $0xb0] sm:$0xff]
        %v2670 = vld [vmem:[%s477 + $0xc0] sm:$0xff]
        %v2671 = vld [vmem:[%s477 + $0xc8] sm:$0xff]
        %v2672 = vld [vmem:[%s477 + $0xd8] sm:$0xff]
        %v2673 = vld [vmem:[%s477 + $0xe0] sm:$0xff]
        %v2674 = vld [vmem:[%s477 + $0xf0] sm:$0xff]
        %v2675 = vld [vmem:[%s477 + $0xf8] sm:$0xff]
        %v2676 = vld [vmem:[%s477 + $0x108] sm:$0xff]
        %v2677 = vld [vmem:[%s477 + $0x110] sm:$0xff]
        %v2678 = vld [vmem:[%s477 + $0x120] sm:$0xff]
        %v2679 = vld [vmem:[%s477 + $0x128] sm:$0xff]
        %v2680 = vld [vmem:[%s477 + $0x138] sm:$0xff]
        %v2681 = vld [vmem:[%s477 + $0x140] sm:$0xff]
        %v2682 = vld [vmem:[%s477 + $0x150] sm:$0xff]
        %v2683 = vld [vmem:[%s477 + $0x158] sm:$0xff]
        %v2684 = vld [vmem:[%s477 + $0x168] sm:$0xff]
        %v2685 = vld [vmem:[%s477 + $0x170] sm:$0xff]
        %v2686 = vlaneseq
        %v2687 = vshrl.u32 %v2686, 7
        %v2688 = vsub.s32 0, %v2687
        %v2689 = vrot.slane %v513, %v2688
        %v2690 = vmul.f32 %v2654, %v2689
        %v2691 = vmul.f32 %v2655, %v2689
        %v2692 = vmul.f32 %v2656, %v2689
        %v2693 = vmul.f32 %v2657, %v2689
        %v2694 = vmul.f32 %v2658, %v2689
        %v2695 = vmul.f32 %v2659, %v2689
        %v2696 = vmul.f32 %v2660, %v2689
        %v2697 = vmul.f32 %v2661, %v2689
        %v2698 = vmul.f32 %v2662, %v2689
        %v2699 = vmul.f32 %v2663, %v2689
        %v2700 = vmul.f32 %v2664, %v2689
        %v2701 = vmul.f32 %v2665, %v2689
        %v2702 = vmul.f32 %v2666, %v2689
        %v2703 = vmul.f32 %v2667, %v2689
        %v2704 = vmul.f32 %v2668, %v2689
        %v2705 = vmul.f32 %v2669, %v2689
        %v2706 = vmul.f32 %v2670, %v2689
        %v2707 = vmul.f32 %v2671, %v2689
        %v2708 = vmul.f32 %v2672, %v2689
        %v2709 = vmul.f32 %v2673, %v2689
        %v2710 = vmul.f32 %v2674, %v2689
        %v2711 = vmul.f32 %v2675, %v2689
        %v2712 = vmul.f32 %v2676, %v2689
        %v2713 = vmul.f32 %v2677, %v2689
        %v2714 = vmul.f32 %v2678, %v2689
        %v2715 = vmul.f32 %v2679, %v2689
        %v2716 = vmul.f32 %v2680, %v2689
        %v2717 = vmul.f32 %v2681, %v2689
        %v2718 = vmul.f32 %v2682, %v2689
        %v2719 = vmul.f32 %v2683, %v2689
        %v2720 = vmul.f32 %v2684, %v2689
        %v2721 = vmul.f32 %v2685, %v2689
        %v2722 = vadd.f32 %v2622, %v2690
        %v2723 = vadd.f32 %v2623, %v2691
        %v2724 = vadd.f32 %v2624, %v2692
        %v2725 = vadd.f32 %v2625, %v2693
        %v2726 = vadd.f32 %v2626, %v2694
        %v2727 = vadd.f32 %v2627, %v2695
        %v2728 = vadd.f32 %v2628, %v2696
        %v2729 = vadd.f32 %v2629, %v2697
        %v2730 = vadd.f32 %v2630, %v2698
        %v2731 = vadd.f32 %v2631, %v2699
        %v2732 = vadd.f32 %v2632, %v2700
        %v2733 = vadd.f32 %v2633, %v2701
        %v2734 = vadd.f32 %v2634, %v2702
        %v2735 = vadd.f32 %v2635, %v2703
        %v2736 = vadd.f32 %v2636, %v2704
        %v2737 = vadd.f32 %v2637, %v2705
        %v2738 = vadd.f32 %v2638, %v2706
        %v2739 = vadd.f32 %v2639, %v2707
        %v2740 = vadd.f32 %v2640, %v2708
        %v2741 = vadd.f32 %v2641, %v2709
        %v2742 = vadd.f32 %v2642, %v2710
        %v2743 = vadd.f32 %v2643, %v2711
        %v2744 = vadd.f32 %v2644, %v2712
        %v2745 = vadd.f32 %v2645, %v2713
        %v2746 = vadd.f32 %v2646, %v2714
        %v2747 = vadd.f32 %v2647, %v2715
        %v2748 = vadd.f32 %v2648, %v2716
        %v2749 = vadd.f32 %v2649, %v2717
        %v2750 = vadd.f32 %v2650, %v2718
        %v2751 = vadd.f32 %v2651, %v2719
        %v2752 = vadd.f32 %v2652, %v2720
        %v2753 = vadd.f32 %v2653, %v2721
        %v2754 = vld [vmem:[%s477 + $0x1] sm:$0xff]
        %v2755 = vld [vmem:[%s477 + $0x9] sm:$0xff]
        %v2756 = vld [vmem:[%s477 + $0x19] sm:$0xff]
        %v2757 = vld [vmem:[%s477 + $0x21] sm:$0xff]
        %v2758 = vld [vmem:[%s477 + $0x31] sm:$0xff]
        %v2759 = vld [vmem:[%s477 + $0x39] sm:$0xff]
        %v2760 = vld [vmem:[%s477 + $0x49] sm:$0xff]
        %v2761 = vld [vmem:[%s477 + $0x51] sm:$0xff]
        %v2762 = vld [vmem:[%s477 + $0x61] sm:$0xff]
        %v2763 = vld [vmem:[%s477 + $0x69] sm:$0xff]
        %v2764 = vld [vmem:[%s477 + $0x79] sm:$0xff]
        %v2765 = vld [vmem:[%s477 + $0x81] sm:$0xff]
        %v2766 = vld [vmem:[%s477 + $0x91] sm:$0xff]
        %v2767 = vld [vmem:[%s477 + $0x99] sm:$0xff]
        %v2768 = vld [vmem:[%s477 + $0xa9] sm:$0xff]
        %v2769 = vld [vmem:[%s477 + $0xb1] sm:$0xff]
        %v2770 = vld [vmem:[%s477 + $0xc1] sm:$0xff]
        %v2771 = vld [vmem:[%s477 + $0xc9] sm:$0xff]
        %v2772 = vld [vmem:[%s477 + $0xd9] sm:$0xff]
        %v2773 = vld [vmem:[%s477 + $0xe1] sm:$0xff]
        %v2774 = vld [vmem:[%s477 + $0xf1] sm:$0xff]
        %v2775 = vld [vmem:[%s477 + $0xf9] sm:$0xff]
        %v2776 = vld [vmem:[%s477 + $0x109] sm:$0xff]
        %v2777 = vld [vmem:[%s477 + $0x111] sm:$0xff]
        %v2778 = vld [vmem:[%s477 + $0x121] sm:$0xff]
        %v2779 = vld [vmem:[%s477 + $0x129] sm:$0xff]
        %v2780 = vld [vmem:[%s477 + $0x139] sm:$0xff]
        %v2781 = vld [vmem:[%s477 + $0x141] sm:$0xff]
        %v2782 = vld [vmem:[%s477 + $0x151] sm:$0xff]
        %v2783 = vld [vmem:[%s477 + $0x159] sm:$0xff]
        %v2784 = vld [vmem:[%s477 + $0x169] sm:$0xff]
        %v2785 = vld [vmem:[%s477 + $0x171] sm:$0xff]
        %v2786 = vlaneseq
        %v2787 = vshrl.u32 %v2786, 7
        %v2788 = vsub.s32 1, %v2787
        %v2789 = vrot.slane %v513, %v2788
        %v2790 = vmul.f32 %v2754, %v2789
        %v2791 = vmul.f32 %v2755, %v2789
        %v2792 = vmul.f32 %v2756, %v2789
        %v2793 = vmul.f32 %v2757, %v2789
        %v2794 = vmul.f32 %v2758, %v2789
        %v2795 = vmul.f32 %v2759, %v2789
        %v2796 = vmul.f32 %v2760, %v2789
        %v2797 = vmul.f32 %v2761, %v2789
        %v2798 = vmul.f32 %v2762, %v2789
        %v2799 = vmul.f32 %v2763, %v2789
        %v2800 = vmul.f32 %v2764, %v2789
        %v2801 = vmul.f32 %v2765, %v2789
        %v2802 = vmul.f32 %v2766, %v2789
        %v2803 = vmul.f32 %v2767, %v2789
        %v2804 = vmul.f32 %v2768, %v2789
        %v2805 = vmul.f32 %v2769, %v2789
        %v2806 = vmul.f32 %v2770, %v2789
        %v2807 = vmul.f32 %v2771, %v2789
        %v2808 = vmul.f32 %v2772, %v2789
        %v2809 = vmul.f32 %v2773, %v2789
        %v2810 = vmul.f32 %v2774, %v2789
        %v2811 = vmul.f32 %v2775, %v2789
        %v2812 = vmul.f32 %v2776, %v2789
        %v2813 = vmul.f32 %v2777, %v2789
        %v2814 = vmul.f32 %v2778, %v2789
        %v2815 = vmul.f32 %v2779, %v2789
        %v2816 = vmul.f32 %v2780, %v2789
        %v2817 = vmul.f32 %v2781, %v2789
        %v2818 = vmul.f32 %v2782, %v2789
        %v2819 = vmul.f32 %v2783, %v2789
        %v2820 = vmul.f32 %v2784, %v2789
        %v2821 = vmul.f32 %v2785, %v2789
        %v2822 = vadd.f32 %v2722, %v2790
        %v2823 = vadd.f32 %v2723, %v2791
        %v2824 = vadd.f32 %v2724, %v2792
        %v2825 = vadd.f32 %v2725, %v2793
        %v2826 = vadd.f32 %v2726, %v2794
        %v2827 = vadd.f32 %v2727, %v2795
        %v2828 = vadd.f32 %v2728, %v2796
        %v2829 = vadd.f32 %v2729, %v2797
        %v2830 = vadd.f32 %v2730, %v2798
        %v2831 = vadd.f32 %v2731, %v2799
        %v2832 = vadd.f32 %v2732, %v2800
        %v2833 = vadd.f32 %v2733, %v2801
        %v2834 = vadd.f32 %v2734, %v2802
        %v2835 = vadd.f32 %v2735, %v2803
        %v2836 = vadd.f32 %v2736, %v2804
        %v2837 = vadd.f32 %v2737, %v2805
        %v2838 = vadd.f32 %v2738, %v2806
        %v2839 = vadd.f32 %v2739, %v2807
        %v2840 = vadd.f32 %v2740, %v2808
        %v2841 = vadd.f32 %v2741, %v2809
        %v2842 = vadd.f32 %v2742, %v2810
        %v2843 = vadd.f32 %v2743, %v2811
        %v2844 = vadd.f32 %v2744, %v2812
        %v2845 = vadd.f32 %v2745, %v2813
        %v2846 = vadd.f32 %v2746, %v2814
        %v2847 = vadd.f32 %v2747, %v2815
        %v2848 = vadd.f32 %v2748, %v2816
        %v2849 = vadd.f32 %v2749, %v2817
        %v2850 = vadd.f32 %v2750, %v2818
        %v2851 = vadd.f32 %v2751, %v2819
        %v2852 = vadd.f32 %v2752, %v2820
        %v2853 = vadd.f32 %v2753, %v2821
        %v2854 = vld [vmem:[%s477 + $0x2] sm:$0xff]
        %v2855 = vld [vmem:[%s477 + $0xa] sm:$0xff]
        %v2856 = vld [vmem:[%s477 + $0x1a] sm:$0xff]
        %v2857 = vld [vmem:[%s477 + $0x22] sm:$0xff]
        %v2858 = vld [vmem:[%s477 + $0x32] sm:$0xff]
        %v2859 = vld [vmem:[%s477 + $0x3a] sm:$0xff]
        %v2860 = vld [vmem:[%s477 + $0x4a] sm:$0xff]
        %v2861 = vld [vmem:[%s477 + $0x52] sm:$0xff]
        %v2862 = vld [vmem:[%s477 + $0x62] sm:$0xff]
        %v2863 = vld [vmem:[%s477 + $0x6a] sm:$0xff]
        %v2864 = vld [vmem:[%s477 + $0x7a] sm:$0xff]
        %v2865 = vld [vmem:[%s477 + $0x82] sm:$0xff]
        %v2866 = vld [vmem:[%s477 + $0x92] sm:$0xff]
        %v2867 = vld [vmem:[%s477 + $0x9a] sm:$0xff]
        %v2868 = vld [vmem:[%s477 + $0xaa] sm:$0xff]
        %v2869 = vld [vmem:[%s477 + $0xb2] sm:$0xff]
        %v2870 = vld [vmem:[%s477 + $0xc2] sm:$0xff]
        %v2871 = vld [vmem:[%s477 + $0xca] sm:$0xff]
        %v2872 = vld [vmem:[%s477 + $0xda] sm:$0xff]
        %v2873 = vld [vmem:[%s477 + $0xe2] sm:$0xff]
        %v2874 = vld [vmem:[%s477 + $0xf2] sm:$0xff]
        %v2875 = vld [vmem:[%s477 + $0xfa] sm:$0xff]
        %v2876 = vld [vmem:[%s477 + $0x10a] sm:$0xff]
        %v2877 = vld [vmem:[%s477 + $0x112] sm:$0xff]
        %v2878 = vld [vmem:[%s477 + $0x122] sm:$0xff]
        %v2879 = vld [vmem:[%s477 + $0x12a] sm:$0xff]
        %v2880 = vld [vmem:[%s477 + $0x13a] sm:$0xff]
        %v2881 = vld [vmem:[%s477 + $0x142] sm:$0xff]
        %v2882 = vld [vmem:[%s477 + $0x152] sm:$0xff]
        %v2883 = vld [vmem:[%s477 + $0x15a] sm:$0xff]
        %v2884 = vld [vmem:[%s477 + $0x16a] sm:$0xff]
        %v2885 = vld [vmem:[%s477 + $0x172] sm:$0xff]
        %v2886 = vlaneseq
        %v2887 = vshrl.u32 %v2886, 7
        %v2888 = vsub.s32 2, %v2887
        %v2889 = vrot.slane %v513, %v2888
        %v2890 = vmul.f32 %v2854, %v2889
        %v2891 = vmul.f32 %v2855, %v2889
        %v2892 = vmul.f32 %v2856, %v2889
        %v2893 = vmul.f32 %v2857, %v2889
        %v2894 = vmul.f32 %v2858, %v2889
        %v2895 = vmul.f32 %v2859, %v2889
        %v2896 = vmul.f32 %v2860, %v2889
        %v2897 = vmul.f32 %v2861, %v2889
        %v2898 = vmul.f32 %v2862, %v2889
        %v2899 = vmul.f32 %v2863, %v2889
        %v2900 = vmul.f32 %v2864, %v2889
        %v2901 = vmul.f32 %v2865, %v2889
        %v2902 = vmul.f32 %v2866, %v2889
        %v2903 = vmul.f32 %v2867, %v2889
        %v2904 = vmul.f32 %v2868, %v2889
        %v2905 = vmul.f32 %v2869, %v2889
        %v2906 = vmul.f32 %v2870, %v2889
        %v2907 = vmul.f32 %v2871, %v2889
        %v2908 = vmul.f32 %v2872, %v2889
        %v2909 = vmul.f32 %v2873, %v2889
        %v2910 = vmul.f32 %v2874, %v2889
        %v2911 = vmul.f32 %v2875, %v2889
        %v2912 = vmul.f32 %v2876, %v2889
        %v2913 = vmul.f32 %v2877, %v2889
        %v2914 = vmul.f32 %v2878, %v2889
        %v2915 = vmul.f32 %v2879, %v2889
        %v2916 = vmul.f32 %v2880, %v2889
        %v2917 = vmul.f32 %v2881, %v2889
        %v2918 = vmul.f32 %v2882, %v2889
        %v2919 = vmul.f32 %v2883, %v2889
        %v2920 = vmul.f32 %v2884, %v2889
        %v2921 = vmul.f32 %v2885, %v2889
        %v2922 = vadd.f32 %v2822, %v2890
        %v2923 = vadd.f32 %v2823, %v2891
        %v2924 = vadd.f32 %v2824, %v2892
        %v2925 = vadd.f32 %v2825, %v2893
        %v2926 = vadd.f32 %v2826, %v2894
        %v2927 = vadd.f32 %v2827, %v2895
        %v2928 = vadd.f32 %v2828, %v2896
        %v2929 = vadd.f32 %v2829, %v2897
        %v2930 = vadd.f32 %v2830, %v2898
        %v2931 = vadd.f32 %v2831, %v2899
        %v2932 = vadd.f32 %v2832, %v2900
        %v2933 = vadd.f32 %v2833, %v2901
        %v2934 = vadd.f32 %v2834, %v2902
        %v2935 = vadd.f32 %v2835, %v2903
        %v2936 = vadd.f32 %v2836, %v2904
        %v2937 = vadd.f32 %v2837, %v2905
        %v2938 = vadd.f32 %v2838, %v2906
        %v2939 = vadd.f32 %v2839, %v2907
        %v2940 = vadd.f32 %v2840, %v2908
        %v2941 = vadd.f32 %v2841, %v2909
        %v2942 = vadd.f32 %v2842, %v2910
        %v2943 = vadd.f32 %v2843, %v2911
        %v2944 = vadd.f32 %v2844, %v2912
        %v2945 = vadd.f32 %v2845, %v2913
        %v2946 = vadd.f32 %v2846, %v2914
        %v2947 = vadd.f32 %v2847, %v2915
        %v2948 = vadd.f32 %v2848, %v2916
        %v2949 = vadd.f32 %v2849, %v2917
        %v2950 = vadd.f32 %v2850, %v2918
        %v2951 = vadd.f32 %v2851, %v2919
        %v2952 = vadd.f32 %v2852, %v2920
        %v2953 = vadd.f32 %v2853, %v2921
        %v2954 = vld [vmem:[%s477 + $0x3] sm:$0xff]
        %v2955 = vld [vmem:[%s477 + $0xb] sm:$0xff]
        %v2956 = vld [vmem:[%s477 + $0x1b] sm:$0xff]
        %v2957 = vld [vmem:[%s477 + $0x23] sm:$0xff]
        %v2958 = vld [vmem:[%s477 + $0x33] sm:$0xff]
        %v2959 = vld [vmem:[%s477 + $0x3b] sm:$0xff]
        %v2960 = vld [vmem:[%s477 + $0x4b] sm:$0xff]
        %v2961 = vld [vmem:[%s477 + $0x53] sm:$0xff]
        %v2962 = vld [vmem:[%s477 + $0x63] sm:$0xff]
        %v2963 = vld [vmem:[%s477 + $0x6b] sm:$0xff]
        %v2964 = vld [vmem:[%s477 + $0x7b] sm:$0xff]
        %v2965 = vld [vmem:[%s477 + $0x83] sm:$0xff]
        %v2966 = vld [vmem:[%s477 + $0x93] sm:$0xff]
        %v2967 = vld [vmem:[%s477 + $0x9b] sm:$0xff]
        %v2968 = vld [vmem:[%s477 + $0xab] sm:$0xff]
        %v2969 = vld [vmem:[%s477 + $0xb3] sm:$0xff]
        %v2970 = vld [vmem:[%s477 + $0xc3] sm:$0xff]
        %v2971 = vld [vmem:[%s477 + $0xcb] sm:$0xff]
        %v2972 = vld [vmem:[%s477 + $0xdb] sm:$0xff]
        %v2973 = vld [vmem:[%s477 + $0xe3] sm:$0xff]
        %v2974 = vld [vmem:[%s477 + $0xf3] sm:$0xff]
        %v2975 = vld [vmem:[%s477 + $0xfb] sm:$0xff]
        %v2976 = vld [vmem:[%s477 + $0x10b] sm:$0xff]
        %v2977 = vld [vmem:[%s477 + $0x113] sm:$0xff]
        %v2978 = vld [vmem:[%s477 + $0x123] sm:$0xff]
        %v2979 = vld [vmem:[%s477 + $0x12b] sm:$0xff]
        %v2980 = vld [vmem:[%s477 + $0x13b] sm:$0xff]
        %v2981 = vld [vmem:[%s477 + $0x143] sm:$0xff]
        %v2982 = vld [vmem:[%s477 + $0x153] sm:$0xff]
        %v2983 = vld [vmem:[%s477 + $0x15b] sm:$0xff]
        %v2984 = vld [vmem:[%s477 + $0x16b] sm:$0xff]
        %v2985 = vld [vmem:[%s477 + $0x173] sm:$0xff]
        %v2986 = vlaneseq
        %v2987 = vshrl.u32 %v2986, 7
        %v2988 = vsub.s32 3, %v2987
        %v2989 = vrot.slane %v513, %v2988
        %v2990 = vmul.f32 %v2954, %v2989
        %v2991 = vmul.f32 %v2955, %v2989
        %v2992 = vmul.f32 %v2956, %v2989
        %v2993 = vmul.f32 %v2957, %v2989
        %v2994 = vmul.f32 %v2958, %v2989
        %v2995 = vmul.f32 %v2959, %v2989
        %v2996 = vmul.f32 %v2960, %v2989
        %v2997 = vmul.f32 %v2961, %v2989
        %v2998 = vmul.f32 %v2962, %v2989
        %v2999 = vmul.f32 %v2963, %v2989
        %v3000 = vmul.f32 %v2964, %v2989
        %v3001 = vmul.f32 %v2965, %v2989
        %v3002 = vmul.f32 %v2966, %v2989
        %v3003 = vmul.f32 %v2967, %v2989
        %v3004 = vmul.f32 %v2968, %v2989
        %v3005 = vmul.f32 %v2969, %v2989
        %v3006 = vmul.f32 %v2970, %v2989
        %v3007 = vmul.f32 %v2971, %v2989
        %v3008 = vmul.f32 %v2972, %v2989
        %v3009 = vmul.f32 %v2973, %v2989
        %v3010 = vmul.f32 %v2974, %v2989
        %v3011 = vmul.f32 %v2975, %v2989
        %v3012 = vmul.f32 %v2976, %v2989
        %v3013 = vmul.f32 %v2977, %v2989
        %v3014 = vmul.f32 %v2978, %v2989
        %v3015 = vmul.f32 %v2979, %v2989
        %v3016 = vmul.f32 %v2980, %v2989
        %v3017 = vmul.f32 %v2981, %v2989
        %v3018 = vmul.f32 %v2982, %v2989
        %v3019 = vmul.f32 %v2983, %v2989
        %v3020 = vmul.f32 %v2984, %v2989
        %v3021 = vmul.f32 %v2985, %v2989
        %v3022 = vadd.f32 %v2922, %v2990
        %v3023 = vadd.f32 %v2923, %v2991
        %v3024 = vadd.f32 %v2924, %v2992
        %v3025 = vadd.f32 %v2925, %v2993
        %v3026 = vadd.f32 %v2926, %v2994
        %v3027 = vadd.f32 %v2927, %v2995
        %v3028 = vadd.f32 %v2928, %v2996
        %v3029 = vadd.f32 %v2929, %v2997
        %v3030 = vadd.f32 %v2930, %v2998
        %v3031 = vadd.f32 %v2931, %v2999
        %v3032 = vadd.f32 %v2932, %v3000
        %v3033 = vadd.f32 %v2933, %v3001
        %v3034 = vadd.f32 %v2934, %v3002
        %v3035 = vadd.f32 %v2935, %v3003
        %v3036 = vadd.f32 %v2936, %v3004
        %v3037 = vadd.f32 %v2937, %v3005
        %v3038 = vadd.f32 %v2938, %v3006
        %v3039 = vadd.f32 %v2939, %v3007
        %v3040 = vadd.f32 %v2940, %v3008
        %v3041 = vadd.f32 %v2941, %v3009
        %v3042 = vadd.f32 %v2942, %v3010
        %v3043 = vadd.f32 %v2943, %v3011
        %v3044 = vadd.f32 %v2944, %v3012
        %v3045 = vadd.f32 %v2945, %v3013
        %v3046 = vadd.f32 %v2946, %v3014
        %v3047 = vadd.f32 %v2947, %v3015
        %v3048 = vadd.f32 %v2948, %v3016
        %v3049 = vadd.f32 %v2949, %v3017
        %v3050 = vadd.f32 %v2950, %v3018
        %v3051 = vadd.f32 %v2951, %v3019
        %v3052 = vadd.f32 %v2952, %v3020
        %v3053 = vadd.f32 %v2953, %v3021
        %v3054 = vld [vmem:[%s477 + $0x4] sm:$0xff]
        %v3055 = vld [vmem:[%s477 + $0xc] sm:$0xff]
        %v3056 = vld [vmem:[%s477 + $0x1c] sm:$0xff]
        %v3057 = vld [vmem:[%s477 + $0x24] sm:$0xff]
        %v3058 = vld [vmem:[%s477 + $0x34] sm:$0xff]
        %v3059 = vld [vmem:[%s477 + $0x3c] sm:$0xff]
        %v3060 = vld [vmem:[%s477 + $0x4c] sm:$0xff]
        %v3061 = vld [vmem:[%s477 + $0x54] sm:$0xff]
        %v3062 = vld [vmem:[%s477 + $0x64] sm:$0xff]
        %v3063 = vld [vmem:[%s477 + $0x6c] sm:$0xff]
        %v3064 = vld [vmem:[%s477 + $0x7c] sm:$0xff]
        %v3065 = vld [vmem:[%s477 + $0x84] sm:$0xff]
        %v3066 = vld [vmem:[%s477 + $0x94] sm:$0xff]
        %v3067 = vld [vmem:[%s477 + $0x9c] sm:$0xff]
        %v3068 = vld [vmem:[%s477 + $0xac] sm:$0xff]
        %v3069 = vld [vmem:[%s477 + $0xb4] sm:$0xff]
        %v3070 = vld [vmem:[%s477 + $0xc4] sm:$0xff]
        %v3071 = vld [vmem:[%s477 + $0xcc] sm:$0xff]
        %v3072 = vld [vmem:[%s477 + $0xdc] sm:$0xff]
        %v3073 = vld [vmem:[%s477 + $0xe4] sm:$0xff]
        %v3074 = vld [vmem:[%s477 + $0xf4] sm:$0xff]
        %v3075 = vld [vmem:[%s477 + $0xfc] sm:$0xff]
        %v3076 = vld [vmem:[%s477 + $0x10c] sm:$0xff]
        %v3077 = vld [vmem:[%s477 + $0x114] sm:$0xff]
        %v3078 = vld [vmem:[%s477 + $0x124] sm:$0xff]
        %v3079 = vld [vmem:[%s477 + $0x12c] sm:$0xff]
        %v3080 = vld [vmem:[%s477 + $0x13c] sm:$0xff]
        %v3081 = vld [vmem:[%s477 + $0x144] sm:$0xff]
        %v3082 = vld [vmem:[%s477 + $0x154] sm:$0xff]
        %v3083 = vld [vmem:[%s477 + $0x15c] sm:$0xff]
        %v3084 = vld [vmem:[%s477 + $0x16c] sm:$0xff]
        %v3085 = vld [vmem:[%s477 + $0x174] sm:$0xff]
        %v3086 = vlaneseq
        %v3087 = vshrl.u32 %v3086, 7
        %v3088 = vsub.s32 4, %v3087
        %v3089 = vrot.slane %v513, %v3088
        %v3090 = vmul.f32 %v3054, %v3089
        %v3091 = vmul.f32 %v3055, %v3089
        %v3092 = vmul.f32 %v3056, %v3089
        %v3093 = vmul.f32 %v3057, %v3089
        %v3094 = vmul.f32 %v3058, %v3089
        %v3095 = vmul.f32 %v3059, %v3089
        %v3096 = vmul.f32 %v3060, %v3089
        %v3097 = vmul.f32 %v3061, %v3089
        %v3098 = vmul.f32 %v3062, %v3089
        %v3099 = vmul.f32 %v3063, %v3089
        %v3100 = vmul.f32 %v3064, %v3089
        %v3101 = vmul.f32 %v3065, %v3089
        %v3102 = vmul.f32 %v3066, %v3089
        %v3103 = vmul.f32 %v3067, %v3089
        %v3104 = vmul.f32 %v3068, %v3089
        %v3105 = vmul.f32 %v3069, %v3089
        %v3106 = vmul.f32 %v3070, %v3089
        %v3107 = vmul.f32 %v3071, %v3089
        %v3108 = vmul.f32 %v3072, %v3089
        %v3109 = vmul.f32 %v3073, %v3089
        %v3110 = vmul.f32 %v3074, %v3089
        %v3111 = vmul.f32 %v3075, %v3089
        %v3112 = vmul.f32 %v3076, %v3089
        %v3113 = vmul.f32 %v3077, %v3089
        %v3114 = vmul.f32 %v3078, %v3089
        %v3115 = vmul.f32 %v3079, %v3089
        %v3116 = vmul.f32 %v3080, %v3089
        %v3117 = vmul.f32 %v3081, %v3089
        %v3118 = vmul.f32 %v3082, %v3089
        %v3119 = vmul.f32 %v3083, %v3089
        %v3120 = vmul.f32 %v3084, %v3089
        %v3121 = vmul.f32 %v3085, %v3089
        %v3122 = vadd.f32 %v3022, %v3090
        %v3123 = vadd.f32 %v3023, %v3091
        %v3124 = vadd.f32 %v3024, %v3092
        %v3125 = vadd.f32 %v3025, %v3093
        %v3126 = vadd.f32 %v3026, %v3094
        %v3127 = vadd.f32 %v3027, %v3095
        %v3128 = vadd.f32 %v3028, %v3096
        %v3129 = vadd.f32 %v3029, %v3097
        %v3130 = vadd.f32 %v3030, %v3098
        %v3131 = vadd.f32 %v3031, %v3099
        %v3132 = vadd.f32 %v3032, %v3100
        %v3133 = vadd.f32 %v3033, %v3101
        %v3134 = vadd.f32 %v3034, %v3102
        %v3135 = vadd.f32 %v3035, %v3103
        %v3136 = vadd.f32 %v3036, %v3104
        %v3137 = vadd.f32 %v3037, %v3105
        %v3138 = vadd.f32 %v3038, %v3106
        %v3139 = vadd.f32 %v3039, %v3107
        %v3140 = vadd.f32 %v3040, %v3108
        %v3141 = vadd.f32 %v3041, %v3109
        %v3142 = vadd.f32 %v3042, %v3110
        %v3143 = vadd.f32 %v3043, %v3111
        %v3144 = vadd.f32 %v3044, %v3112
        %v3145 = vadd.f32 %v3045, %v3113
        %v3146 = vadd.f32 %v3046, %v3114
        %v3147 = vadd.f32 %v3047, %v3115
        %v3148 = vadd.f32 %v3048, %v3116
        %v3149 = vadd.f32 %v3049, %v3117
        %v3150 = vadd.f32 %v3050, %v3118
        %v3151 = vadd.f32 %v3051, %v3119
        %v3152 = vadd.f32 %v3052, %v3120
        %v3153 = vadd.f32 %v3053, %v3121
        %v3154 = vld [vmem:[%s477 + $0x5] sm:$0xff]
        %v3155 = vld [vmem:[%s477 + $0xd] sm:$0xff]
        %v3156 = vld [vmem:[%s477 + $0x1d] sm:$0xff]
        %v3157 = vld [vmem:[%s477 + $0x25] sm:$0xff]
        %v3158 = vld [vmem:[%s477 + $0x35] sm:$0xff]
        %v3159 = vld [vmem:[%s477 + $0x3d] sm:$0xff]
        %v3160 = vld [vmem:[%s477 + $0x4d] sm:$0xff]
        %v3161 = vld [vmem:[%s477 + $0x55] sm:$0xff]
        %v3162 = vld [vmem:[%s477 + $0x65] sm:$0xff]
        %v3163 = vld [vmem:[%s477 + $0x6d] sm:$0xff]
        %v3164 = vld [vmem:[%s477 + $0x7d] sm:$0xff]
        %v3165 = vld [vmem:[%s477 + $0x85] sm:$0xff]
        %v3166 = vld [vmem:[%s477 + $0x95] sm:$0xff]
        %v3167 = vld [vmem:[%s477 + $0x9d] sm:$0xff]
        %v3168 = vld [vmem:[%s477 + $0xad] sm:$0xff]
        %v3169 = vld [vmem:[%s477 + $0xb5] sm:$0xff]
        %v3170 = vld [vmem:[%s477 + $0xc5] sm:$0xff]
        %v3171 = vld [vmem:[%s477 + $0xcd] sm:$0xff]
        %v3172 = vld [vmem:[%s477 + $0xdd] sm:$0xff]
        %v3173 = vld [vmem:[%s477 + $0xe5] sm:$0xff]
        %v3174 = vld [vmem:[%s477 + $0xf5] sm:$0xff]
        %v3175 = vld [vmem:[%s477 + $0xfd] sm:$0xff]
        %v3176 = vld [vmem:[%s477 + $0x10d] sm:$0xff]
        %v3177 = vld [vmem:[%s477 + $0x115] sm:$0xff]
        %v3178 = vld [vmem:[%s477 + $0x125] sm:$0xff]
        %v3179 = vld [vmem:[%s477 + $0x12d] sm:$0xff]
        %v3180 = vld [vmem:[%s477 + $0x13d] sm:$0xff]
        %v3181 = vld [vmem:[%s477 + $0x145] sm:$0xff]
        %v3182 = vld [vmem:[%s477 + $0x155] sm:$0xff]
        %v3183 = vld [vmem:[%s477 + $0x15d] sm:$0xff]
        %v3184 = vld [vmem:[%s477 + $0x16d] sm:$0xff]
        %v3185 = vld [vmem:[%s477 + $0x175] sm:$0xff]
        %v3186 = vlaneseq
        %v3187 = vshrl.u32 %v3186, 7
        %v3188 = vsub.s32 5, %v3187
        %v3189 = vrot.slane %v513, %v3188
        %v3190 = vmul.f32 %v3154, %v3189
        %v3191 = vmul.f32 %v3155, %v3189
        %v3192 = vmul.f32 %v3156, %v3189
        %v3193 = vmul.f32 %v3157, %v3189
        %v3194 = vmul.f32 %v3158, %v3189
        %v3195 = vmul.f32 %v3159, %v3189
        %v3196 = vmul.f32 %v3160, %v3189
        %v3197 = vmul.f32 %v3161, %v3189
        %v3198 = vmul.f32 %v3162, %v3189
        %v3199 = vmul.f32 %v3163, %v3189
        %v3200 = vmul.f32 %v3164, %v3189
        %v3201 = vmul.f32 %v3165, %v3189
        %v3202 = vmul.f32 %v3166, %v3189
        %v3203 = vmul.f32 %v3167, %v3189
        %v3204 = vmul.f32 %v3168, %v3189
        %v3205 = vmul.f32 %v3169, %v3189
        %v3206 = vmul.f32 %v3170, %v3189
        %v3207 = vmul.f32 %v3171, %v3189
        %v3208 = vmul.f32 %v3172, %v3189
        %v3209 = vmul.f32 %v3173, %v3189
        %v3210 = vmul.f32 %v3174, %v3189
        %v3211 = vmul.f32 %v3175, %v3189
        %v3212 = vmul.f32 %v3176, %v3189
        %v3213 = vmul.f32 %v3177, %v3189
        %v3214 = vmul.f32 %v3178, %v3189
        %v3215 = vmul.f32 %v3179, %v3189
        %v3216 = vmul.f32 %v3180, %v3189
        %v3217 = vmul.f32 %v3181, %v3189
        %v3218 = vmul.f32 %v3182, %v3189
        %v3219 = vmul.f32 %v3183, %v3189
        %v3220 = vmul.f32 %v3184, %v3189
        %v3221 = vmul.f32 %v3185, %v3189
        %v3222 = vadd.f32 %v3122, %v3190
        %v3223 = vadd.f32 %v3123, %v3191
        %v3224 = vadd.f32 %v3124, %v3192
        %v3225 = vadd.f32 %v3125, %v3193
        %v3226 = vadd.f32 %v3126, %v3194
        %v3227 = vadd.f32 %v3127, %v3195
        %v3228 = vadd.f32 %v3128, %v3196
        %v3229 = vadd.f32 %v3129, %v3197
        %v3230 = vadd.f32 %v3130, %v3198
        %v3231 = vadd.f32 %v3131, %v3199
        %v3232 = vadd.f32 %v3132, %v3200
        %v3233 = vadd.f32 %v3133, %v3201
        %v3234 = vadd.f32 %v3134, %v3202
        %v3235 = vadd.f32 %v3135, %v3203
        %v3236 = vadd.f32 %v3136, %v3204
        %v3237 = vadd.f32 %v3137, %v3205
        %v3238 = vadd.f32 %v3138, %v3206
        %v3239 = vadd.f32 %v3139, %v3207
        %v3240 = vadd.f32 %v3140, %v3208
        %v3241 = vadd.f32 %v3141, %v3209
        %v3242 = vadd.f32 %v3142, %v3210
        %v3243 = vadd.f32 %v3143, %v3211
        %v3244 = vadd.f32 %v3144, %v3212
        %v3245 = vadd.f32 %v3145, %v3213
        %v3246 = vadd.f32 %v3146, %v3214
        %v3247 = vadd.f32 %v3147, %v3215
        %v3248 = vadd.f32 %v3148, %v3216
        %v3249 = vadd.f32 %v3149, %v3217
        %v3250 = vadd.f32 %v3150, %v3218
        %v3251 = vadd.f32 %v3151, %v3219
        %v3252 = vadd.f32 %v3152, %v3220
        %v3253 = vadd.f32 %v3153, %v3221
        %v3254 = vld [vmem:[%s477 + $0x6] sm:$0xff]
        %v3255 = vld [vmem:[%s477 + $0xe] sm:$0xff]
        %v3256 = vld [vmem:[%s477 + $0x1e] sm:$0xff]
        %v3257 = vld [vmem:[%s477 + $0x26] sm:$0xff]
        %v3258 = vld [vmem:[%s477 + $0x36] sm:$0xff]
        %v3259 = vld [vmem:[%s477 + $0x3e] sm:$0xff]
        %v3260 = vld [vmem:[%s477 + $0x4e] sm:$0xff]
        %v3261 = vld [vmem:[%s477 + $0x56] sm:$0xff]
        %v3262 = vld [vmem:[%s477 + $0x66] sm:$0xff]
        %v3263 = vld [vmem:[%s477 + $0x6e] sm:$0xff]
        %v3264 = vld [vmem:[%s477 + $0x7e] sm:$0xff]
        %v3265 = vld [vmem:[%s477 + $0x86] sm:$0xff]
        %v3266 = vld [vmem:[%s477 + $0x96] sm:$0xff]
        %v3267 = vld [vmem:[%s477 + $0x9e] sm:$0xff]
        %v3268 = vld [vmem:[%s477 + $0xae] sm:$0xff]
        %v3269 = vld [vmem:[%s477 + $0xb6] sm:$0xff]
        %v3270 = vld [vmem:[%s477 + $0xc6] sm:$0xff]
        %v3271 = vld [vmem:[%s477 + $0xce] sm:$0xff]
        %v3272 = vld [vmem:[%s477 + $0xde] sm:$0xff]
        %v3273 = vld [vmem:[%s477 + $0xe6] sm:$0xff]
        %v3274 = vld [vmem:[%s477 + $0xf6] sm:$0xff]
        %v3275 = vld [vmem:[%s477 + $0xfe] sm:$0xff]
        %v3276 = vld [vmem:[%s477 + $0x10e] sm:$0xff]
        %v3277 = vld [vmem:[%s477 + $0x116] sm:$0xff]
        %v3278 = vld [vmem:[%s477 + $0x126] sm:$0xff]
        %v3279 = vld [vmem:[%s477 + $0x12e] sm:$0xff]
        %v3280 = vld [vmem:[%s477 + $0x13e] sm:$0xff]
        %v3281 = vld [vmem:[%s477 + $0x146] sm:$0xff]
        %v3282 = vld [vmem:[%s477 + $0x156] sm:$0xff]
        %v3283 = vld [vmem:[%s477 + $0x15e] sm:$0xff]
        %v3284 = vld [vmem:[%s477 + $0x16e] sm:$0xff]
        %v3285 = vld [vmem:[%s477 + $0x176] sm:$0xff]
        %v3286 = vlaneseq
        %v3287 = vshrl.u32 %v3286, 7
        %v3288 = vsub.s32 6, %v3287
        %v3289 = vrot.slane %v513, %v3288
        %v3290 = vmul.f32 %v3254, %v3289
        %v3291 = vmul.f32 %v3255, %v3289
        %v3292 = vmul.f32 %v3256, %v3289
        %v3293 = vmul.f32 %v3257, %v3289
        %v3294 = vmul.f32 %v3258, %v3289
        %v3295 = vmul.f32 %v3259, %v3289
        %v3296 = vmul.f32 %v3260, %v3289
        %v3297 = vmul.f32 %v3261, %v3289
        %v3298 = vmul.f32 %v3262, %v3289
        %v3299 = vmul.f32 %v3263, %v3289
        %v3300 = vmul.f32 %v3264, %v3289
        %v3301 = vmul.f32 %v3265, %v3289
        %v3302 = vmul.f32 %v3266, %v3289
        %v3303 = vmul.f32 %v3267, %v3289
        %v3304 = vmul.f32 %v3268, %v3289
        %v3305 = vmul.f32 %v3269, %v3289
        %v3306 = vmul.f32 %v3270, %v3289
        %v3307 = vmul.f32 %v3271, %v3289
        %v3308 = vmul.f32 %v3272, %v3289
        %v3309 = vmul.f32 %v3273, %v3289
        %v3310 = vmul.f32 %v3274, %v3289
        %v3311 = vmul.f32 %v3275, %v3289
        %v3312 = vmul.f32 %v3276, %v3289
        %v3313 = vmul.f32 %v3277, %v3289
        %v3314 = vmul.f32 %v3278, %v3289
        %v3315 = vmul.f32 %v3279, %v3289
        %v3316 = vmul.f32 %v3280, %v3289
        %v3317 = vmul.f32 %v3281, %v3289
        %v3318 = vmul.f32 %v3282, %v3289
        %v3319 = vmul.f32 %v3283, %v3289
        %v3320 = vmul.f32 %v3284, %v3289
        %v3321 = vmul.f32 %v3285, %v3289
        %v3322 = vadd.f32 %v3222, %v3290
        %v3323 = vadd.f32 %v3223, %v3291
        %v3324 = vadd.f32 %v3224, %v3292
        %v3325 = vadd.f32 %v3225, %v3293
        %v3326 = vadd.f32 %v3226, %v3294
        %v3327 = vadd.f32 %v3227, %v3295
        %v3328 = vadd.f32 %v3228, %v3296
        %v3329 = vadd.f32 %v3229, %v3297
        %v3330 = vadd.f32 %v3230, %v3298
        %v3331 = vadd.f32 %v3231, %v3299
        %v3332 = vadd.f32 %v3232, %v3300
        %v3333 = vadd.f32 %v3233, %v3301
        %v3334 = vadd.f32 %v3234, %v3302
        %v3335 = vadd.f32 %v3235, %v3303
        %v3336 = vadd.f32 %v3236, %v3304
        %v3337 = vadd.f32 %v3237, %v3305
        %v3338 = vadd.f32 %v3238, %v3306
        %v3339 = vadd.f32 %v3239, %v3307
        %v3340 = vadd.f32 %v3240, %v3308
        %v3341 = vadd.f32 %v3241, %v3309
        %v3342 = vadd.f32 %v3242, %v3310
        %v3343 = vadd.f32 %v3243, %v3311
        %v3344 = vadd.f32 %v3244, %v3312
        %v3345 = vadd.f32 %v3245, %v3313
        %v3346 = vadd.f32 %v3246, %v3314
        %v3347 = vadd.f32 %v3247, %v3315
        %v3348 = vadd.f32 %v3248, %v3316
        %v3349 = vadd.f32 %v3249, %v3317
        %v3350 = vadd.f32 %v3250, %v3318
        %v3351 = vadd.f32 %v3251, %v3319
        %v3352 = vadd.f32 %v3252, %v3320
        %v3353 = vadd.f32 %v3253, %v3321
        %s3354 = scalar_lea.vmem [#allocation2], 96
        %v3355 = vld [vmem:[%s3354] sm:$0xff]
        %v3356 = vld [vmem:[%s3354 + $0x8] sm:$0xff]
        %v3357 = vld [vmem:[%s3354 + $0x18] sm:$0xff]
        %v3358 = vld [vmem:[%s3354 + $0x20] sm:$0xff]
        %v3359 = vld [vmem:[%s3354 + $0x30] sm:$0xff]
        %v3360 = vld [vmem:[%s3354 + $0x38] sm:$0xff]
        %v3361 = vld [vmem:[%s3354 + $0x48] sm:$0xff]
        %v3362 = vld [vmem:[%s3354 + $0x50] sm:$0xff]
        %v3363 = vld [vmem:[%s3354 + $0x60] sm:$0xff]
        %v3364 = vld [vmem:[%s3354 + $0x68] sm:$0xff]
        %v3365 = vld [vmem:[%s3354 + $0x78] sm:$0xff]
        %v3366 = vld [vmem:[%s3354 + $0x80] sm:$0xff]
        %v3367 = vld [vmem:[%s3354 + $0x90] sm:$0xff]
        %v3368 = vld [vmem:[%s3354 + $0x98] sm:$0xff]
        %v3369 = vld [vmem:[%s3354 + $0xa8] sm:$0xff]
        %v3370 = vld [vmem:[%s3354 + $0xb0] sm:$0xff]
        %v3371 = vld [vmem:[%s3354 + $0xc0] sm:$0xff]
        %v3372 = vld [vmem:[%s3354 + $0xc8] sm:$0xff]
        %v3373 = vld [vmem:[%s3354 + $0xd8] sm:$0xff]
        %v3374 = vld [vmem:[%s3354 + $0xe0] sm:$0xff]
        %v3375 = vld [vmem:[%s3354 + $0xf0] sm:$0xff]
        %v3376 = vld [vmem:[%s3354 + $0xf8] sm:$0xff]
        %v3377 = vld [vmem:[%s3354 + $0x108] sm:$0xff]
        %v3378 = vld [vmem:[%s3354 + $0x110] sm:$0xff]
        %v3379 = vld [vmem:[%s3354 + $0x120] sm:$0xff]
        %v3380 = vld [vmem:[%s3354 + $0x128] sm:$0xff]
        %v3381 = vld [vmem:[%s3354 + $0x138] sm:$0xff]
        %v3382 = vld [vmem:[%s3354 + $0x140] sm:$0xff]
        %v3383 = vld [vmem:[%s3354 + $0x150] sm:$0xff]
        %v3384 = vld [vmem:[%s3354 + $0x158] sm:$0xff]
        %v3385 = vld [vmem:[%s3354 + $0x168] sm:$0xff]
        %v3386 = vld [vmem:[%s3354 + $0x170] sm:$0xff]
        %v3387 = vlaneseq
        %v3388 = vshrl.u32 %v3387, 7
        %v3389 = vsub.s32 0, %v3388
        %v3390 = vrot.slane %v514, %v3389
        %v3391 = vmul.f32 %v3355, %v3390
        %v3392 = vmul.f32 %v3356, %v3390
        %v3393 = vmul.f32 %v3357, %v3390
        %v3394 = vmul.f32 %v3358, %v3390
        %v3395 = vmul.f32 %v3359, %v3390
        %v3396 = vmul.f32 %v3360, %v3390
        %v3397 = vmul.f32 %v3361, %v3390
        %v3398 = vmul.f32 %v3362, %v3390
        %v3399 = vmul.f32 %v3363, %v3390
        %v3400 = vmul.f32 %v3364, %v3390
        %v3401 = vmul.f32 %v3365, %v3390
        %v3402 = vmul.f32 %v3366, %v3390
        %v3403 = vmul.f32 %v3367, %v3390
        %v3404 = vmul.f32 %v3368, %v3390
        %v3405 = vmul.f32 %v3369, %v3390
        %v3406 = vmul.f32 %v3370, %v3390
        %v3407 = vmul.f32 %v3371, %v3390
        %v3408 = vmul.f32 %v3372, %v3390
        %v3409 = vmul.f32 %v3373, %v3390
        %v3410 = vmul.f32 %v3374, %v3390
        %v3411 = vmul.f32 %v3375, %v3390
        %v3412 = vmul.f32 %v3376, %v3390
        %v3413 = vmul.f32 %v3377, %v3390
        %v3414 = vmul.f32 %v3378, %v3390
        %v3415 = vmul.f32 %v3379, %v3390
        %v3416 = vmul.f32 %v3380, %v3390
        %v3417 = vmul.f32 %v3381, %v3390
        %v3418 = vmul.f32 %v3382, %v3390
        %v3419 = vmul.f32 %v3383, %v3390
        %v3420 = vmul.f32 %v3384, %v3390
        %v3421 = vmul.f32 %v3385, %v3390
        %v3422 = vmul.f32 %v3386, %v3390
        %v3423 = vadd.f32 %v3322, %v3391
        %v3424 = vadd.f32 %v3323, %v3392
        %v3425 = vadd.f32 %v3324, %v3393
        %v3426 = vadd.f32 %v3325, %v3394
        %v3427 = vadd.f32 %v3326, %v3395
        %v3428 = vadd.f32 %v3327, %v3396
        %v3429 = vadd.f32 %v3328, %v3397
        %v3430 = vadd.f32 %v3329, %v3398
        %v3431 = vadd.f32 %v3330, %v3399
        %v3432 = vadd.f32 %v3331, %v3400
        %v3433 = vadd.f32 %v3332, %v3401
        %v3434 = vadd.f32 %v3333, %v3402
        %v3435 = vadd.f32 %v3334, %v3403
        %v3436 = vadd.f32 %v3335, %v3404
        %v3437 = vadd.f32 %v3336, %v3405
        %v3438 = vadd.f32 %v3337, %v3406
        %v3439 = vadd.f32 %v3338, %v3407
        %v3440 = vadd.f32 %v3339, %v3408
        %v3441 = vadd.f32 %v3340, %v3409
        %v3442 = vadd.f32 %v3341, %v3410
        %v3443 = vadd.f32 %v3342, %v3411
        %v3444 = vadd.f32 %v3343, %v3412
        %v3445 = vadd.f32 %v3344, %v3413
        %v3446 = vadd.f32 %v3345, %v3414
        %v3447 = vadd.f32 %v3346, %v3415
        %v3448 = vadd.f32 %v3347, %v3416
        %v3449 = vadd.f32 %v3348, %v3417
        %v3450 = vadd.f32 %v3349, %v3418
        %v3451 = vadd.f32 %v3350, %v3419
        %v3452 = vadd.f32 %v3351, %v3420
        %v3453 = vadd.f32 %v3352, %v3421
        %v3454 = vadd.f32 %v3353, %v3422
        %v3455 = vld [vmem:[%s3354 + $0x1] sm:$0xff]
        %v3456 = vld [vmem:[%s3354 + $0x9] sm:$0xff]
        %v3457 = vld [vmem:[%s3354 + $0x19] sm:$0xff]
        %v3458 = vld [vmem:[%s3354 + $0x21] sm:$0xff]
        %v3459 = vld [vmem:[%s3354 + $0x31] sm:$0xff]
        %v3460 = vld [vmem:[%s3354 + $0x39] sm:$0xff]
        %v3461 = vld [vmem:[%s3354 + $0x49] sm:$0xff]
        %v3462 = vld [vmem:[%s3354 + $0x51] sm:$0xff]
        %v3463 = vld [vmem:[%s3354 + $0x61] sm:$0xff]
        %v3464 = vld [vmem:[%s3354 + $0x69] sm:$0xff]
        %v3465 = vld [vmem:[%s3354 + $0x79] sm:$0xff]
        %v3466 = vld [vmem:[%s3354 + $0x81] sm:$0xff]
        %v3467 = vld [vmem:[%s3354 + $0x91] sm:$0xff]
        %v3468 = vld [vmem:[%s3354 + $0x99] sm:$0xff]
        %v3469 = vld [vmem:[%s3354 + $0xa9] sm:$0xff]
        %v3470 = vld [vmem:[%s3354 + $0xb1] sm:$0xff]
        %v3471 = vld [vmem:[%s3354 + $0xc1] sm:$0xff]
        %v3472 = vld [vmem:[%s3354 + $0xc9] sm:$0xff]
        %v3473 = vld [vmem:[%s3354 + $0xd9] sm:$0xff]
        %v3474 = vld [vmem:[%s3354 + $0xe1] sm:$0xff]
        %v3475 = vld [vmem:[%s3354 + $0xf1] sm:$0xff]
        %v3476 = vld [vmem:[%s3354 + $0xf9] sm:$0xff]
        %v3477 = vld [vmem:[%s3354 + $0x109] sm:$0xff]
        %v3478 = vld [vmem:[%s3354 + $0x111] sm:$0xff]
        %v3479 = vld [vmem:[%s3354 + $0x121] sm:$0xff]
        %v3480 = vld [vmem:[%s3354 + $0x129] sm:$0xff]
        %v3481 = vld [vmem:[%s3354 + $0x139] sm:$0xff]
        %v3482 = vld [vmem:[%s3354 + $0x141] sm:$0xff]
        %v3483 = vld [vmem:[%s3354 + $0x151] sm:$0xff]
        %v3484 = vld [vmem:[%s3354 + $0x159] sm:$0xff]
        %v3485 = vld [vmem:[%s3354 + $0x169] sm:$0xff]
        %v3486 = vld [vmem:[%s3354 + $0x171] sm:$0xff]
        %v3487 = vlaneseq
        %v3488 = vshrl.u32 %v3487, 7
        %v3489 = vsub.s32 1, %v3488
        %v3490 = vrot.slane %v514, %v3489
        %v3491 = vmul.f32 %v3455, %v3490
        %v3492 = vmul.f32 %v3456, %v3490
        %v3493 = vmul.f32 %v3457, %v3490
        %v3494 = vmul.f32 %v3458, %v3490
        %v3495 = vmul.f32 %v3459, %v3490
        %v3496 = vmul.f32 %v3460, %v3490
        %v3497 = vmul.f32 %v3461, %v3490
        %v3498 = vmul.f32 %v3462, %v3490
        %v3499 = vmul.f32 %v3463, %v3490
        %v3500 = vmul.f32 %v3464, %v3490
        %v3501 = vmul.f32 %v3465, %v3490
        %v3502 = vmul.f32 %v3466, %v3490
        %v3503 = vmul.f32 %v3467, %v3490
        %v3504 = vmul.f32 %v3468, %v3490
        %v3505 = vmul.f32 %v3469, %v3490
        %v3506 = vmul.f32 %v3470, %v3490
        %v3507 = vmul.f32 %v3471, %v3490
        %v3508 = vmul.f32 %v3472, %v3490
        %v3509 = vmul.f32 %v3473, %v3490
        %v3510 = vmul.f32 %v3474, %v3490
        %v3511 = vmul.f32 %v3475, %v3490
        %v3512 = vmul.f32 %v3476, %v3490
        %v3513 = vmul.f32 %v3477, %v3490
        %v3514 = vmul.f32 %v3478, %v3490
        %v3515 = vmul.f32 %v3479, %v3490
        %v3516 = vmul.f32 %v3480, %v3490
        %v3517 = vmul.f32 %v3481, %v3490
        %v3518 = vmul.f32 %v3482, %v3490
        %v3519 = vmul.f32 %v3483, %v3490
        %v3520 = vmul.f32 %v3484, %v3490
        %v3521 = vmul.f32 %v3485, %v3490
        %v3522 = vmul.f32 %v3486, %v3490
        %v3523 = vadd.f32 %v3423, %v3491
        %v3524 = vadd.f32 %v3424, %v3492
        %v3525 = vadd.f32 %v3425, %v3493
        %v3526 = vadd.f32 %v3426, %v3494
        %v3527 = vadd.f32 %v3427, %v3495
        %v3528 = vadd.f32 %v3428, %v3496
        %v3529 = vadd.f32 %v3429, %v3497
        %v3530 = vadd.f32 %v3430, %v3498
        %v3531 = vadd.f32 %v3431, %v3499
        %v3532 = vadd.f32 %v3432, %v3500
        %v3533 = vadd.f32 %v3433, %v3501
        %v3534 = vadd.f32 %v3434, %v3502
        %v3535 = vadd.f32 %v3435, %v3503
        %v3536 = vadd.f32 %v3436, %v3504
        %v3537 = vadd.f32 %v3437, %v3505
        %v3538 = vadd.f32 %v3438, %v3506
        %v3539 = vadd.f32 %v3439, %v3507
        %v3540 = vadd.f32 %v3440, %v3508
        %v3541 = vadd.f32 %v3441, %v3509
        %v3542 = vadd.f32 %v3442, %v3510
        %v3543 = vadd.f32 %v3443, %v3511
        %v3544 = vadd.f32 %v3444, %v3512
        %v3545 = vadd.f32 %v3445, %v3513
        %v3546 = vadd.f32 %v3446, %v3514
        %v3547 = vadd.f32 %v3447, %v3515
        %v3548 = vadd.f32 %v3448, %v3516
        %v3549 = vadd.f32 %v3449, %v3517
        %v3550 = vadd.f32 %v3450, %v3518
        %v3551 = vadd.f32 %v3451, %v3519
        %v3552 = vadd.f32 %v3452, %v3520
        %v3553 = vadd.f32 %v3453, %v3521
        %v3554 = vadd.f32 %v3454, %v3522
        %v3555 = vld [vmem:[%s3354 + $0x2] sm:$0xff]
        %v3556 = vld [vmem:[%s3354 + $0xa] sm:$0xff]
        %v3557 = vld [vmem:[%s3354 + $0x1a] sm:$0xff]
        %v3558 = vld [vmem:[%s3354 + $0x22] sm:$0xff]
        %v3559 = vld [vmem:[%s3354 + $0x32] sm:$0xff]
        %v3560 = vld [vmem:[%s3354 + $0x3a] sm:$0xff]
        %v3561 = vld [vmem:[%s3354 + $0x4a] sm:$0xff]
        %v3562 = vld [vmem:[%s3354 + $0x52] sm:$0xff]
        %v3563 = vld [vmem:[%s3354 + $0x62] sm:$0xff]
        %v3564 = vld [vmem:[%s3354 + $0x6a] sm:$0xff]
        %v3565 = vld [vmem:[%s3354 + $0x7a] sm:$0xff]
        %v3566 = vld [vmem:[%s3354 + $0x82] sm:$0xff]
        %v3567 = vld [vmem:[%s3354 + $0x92] sm:$0xff]
        %v3568 = vld [vmem:[%s3354 + $0x9a] sm:$0xff]
        %v3569 = vld [vmem:[%s3354 + $0xaa] sm:$0xff]
        %v3570 = vld [vmem:[%s3354 + $0xb2] sm:$0xff]
        %v3571 = vld [vmem:[%s3354 + $0xc2] sm:$0xff]
        %v3572 = vld [vmem:[%s3354 + $0xca] sm:$0xff]
        %v3573 = vld [vmem:[%s3354 + $0xda] sm:$0xff]
        %v3574 = vld [vmem:[%s3354 + $0xe2] sm:$0xff]
        %v3575 = vld [vmem:[%s3354 + $0xf2] sm:$0xff]
        %v3576 = vld [vmem:[%s3354 + $0xfa] sm:$0xff]
        %v3577 = vld [vmem:[%s3354 + $0x10a] sm:$0xff]
        %v3578 = vld [vmem:[%s3354 + $0x112] sm:$0xff]
        %v3579 = vld [vmem:[%s3354 + $0x122] sm:$0xff]
        %v3580 = vld [vmem:[%s3354 + $0x12a] sm:$0xff]
        %v3581 = vld [vmem:[%s3354 + $0x13a] sm:$0xff]
        %v3582 = vld [vmem:[%s3354 + $0x142] sm:$0xff]
        %v3583 = vld [vmem:[%s3354 + $0x152] sm:$0xff]
        %v3584 = vld [vmem:[%s3354 + $0x15a] sm:$0xff]
        %v3585 = vld [vmem:[%s3354 + $0x16a] sm:$0xff]
        %v3586 = vld [vmem:[%s3354 + $0x172] sm:$0xff]
        %v3587 = vlaneseq
        %v3588 = vshrl.u32 %v3587, 7
        %v3589 = vsub.s32 2, %v3588
        %v3590 = vrot.slane %v514, %v3589
        %v3591 = vmul.f32 %v3555, %v3590
        %v3592 = vmul.f32 %v3556, %v3590
        %v3593 = vmul.f32 %v3557, %v3590
        %v3594 = vmul.f32 %v3558, %v3590
        %v3595 = vmul.f32 %v3559, %v3590
        %v3596 = vmul.f32 %v3560, %v3590
        %v3597 = vmul.f32 %v3561, %v3590
        %v3598 = vmul.f32 %v3562, %v3590
        %v3599 = vmul.f32 %v3563, %v3590
        %v3600 = vmul.f32 %v3564, %v3590
        %v3601 = vmul.f32 %v3565, %v3590
        %v3602 = vmul.f32 %v3566, %v3590
        %v3603 = vmul.f32 %v3567, %v3590
        %v3604 = vmul.f32 %v3568, %v3590
        %v3605 = vmul.f32 %v3569, %v3590
        %v3606 = vmul.f32 %v3570, %v3590
        %v3607 = vmul.f32 %v3571, %v3590
        %v3608 = vmul.f32 %v3572, %v3590
        %v3609 = vmul.f32 %v3573, %v3590
        %v3610 = vmul.f32 %v3574, %v3590
        %v3611 = vmul.f32 %v3575, %v3590
        %v3612 = vmul.f32 %v3576, %v3590
        %v3613 = vmul.f32 %v3577, %v3590
        %v3614 = vmul.f32 %v3578, %v3590
        %v3615 = vmul.f32 %v3579, %v3590
        %v3616 = vmul.f32 %v3580, %v3590
        %v3617 = vmul.f32 %v3581, %v3590
        %v3618 = vmul.f32 %v3582, %v3590
        %v3619 = vmul.f32 %v3583, %v3590
        %v3620 = vmul.f32 %v3584, %v3590
        %v3621 = vmul.f32 %v3585, %v3590
        %v3622 = vmul.f32 %v3586, %v3590
        %v3623 = vadd.f32 %v3523, %v3591
        %v3624 = vadd.f32 %v3524, %v3592
        %v3625 = vadd.f32 %v3525, %v3593
        %v3626 = vadd.f32 %v3526, %v3594
        %v3627 = vadd.f32 %v3527, %v3595
        %v3628 = vadd.f32 %v3528, %v3596
        %v3629 = vadd.f32 %v3529, %v3597
        %v3630 = vadd.f32 %v3530, %v3598
        %v3631 = vadd.f32 %v3531, %v3599
        %v3632 = vadd.f32 %v3532, %v3600
        %v3633 = vadd.f32 %v3533, %v3601
        %v3634 = vadd.f32 %v3534, %v3602
        %v3635 = vadd.f32 %v3535, %v3603
        %v3636 = vadd.f32 %v3536, %v3604
        %v3637 = vadd.f32 %v3537, %v3605
        %v3638 = vadd.f32 %v3538, %v3606
        %v3639 = vadd.f32 %v3539, %v3607
        %v3640 = vadd.f32 %v3540, %v3608
        %v3641 = vadd.f32 %v3541, %v3609
        %v3642 = vadd.f32 %v3542, %v3610
        %v3643 = vadd.f32 %v3543, %v3611
        %v3644 = vadd.f32 %v3544, %v3612
        %v3645 = vadd.f32 %v3545, %v3613
        %v3646 = vadd.f32 %v3546, %v3614
        %v3647 = vadd.f32 %v3547, %v3615
        %v3648 = vadd.f32 %v3548, %v3616
        %v3649 = vadd.f32 %v3549, %v3617
        %v3650 = vadd.f32 %v3550, %v3618
        %v3651 = vadd.f32 %v3551, %v3619
        %v3652 = vadd.f32 %v3552, %v3620
        %v3653 = vadd.f32 %v3553, %v3621
        %v3654 = vadd.f32 %v3554, %v3622
        %v3655 = vld [vmem:[%s3354 + $0x3] sm:$0xff]
        %v3656 = vld [vmem:[%s3354 + $0xb] sm:$0xff]
        %v3657 = vld [vmem:[%s3354 + $0x1b] sm:$0xff]
        %v3658 = vld [vmem:[%s3354 + $0x23] sm:$0xff]
        %v3659 = vld [vmem:[%s3354 + $0x33] sm:$0xff]
        %v3660 = vld [vmem:[%s3354 + $0x3b] sm:$0xff]
        %v3661 = vld [vmem:[%s3354 + $0x4b] sm:$0xff]
        %v3662 = vld [vmem:[%s3354 + $0x53] sm:$0xff]
        %v3663 = vld [vmem:[%s3354 + $0x63] sm:$0xff]
        %v3664 = vld [vmem:[%s3354 + $0x6b] sm:$0xff]
        %v3665 = vld [vmem:[%s3354 + $0x7b] sm:$0xff]
        %v3666 = vld [vmem:[%s3354 + $0x83] sm:$0xff]
        %v3667 = vld [vmem:[%s3354 + $0x93] sm:$0xff]
        %v3668 = vld [vmem:[%s3354 + $0x9b] sm:$0xff]
        %v3669 = vld [vmem:[%s3354 + $0xab] sm:$0xff]
        %v3670 = vld [vmem:[%s3354 + $0xb3] sm:$0xff]
        %v3671 = vld [vmem:[%s3354 + $0xc3] sm:$0xff]
        %v3672 = vld [vmem:[%s3354 + $0xcb] sm:$0xff]
        %v3673 = vld [vmem:[%s3354 + $0xdb] sm:$0xff]
        %v3674 = vld [vmem:[%s3354 + $0xe3] sm:$0xff]
        %v3675 = vld [vmem:[%s3354 + $0xf3] sm:$0xff]
        %v3676 = vld [vmem:[%s3354 + $0xfb] sm:$0xff]
        %v3677 = vld [vmem:[%s3354 + $0x10b] sm:$0xff]
        %v3678 = vld [vmem:[%s3354 + $0x113] sm:$0xff]
        %v3679 = vld [vmem:[%s3354 + $0x123] sm:$0xff]
        %v3680 = vld [vmem:[%s3354 + $0x12b] sm:$0xff]
        %v3681 = vld [vmem:[%s3354 + $0x13b] sm:$0xff]
        %v3682 = vld [vmem:[%s3354 + $0x143] sm:$0xff]
        %v3683 = vld [vmem:[%s3354 + $0x153] sm:$0xff]
        %v3684 = vld [vmem:[%s3354 + $0x15b] sm:$0xff]
        %v3685 = vld [vmem:[%s3354 + $0x16b] sm:$0xff]
        %v3686 = vld [vmem:[%s3354 + $0x173] sm:$0xff]
        %v3687 = vlaneseq
        %v3688 = vshrl.u32 %v3687, 7
        %v3689 = vsub.s32 3, %v3688
        %v3690 = vrot.slane %v514, %v3689
        %v3691 = vmul.f32 %v3655, %v3690
        %v3692 = vmul.f32 %v3656, %v3690
        %v3693 = vmul.f32 %v3657, %v3690
        %v3694 = vmul.f32 %v3658, %v3690
        %v3695 = vmul.f32 %v3659, %v3690
        %v3696 = vmul.f32 %v3660, %v3690
        %v3697 = vmul.f32 %v3661, %v3690
        %v3698 = vmul.f32 %v3662, %v3690
        %v3699 = vmul.f32 %v3663, %v3690
        %v3700 = vmul.f32 %v3664, %v3690
        %v3701 = vmul.f32 %v3665, %v3690
        %v3702 = vmul.f32 %v3666, %v3690
        %v3703 = vmul.f32 %v3667, %v3690
        %v3704 = vmul.f32 %v3668, %v3690
        %v3705 = vmul.f32 %v3669, %v3690
        %v3706 = vmul.f32 %v3670, %v3690
        %v3707 = vmul.f32 %v3671, %v3690
        %v3708 = vmul.f32 %v3672, %v3690
        %v3709 = vmul.f32 %v3673, %v3690
        %v3710 = vmul.f32 %v3674, %v3690
        %v3711 = vmul.f32 %v3675, %v3690
        %v3712 = vmul.f32 %v3676, %v3690
        %v3713 = vmul.f32 %v3677, %v3690
        %v3714 = vmul.f32 %v3678, %v3690
        %v3715 = vmul.f32 %v3679, %v3690
        %v3716 = vmul.f32 %v3680, %v3690
        %v3717 = vmul.f32 %v3681, %v3690
        %v3718 = vmul.f32 %v3682, %v3690
        %v3719 = vmul.f32 %v3683, %v3690
        %v3720 = vmul.f32 %v3684, %v3690
        %v3721 = vmul.f32 %v3685, %v3690
        %v3722 = vmul.f32 %v3686, %v3690
        %v3723 = vadd.f32 %v3623, %v3691
        %v3724 = vadd.f32 %v3624, %v3692
        %v3725 = vadd.f32 %v3625, %v3693
        %v3726 = vadd.f32 %v3626, %v3694
        %v3727 = vadd.f32 %v3627, %v3695
        %v3728 = vadd.f32 %v3628, %v3696
        %v3729 = vadd.f32 %v3629, %v3697
        %v3730 = vadd.f32 %v3630, %v3698
        %v3731 = vadd.f32 %v3631, %v3699
        %v3732 = vadd.f32 %v3632, %v3700
        %v3733 = vadd.f32 %v3633, %v3701
        %v3734 = vadd.f32 %v3634, %v3702
        %v3735 = vadd.f32 %v3635, %v3703
        %v3736 = vadd.f32 %v3636, %v3704
        %v3737 = vadd.f32 %v3637, %v3705
        %v3738 = vadd.f32 %v3638, %v3706
        %v3739 = vadd.f32 %v3639, %v3707
        %v3740 = vadd.f32 %v3640, %v3708
        %v3741 = vadd.f32 %v3641, %v3709
        %v3742 = vadd.f32 %v3642, %v3710
        %v3743 = vadd.f32 %v3643, %v3711
        %v3744 = vadd.f32 %v3644, %v3712
        %v3745 = vadd.f32 %v3645, %v3713
        %v3746 = vadd.f32 %v3646, %v3714
        %v3747 = vadd.f32 %v3647, %v3715
        %v3748 = vadd.f32 %v3648, %v3716
        %v3749 = vadd.f32 %v3649, %v3717
        %v3750 = vadd.f32 %v3650, %v3718
        %v3751 = vadd.f32 %v3651, %v3719
        %v3752 = vadd.f32 %v3652, %v3720
        %v3753 = vadd.f32 %v3653, %v3721
        %v3754 = vadd.f32 %v3654, %v3722
        %v3755 = vld [vmem:[%s3354 + $0x4] sm:$0xff]
        %v3756 = vld [vmem:[%s3354 + $0xc] sm:$0xff]
        %v3757 = vld [vmem:[%s3354 + $0x1c] sm:$0xff]
        %v3758 = vld [vmem:[%s3354 + $0x24] sm:$0xff]
        %v3759 = vld [vmem:[%s3354 + $0x34] sm:$0xff]
        %v3760 = vld [vmem:[%s3354 + $0x3c] sm:$0xff]
        %v3761 = vld [vmem:[%s3354 + $0x4c] sm:$0xff]
        %v3762 = vld [vmem:[%s3354 + $0x54] sm:$0xff]
        %v3763 = vld [vmem:[%s3354 + $0x64] sm:$0xff]
        %v3764 = vld [vmem:[%s3354 + $0x6c] sm:$0xff]
        %v3765 = vld [vmem:[%s3354 + $0x7c] sm:$0xff]
        %v3766 = vld [vmem:[%s3354 + $0x84] sm:$0xff]
        %v3767 = vld [vmem:[%s3354 + $0x94] sm:$0xff]
        %v3768 = vld [vmem:[%s3354 + $0x9c] sm:$0xff]
        %v3769 = vld [vmem:[%s3354 + $0xac] sm:$0xff]
        %v3770 = vld [vmem:[%s3354 + $0xb4] sm:$0xff]
        %v3771 = vld [vmem:[%s3354 + $0xc4] sm:$0xff]
        %v3772 = vld [vmem:[%s3354 + $0xcc] sm:$0xff]
        %v3773 = vld [vmem:[%s3354 + $0xdc] sm:$0xff]
        %v3774 = vld [vmem:[%s3354 + $0xe4] sm:$0xff]
        %v3775 = vld [vmem:[%s3354 + $0xf4] sm:$0xff]
        %v3776 = vld [vmem:[%s3354 + $0xfc] sm:$0xff]
        %v3777 = vld [vmem:[%s3354 + $0x10c] sm:$0xff]
        %v3778 = vld [vmem:[%s3354 + $0x114] sm:$0xff]
        %v3779 = vld [vmem:[%s3354 + $0x124] sm:$0xff]
        %v3780 = vld [vmem:[%s3354 + $0x12c] sm:$0xff]
        %v3781 = vld [vmem:[%s3354 + $0x13c] sm:$0xff]
        %v3782 = vld [vmem:[%s3354 + $0x144] sm:$0xff]
        %v3783 = vld [vmem:[%s3354 + $0x154] sm:$0xff]
        %v3784 = vld [vmem:[%s3354 + $0x15c] sm:$0xff]
        %v3785 = vld [vmem:[%s3354 + $0x16c] sm:$0xff]
        %v3786 = vld [vmem:[%s3354 + $0x174] sm:$0xff]
        %v3787 = vlaneseq
        %v3788 = vshrl.u32 %v3787, 7
        %v3789 = vsub.s32 4, %v3788
        %v3790 = vrot.slane %v514, %v3789
        %v3791 = vmul.f32 %v3755, %v3790
        %v3792 = vmul.f32 %v3756, %v3790
        %v3793 = vmul.f32 %v3757, %v3790
        %v3794 = vmul.f32 %v3758, %v3790
        %v3795 = vmul.f32 %v3759, %v3790
        %v3796 = vmul.f32 %v3760, %v3790
        %v3797 = vmul.f32 %v3761, %v3790
        %v3798 = vmul.f32 %v3762, %v3790
        %v3799 = vmul.f32 %v3763, %v3790
        %v3800 = vmul.f32 %v3764, %v3790
        %v3801 = vmul.f32 %v3765, %v3790
        %v3802 = vmul.f32 %v3766, %v3790
        %v3803 = vmul.f32 %v3767, %v3790
        %v3804 = vmul.f32 %v3768, %v3790
        %v3805 = vmul.f32 %v3769, %v3790
        %v3806 = vmul.f32 %v3770, %v3790
        %v3807 = vmul.f32 %v3771, %v3790
        %v3808 = vmul.f32 %v3772, %v3790
        %v3809 = vmul.f32 %v3773, %v3790
        %v3810 = vmul.f32 %v3774, %v3790
        %v3811 = vmul.f32 %v3775, %v3790
        %v3812 = vmul.f32 %v3776, %v3790
        %v3813 = vmul.f32 %v3777, %v3790
        %v3814 = vmul.f32 %v3778, %v3790
        %v3815 = vmul.f32 %v3779, %v3790
        %v3816 = vmul.f32 %v3780, %v3790
        %v3817 = vmul.f32 %v3781, %v3790
        %v3818 = vmul.f32 %v3782, %v3790
        %v3819 = vmul.f32 %v3783, %v3790
        %v3820 = vmul.f32 %v3784, %v3790
        %v3821 = vmul.f32 %v3785, %v3790
        %v3822 = vmul.f32 %v3786, %v3790
        %v3823 = vadd.f32 %v3723, %v3791
        %v3824 = vadd.f32 %v3724, %v3792
        %v3825 = vadd.f32 %v3725, %v3793
        %v3826 = vadd.f32 %v3726, %v3794
        %v3827 = vadd.f32 %v3727, %v3795
        %v3828 = vadd.f32 %v3728, %v3796
        %v3829 = vadd.f32 %v3729, %v3797
        %v3830 = vadd.f32 %v3730, %v3798
        %v3831 = vadd.f32 %v3731, %v3799
        %v3832 = vadd.f32 %v3732, %v3800
        %v3833 = vadd.f32 %v3733, %v3801
        %v3834 = vadd.f32 %v3734, %v3802
        %v3835 = vadd.f32 %v3735, %v3803
        %v3836 = vadd.f32 %v3736, %v3804
        %v3837 = vadd.f32 %v3737, %v3805
        %v3838 = vadd.f32 %v3738, %v3806
        %v3839 = vadd.f32 %v3739, %v3807
        %v3840 = vadd.f32 %v3740, %v3808
        %v3841 = vadd.f32 %v3741, %v3809
        %v3842 = vadd.f32 %v3742, %v3810
        %v3843 = vadd.f32 %v3743, %v3811
        %v3844 = vadd.f32 %v3744, %v3812
        %v3845 = vadd.f32 %v3745, %v3813
        %v3846 = vadd.f32 %v3746, %v3814
        %v3847 = vadd.f32 %v3747, %v3815
        %v3848 = vadd.f32 %v3748, %v3816
        %v3849 = vadd.f32 %v3749, %v3817
        %v3850 = vadd.f32 %v3750, %v3818
        %v3851 = vadd.f32 %v3751, %v3819
        %v3852 = vadd.f32 %v3752, %v3820
        %v3853 = vadd.f32 %v3753, %v3821
        %v3854 = vadd.f32 %v3754, %v3822
        %v3855 = vld [vmem:[%s3354 + $0x5] sm:$0xff]
        %v3856 = vld [vmem:[%s3354 + $0xd] sm:$0xff]
        %v3857 = vld [vmem:[%s3354 + $0x1d] sm:$0xff]
        %v3858 = vld [vmem:[%s3354 + $0x25] sm:$0xff]
        %v3859 = vld [vmem:[%s3354 + $0x35] sm:$0xff]
        %v3860 = vld [vmem:[%s3354 + $0x3d] sm:$0xff]
        %v3861 = vld [vmem:[%s3354 + $0x4d] sm:$0xff]
        %v3862 = vld [vmem:[%s3354 + $0x55] sm:$0xff]
        %v3863 = vld [vmem:[%s3354 + $0x65] sm:$0xff]
        %v3864 = vld [vmem:[%s3354 + $0x6d] sm:$0xff]
        %v3865 = vld [vmem:[%s3354 + $0x7d] sm:$0xff]
        %v3866 = vld [vmem:[%s3354 + $0x85] sm:$0xff]
        %v3867 = vld [vmem:[%s3354 + $0x95] sm:$0xff]
        %v3868 = vld [vmem:[%s3354 + $0x9d] sm:$0xff]
        %v3869 = vld [vmem:[%s3354 + $0xad] sm:$0xff]
        %v3870 = vld [vmem:[%s3354 + $0xb5] sm:$0xff]
        %v3871 = vld [vmem:[%s3354 + $0xc5] sm:$0xff]
        %v3872 = vld [vmem:[%s3354 + $0xcd] sm:$0xff]
        %v3873 = vld [vmem:[%s3354 + $0xdd] sm:$0xff]
        %v3874 = vld [vmem:[%s3354 + $0xe5] sm:$0xff]
        %v3875 = vld [vmem:[%s3354 + $0xf5] sm:$0xff]
        %v3876 = vld [vmem:[%s3354 + $0xfd] sm:$0xff]
        %v3877 = vld [vmem:[%s3354 + $0x10d] sm:$0xff]
        %v3878 = vld [vmem:[%s3354 + $0x115] sm:$0xff]
        %v3879 = vld [vmem:[%s3354 + $0x125] sm:$0xff]
        %v3880 = vld [vmem:[%s3354 + $0x12d] sm:$0xff]
        %v3881 = vld [vmem:[%s3354 + $0x13d] sm:$0xff]
        %v3882 = vld [vmem:[%s3354 + $0x145] sm:$0xff]
        %v3883 = vld [vmem:[%s3354 + $0x155] sm:$0xff]
        %v3884 = vld [vmem:[%s3354 + $0x15d] sm:$0xff]
        %v3885 = vld [vmem:[%s3354 + $0x16d] sm:$0xff]
        %v3886 = vld [vmem:[%s3354 + $0x175] sm:$0xff]
        %v3887 = vlaneseq
        %v3888 = vshrl.u32 %v3887, 7
        %v3889 = vsub.s32 5, %v3888
        %v3890 = vrot.slane %v514, %v3889
        %v3891 = vmul.f32 %v3855, %v3890
        %v3892 = vmul.f32 %v3856, %v3890
        %v3893 = vmul.f32 %v3857, %v3890
        %v3894 = vmul.f32 %v3858, %v3890
        %v3895 = vmul.f32 %v3859, %v3890
        %v3896 = vmul.f32 %v3860, %v3890
        %v3897 = vmul.f32 %v3861, %v3890
        %v3898 = vmul.f32 %v3862, %v3890
        %v3899 = vmul.f32 %v3863, %v3890
        %v3900 = vmul.f32 %v3864, %v3890
        %v3901 = vmul.f32 %v3865, %v3890
        %v3902 = vmul.f32 %v3866, %v3890
        %v3903 = vmul.f32 %v3867, %v3890
        %v3904 = vmul.f32 %v3868, %v3890
        %v3905 = vmul.f32 %v3869, %v3890
        %v3906 = vmul.f32 %v3870, %v3890
        %v3907 = vmul.f32 %v3871, %v3890
        %v3908 = vmul.f32 %v3872, %v3890
        %v3909 = vmul.f32 %v3873, %v3890
        %v3910 = vmul.f32 %v3874, %v3890
        %v3911 = vmul.f32 %v3875, %v3890
        %v3912 = vmul.f32 %v3876, %v3890
        %v3913 = vmul.f32 %v3877, %v3890
        %v3914 = vmul.f32 %v3878, %v3890
        %v3915 = vmul.f32 %v3879, %v3890
        %v3916 = vmul.f32 %v3880, %v3890
        %v3917 = vmul.f32 %v3881, %v3890
        %v3918 = vmul.f32 %v3882, %v3890
        %v3919 = vmul.f32 %v3883, %v3890
        %v3920 = vmul.f32 %v3884, %v3890
        %v3921 = vmul.f32 %v3885, %v3890
        %v3922 = vmul.f32 %v3886, %v3890
        %v3923 = vadd.f32 %v3823, %v3891
        %v3924 = vadd.f32 %v3824, %v3892
        %v3925 = vadd.f32 %v3825, %v3893
        %v3926 = vadd.f32 %v3826, %v3894
        %v3927 = vadd.f32 %v3827, %v3895
        %v3928 = vadd.f32 %v3828, %v3896
        %v3929 = vadd.f32 %v3829, %v3897
        %v3930 = vadd.f32 %v3830, %v3898
        %v3931 = vadd.f32 %v3831, %v3899
        %v3932 = vadd.f32 %v3832, %v3900
        %v3933 = vadd.f32 %v3833, %v3901
        %v3934 = vadd.f32 %v3834, %v3902
        %v3935 = vadd.f32 %v3835, %v3903
        %v3936 = vadd.f32 %v3836, %v3904
        %v3937 = vadd.f32 %v3837, %v3905
        %v3938 = vadd.f32 %v3838, %v3906
        %v3939 = vadd.f32 %v3839, %v3907
        %v3940 = vadd.f32 %v3840, %v3908
        %v3941 = vadd.f32 %v3841, %v3909
        %v3942 = vadd.f32 %v3842, %v3910
        %v3943 = vadd.f32 %v3843, %v3911
        %v3944 = vadd.f32 %v3844, %v3912
        %v3945 = vadd.f32 %v3845, %v3913
        %v3946 = vadd.f32 %v3846, %v3914
        %v3947 = vadd.f32 %v3847, %v3915
        %v3948 = vadd.f32 %v3848, %v3916
        %v3949 = vadd.f32 %v3849, %v3917
        %v3950 = vadd.f32 %v3850, %v3918
        %v3951 = vadd.f32 %v3851, %v3919
        %v3952 = vadd.f32 %v3852, %v3920
        %v3953 = vadd.f32 %v3853, %v3921
        %v3954 = vadd.f32 %v3854, %v3922
        %v3955 = vld [vmem:[%s3354 + $0x6] sm:$0xff]
        %v3956 = vld [vmem:[%s3354 + $0xe] sm:$0xff]
        %v3957 = vld [vmem:[%s3354 + $0x1e] sm:$0xff]
        %v3958 = vld [vmem:[%s3354 + $0x26] sm:$0xff]
        %v3959 = vld [vmem:[%s3354 + $0x36] sm:$0xff]
        %v3960 = vld [vmem:[%s3354 + $0x3e] sm:$0xff]
        %v3961 = vld [vmem:[%s3354 + $0x4e] sm:$0xff]
        %v3962 = vld [vmem:[%s3354 + $0x56] sm:$0xff]
        %v3963 = vld [vmem:[%s3354 + $0x66] sm:$0xff]
        %v3964 = vld [vmem:[%s3354 + $0x6e] sm:$0xff]
        %v3965 = vld [vmem:[%s3354 + $0x7e] sm:$0xff]
        %v3966 = vld [vmem:[%s3354 + $0x86] sm:$0xff]
        %v3967 = vld [vmem:[%s3354 + $0x96] sm:$0xff]
        %v3968 = vld [vmem:[%s3354 + $0x9e] sm:$0xff]
        %v3969 = vld [vmem:[%s3354 + $0xae] sm:$0xff]
        %v3970 = vld [vmem:[%s3354 + $0xb6] sm:$0xff]
        %v3971 = vld [vmem:[%s3354 + $0xc6] sm:$0xff]
        %v3972 = vld [vmem:[%s3354 + $0xce] sm:$0xff]
        %v3973 = vld [vmem:[%s3354 + $0xde] sm:$0xff]
        %v3974 = vld [vmem:[%s3354 + $0xe6] sm:$0xff]
        %v3975 = vld [vmem:[%s3354 + $0xf6] sm:$0xff]
        %v3976 = vld [vmem:[%s3354 + $0xfe] sm:$0xff]
        %v3977 = vld [vmem:[%s3354 + $0x10e] sm:$0xff]
        %v3978 = vld [vmem:[%s3354 + $0x116] sm:$0xff]
        %v3979 = vld [vmem:[%s3354 + $0x126] sm:$0xff]
        %v3980 = vld [vmem:[%s3354 + $0x12e] sm:$0xff]
        %v3981 = vld [vmem:[%s3354 + $0x13e] sm:$0xff]
        %v3982 = vld [vmem:[%s3354 + $0x146] sm:$0xff]
        %v3983 = vld [vmem:[%s3354 + $0x156] sm:$0xff]
        %v3984 = vld [vmem:[%s3354 + $0x15e] sm:$0xff]
        %v3985 = vld [vmem:[%s3354 + $0x16e] sm:$0xff]
        %v3986 = vld [vmem:[%s3354 + $0x176] sm:$0xff]
        %v3987 = vlaneseq
        %v3988 = vshrl.u32 %v3987, 7
        %v3989 = vsub.s32 6, %v3988
        %v3990 = vrot.slane %v514, %v3989
        %v3991 = vmul.f32 %v3955, %v3990
        %v3992 = vmul.f32 %v3956, %v3990
        %v3993 = vmul.f32 %v3957, %v3990
        %v3994 = vmul.f32 %v3958, %v3990
        %v3995 = vmul.f32 %v3959, %v3990
        %v3996 = vmul.f32 %v3960, %v3990
        %v3997 = vmul.f32 %v3961, %v3990
        %v3998 = vmul.f32 %v3962, %v3990
        %v3999 = vmul.f32 %v3963, %v3990
        %v4000 = vmul.f32 %v3964, %v3990
        %v4001 = vmul.f32 %v3965, %v3990
        %v4002 = vmul.f32 %v3966, %v3990
        %v4003 = vmul.f32 %v3967, %v3990
        %v4004 = vmul.f32 %v3968, %v3990
        %v4005 = vmul.f32 %v3969, %v3990
        %v4006 = vmul.f32 %v3970, %v3990
        %v4007 = vmul.f32 %v3971, %v3990
        %v4008 = vmul.f32 %v3972, %v3990
        %v4009 = vmul.f32 %v3973, %v3990
        %v4010 = vmul.f32 %v3974, %v3990
        %v4011 = vmul.f32 %v3975, %v3990
        %v4012 = vmul.f32 %v3976, %v3990
        %v4013 = vmul.f32 %v3977, %v3990
        %v4014 = vmul.f32 %v3978, %v3990
        %v4015 = vmul.f32 %v3979, %v3990
        %v4016 = vmul.f32 %v3980, %v3990
        %v4017 = vmul.f32 %v3981, %v3990
        %v4018 = vmul.f32 %v3982, %v3990
        %v4019 = vmul.f32 %v3983, %v3990
        %v4020 = vmul.f32 %v3984, %v3990
        %v4021 = vmul.f32 %v3985, %v3990
        %v4022 = vmul.f32 %v3986, %v3990
        %v4023 = vadd.f32 %v3923, %v3991
        %v4024 = vadd.f32 %v3924, %v3992
        %v4025 = vadd.f32 %v3925, %v3993
        %v4026 = vadd.f32 %v3926, %v3994
        %v4027 = vadd.f32 %v3927, %v3995
        %v4028 = vadd.f32 %v3928, %v3996
        %v4029 = vadd.f32 %v3929, %v3997
        %v4030 = vadd.f32 %v3930, %v3998
        %v4031 = vadd.f32 %v3931, %v3999
        %v4032 = vadd.f32 %v3932, %v4000
        %v4033 = vadd.f32 %v3933, %v4001
        %v4034 = vadd.f32 %v3934, %v4002
        %v4035 = vadd.f32 %v3935, %v4003
        %v4036 = vadd.f32 %v3936, %v4004
        %v4037 = vadd.f32 %v3937, %v4005
        %v4038 = vadd.f32 %v3938, %v4006
        %v4039 = vadd.f32 %v3939, %v4007
        %v4040 = vadd.f32 %v3940, %v4008
        %v4041 = vadd.f32 %v3941, %v4009
        %v4042 = vadd.f32 %v3942, %v4010
        %v4043 = vadd.f32 %v3943, %v4011
        %v4044 = vadd.f32 %v3944, %v4012
        %v4045 = vadd.f32 %v3945, %v4013
        %v4046 = vadd.f32 %v3946, %v4014
        %v4047 = vadd.f32 %v3947, %v4015
        %v4048 = vadd.f32 %v3948, %v4016
        %v4049 = vadd.f32 %v3949, %v4017
        %v4050 = vadd.f32 %v3950, %v4018
        %v4051 = vadd.f32 %v3951, %v4019
        %v4052 = vadd.f32 %v3952, %v4020
        %v4053 = vadd.f32 %v3953, %v4021
        %v4054 = vadd.f32 %v3954, %v4022
        %s4055 = scalar_lea.vmem [#allocation2], 120
        %v4056 = vld [vmem:[%s4055] sm:$0xff]
        %v4057 = vld [vmem:[%s4055 + $0x8] sm:$0xff]
        %v4058 = vld [vmem:[%s4055 + $0x18] sm:$0xff]
        %v4059 = vld [vmem:[%s4055 + $0x20] sm:$0xff]
        %v4060 = vld [vmem:[%s4055 + $0x30] sm:$0xff]
        %v4061 = vld [vmem:[%s4055 + $0x38] sm:$0xff]
        %v4062 = vld [vmem:[%s4055 + $0x48] sm:$0xff]
        %v4063 = vld [vmem:[%s4055 + $0x50] sm:$0xff]
        %v4064 = vld [vmem:[%s4055 + $0x60] sm:$0xff]
        %v4065 = vld [vmem:[%s4055 + $0x68] sm:$0xff]
        %v4066 = vld [vmem:[%s4055 + $0x78] sm:$0xff]
        %v4067 = vld [vmem:[%s4055 + $0x80] sm:$0xff]
        %v4068 = vld [vmem:[%s4055 + $0x90] sm:$0xff]
        %v4069 = vld [vmem:[%s4055 + $0x98] sm:$0xff]
        %v4070 = vld [vmem:[%s4055 + $0xa8] sm:$0xff]
        %v4071 = vld [vmem:[%s4055 + $0xb0] sm:$0xff]
        %v4072 = vld [vmem:[%s4055 + $0xc0] sm:$0xff]
        %v4073 = vld [vmem:[%s4055 + $0xc8] sm:$0xff]
        %v4074 = vld [vmem:[%s4055 + $0xd8] sm:$0xff]
        %v4075 = vld [vmem:[%s4055 + $0xe0] sm:$0xff]
        %v4076 = vld [vmem:[%s4055 + $0xf0] sm:$0xff]
        %v4077 = vld [vmem:[%s4055 + $0xf8] sm:$0xff]
        %v4078 = vld [vmem:[%s4055 + $0x108] sm:$0xff]
        %v4079 = vld [vmem:[%s4055 + $0x110] sm:$0xff]
        %v4080 = vld [vmem:[%s4055 + $0x120] sm:$0xff]
        %v4081 = vld [vmem:[%s4055 + $0x128] sm:$0xff]
        %v4082 = vld [vmem:[%s4055 + $0x138] sm:$0xff]
        %v4083 = vld [vmem:[%s4055 + $0x140] sm:$0xff]
        %v4084 = vld [vmem:[%s4055 + $0x150] sm:$0xff]
        %v4085 = vld [vmem:[%s4055 + $0x158] sm:$0xff]
        %v4086 = vld [vmem:[%s4055 + $0x168] sm:$0xff]
        %v4087 = vld [vmem:[%s4055 + $0x170] sm:$0xff]
        %v4088 = vlaneseq
        %v4089 = vshrl.u32 %v4088, 7
        %v4090 = vsub.s32 0, %v4089
        %v4091 = vrot.slane %v515, %v4090
        %v4092 = vmul.f32 %v4056, %v4091
        %v4093 = vmul.f32 %v4057, %v4091
        %v4094 = vmul.f32 %v4058, %v4091
        %v4095 = vmul.f32 %v4059, %v4091
        %v4096 = vmul.f32 %v4060, %v4091
        %v4097 = vmul.f32 %v4061, %v4091
        %v4098 = vmul.f32 %v4062, %v4091
        %v4099 = vmul.f32 %v4063, %v4091
        %v4100 = vmul.f32 %v4064, %v4091
        %v4101 = vmul.f32 %v4065, %v4091
        %v4102 = vmul.f32 %v4066, %v4091
        %v4103 = vmul.f32 %v4067, %v4091
        %v4104 = vmul.f32 %v4068, %v4091
        %v4105 = vmul.f32 %v4069, %v4091
        %v4106 = vmul.f32 %v4070, %v4091
        %v4107 = vmul.f32 %v4071, %v4091
        %v4108 = vmul.f32 %v4072, %v4091
        %v4109 = vmul.f32 %v4073, %v4091
        %v4110 = vmul.f32 %v4074, %v4091
        %v4111 = vmul.f32 %v4075, %v4091
        %v4112 = vmul.f32 %v4076, %v4091
        %v4113 = vmul.f32 %v4077, %v4091
        %v4114 = vmul.f32 %v4078, %v4091
        %v4115 = vmul.f32 %v4079, %v4091
        %v4116 = vmul.f32 %v4080, %v4091
        %v4117 = vmul.f32 %v4081, %v4091
        %v4118 = vmul.f32 %v4082, %v4091
        %v4119 = vmul.f32 %v4083, %v4091
        %v4120 = vmul.f32 %v4084, %v4091
        %v4121 = vmul.f32 %v4085, %v4091
        %v4122 = vmul.f32 %v4086, %v4091
        %v4123 = vmul.f32 %v4087, %v4091
        %v4124 = vadd.f32 %v4023, %v4092
        %v4125 = vadd.f32 %v4024, %v4093
        %v4126 = vadd.f32 %v4025, %v4094
        %v4127 = vadd.f32 %v4026, %v4095
        %v4128 = vadd.f32 %v4027, %v4096
        %v4129 = vadd.f32 %v4028, %v4097
        %v4130 = vadd.f32 %v4029, %v4098
        %v4131 = vadd.f32 %v4030, %v4099
        %v4132 = vadd.f32 %v4031, %v4100
        %v4133 = vadd.f32 %v4032, %v4101
        %v4134 = vadd.f32 %v4033, %v4102
        %v4135 = vadd.f32 %v4034, %v4103
        %v4136 = vadd.f32 %v4035, %v4104
        %v4137 = vadd.f32 %v4036, %v4105
        %v4138 = vadd.f32 %v4037, %v4106
        %v4139 = vadd.f32 %v4038, %v4107
        %v4140 = vadd.f32 %v4039, %v4108
        %v4141 = vadd.f32 %v4040, %v4109
        %v4142 = vadd.f32 %v4041, %v4110
        %v4143 = vadd.f32 %v4042, %v4111
        %v4144 = vadd.f32 %v4043, %v4112
        %v4145 = vadd.f32 %v4044, %v4113
        %v4146 = vadd.f32 %v4045, %v4114
        %v4147 = vadd.f32 %v4046, %v4115
        %v4148 = vadd.f32 %v4047, %v4116
        %v4149 = vadd.f32 %v4048, %v4117
        %v4150 = vadd.f32 %v4049, %v4118
        %v4151 = vadd.f32 %v4050, %v4119
        %v4152 = vadd.f32 %v4051, %v4120
        %v4153 = vadd.f32 %v4052, %v4121
        %v4154 = vadd.f32 %v4053, %v4122
        %v4155 = vadd.f32 %v4054, %v4123
        %v4156 = vld [vmem:[%s4055 + $0x1] sm:$0xff]
        %v4157 = vld [vmem:[%s4055 + $0x9] sm:$0xff]
        %v4158 = vld [vmem:[%s4055 + $0x19] sm:$0xff]
        %v4159 = vld [vmem:[%s4055 + $0x21] sm:$0xff]
        %v4160 = vld [vmem:[%s4055 + $0x31] sm:$0xff]
        %v4161 = vld [vmem:[%s4055 + $0x39] sm:$0xff]
        %v4162 = vld [vmem:[%s4055 + $0x49] sm:$0xff]
        %v4163 = vld [vmem:[%s4055 + $0x51] sm:$0xff]
        %v4164 = vld [vmem:[%s4055 + $0x61] sm:$0xff]
        %v4165 = vld [vmem:[%s4055 + $0x69] sm:$0xff]
        %v4166 = vld [vmem:[%s4055 + $0x79] sm:$0xff]
        %v4167 = vld [vmem:[%s4055 + $0x81] sm:$0xff]
        %v4168 = vld [vmem:[%s4055 + $0x91] sm:$0xff]
        %v4169 = vld [vmem:[%s4055 + $0x99] sm:$0xff]
        %v4170 = vld [vmem:[%s4055 + $0xa9] sm:$0xff]
        %v4171 = vld [vmem:[%s4055 + $0xb1] sm:$0xff]
        %v4172 = vld [vmem:[%s4055 + $0xc1] sm:$0xff]
        %v4173 = vld [vmem:[%s4055 + $0xc9] sm:$0xff]
        %v4174 = vld [vmem:[%s4055 + $0xd9] sm:$0xff]
        %v4175 = vld [vmem:[%s4055 + $0xe1] sm:$0xff]
        %v4176 = vld [vmem:[%s4055 + $0xf1] sm:$0xff]
        %v4177 = vld [vmem:[%s4055 + $0xf9] sm:$0xff]
        %v4178 = vld [vmem:[%s4055 + $0x109] sm:$0xff]
        %v4179 = vld [vmem:[%s4055 + $0x111] sm:$0xff]
        %v4180 = vld [vmem:[%s4055 + $0x121] sm:$0xff]
        %v4181 = vld [vmem:[%s4055 + $0x129] sm:$0xff]
        %v4182 = vld [vmem:[%s4055 + $0x139] sm:$0xff]
        %v4183 = vld [vmem:[%s4055 + $0x141] sm:$0xff]
        %v4184 = vld [vmem:[%s4055 + $0x151] sm:$0xff]
        %v4185 = vld [vmem:[%s4055 + $0x159] sm:$0xff]
        %v4186 = vld [vmem:[%s4055 + $0x169] sm:$0xff]
        %v4187 = vld [vmem:[%s4055 + $0x171] sm:$0xff]
        %v4188 = vlaneseq
        %v4189 = vshrl.u32 %v4188, 7
        %v4190 = vsub.s32 1, %v4189
        %v4191 = vrot.slane %v515, %v4190
        %v4192 = vmul.f32 %v4156, %v4191
        %v4193 = vmul.f32 %v4157, %v4191
        %v4194 = vmul.f32 %v4158, %v4191
        %v4195 = vmul.f32 %v4159, %v4191
        %v4196 = vmul.f32 %v4160, %v4191
        %v4197 = vmul.f32 %v4161, %v4191
        %v4198 = vmul.f32 %v4162, %v4191
        %v4199 = vmul.f32 %v4163, %v4191
        %v4200 = vmul.f32 %v4164, %v4191
        %v4201 = vmul.f32 %v4165, %v4191
        %v4202 = vmul.f32 %v4166, %v4191
        %v4203 = vmul.f32 %v4167, %v4191
        %v4204 = vmul.f32 %v4168, %v4191
        %v4205 = vmul.f32 %v4169, %v4191
        %v4206 = vmul.f32 %v4170, %v4191
        %v4207 = vmul.f32 %v4171, %v4191
        %v4208 = vmul.f32 %v4172, %v4191
        %v4209 = vmul.f32 %v4173, %v4191
        %v4210 = vmul.f32 %v4174, %v4191
        %v4211 = vmul.f32 %v4175, %v4191
        %v4212 = vmul.f32 %v4176, %v4191
        %v4213 = vmul.f32 %v4177, %v4191
        %v4214 = vmul.f32 %v4178, %v4191
        %v4215 = vmul.f32 %v4179, %v4191
        %v4216 = vmul.f32 %v4180, %v4191
        %v4217 = vmul.f32 %v4181, %v4191
        %v4218 = vmul.f32 %v4182, %v4191
        %v4219 = vmul.f32 %v4183, %v4191
        %v4220 = vmul.f32 %v4184, %v4191
        %v4221 = vmul.f32 %v4185, %v4191
        %v4222 = vmul.f32 %v4186, %v4191
        %v4223 = vmul.f32 %v4187, %v4191
        %v4224 = vadd.f32 %v4124, %v4192
        %v4225 = vadd.f32 %v4125, %v4193
        %v4226 = vadd.f32 %v4126, %v4194
        %v4227 = vadd.f32 %v4127, %v4195
        %v4228 = vadd.f32 %v4128, %v4196
        %v4229 = vadd.f32 %v4129, %v4197
        %v4230 = vadd.f32 %v4130, %v4198
        %v4231 = vadd.f32 %v4131, %v4199
        %v4232 = vadd.f32 %v4132, %v4200
        %v4233 = vadd.f32 %v4133, %v4201
        %v4234 = vadd.f32 %v4134, %v4202
        %v4235 = vadd.f32 %v4135, %v4203
        %v4236 = vadd.f32 %v4136, %v4204
        %v4237 = vadd.f32 %v4137, %v4205
        %v4238 = vadd.f32 %v4138, %v4206
        %v4239 = vadd.f32 %v4139, %v4207
        %v4240 = vadd.f32 %v4140, %v4208
        %v4241 = vadd.f32 %v4141, %v4209
        %v4242 = vadd.f32 %v4142, %v4210
        %v4243 = vadd.f32 %v4143, %v4211
        %v4244 = vadd.f32 %v4144, %v4212
        %v4245 = vadd.f32 %v4145, %v4213
        %v4246 = vadd.f32 %v4146, %v4214
        %v4247 = vadd.f32 %v4147, %v4215
        %v4248 = vadd.f32 %v4148, %v4216
        %v4249 = vadd.f32 %v4149, %v4217
        %v4250 = vadd.f32 %v4150, %v4218
        %v4251 = vadd.f32 %v4151, %v4219
        %v4252 = vadd.f32 %v4152, %v4220
        %v4253 = vadd.f32 %v4153, %v4221
        %v4254 = vadd.f32 %v4154, %v4222
        %v4255 = vadd.f32 %v4155, %v4223
        %v4256 = vld [vmem:[%s4055 + $0x2] sm:$0xff]
        %v4257 = vld [vmem:[%s4055 + $0xa] sm:$0xff]
        %v4258 = vld [vmem:[%s4055 + $0x1a] sm:$0xff]
        %v4259 = vld [vmem:[%s4055 + $0x22] sm:$0xff]
        %v4260 = vld [vmem:[%s4055 + $0x32] sm:$0xff]
        %v4261 = vld [vmem:[%s4055 + $0x3a] sm:$0xff]
        %v4262 = vld [vmem:[%s4055 + $0x4a] sm:$0xff]
        %v4263 = vld [vmem:[%s4055 + $0x52] sm:$0xff]
        %v4264 = vld [vmem:[%s4055 + $0x62] sm:$0xff]
        %v4265 = vld [vmem:[%s4055 + $0x6a] sm:$0xff]
        %v4266 = vld [vmem:[%s4055 + $0x7a] sm:$0xff]
        %v4267 = vld [vmem:[%s4055 + $0x82] sm:$0xff]
        %v4268 = vld [vmem:[%s4055 + $0x92] sm:$0xff]
        %v4269 = vld [vmem:[%s4055 + $0x9a] sm:$0xff]
        %v4270 = vld [vmem:[%s4055 + $0xaa] sm:$0xff]
        %v4271 = vld [vmem:[%s4055 + $0xb2] sm:$0xff]
        %v4272 = vld [vmem:[%s4055 + $0xc2] sm:$0xff]
        %v4273 = vld [vmem:[%s4055 + $0xca] sm:$0xff]
        %v4274 = vld [vmem:[%s4055 + $0xda] sm:$0xff]
        %v4275 = vld [vmem:[%s4055 + $0xe2] sm:$0xff]
        %v4276 = vld [vmem:[%s4055 + $0xf2] sm:$0xff]
        %v4277 = vld [vmem:[%s4055 + $0xfa] sm:$0xff]
        %v4278 = vld [vmem:[%s4055 + $0x10a] sm:$0xff]
        %v4279 = vld [vmem:[%s4055 + $0x112] sm:$0xff]
        %v4280 = vld [vmem:[%s4055 + $0x122] sm:$0xff]
        %v4281 = vld [vmem:[%s4055 + $0x12a] sm:$0xff]
        %v4282 = vld [vmem:[%s4055 + $0x13a] sm:$0xff]
        %v4283 = vld [vmem:[%s4055 + $0x142] sm:$0xff]
        %v4284 = vld [vmem:[%s4055 + $0x152] sm:$0xff]
        %v4285 = vld [vmem:[%s4055 + $0x15a] sm:$0xff]
        %v4286 = vld [vmem:[%s4055 + $0x16a] sm:$0xff]
        %v4287 = vld [vmem:[%s4055 + $0x172] sm:$0xff]
        %v4288 = vlaneseq
        %v4289 = vshrl.u32 %v4288, 7
        %v4290 = vsub.s32 2, %v4289
        %v4291 = vrot.slane %v515, %v4290
        %v4292 = vmul.f32 %v4256, %v4291
        %v4293 = vmul.f32 %v4257, %v4291
        %v4294 = vmul.f32 %v4258, %v4291
        %v4295 = vmul.f32 %v4259, %v4291
        %v4296 = vmul.f32 %v4260, %v4291
        %v4297 = vmul.f32 %v4261, %v4291
        %v4298 = vmul.f32 %v4262, %v4291
        %v4299 = vmul.f32 %v4263, %v4291
        %v4300 = vmul.f32 %v4264, %v4291
        %v4301 = vmul.f32 %v4265, %v4291
        %v4302 = vmul.f32 %v4266, %v4291
        %v4303 = vmul.f32 %v4267, %v4291
        %v4304 = vmul.f32 %v4268, %v4291
        %v4305 = vmul.f32 %v4269, %v4291
        %v4306 = vmul.f32 %v4270, %v4291
        %v4307 = vmul.f32 %v4271, %v4291
        %v4308 = vmul.f32 %v4272, %v4291
        %v4309 = vmul.f32 %v4273, %v4291
        %v4310 = vmul.f32 %v4274, %v4291
        %v4311 = vmul.f32 %v4275, %v4291
        %v4312 = vmul.f32 %v4276, %v4291
        %v4313 = vmul.f32 %v4277, %v4291
        %v4314 = vmul.f32 %v4278, %v4291
        %v4315 = vmul.f32 %v4279, %v4291
        %v4316 = vmul.f32 %v4280, %v4291
        %v4317 = vmul.f32 %v4281, %v4291
        %v4318 = vmul.f32 %v4282, %v4291
        %v4319 = vmul.f32 %v4283, %v4291
        %v4320 = vmul.f32 %v4284, %v4291
        %v4321 = vmul.f32 %v4285, %v4291
        %v4322 = vmul.f32 %v4286, %v4291
        %v4323 = vmul.f32 %v4287, %v4291
        %v4324 = vadd.f32 %v4224, %v4292
        %v4325 = vadd.f32 %v4225, %v4293
        %v4326 = vadd.f32 %v4226, %v4294
        %v4327 = vadd.f32 %v4227, %v4295
        %v4328 = vadd.f32 %v4228, %v4296
        %v4329 = vadd.f32 %v4229, %v4297
        %v4330 = vadd.f32 %v4230, %v4298
        %v4331 = vadd.f32 %v4231, %v4299
        %v4332 = vadd.f32 %v4232, %v4300
        %v4333 = vadd.f32 %v4233, %v4301
        %v4334 = vadd.f32 %v4234, %v4302
        %v4335 = vadd.f32 %v4235, %v4303
        %v4336 = vadd.f32 %v4236, %v4304
        %v4337 = vadd.f32 %v4237, %v4305
        %v4338 = vadd.f32 %v4238, %v4306
        %v4339 = vadd.f32 %v4239, %v4307
        %v4340 = vadd.f32 %v4240, %v4308
        %v4341 = vadd.f32 %v4241, %v4309
        %v4342 = vadd.f32 %v4242, %v4310
        %v4343 = vadd.f32 %v4243, %v4311
        %v4344 = vadd.f32 %v4244, %v4312
        %v4345 = vadd.f32 %v4245, %v4313
        %v4346 = vadd.f32 %v4246, %v4314
        %v4347 = vadd.f32 %v4247, %v4315
        %v4348 = vadd.f32 %v4248, %v4316
        %v4349 = vadd.f32 %v4249, %v4317
        %v4350 = vadd.f32 %v4250, %v4318
        %v4351 = vadd.f32 %v4251, %v4319
        %v4352 = vadd.f32 %v4252, %v4320
        %v4353 = vadd.f32 %v4253, %v4321
        %v4354 = vadd.f32 %v4254, %v4322
        %v4355 = vadd.f32 %v4255, %v4323
        %v4356 = vld [vmem:[%s4055 + $0x3] sm:$0xff]
        %v4357 = vld [vmem:[%s4055 + $0xb] sm:$0xff]
        %v4358 = vld [vmem:[%s4055 + $0x1b] sm:$0xff]
        %v4359 = vld [vmem:[%s4055 + $0x23] sm:$0xff]
        %v4360 = vld [vmem:[%s4055 + $0x33] sm:$0xff]
        %v4361 = vld [vmem:[%s4055 + $0x3b] sm:$0xff]
        %v4362 = vld [vmem:[%s4055 + $0x4b] sm:$0xff]
        %v4363 = vld [vmem:[%s4055 + $0x53] sm:$0xff]
        %v4364 = vld [vmem:[%s4055 + $0x63] sm:$0xff]
        %v4365 = vld [vmem:[%s4055 + $0x6b] sm:$0xff]
        %v4366 = vld [vmem:[%s4055 + $0x7b] sm:$0xff]
        %v4367 = vld [vmem:[%s4055 + $0x83] sm:$0xff]
        %v4368 = vld [vmem:[%s4055 + $0x93] sm:$0xff]
        %v4369 = vld [vmem:[%s4055 + $0x9b] sm:$0xff]
        %v4370 = vld [vmem:[%s4055 + $0xab] sm:$0xff]
        %v4371 = vld [vmem:[%s4055 + $0xb3] sm:$0xff]
        %v4372 = vld [vmem:[%s4055 + $0xc3] sm:$0xff]
        %v4373 = vld [vmem:[%s4055 + $0xcb] sm:$0xff]
        %v4374 = vld [vmem:[%s4055 + $0xdb] sm:$0xff]
        %v4375 = vld [vmem:[%s4055 + $0xe3] sm:$0xff]
        %v4376 = vld [vmem:[%s4055 + $0xf3] sm:$0xff]
        %v4377 = vld [vmem:[%s4055 + $0xfb] sm:$0xff]
        %v4378 = vld [vmem:[%s4055 + $0x10b] sm:$0xff]
        %v4379 = vld [vmem:[%s4055 + $0x113] sm:$0xff]
        %v4380 = vld [vmem:[%s4055 + $0x123] sm:$0xff]
        %v4381 = vld [vmem:[%s4055 + $0x12b] sm:$0xff]
        %v4382 = vld [vmem:[%s4055 + $0x13b] sm:$0xff]
        %v4383 = vld [vmem:[%s4055 + $0x143] sm:$0xff]
        %v4384 = vld [vmem:[%s4055 + $0x153] sm:$0xff]
        %v4385 = vld [vmem:[%s4055 + $0x15b] sm:$0xff]
        %v4386 = vld [vmem:[%s4055 + $0x16b] sm:$0xff]
        %v4387 = vld [vmem:[%s4055 + $0x173] sm:$0xff]
        %v4388 = vlaneseq
        %v4389 = vshrl.u32 %v4388, 7
        %v4390 = vsub.s32 3, %v4389
        %v4391 = vrot.slane %v515, %v4390
        %v4392 = vmul.f32 %v4356, %v4391
        %v4393 = vmul.f32 %v4357, %v4391
        %v4394 = vmul.f32 %v4358, %v4391
        %v4395 = vmul.f32 %v4359, %v4391
        %v4396 = vmul.f32 %v4360, %v4391
        %v4397 = vmul.f32 %v4361, %v4391
        %v4398 = vmul.f32 %v4362, %v4391
        %v4399 = vmul.f32 %v4363, %v4391
        %v4400 = vmul.f32 %v4364, %v4391
        %v4401 = vmul.f32 %v4365, %v4391
        %v4402 = vmul.f32 %v4366, %v4391
        %v4403 = vmul.f32 %v4367, %v4391
        %v4404 = vmul.f32 %v4368, %v4391
        %v4405 = vmul.f32 %v4369, %v4391
        %v4406 = vmul.f32 %v4370, %v4391
        %v4407 = vmul.f32 %v4371, %v4391
        %v4408 = vmul.f32 %v4372, %v4391
        %v4409 = vmul.f32 %v4373, %v4391
        %v4410 = vmul.f32 %v4374, %v4391
        %v4411 = vmul.f32 %v4375, %v4391
        %v4412 = vmul.f32 %v4376, %v4391
        %v4413 = vmul.f32 %v4377, %v4391
        %v4414 = vmul.f32 %v4378, %v4391
        %v4415 = vmul.f32 %v4379, %v4391
        %v4416 = vmul.f32 %v4380, %v4391
        %v4417 = vmul.f32 %v4381, %v4391
        %v4418 = vmul.f32 %v4382, %v4391
        %v4419 = vmul.f32 %v4383, %v4391
        %v4420 = vmul.f32 %v4384, %v4391
        %v4421 = vmul.f32 %v4385, %v4391
        %v4422 = vmul.f32 %v4386, %v4391
        %v4423 = vmul.f32 %v4387, %v4391
        %v4424 = vadd.f32 %v4324, %v4392
        %v4425 = vadd.f32 %v4325, %v4393
        %v4426 = vadd.f32 %v4326, %v4394
        %v4427 = vadd.f32 %v4327, %v4395
        %v4428 = vadd.f32 %v4328, %v4396
        %v4429 = vadd.f32 %v4329, %v4397
        %v4430 = vadd.f32 %v4330, %v4398
        %v4431 = vadd.f32 %v4331, %v4399
        %v4432 = vadd.f32 %v4332, %v4400
        %v4433 = vadd.f32 %v4333, %v4401
        %v4434 = vadd.f32 %v4334, %v4402
        %v4435 = vadd.f32 %v4335, %v4403
        %v4436 = vadd.f32 %v4336, %v4404
        %v4437 = vadd.f32 %v4337, %v4405
        %v4438 = vadd.f32 %v4338, %v4406
        %v4439 = vadd.f32 %v4339, %v4407
        %v4440 = vadd.f32 %v4340, %v4408
        %v4441 = vadd.f32 %v4341, %v4409
        %v4442 = vadd.f32 %v4342, %v4410
        %v4443 = vadd.f32 %v4343, %v4411
        %v4444 = vadd.f32 %v4344, %v4412
        %v4445 = vadd.f32 %v4345, %v4413
        %v4446 = vadd.f32 %v4346, %v4414
        %v4447 = vadd.f32 %v4347, %v4415
        %v4448 = vadd.f32 %v4348, %v4416
        %v4449 = vadd.f32 %v4349, %v4417
        %v4450 = vadd.f32 %v4350, %v4418
        %v4451 = vadd.f32 %v4351, %v4419
        %v4452 = vadd.f32 %v4352, %v4420
        %v4453 = vadd.f32 %v4353, %v4421
        %v4454 = vadd.f32 %v4354, %v4422
        %v4455 = vadd.f32 %v4355, %v4423
        %v4456 = vld [vmem:[%s4055 + $0x4] sm:$0xff]
        %v4457 = vld [vmem:[%s4055 + $0xc] sm:$0xff]
        %v4458 = vld [vmem:[%s4055 + $0x1c] sm:$0xff]
        %v4459 = vld [vmem:[%s4055 + $0x24] sm:$0xff]
        %v4460 = vld [vmem:[%s4055 + $0x34] sm:$0xff]
        %v4461 = vld [vmem:[%s4055 + $0x3c] sm:$0xff]
        %v4462 = vld [vmem:[%s4055 + $0x4c] sm:$0xff]
        %v4463 = vld [vmem:[%s4055 + $0x54] sm:$0xff]
        %v4464 = vld [vmem:[%s4055 + $0x64] sm:$0xff]
        %v4465 = vld [vmem:[%s4055 + $0x6c] sm:$0xff]
        %v4466 = vld [vmem:[%s4055 + $0x7c] sm:$0xff]
        %v4467 = vld [vmem:[%s4055 + $0x84] sm:$0xff]
        %v4468 = vld [vmem:[%s4055 + $0x94] sm:$0xff]
        %v4469 = vld [vmem:[%s4055 + $0x9c] sm:$0xff]
        %v4470 = vld [vmem:[%s4055 + $0xac] sm:$0xff]
        %v4471 = vld [vmem:[%s4055 + $0xb4] sm:$0xff]
        %v4472 = vld [vmem:[%s4055 + $0xc4] sm:$0xff]
        %v4473 = vld [vmem:[%s4055 + $0xcc] sm:$0xff]
        %v4474 = vld [vmem:[%s4055 + $0xdc] sm:$0xff]
        %v4475 = vld [vmem:[%s4055 + $0xe4] sm:$0xff]
        %v4476 = vld [vmem:[%s4055 + $0xf4] sm:$0xff]
        %v4477 = vld [vmem:[%s4055 + $0xfc] sm:$0xff]
        %v4478 = vld [vmem:[%s4055 + $0x10c] sm:$0xff]
        %v4479 = vld [vmem:[%s4055 + $0x114] sm:$0xff]
        %v4480 = vld [vmem:[%s4055 + $0x124] sm:$0xff]
        %v4481 = vld [vmem:[%s4055 + $0x12c] sm:$0xff]
        %v4482 = vld [vmem:[%s4055 + $0x13c] sm:$0xff]
        %v4483 = vld [vmem:[%s4055 + $0x144] sm:$0xff]
        %v4484 = vld [vmem:[%s4055 + $0x154] sm:$0xff]
        %v4485 = vld [vmem:[%s4055 + $0x15c] sm:$0xff]
        %v4486 = vld [vmem:[%s4055 + $0x16c] sm:$0xff]
        %v4487 = vld [vmem:[%s4055 + $0x174] sm:$0xff]
        %v4488 = vlaneseq
        %v4489 = vshrl.u32 %v4488, 7
        %v4490 = vsub.s32 4, %v4489
        %v4491 = vrot.slane %v515, %v4490
        %v4492 = vmul.f32 %v4456, %v4491
        %v4493 = vmul.f32 %v4457, %v4491
        %v4494 = vmul.f32 %v4458, %v4491
        %v4495 = vmul.f32 %v4459, %v4491
        %v4496 = vmul.f32 %v4460, %v4491
        %v4497 = vmul.f32 %v4461, %v4491
        %v4498 = vmul.f32 %v4462, %v4491
        %v4499 = vmul.f32 %v4463, %v4491
        %v4500 = vmul.f32 %v4464, %v4491
        %v4501 = vmul.f32 %v4465, %v4491
        %v4502 = vmul.f32 %v4466, %v4491
        %v4503 = vmul.f32 %v4467, %v4491
        %v4504 = vmul.f32 %v4468, %v4491
        %v4505 = vmul.f32 %v4469, %v4491
        %v4506 = vmul.f32 %v4470, %v4491
        %v4507 = vmul.f32 %v4471, %v4491
        %v4508 = vmul.f32 %v4472, %v4491
        %v4509 = vmul.f32 %v4473, %v4491
        %v4510 = vmul.f32 %v4474, %v4491
        %v4511 = vmul.f32 %v4475, %v4491
        %v4512 = vmul.f32 %v4476, %v4491
        %v4513 = vmul.f32 %v4477, %v4491
        %v4514 = vmul.f32 %v4478, %v4491
        %v4515 = vmul.f32 %v4479, %v4491
        %v4516 = vmul.f32 %v4480, %v4491
        %v4517 = vmul.f32 %v4481, %v4491
        %v4518 = vmul.f32 %v4482, %v4491
        %v4519 = vmul.f32 %v4483, %v4491
        %v4520 = vmul.f32 %v4484, %v4491
        %v4521 = vmul.f32 %v4485, %v4491
        %v4522 = vmul.f32 %v4486, %v4491
        %v4523 = vmul.f32 %v4487, %v4491
        %v4524 = vadd.f32 %v4424, %v4492
        %v4525 = vadd.f32 %v4425, %v4493
        %v4526 = vadd.f32 %v4426, %v4494
        %v4527 = vadd.f32 %v4427, %v4495
        %v4528 = vadd.f32 %v4428, %v4496
        %v4529 = vadd.f32 %v4429, %v4497
        %v4530 = vadd.f32 %v4430, %v4498
        %v4531 = vadd.f32 %v4431, %v4499
        %v4532 = vadd.f32 %v4432, %v4500
        %v4533 = vadd.f32 %v4433, %v4501
        %v4534 = vadd.f32 %v4434, %v4502
        %v4535 = vadd.f32 %v4435, %v4503
        %v4536 = vadd.f32 %v4436, %v4504
        %v4537 = vadd.f32 %v4437, %v4505
        %v4538 = vadd.f32 %v4438, %v4506
        %v4539 = vadd.f32 %v4439, %v4507
        %v4540 = vadd.f32 %v4440, %v4508
        %v4541 = vadd.f32 %v4441, %v4509
        %v4542 = vadd.f32 %v4442, %v4510
        %v4543 = vadd.f32 %v4443, %v4511
        %v4544 = vadd.f32 %v4444, %v4512
        %v4545 = vadd.f32 %v4445, %v4513
        %v4546 = vadd.f32 %v4446, %v4514
        %v4547 = vadd.f32 %v4447, %v4515
        %v4548 = vadd.f32 %v4448, %v4516
        %v4549 = vadd.f32 %v4449, %v4517
        %v4550 = vadd.f32 %v4450, %v4518
        %v4551 = vadd.f32 %v4451, %v4519
        %v4552 = vadd.f32 %v4452, %v4520
        %v4553 = vadd.f32 %v4453, %v4521
        %v4554 = vadd.f32 %v4454, %v4522
        %v4555 = vadd.f32 %v4455, %v4523
        %v4556 = vld [vmem:[%s4055 + $0x5] sm:$0xff]
        %v4557 = vld [vmem:[%s4055 + $0xd] sm:$0xff]
        %v4558 = vld [vmem:[%s4055 + $0x1d] sm:$0xff]
        %v4559 = vld [vmem:[%s4055 + $0x25] sm:$0xff]
        %v4560 = vld [vmem:[%s4055 + $0x35] sm:$0xff]
        %v4561 = vld [vmem:[%s4055 + $0x3d] sm:$0xff]
        %v4562 = vld [vmem:[%s4055 + $0x4d] sm:$0xff]
        %v4563 = vld [vmem:[%s4055 + $0x55] sm:$0xff]
        %v4564 = vld [vmem:[%s4055 + $0x65] sm:$0xff]
        %v4565 = vld [vmem:[%s4055 + $0x6d] sm:$0xff]
        %v4566 = vld [vmem:[%s4055 + $0x7d] sm:$0xff]
        %v4567 = vld [vmem:[%s4055 + $0x85] sm:$0xff]
        %v4568 = vld [vmem:[%s4055 + $0x95] sm:$0xff]
        %v4569 = vld [vmem:[%s4055 + $0x9d] sm:$0xff]
        %v4570 = vld [vmem:[%s4055 + $0xad] sm:$0xff]
        %v4571 = vld [vmem:[%s4055 + $0xb5] sm:$0xff]
        %v4572 = vld [vmem:[%s4055 + $0xc5] sm:$0xff]
        %v4573 = vld [vmem:[%s4055 + $0xcd] sm:$0xff]
        %v4574 = vld [vmem:[%s4055 + $0xdd] sm:$0xff]
        %v4575 = vld [vmem:[%s4055 + $0xe5] sm:$0xff]
        %v4576 = vld [vmem:[%s4055 + $0xf5] sm:$0xff]
        %v4577 = vld [vmem:[%s4055 + $0xfd] sm:$0xff]
        %v4578 = vld [vmem:[%s4055 + $0x10d] sm:$0xff]
        %v4579 = vld [vmem:[%s4055 + $0x115] sm:$0xff]
        %v4580 = vld [vmem:[%s4055 + $0x125] sm:$0xff]
        %v4581 = vld [vmem:[%s4055 + $0x12d] sm:$0xff]
        %v4582 = vld [vmem:[%s4055 + $0x13d] sm:$0xff]
        %v4583 = vld [vmem:[%s4055 + $0x145] sm:$0xff]
        %v4584 = vld [vmem:[%s4055 + $0x155] sm:$0xff]
        %v4585 = vld [vmem:[%s4055 + $0x15d] sm:$0xff]
        %v4586 = vld [vmem:[%s4055 + $0x16d] sm:$0xff]
        %v4587 = vld [vmem:[%s4055 + $0x175] sm:$0xff]
        %v4588 = vlaneseq
        %v4589 = vshrl.u32 %v4588, 7
        %v4590 = vsub.s32 5, %v4589
        %v4591 = vrot.slane %v515, %v4590
        %v4592 = vmul.f32 %v4556, %v4591
        %v4593 = vmul.f32 %v4557, %v4591
        %v4594 = vmul.f32 %v4558, %v4591
        %v4595 = vmul.f32 %v4559, %v4591
        %v4596 = vmul.f32 %v4560, %v4591
        %v4597 = vmul.f32 %v4561, %v4591
        %v4598 = vmul.f32 %v4562, %v4591
        %v4599 = vmul.f32 %v4563, %v4591
        %v4600 = vmul.f32 %v4564, %v4591
        %v4601 = vmul.f32 %v4565, %v4591
        %v4602 = vmul.f32 %v4566, %v4591
        %v4603 = vmul.f32 %v4567, %v4591
        %v4604 = vmul.f32 %v4568, %v4591
        %v4605 = vmul.f32 %v4569, %v4591
        %v4606 = vmul.f32 %v4570, %v4591
        %v4607 = vmul.f32 %v4571, %v4591
        %v4608 = vmul.f32 %v4572, %v4591
        %v4609 = vmul.f32 %v4573, %v4591
        %v4610 = vmul.f32 %v4574, %v4591
        %v4611 = vmul.f32 %v4575, %v4591
        %v4612 = vmul.f32 %v4576, %v4591
        %v4613 = vmul.f32 %v4577, %v4591
        %v4614 = vmul.f32 %v4578, %v4591
        %v4615 = vmul.f32 %v4579, %v4591
        %v4616 = vmul.f32 %v4580, %v4591
        %v4617 = vmul.f32 %v4581, %v4591
        %v4618 = vmul.f32 %v4582, %v4591
        %v4619 = vmul.f32 %v4583, %v4591
        %v4620 = vmul.f32 %v4584, %v4591
        %v4621 = vmul.f32 %v4585, %v4591
        %v4622 = vmul.f32 %v4586, %v4591
        %v4623 = vmul.f32 %v4587, %v4591
        %v4624 = vadd.f32 %v4524, %v4592
        %v4625 = vadd.f32 %v4525, %v4593
        %v4626 = vadd.f32 %v4526, %v4594
        %v4627 = vadd.f32 %v4527, %v4595
        %v4628 = vadd.f32 %v4528, %v4596
        %v4629 = vadd.f32 %v4529, %v4597
        %v4630 = vadd.f32 %v4530, %v4598
        %v4631 = vadd.f32 %v4531, %v4599
        %v4632 = vadd.f32 %v4532, %v4600
        %v4633 = vadd.f32 %v4533, %v4601
        %v4634 = vadd.f32 %v4534, %v4602
        %v4635 = vadd.f32 %v4535, %v4603
        %v4636 = vadd.f32 %v4536, %v4604
        %v4637 = vadd.f32 %v4537, %v4605
        %v4638 = vadd.f32 %v4538, %v4606
        %v4639 = vadd.f32 %v4539, %v4607
        %v4640 = vadd.f32 %v4540, %v4608
        %v4641 = vadd.f32 %v4541, %v4609
        %v4642 = vadd.f32 %v4542, %v4610
        %v4643 = vadd.f32 %v4543, %v4611
        %v4644 = vadd.f32 %v4544, %v4612
        %v4645 = vadd.f32 %v4545, %v4613
        %v4646 = vadd.f32 %v4546, %v4614
        %v4647 = vadd.f32 %v4547, %v4615
        %v4648 = vadd.f32 %v4548, %v4616
        %v4649 = vadd.f32 %v4549, %v4617
        %v4650 = vadd.f32 %v4550, %v4618
        %v4651 = vadd.f32 %v4551, %v4619
        %v4652 = vadd.f32 %v4552, %v4620
        %v4653 = vadd.f32 %v4553, %v4621
        %v4654 = vadd.f32 %v4554, %v4622
        %v4655 = vadd.f32 %v4555, %v4623
        %v4656 = vld [vmem:[%s4055 + $0x6] sm:$0xff]
        %v4657 = vld [vmem:[%s4055 + $0xe] sm:$0xff]
        %v4658 = vld [vmem:[%s4055 + $0x1e] sm:$0xff]
        %v4659 = vld [vmem:[%s4055 + $0x26] sm:$0xff]
        %v4660 = vld [vmem:[%s4055 + $0x36] sm:$0xff]
        %v4661 = vld [vmem:[%s4055 + $0x3e] sm:$0xff]
        %v4662 = vld [vmem:[%s4055 + $0x4e] sm:$0xff]
        %v4663 = vld [vmem:[%s4055 + $0x56] sm:$0xff]
        %v4664 = vld [vmem:[%s4055 + $0x66] sm:$0xff]
        %v4665 = vld [vmem:[%s4055 + $0x6e] sm:$0xff]
        %v4666 = vld [vmem:[%s4055 + $0x7e] sm:$0xff]
        %v4667 = vld [vmem:[%s4055 + $0x86] sm:$0xff]
        %v4668 = vld [vmem:[%s4055 + $0x96] sm:$0xff]
        %v4669 = vld [vmem:[%s4055 + $0x9e] sm:$0xff]
        %v4670 = vld [vmem:[%s4055 + $0xae] sm:$0xff]
        %v4671 = vld [vmem:[%s4055 + $0xb6] sm:$0xff]
        %v4672 = vld [vmem:[%s4055 + $0xc6] sm:$0xff]
        %v4673 = vld [vmem:[%s4055 + $0xce] sm:$0xff]
        %v4674 = vld [vmem:[%s4055 + $0xde] sm:$0xff]
        %v4675 = vld [vmem:[%s4055 + $0xe6] sm:$0xff]
        %v4676 = vld [vmem:[%s4055 + $0xf6] sm:$0xff]
        %v4677 = vld [vmem:[%s4055 + $0xfe] sm:$0xff]
        %v4678 = vld [vmem:[%s4055 + $0x10e] sm:$0xff]
        %v4679 = vld [vmem:[%s4055 + $0x116] sm:$0xff]
        %v4680 = vld [vmem:[%s4055 + $0x126] sm:$0xff]
        %v4681 = vld [vmem:[%s4055 + $0x12e] sm:$0xff]
        %v4682 = vld [vmem:[%s4055 + $0x13e] sm:$0xff]
        %v4683 = vld [vmem:[%s4055 + $0x146] sm:$0xff]
        %v4684 = vld [vmem:[%s4055 + $0x156] sm:$0xff]
        %v4685 = vld [vmem:[%s4055 + $0x15e] sm:$0xff]
        %v4686 = vld [vmem:[%s4055 + $0x16e] sm:$0xff]
        %v4687 = vld [vmem:[%s4055 + $0x176] sm:$0xff]
        %v4688 = vlaneseq
        %v4689 = vshrl.u32 %v4688, 7
        %v4690 = vsub.s32 6, %v4689
        %v4691 = vrot.slane %v515, %v4690
        %v4692 = vmul.f32 %v4656, %v4691
        %v4693 = vmul.f32 %v4657, %v4691
        %v4694 = vmul.f32 %v4658, %v4691
        %v4695 = vmul.f32 %v4659, %v4691
        %v4696 = vmul.f32 %v4660, %v4691
        %v4697 = vmul.f32 %v4661, %v4691
        %v4698 = vmul.f32 %v4662, %v4691
        %v4699 = vmul.f32 %v4663, %v4691
        %v4700 = vmul.f32 %v4664, %v4691
        %v4701 = vmul.f32 %v4665, %v4691
        %v4702 = vmul.f32 %v4666, %v4691
        %v4703 = vmul.f32 %v4667, %v4691
        %v4704 = vmul.f32 %v4668, %v4691
        %v4705 = vmul.f32 %v4669, %v4691
        %v4706 = vmul.f32 %v4670, %v4691
        %v4707 = vmul.f32 %v4671, %v4691
        %v4708 = vmul.f32 %v4672, %v4691
        %v4709 = vmul.f32 %v4673, %v4691
        %v4710 = vmul.f32 %v4674, %v4691
        %v4711 = vmul.f32 %v4675, %v4691
        %v4712 = vmul.f32 %v4676, %v4691
        %v4713 = vmul.f32 %v4677, %v4691
        %v4714 = vmul.f32 %v4678, %v4691
        %v4715 = vmul.f32 %v4679, %v4691
        %v4716 = vmul.f32 %v4680, %v4691
        %v4717 = vmul.f32 %v4681, %v4691
        %v4718 = vmul.f32 %v4682, %v4691
        %v4719 = vmul.f32 %v4683, %v4691
        %v4720 = vmul.f32 %v4684, %v4691
        %v4721 = vmul.f32 %v4685, %v4691
        %v4722 = vmul.f32 %v4686, %v4691
        %v4723 = vmul.f32 %v4687, %v4691
        %v4724 = vadd.f32 %v4624, %v4692
        %v4725 = vadd.f32 %v4625, %v4693
        %v4726 = vadd.f32 %v4626, %v4694
        %v4727 = vadd.f32 %v4627, %v4695
        %v4728 = vadd.f32 %v4628, %v4696
        %v4729 = vadd.f32 %v4629, %v4697
        %v4730 = vadd.f32 %v4630, %v4698
        %v4731 = vadd.f32 %v4631, %v4699
        %v4732 = vadd.f32 %v4632, %v4700
        %v4733 = vadd.f32 %v4633, %v4701
        %v4734 = vadd.f32 %v4634, %v4702
        %v4735 = vadd.f32 %v4635, %v4703
        %v4736 = vadd.f32 %v4636, %v4704
        %v4737 = vadd.f32 %v4637, %v4705
        %v4738 = vadd.f32 %v4638, %v4706
        %v4739 = vadd.f32 %v4639, %v4707
        %v4740 = vadd.f32 %v4640, %v4708
        %v4741 = vadd.f32 %v4641, %v4709
        %v4742 = vadd.f32 %v4642, %v4710
        %v4743 = vadd.f32 %v4643, %v4711
        %v4744 = vadd.f32 %v4644, %v4712
        %v4745 = vadd.f32 %v4645, %v4713
        %v4746 = vadd.f32 %v4646, %v4714
        %v4747 = vadd.f32 %v4647, %v4715
        %v4748 = vadd.f32 %v4648, %v4716
        %v4749 = vadd.f32 %v4649, %v4717
        %v4750 = vadd.f32 %v4650, %v4718
        %v4751 = vadd.f32 %v4651, %v4719
        %v4752 = vadd.f32 %v4652, %v4720
        %v4753 = vadd.f32 %v4653, %v4721
        %v4754 = vadd.f32 %v4654, %v4722
        %v4755 = vadd.f32 %v4655, %v4723
        %s4756 = scalar_lea.vmem [#allocation2], 144
        %v4757 = vld [vmem:[%s4756] sm:$0xff]
        %v4758 = vld [vmem:[%s4756 + $0x8] sm:$0xff]
        %v4759 = vld [vmem:[%s4756 + $0x18] sm:$0xff]
        %v4760 = vld [vmem:[%s4756 + $0x20] sm:$0xff]
        %v4761 = vld [vmem:[%s4756 + $0x30] sm:$0xff]
        %v4762 = vld [vmem:[%s4756 + $0x38] sm:$0xff]
        %v4763 = vld [vmem:[%s4756 + $0x48] sm:$0xff]
        %v4764 = vld [vmem:[%s4756 + $0x50] sm:$0xff]
        %v4765 = vld [vmem:[%s4756 + $0x60] sm:$0xff]
        %v4766 = vld [vmem:[%s4756 + $0x68] sm:$0xff]
        %v4767 = vld [vmem:[%s4756 + $0x78] sm:$0xff]
        %v4768 = vld [vmem:[%s4756 + $0x80] sm:$0xff]
        %v4769 = vld [vmem:[%s4756 + $0x90] sm:$0xff]
        %v4770 = vld [vmem:[%s4756 + $0x98] sm:$0xff]
        %v4771 = vld [vmem:[%s4756 + $0xa8] sm:$0xff]
        %v4772 = vld [vmem:[%s4756 + $0xb0] sm:$0xff]
        %v4773 = vld [vmem:[%s4756 + $0xc0] sm:$0xff]
        %v4774 = vld [vmem:[%s4756 + $0xc8] sm:$0xff]
        %v4775 = vld [vmem:[%s4756 + $0xd8] sm:$0xff]
        %v4776 = vld [vmem:[%s4756 + $0xe0] sm:$0xff]
        %v4777 = vld [vmem:[%s4756 + $0xf0] sm:$0xff]
        %v4778 = vld [vmem:[%s4756 + $0xf8] sm:$0xff]
        %v4779 = vld [vmem:[%s4756 + $0x108] sm:$0xff]
        %v4780 = vld [vmem:[%s4756 + $0x110] sm:$0xff]
        %v4781 = vld [vmem:[%s4756 + $0x120] sm:$0xff]
        %v4782 = vld [vmem:[%s4756 + $0x128] sm:$0xff]
        %v4783 = vld [vmem:[%s4756 + $0x138] sm:$0xff]
        %v4784 = vld [vmem:[%s4756 + $0x140] sm:$0xff]
        %v4785 = vld [vmem:[%s4756 + $0x150] sm:$0xff]
        %v4786 = vld [vmem:[%s4756 + $0x158] sm:$0xff]
        %v4787 = vld [vmem:[%s4756 + $0x168] sm:$0xff]
        %v4788 = vld [vmem:[%s4756 + $0x170] sm:$0xff]
        %v4789 = vlaneseq
        %v4790 = vshrl.u32 %v4789, 7
        %v4791 = vsub.s32 0, %v4790
        %v4792 = vrot.slane %v516, %v4791
        %v4793 = vmul.f32 %v4757, %v4792
        %v4794 = vmul.f32 %v4758, %v4792
        %v4795 = vmul.f32 %v4759, %v4792
        %v4796 = vmul.f32 %v4760, %v4792
        %v4797 = vmul.f32 %v4761, %v4792
        %v4798 = vmul.f32 %v4762, %v4792
        %v4799 = vmul.f32 %v4763, %v4792
        %v4800 = vmul.f32 %v4764, %v4792
        %v4801 = vmul.f32 %v4765, %v4792
        %v4802 = vmul.f32 %v4766, %v4792
        %v4803 = vmul.f32 %v4767, %v4792
        %v4804 = vmul.f32 %v4768, %v4792
        %v4805 = vmul.f32 %v4769, %v4792
        %v4806 = vmul.f32 %v4770, %v4792
        %v4807 = vmul.f32 %v4771, %v4792
        %v4808 = vmul.f32 %v4772, %v4792
        %v4809 = vmul.f32 %v4773, %v4792
        %v4810 = vmul.f32 %v4774, %v4792
        %v4811 = vmul.f32 %v4775, %v4792
        %v4812 = vmul.f32 %v4776, %v4792
        %v4813 = vmul.f32 %v4777, %v4792
        %v4814 = vmul.f32 %v4778, %v4792
        %v4815 = vmul.f32 %v4779, %v4792
        %v4816 = vmul.f32 %v4780, %v4792
        %v4817 = vmul.f32 %v4781, %v4792
        %v4818 = vmul.f32 %v4782, %v4792
        %v4819 = vmul.f32 %v4783, %v4792
        %v4820 = vmul.f32 %v4784, %v4792
        %v4821 = vmul.f32 %v4785, %v4792
        %v4822 = vmul.f32 %v4786, %v4792
        %v4823 = vmul.f32 %v4787, %v4792
        %v4824 = vmul.f32 %v4788, %v4792
        %v4825 = vadd.f32 %v4724, %v4793
        %v4826 = vadd.f32 %v4725, %v4794
        %v4827 = vadd.f32 %v4726, %v4795
        %v4828 = vadd.f32 %v4727, %v4796
        %v4829 = vadd.f32 %v4728, %v4797
        %v4830 = vadd.f32 %v4729, %v4798
        %v4831 = vadd.f32 %v4730, %v4799
        %v4832 = vadd.f32 %v4731, %v4800
        %v4833 = vadd.f32 %v4732, %v4801
        %v4834 = vadd.f32 %v4733, %v4802
        %v4835 = vadd.f32 %v4734, %v4803
        %v4836 = vadd.f32 %v4735, %v4804
        %v4837 = vadd.f32 %v4736, %v4805
        %v4838 = vadd.f32 %v4737, %v4806
        %v4839 = vadd.f32 %v4738, %v4807
        %v4840 = vadd.f32 %v4739, %v4808
        %v4841 = vadd.f32 %v4740, %v4809
        %v4842 = vadd.f32 %v4741, %v4810
        %v4843 = vadd.f32 %v4742, %v4811
        %v4844 = vadd.f32 %v4743, %v4812
        %v4845 = vadd.f32 %v4744, %v4813
        %v4846 = vadd.f32 %v4745, %v4814
        %v4847 = vadd.f32 %v4746, %v4815
        %v4848 = vadd.f32 %v4747, %v4816
        %v4849 = vadd.f32 %v4748, %v4817
        %v4850 = vadd.f32 %v4749, %v4818
        %v4851 = vadd.f32 %v4750, %v4819
        %v4852 = vadd.f32 %v4751, %v4820
        %v4853 = vadd.f32 %v4752, %v4821
        %v4854 = vadd.f32 %v4753, %v4822
        %v4855 = vadd.f32 %v4754, %v4823
        %v4856 = vadd.f32 %v4755, %v4824
        %v4857 = vld [vmem:[%s4756 + $0x1] sm:$0xff]
        %v4858 = vld [vmem:[%s4756 + $0x9] sm:$0xff]
        %v4859 = vld [vmem:[%s4756 + $0x19] sm:$0xff]
        %v4860 = vld [vmem:[%s4756 + $0x21] sm:$0xff]
        %v4861 = vld [vmem:[%s4756 + $0x31] sm:$0xff]
        %v4862 = vld [vmem:[%s4756 + $0x39] sm:$0xff]
        %v4863 = vld [vmem:[%s4756 + $0x49] sm:$0xff]
        %v4864 = vld [vmem:[%s4756 + $0x51] sm:$0xff]
        %v4865 = vld [vmem:[%s4756 + $0x61] sm:$0xff]
        %v4866 = vld [vmem:[%s4756 + $0x69] sm:$0xff]
        %v4867 = vld [vmem:[%s4756 + $0x79] sm:$0xff]
        %v4868 = vld [vmem:[%s4756 + $0x81] sm:$0xff]
        %v4869 = vld [vmem:[%s4756 + $0x91] sm:$0xff]
        %v4870 = vld [vmem:[%s4756 + $0x99] sm:$0xff]
        %v4871 = vld [vmem:[%s4756 + $0xa9] sm:$0xff]
        %v4872 = vld [vmem:[%s4756 + $0xb1] sm:$0xff]
        %v4873 = vld [vmem:[%s4756 + $0xc1] sm:$0xff]
        %v4874 = vld [vmem:[%s4756 + $0xc9] sm:$0xff]
        %v4875 = vld [vmem:[%s4756 + $0xd9] sm:$0xff]
        %v4876 = vld [vmem:[%s4756 + $0xe1] sm:$0xff]
        %v4877 = vld [vmem:[%s4756 + $0xf1] sm:$0xff]
        %v4878 = vld [vmem:[%s4756 + $0xf9] sm:$0xff]
        %v4879 = vld [vmem:[%s4756 + $0x109] sm:$0xff]
        %v4880 = vld [vmem:[%s4756 + $0x111] sm:$0xff]
        %v4881 = vld [vmem:[%s4756 + $0x121] sm:$0xff]
        %v4882 = vld [vmem:[%s4756 + $0x129] sm:$0xff]
        %v4883 = vld [vmem:[%s4756 + $0x139] sm:$0xff]
        %v4884 = vld [vmem:[%s4756 + $0x141] sm:$0xff]
        %v4885 = vld [vmem:[%s4756 + $0x151] sm:$0xff]
        %v4886 = vld [vmem:[%s4756 + $0x159] sm:$0xff]
        %v4887 = vld [vmem:[%s4756 + $0x169] sm:$0xff]
        %v4888 = vld [vmem:[%s4756 + $0x171] sm:$0xff]
        %v4889 = vlaneseq
        %v4890 = vshrl.u32 %v4889, 7
        %v4891 = vsub.s32 1, %v4890
        %v4892 = vrot.slane %v516, %v4891
        %v4893 = vmul.f32 %v4857, %v4892
        %v4894 = vmul.f32 %v4858, %v4892
        %v4895 = vmul.f32 %v4859, %v4892
        %v4896 = vmul.f32 %v4860, %v4892
        %v4897 = vmul.f32 %v4861, %v4892
        %v4898 = vmul.f32 %v4862, %v4892
        %v4899 = vmul.f32 %v4863, %v4892
        %v4900 = vmul.f32 %v4864, %v4892
        %v4901 = vmul.f32 %v4865, %v4892
        %v4902 = vmul.f32 %v4866, %v4892
        %v4903 = vmul.f32 %v4867, %v4892
        %v4904 = vmul.f32 %v4868, %v4892
        %v4905 = vmul.f32 %v4869, %v4892
        %v4906 = vmul.f32 %v4870, %v4892
        %v4907 = vmul.f32 %v4871, %v4892
        %v4908 = vmul.f32 %v4872, %v4892
        %v4909 = vmul.f32 %v4873, %v4892
        %v4910 = vmul.f32 %v4874, %v4892
        %v4911 = vmul.f32 %v4875, %v4892
        %v4912 = vmul.f32 %v4876, %v4892
        %v4913 = vmul.f32 %v4877, %v4892
        %v4914 = vmul.f32 %v4878, %v4892
        %v4915 = vmul.f32 %v4879, %v4892
        %v4916 = vmul.f32 %v4880, %v4892
        %v4917 = vmul.f32 %v4881, %v4892
        %v4918 = vmul.f32 %v4882, %v4892
        %v4919 = vmul.f32 %v4883, %v4892
        %v4920 = vmul.f32 %v4884, %v4892
        %v4921 = vmul.f32 %v4885, %v4892
        %v4922 = vmul.f32 %v4886, %v4892
        %v4923 = vmul.f32 %v4887, %v4892
        %v4924 = vmul.f32 %v4888, %v4892
        %v4925 = vadd.f32 %v4825, %v4893
        %v4926 = vadd.f32 %v4826, %v4894
        %v4927 = vadd.f32 %v4827, %v4895
        %v4928 = vadd.f32 %v4828, %v4896
        %v4929 = vadd.f32 %v4829, %v4897
        %v4930 = vadd.f32 %v4830, %v4898
        %v4931 = vadd.f32 %v4831, %v4899
        %v4932 = vadd.f32 %v4832, %v4900
        %v4933 = vadd.f32 %v4833, %v4901
        %v4934 = vadd.f32 %v4834, %v4902
        %v4935 = vadd.f32 %v4835, %v4903
        %v4936 = vadd.f32 %v4836, %v4904
        %v4937 = vadd.f32 %v4837, %v4905
        %v4938 = vadd.f32 %v4838, %v4906
        %v4939 = vadd.f32 %v4839, %v4907
        %v4940 = vadd.f32 %v4840, %v4908
        %v4941 = vadd.f32 %v4841, %v4909
        %v4942 = vadd.f32 %v4842, %v4910
        %v4943 = vadd.f32 %v4843, %v4911
        %v4944 = vadd.f32 %v4844, %v4912
        %v4945 = vadd.f32 %v4845, %v4913
        %v4946 = vadd.f32 %v4846, %v4914
        %v4947 = vadd.f32 %v4847, %v4915
        %v4948 = vadd.f32 %v4848, %v4916
        %v4949 = vadd.f32 %v4849, %v4917
        %v4950 = vadd.f32 %v4850, %v4918
        %v4951 = vadd.f32 %v4851, %v4919
        %v4952 = vadd.f32 %v4852, %v4920
        %v4953 = vadd.f32 %v4853, %v4921
        %v4954 = vadd.f32 %v4854, %v4922
        %v4955 = vadd.f32 %v4855, %v4923
        %v4956 = vadd.f32 %v4856, %v4924
        %v4957 = vld [vmem:[%s4756 + $0x2] sm:$0xff]
        %v4958 = vld [vmem:[%s4756 + $0xa] sm:$0xff]
        %v4959 = vld [vmem:[%s4756 + $0x1a] sm:$0xff]
        %v4960 = vld [vmem:[%s4756 + $0x22] sm:$0xff]
        %v4961 = vld [vmem:[%s4756 + $0x32] sm:$0xff]
        %v4962 = vld [vmem:[%s4756 + $0x3a] sm:$0xff]
        %v4963 = vld [vmem:[%s4756 + $0x4a] sm:$0xff]
        %v4964 = vld [vmem:[%s4756 + $0x52] sm:$0xff]
        %v4965 = vld [vmem:[%s4756 + $0x62] sm:$0xff]
        %v4966 = vld [vmem:[%s4756 + $0x6a] sm:$0xff]
        %v4967 = vld [vmem:[%s4756 + $0x7a] sm:$0xff]
        %v4968 = vld [vmem:[%s4756 + $0x82] sm:$0xff]
        %v4969 = vld [vmem:[%s4756 + $0x92] sm:$0xff]
        %v4970 = vld [vmem:[%s4756 + $0x9a] sm:$0xff]
        %v4971 = vld [vmem:[%s4756 + $0xaa] sm:$0xff]
        %v4972 = vld [vmem:[%s4756 + $0xb2] sm:$0xff]
        %v4973 = vld [vmem:[%s4756 + $0xc2] sm:$0xff]
        %v4974 = vld [vmem:[%s4756 + $0xca] sm:$0xff]
        %v4975 = vld [vmem:[%s4756 + $0xda] sm:$0xff]
        %v4976 = vld [vmem:[%s4756 + $0xe2] sm:$0xff]
        %v4977 = vld [vmem:[%s4756 + $0xf2] sm:$0xff]
        %v4978 = vld [vmem:[%s4756 + $0xfa] sm:$0xff]
        %v4979 = vld [vmem:[%s4756 + $0x10a] sm:$0xff]
        %v4980 = vld [vmem:[%s4756 + $0x112] sm:$0xff]
        %v4981 = vld [vmem:[%s4756 + $0x122] sm:$0xff]
        %v4982 = vld [vmem:[%s4756 + $0x12a] sm:$0xff]
        %v4983 = vld [vmem:[%s4756 + $0x13a] sm:$0xff]
        %v4984 = vld [vmem:[%s4756 + $0x142] sm:$0xff]
        %v4985 = vld [vmem:[%s4756 + $0x152] sm:$0xff]
        %v4986 = vld [vmem:[%s4756 + $0x15a] sm:$0xff]
        %v4987 = vld [vmem:[%s4756 + $0x16a] sm:$0xff]
        %v4988 = vld [vmem:[%s4756 + $0x172] sm:$0xff]
        %v4989 = vlaneseq
        %v4990 = vshrl.u32 %v4989, 7
        %v4991 = vsub.s32 2, %v4990
        %v4992 = vrot.slane %v516, %v4991
        %v4993 = vmul.f32 %v4957, %v4992
        %v4994 = vmul.f32 %v4958, %v4992
        %v4995 = vmul.f32 %v4959, %v4992
        %v4996 = vmul.f32 %v4960, %v4992
        %v4997 = vmul.f32 %v4961, %v4992
        %v4998 = vmul.f32 %v4962, %v4992
        %v4999 = vmul.f32 %v4963, %v4992
        %v5000 = vmul.f32 %v4964, %v4992
        %v5001 = vmul.f32 %v4965, %v4992
        %v5002 = vmul.f32 %v4966, %v4992
        %v5003 = vmul.f32 %v4967, %v4992
        %v5004 = vmul.f32 %v4968, %v4992
        %v5005 = vmul.f32 %v4969, %v4992
        %v5006 = vmul.f32 %v4970, %v4992
        %v5007 = vmul.f32 %v4971, %v4992
        %v5008 = vmul.f32 %v4972, %v4992
        %v5009 = vmul.f32 %v4973, %v4992
        %v5010 = vmul.f32 %v4974, %v4992
        %v5011 = vmul.f32 %v4975, %v4992
        %v5012 = vmul.f32 %v4976, %v4992
        %v5013 = vmul.f32 %v4977, %v4992
        %v5014 = vmul.f32 %v4978, %v4992
        %v5015 = vmul.f32 %v4979, %v4992
        %v5016 = vmul.f32 %v4980, %v4992
        %v5017 = vmul.f32 %v4981, %v4992
        %v5018 = vmul.f32 %v4982, %v4992
        %v5019 = vmul.f32 %v4983, %v4992
        %v5020 = vmul.f32 %v4984, %v4992
        %v5021 = vmul.f32 %v4985, %v4992
        %v5022 = vmul.f32 %v4986, %v4992
        %v5023 = vmul.f32 %v4987, %v4992
        %v5024 = vmul.f32 %v4988, %v4992
        %v5025 = vadd.f32 %v4925, %v4993
        %v5026 = vadd.f32 %v4926, %v4994
        %v5027 = vadd.f32 %v4927, %v4995
        %v5028 = vadd.f32 %v4928, %v4996
        %v5029 = vadd.f32 %v4929, %v4997
        %v5030 = vadd.f32 %v4930, %v4998
        %v5031 = vadd.f32 %v4931, %v4999
        %v5032 = vadd.f32 %v4932, %v5000
        %v5033 = vadd.f32 %v4933, %v5001
        %v5034 = vadd.f32 %v4934, %v5002
        %v5035 = vadd.f32 %v4935, %v5003
        %v5036 = vadd.f32 %v4936, %v5004
        %v5037 = vadd.f32 %v4937, %v5005
        %v5038 = vadd.f32 %v4938, %v5006
        %v5039 = vadd.f32 %v4939, %v5007
        %v5040 = vadd.f32 %v4940, %v5008
        %v5041 = vadd.f32 %v4941, %v5009
        %v5042 = vadd.f32 %v4942, %v5010
        %v5043 = vadd.f32 %v4943, %v5011
        %v5044 = vadd.f32 %v4944, %v5012
        %v5045 = vadd.f32 %v4945, %v5013
        %v5046 = vadd.f32 %v4946, %v5014
        %v5047 = vadd.f32 %v4947, %v5015
        %v5048 = vadd.f32 %v4948, %v5016
        %v5049 = vadd.f32 %v4949, %v5017
        %v5050 = vadd.f32 %v4950, %v5018
        %v5051 = vadd.f32 %v4951, %v5019
        %v5052 = vadd.f32 %v4952, %v5020
        %v5053 = vadd.f32 %v4953, %v5021
        %v5054 = vadd.f32 %v4954, %v5022
        %v5055 = vadd.f32 %v4955, %v5023
        %v5056 = vadd.f32 %v4956, %v5024
        %v5057 = vld [vmem:[%s4756 + $0x3] sm:$0xff]
        %v5058 = vld [vmem:[%s4756 + $0xb] sm:$0xff]
        %v5059 = vld [vmem:[%s4756 + $0x1b] sm:$0xff]
        %v5060 = vld [vmem:[%s4756 + $0x23] sm:$0xff]
        %v5061 = vld [vmem:[%s4756 + $0x33] sm:$0xff]
        %v5062 = vld [vmem:[%s4756 + $0x3b] sm:$0xff]
        %v5063 = vld [vmem:[%s4756 + $0x4b] sm:$0xff]
        %v5064 = vld [vmem:[%s4756 + $0x53] sm:$0xff]
        %v5065 = vld [vmem:[%s4756 + $0x63] sm:$0xff]
        %v5066 = vld [vmem:[%s4756 + $0x6b] sm:$0xff]
        %v5067 = vld [vmem:[%s4756 + $0x7b] sm:$0xff]
        %v5068 = vld [vmem:[%s4756 + $0x83] sm:$0xff]
        %v5069 = vld [vmem:[%s4756 + $0x93] sm:$0xff]
        %v5070 = vld [vmem:[%s4756 + $0x9b] sm:$0xff]
        %v5071 = vld [vmem:[%s4756 + $0xab] sm:$0xff]
        %v5072 = vld [vmem:[%s4756 + $0xb3] sm:$0xff]
        %v5073 = vld [vmem:[%s4756 + $0xc3] sm:$0xff]
        %v5074 = vld [vmem:[%s4756 + $0xcb] sm:$0xff]
        %v5075 = vld [vmem:[%s4756 + $0xdb] sm:$0xff]
        %v5076 = vld [vmem:[%s4756 + $0xe3] sm:$0xff]
        %v5077 = vld [vmem:[%s4756 + $0xf3] sm:$0xff]
        %v5078 = vld [vmem:[%s4756 + $0xfb] sm:$0xff]
        %v5079 = vld [vmem:[%s4756 + $0x10b] sm:$0xff]
        %v5080 = vld [vmem:[%s4756 + $0x113] sm:$0xff]
        %v5081 = vld [vmem:[%s4756 + $0x123] sm:$0xff]
        %v5082 = vld [vmem:[%s4756 + $0x12b] sm:$0xff]
        %v5083 = vld [vmem:[%s4756 + $0x13b] sm:$0xff]
        %v5084 = vld [vmem:[%s4756 + $0x143] sm:$0xff]
        %v5085 = vld [vmem:[%s4756 + $0x153] sm:$0xff]
        %v5086 = vld [vmem:[%s4756 + $0x15b] sm:$0xff]
        %v5087 = vld [vmem:[%s4756 + $0x16b] sm:$0xff]
        %v5088 = vld [vmem:[%s4756 + $0x173] sm:$0xff]
        %v5089 = vlaneseq
        %v5090 = vshrl.u32 %v5089, 7
        %v5091 = vsub.s32 3, %v5090
        %v5092 = vrot.slane %v516, %v5091
        %v5093 = vmul.f32 %v5057, %v5092
        %v5094 = vmul.f32 %v5058, %v5092
        %v5095 = vmul.f32 %v5059, %v5092
        %v5096 = vmul.f32 %v5060, %v5092
        %v5097 = vmul.f32 %v5061, %v5092
        %v5098 = vmul.f32 %v5062, %v5092
        %v5099 = vmul.f32 %v5063, %v5092
        %v5100 = vmul.f32 %v5064, %v5092
        %v5101 = vmul.f32 %v5065, %v5092
        %v5102 = vmul.f32 %v5066, %v5092
        %v5103 = vmul.f32 %v5067, %v5092
        %v5104 = vmul.f32 %v5068, %v5092
        %v5105 = vmul.f32 %v5069, %v5092
        %v5106 = vmul.f32 %v5070, %v5092
        %v5107 = vmul.f32 %v5071, %v5092
        %v5108 = vmul.f32 %v5072, %v5092
        %v5109 = vmul.f32 %v5073, %v5092
        %v5110 = vmul.f32 %v5074, %v5092
        %v5111 = vmul.f32 %v5075, %v5092
        %v5112 = vmul.f32 %v5076, %v5092
        %v5113 = vmul.f32 %v5077, %v5092
        %v5114 = vmul.f32 %v5078, %v5092
        %v5115 = vmul.f32 %v5079, %v5092
        %v5116 = vmul.f32 %v5080, %v5092
        %v5117 = vmul.f32 %v5081, %v5092
        %v5118 = vmul.f32 %v5082, %v5092
        %v5119 = vmul.f32 %v5083, %v5092
        %v5120 = vmul.f32 %v5084, %v5092
        %v5121 = vmul.f32 %v5085, %v5092
        %v5122 = vmul.f32 %v5086, %v5092
        %v5123 = vmul.f32 %v5087, %v5092
        %v5124 = vmul.f32 %v5088, %v5092
        %v5125 = vadd.f32 %v5025, %v5093
        %v5126 = vadd.f32 %v5026, %v5094
        %v5127 = vadd.f32 %v5027, %v5095
        %v5128 = vadd.f32 %v5028, %v5096
        %v5129 = vadd.f32 %v5029, %v5097
        %v5130 = vadd.f32 %v5030, %v5098
        %v5131 = vadd.f32 %v5031, %v5099
        %v5132 = vadd.f32 %v5032, %v5100
        %v5133 = vadd.f32 %v5033, %v5101
        %v5134 = vadd.f32 %v5034, %v5102
        %v5135 = vadd.f32 %v5035, %v5103
        %v5136 = vadd.f32 %v5036, %v5104
        %v5137 = vadd.f32 %v5037, %v5105
        %v5138 = vadd.f32 %v5038, %v5106
        %v5139 = vadd.f32 %v5039, %v5107
        %v5140 = vadd.f32 %v5040, %v5108
        %v5141 = vadd.f32 %v5041, %v5109
        %v5142 = vadd.f32 %v5042, %v5110
        %v5143 = vadd.f32 %v5043, %v5111
        %v5144 = vadd.f32 %v5044, %v5112
        %v5145 = vadd.f32 %v5045, %v5113
        %v5146 = vadd.f32 %v5046, %v5114
        %v5147 = vadd.f32 %v5047, %v5115
        %v5148 = vadd.f32 %v5048, %v5116
        %v5149 = vadd.f32 %v5049, %v5117
        %v5150 = vadd.f32 %v5050, %v5118
        %v5151 = vadd.f32 %v5051, %v5119
        %v5152 = vadd.f32 %v5052, %v5120
        %v5153 = vadd.f32 %v5053, %v5121
        %v5154 = vadd.f32 %v5054, %v5122
        %v5155 = vadd.f32 %v5055, %v5123
        %v5156 = vadd.f32 %v5056, %v5124
        %v5157 = vld [vmem:[%s4756 + $0x4] sm:$0xff]
        %v5158 = vld [vmem:[%s4756 + $0xc] sm:$0xff]
        %v5159 = vld [vmem:[%s4756 + $0x1c] sm:$0xff]
        %v5160 = vld [vmem:[%s4756 + $0x24] sm:$0xff]
        %v5161 = vld [vmem:[%s4756 + $0x34] sm:$0xff]
        %v5162 = vld [vmem:[%s4756 + $0x3c] sm:$0xff]
        %v5163 = vld [vmem:[%s4756 + $0x4c] sm:$0xff]
        %v5164 = vld [vmem:[%s4756 + $0x54] sm:$0xff]
        %v5165 = vld [vmem:[%s4756 + $0x64] sm:$0xff]
        %v5166 = vld [vmem:[%s4756 + $0x6c] sm:$0xff]
        %v5167 = vld [vmem:[%s4756 + $0x7c] sm:$0xff]
        %v5168 = vld [vmem:[%s4756 + $0x84] sm:$0xff]
        %v5169 = vld [vmem:[%s4756 + $0x94] sm:$0xff]
        %v5170 = vld [vmem:[%s4756 + $0x9c] sm:$0xff]
        %v5171 = vld [vmem:[%s4756 + $0xac] sm:$0xff]
        %v5172 = vld [vmem:[%s4756 + $0xb4] sm:$0xff]
        %v5173 = vld [vmem:[%s4756 + $0xc4] sm:$0xff]
        %v5174 = vld [vmem:[%s4756 + $0xcc] sm:$0xff]
        %v5175 = vld [vmem:[%s4756 + $0xdc] sm:$0xff]
        %v5176 = vld [vmem:[%s4756 + $0xe4] sm:$0xff]
        %v5177 = vld [vmem:[%s4756 + $0xf4] sm:$0xff]
        %v5178 = vld [vmem:[%s4756 + $0xfc] sm:$0xff]
        %v5179 = vld [vmem:[%s4756 + $0x10c] sm:$0xff]
        %v5180 = vld [vmem:[%s4756 + $0x114] sm:$0xff]
        %v5181 = vld [vmem:[%s4756 + $0x124] sm:$0xff]
        %v5182 = vld [vmem:[%s4756 + $0x12c] sm:$0xff]
        %v5183 = vld [vmem:[%s4756 + $0x13c] sm:$0xff]
        %v5184 = vld [vmem:[%s4756 + $0x144] sm:$0xff]
        %v5185 = vld [vmem:[%s4756 + $0x154] sm:$0xff]
        %v5186 = vld [vmem:[%s4756 + $0x15c] sm:$0xff]
        %v5187 = vld [vmem:[%s4756 + $0x16c] sm:$0xff]
        %v5188 = vld [vmem:[%s4756 + $0x174] sm:$0xff]
        %v5189 = vlaneseq
        %v5190 = vshrl.u32 %v5189, 7
        %v5191 = vsub.s32 4, %v5190
        %v5192 = vrot.slane %v516, %v5191
        %v5193 = vmul.f32 %v5157, %v5192
        %v5194 = vmul.f32 %v5158, %v5192
        %v5195 = vmul.f32 %v5159, %v5192
        %v5196 = vmul.f32 %v5160, %v5192
        %v5197 = vmul.f32 %v5161, %v5192
        %v5198 = vmul.f32 %v5162, %v5192
        %v5199 = vmul.f32 %v5163, %v5192
        %v5200 = vmul.f32 %v5164, %v5192
        %v5201 = vmul.f32 %v5165, %v5192
        %v5202 = vmul.f32 %v5166, %v5192
        %v5203 = vmul.f32 %v5167, %v5192
        %v5204 = vmul.f32 %v5168, %v5192
        %v5205 = vmul.f32 %v5169, %v5192
        %v5206 = vmul.f32 %v5170, %v5192
        %v5207 = vmul.f32 %v5171, %v5192
        %v5208 = vmul.f32 %v5172, %v5192
        %v5209 = vmul.f32 %v5173, %v5192
        %v5210 = vmul.f32 %v5174, %v5192
        %v5211 = vmul.f32 %v5175, %v5192
        %v5212 = vmul.f32 %v5176, %v5192
        %v5213 = vmul.f32 %v5177, %v5192
        %v5214 = vmul.f32 %v5178, %v5192
        %v5215 = vmul.f32 %v5179, %v5192
        %v5216 = vmul.f32 %v5180, %v5192
        %v5217 = vmul.f32 %v5181, %v5192
        %v5218 = vmul.f32 %v5182, %v5192
        %v5219 = vmul.f32 %v5183, %v5192
        %v5220 = vmul.f32 %v5184, %v5192
        %v5221 = vmul.f32 %v5185, %v5192
        %v5222 = vmul.f32 %v5186, %v5192
        %v5223 = vmul.f32 %v5187, %v5192
        %v5224 = vmul.f32 %v5188, %v5192
        %v5225 = vadd.f32 %v5125, %v5193
        %v5226 = vadd.f32 %v5126, %v5194
        %v5227 = vadd.f32 %v5127, %v5195
        %v5228 = vadd.f32 %v5128, %v5196
        %v5229 = vadd.f32 %v5129, %v5197
        %v5230 = vadd.f32 %v5130, %v5198
        %v5231 = vadd.f32 %v5131, %v5199
        %v5232 = vadd.f32 %v5132, %v5200
        %v5233 = vadd.f32 %v5133, %v5201
        %v5234 = vadd.f32 %v5134, %v5202
        %v5235 = vadd.f32 %v5135, %v5203
        %v5236 = vadd.f32 %v5136, %v5204
        %v5237 = vadd.f32 %v5137, %v5205
        %v5238 = vadd.f32 %v5138, %v5206
        %v5239 = vadd.f32 %v5139, %v5207
        %v5240 = vadd.f32 %v5140, %v5208
        %v5241 = vadd.f32 %v5141, %v5209
        %v5242 = vadd.f32 %v5142, %v5210
        %v5243 = vadd.f32 %v5143, %v5211
        %v5244 = vadd.f32 %v5144, %v5212
        %v5245 = vadd.f32 %v5145, %v5213
        %v5246 = vadd.f32 %v5146, %v5214
        %v5247 = vadd.f32 %v5147, %v5215
        %v5248 = vadd.f32 %v5148, %v5216
        %v5249 = vadd.f32 %v5149, %v5217
        %v5250 = vadd.f32 %v5150, %v5218
        %v5251 = vadd.f32 %v5151, %v5219
        %v5252 = vadd.f32 %v5152, %v5220
        %v5253 = vadd.f32 %v5153, %v5221
        %v5254 = vadd.f32 %v5154, %v5222
        %v5255 = vadd.f32 %v5155, %v5223
        %v5256 = vadd.f32 %v5156, %v5224
        %v5257 = vld [vmem:[%s4756 + $0x5] sm:$0xff]
        %v5258 = vld [vmem:[%s4756 + $0xd] sm:$0xff]
        %v5259 = vld [vmem:[%s4756 + $0x1d] sm:$0xff]
        %v5260 = vld [vmem:[%s4756 + $0x25] sm:$0xff]
        %v5261 = vld [vmem:[%s4756 + $0x35] sm:$0xff]
        %v5262 = vld [vmem:[%s4756 + $0x3d] sm:$0xff]
        %v5263 = vld [vmem:[%s4756 + $0x4d] sm:$0xff]
        %v5264 = vld [vmem:[%s4756 + $0x55] sm:$0xff]
        %v5265 = vld [vmem:[%s4756 + $0x65] sm:$0xff]
        %v5266 = vld [vmem:[%s4756 + $0x6d] sm:$0xff]
        %v5267 = vld [vmem:[%s4756 + $0x7d] sm:$0xff]
        %v5268 = vld [vmem:[%s4756 + $0x85] sm:$0xff]
        %v5269 = vld [vmem:[%s4756 + $0x95] sm:$0xff]
        %v5270 = vld [vmem:[%s4756 + $0x9d] sm:$0xff]
        %v5271 = vld [vmem:[%s4756 + $0xad] sm:$0xff]
        %v5272 = vld [vmem:[%s4756 + $0xb5] sm:$0xff]
        %v5273 = vld [vmem:[%s4756 + $0xc5] sm:$0xff]
        %v5274 = vld [vmem:[%s4756 + $0xcd] sm:$0xff]
        %v5275 = vld [vmem:[%s4756 + $0xdd] sm:$0xff]
        %v5276 = vld [vmem:[%s4756 + $0xe5] sm:$0xff]
        %v5277 = vld [vmem:[%s4756 + $0xf5] sm:$0xff]
        %v5278 = vld [vmem:[%s4756 + $0xfd] sm:$0xff]
        %v5279 = vld [vmem:[%s4756 + $0x10d] sm:$0xff]
        %v5280 = vld [vmem:[%s4756 + $0x115] sm:$0xff]
        %v5281 = vld [vmem:[%s4756 + $0x125] sm:$0xff]
        %v5282 = vld [vmem:[%s4756 + $0x12d] sm:$0xff]
        %v5283 = vld [vmem:[%s4756 + $0x13d] sm:$0xff]
        %v5284 = vld [vmem:[%s4756 + $0x145] sm:$0xff]
        %v5285 = vld [vmem:[%s4756 + $0x155] sm:$0xff]
        %v5286 = vld [vmem:[%s4756 + $0x15d] sm:$0xff]
        %v5287 = vld [vmem:[%s4756 + $0x16d] sm:$0xff]
        %v5288 = vld [vmem:[%s4756 + $0x175] sm:$0xff]
        %v5289 = vlaneseq
        %v5290 = vshrl.u32 %v5289, 7
        %v5291 = vsub.s32 5, %v5290
        %v5292 = vrot.slane %v516, %v5291
        %v5293 = vmul.f32 %v5257, %v5292
        %v5294 = vmul.f32 %v5258, %v5292
        %v5295 = vmul.f32 %v5259, %v5292
        %v5296 = vmul.f32 %v5260, %v5292
        %v5297 = vmul.f32 %v5261, %v5292
        %v5298 = vmul.f32 %v5262, %v5292
        %v5299 = vmul.f32 %v5263, %v5292
        %v5300 = vmul.f32 %v5264, %v5292
        %v5301 = vmul.f32 %v5265, %v5292
        %v5302 = vmul.f32 %v5266, %v5292
        %v5303 = vmul.f32 %v5267, %v5292
        %v5304 = vmul.f32 %v5268, %v5292
        %v5305 = vmul.f32 %v5269, %v5292
        %v5306 = vmul.f32 %v5270, %v5292
        %v5307 = vmul.f32 %v5271, %v5292
        %v5308 = vmul.f32 %v5272, %v5292
        %v5309 = vmul.f32 %v5273, %v5292
        %v5310 = vmul.f32 %v5274, %v5292
        %v5311 = vmul.f32 %v5275, %v5292
        %v5312 = vmul.f32 %v5276, %v5292
        %v5313 = vmul.f32 %v5277, %v5292
        %v5314 = vmul.f32 %v5278, %v5292
        %v5315 = vmul.f32 %v5279, %v5292
        %v5316 = vmul.f32 %v5280, %v5292
        %v5317 = vmul.f32 %v5281, %v5292
        %v5318 = vmul.f32 %v5282, %v5292
        %v5319 = vmul.f32 %v5283, %v5292
        %v5320 = vmul.f32 %v5284, %v5292
        %v5321 = vmul.f32 %v5285, %v5292
        %v5322 = vmul.f32 %v5286, %v5292
        %v5323 = vmul.f32 %v5287, %v5292
        %v5324 = vmul.f32 %v5288, %v5292
        %v5325 = vadd.f32 %v5225, %v5293
        %v5326 = vadd.f32 %v5226, %v5294
        %v5327 = vadd.f32 %v5227, %v5295
        %v5328 = vadd.f32 %v5228, %v5296
        %v5329 = vadd.f32 %v5229, %v5297
        %v5330 = vadd.f32 %v5230, %v5298
        %v5331 = vadd.f32 %v5231, %v5299
        %v5332 = vadd.f32 %v5232, %v5300
        %v5333 = vadd.f32 %v5233, %v5301
        %v5334 = vadd.f32 %v5234, %v5302
        %v5335 = vadd.f32 %v5235, %v5303
        %v5336 = vadd.f32 %v5236, %v5304
        %v5337 = vadd.f32 %v5237, %v5305
        %v5338 = vadd.f32 %v5238, %v5306
        %v5339 = vadd.f32 %v5239, %v5307
        %v5340 = vadd.f32 %v5240, %v5308
        %v5341 = vadd.f32 %v5241, %v5309
        %v5342 = vadd.f32 %v5242, %v5310
        %v5343 = vadd.f32 %v5243, %v5311
        %v5344 = vadd.f32 %v5244, %v5312
        %v5345 = vadd.f32 %v5245, %v5313
        %v5346 = vadd.f32 %v5246, %v5314
        %v5347 = vadd.f32 %v5247, %v5315
        %v5348 = vadd.f32 %v5248, %v5316
        %v5349 = vadd.f32 %v5249, %v5317
        %v5350 = vadd.f32 %v5250, %v5318
        %v5351 = vadd.f32 %v5251, %v5319
        %v5352 = vadd.f32 %v5252, %v5320
        %v5353 = vadd.f32 %v5253, %v5321
        %v5354 = vadd.f32 %v5254, %v5322
        %v5355 = vadd.f32 %v5255, %v5323
        %v5356 = vadd.f32 %v5256, %v5324
        %v5357 = vld [vmem:[%s4756 + $0x6] sm:$0xff]
        %v5358 = vld [vmem:[%s4756 + $0xe] sm:$0xff]
        %v5359 = vld [vmem:[%s4756 + $0x1e] sm:$0xff]
        %v5360 = vld [vmem:[%s4756 + $0x26] sm:$0xff]
        %v5361 = vld [vmem:[%s4756 + $0x36] sm:$0xff]
        %v5362 = vld [vmem:[%s4756 + $0x3e] sm:$0xff]
        %v5363 = vld [vmem:[%s4756 + $0x4e] sm:$0xff]
        %v5364 = vld [vmem:[%s4756 + $0x56] sm:$0xff]
        %v5365 = vld [vmem:[%s4756 + $0x66] sm:$0xff]
        %v5366 = vld [vmem:[%s4756 + $0x6e] sm:$0xff]
        %v5367 = vld [vmem:[%s4756 + $0x7e] sm:$0xff]
        %v5368 = vld [vmem:[%s4756 + $0x86] sm:$0xff]
        %v5369 = vld [vmem:[%s4756 + $0x96] sm:$0xff]
        %v5370 = vld [vmem:[%s4756 + $0x9e] sm:$0xff]
        %v5371 = vld [vmem:[%s4756 + $0xae] sm:$0xff]
        %v5372 = vld [vmem:[%s4756 + $0xb6] sm:$0xff]
        %v5373 = vld [vmem:[%s4756 + $0xc6] sm:$0xff]
        %v5374 = vld [vmem:[%s4756 + $0xce] sm:$0xff]
        %v5375 = vld [vmem:[%s4756 + $0xde] sm:$0xff]
        %v5376 = vld [vmem:[%s4756 + $0xe6] sm:$0xff]
        %v5377 = vld [vmem:[%s4756 + $0xf6] sm:$0xff]
        %v5378 = vld [vmem:[%s4756 + $0xfe] sm:$0xff]
        %v5379 = vld [vmem:[%s4756 + $0x10e] sm:$0xff]
        %v5380 = vld [vmem:[%s4756 + $0x116] sm:$0xff]
        %v5381 = vld [vmem:[%s4756 + $0x126] sm:$0xff]
        %v5382 = vld [vmem:[%s4756 + $0x12e] sm:$0xff]
        %v5383 = vld [vmem:[%s4756 + $0x13e] sm:$0xff]
        %v5384 = vld [vmem:[%s4756 + $0x146] sm:$0xff]
        %v5385 = vld [vmem:[%s4756 + $0x156] sm:$0xff]
        %v5386 = vld [vmem:[%s4756 + $0x15e] sm:$0xff]
        %v5387 = vld [vmem:[%s4756 + $0x16e] sm:$0xff]
        %v5388 = vld [vmem:[%s4756 + $0x176] sm:$0xff]
        %v5389 = vlaneseq
        %v5390 = vshrl.u32 %v5389, 7
        %v5391 = vsub.s32 6, %v5390
        %v5392 = vrot.slane %v516, %v5391
        %v5393 = vmul.f32 %v5357, %v5392
        %v5394 = vmul.f32 %v5358, %v5392
        %v5395 = vmul.f32 %v5359, %v5392
        %v5396 = vmul.f32 %v5360, %v5392
        %v5397 = vmul.f32 %v5361, %v5392
        %v5398 = vmul.f32 %v5362, %v5392
        %v5399 = vmul.f32 %v5363, %v5392
        %v5400 = vmul.f32 %v5364, %v5392
        %v5401 = vmul.f32 %v5365, %v5392
        %v5402 = vmul.f32 %v5366, %v5392
        %v5403 = vmul.f32 %v5367, %v5392
        %v5404 = vmul.f32 %v5368, %v5392
        %v5405 = vmul.f32 %v5369, %v5392
        %v5406 = vmul.f32 %v5370, %v5392
        %v5407 = vmul.f32 %v5371, %v5392
        %v5408 = vmul.f32 %v5372, %v5392
        %v5409 = vmul.f32 %v5373, %v5392
        %v5410 = vmul.f32 %v5374, %v5392
        %v5411 = vmul.f32 %v5375, %v5392
        %v5412 = vmul.f32 %v5376, %v5392
        %v5413 = vmul.f32 %v5377, %v5392
        %v5414 = vmul.f32 %v5378, %v5392
        %v5415 = vmul.f32 %v5379, %v5392
        %v5416 = vmul.f32 %v5380, %v5392
        %v5417 = vmul.f32 %v5381, %v5392
        %v5418 = vmul.f32 %v5382, %v5392
        %v5419 = vmul.f32 %v5383, %v5392
        %v5420 = vmul.f32 %v5384, %v5392
        %v5421 = vmul.f32 %v5385, %v5392
        %v5422 = vmul.f32 %v5386, %v5392
        %v5423 = vmul.f32 %v5387, %v5392
        %v5424 = vmul.f32 %v5388, %v5392
        %v5425 = vadd.f32 %v5325, %v5393
        %v5426 = vadd.f32 %v5326, %v5394
        %v5427 = vadd.f32 %v5327, %v5395
        %v5428 = vadd.f32 %v5328, %v5396
        %v5429 = vadd.f32 %v5329, %v5397
        %v5430 = vadd.f32 %v5330, %v5398
        %v5431 = vadd.f32 %v5331, %v5399
        %v5432 = vadd.f32 %v5332, %v5400
        %v5433 = vadd.f32 %v5333, %v5401
        %v5434 = vadd.f32 %v5334, %v5402
        %v5435 = vadd.f32 %v5335, %v5403
        %v5436 = vadd.f32 %v5336, %v5404
        %v5437 = vadd.f32 %v5337, %v5405
        %v5438 = vadd.f32 %v5338, %v5406
        %v5439 = vadd.f32 %v5339, %v5407
        %v5440 = vadd.f32 %v5340, %v5408
        %v5441 = vadd.f32 %v5341, %v5409
        %v5442 = vadd.f32 %v5342, %v5410
        %v5443 = vadd.f32 %v5343, %v5411
        %v5444 = vadd.f32 %v5344, %v5412
        %v5445 = vadd.f32 %v5345, %v5413
        %v5446 = vadd.f32 %v5346, %v5414
        %v5447 = vadd.f32 %v5347, %v5415
        %v5448 = vadd.f32 %v5348, %v5416
        %v5449 = vadd.f32 %v5349, %v5417
        %v5450 = vadd.f32 %v5350, %v5418
        %v5451 = vadd.f32 %v5351, %v5419
        %v5452 = vadd.f32 %v5352, %v5420
        %v5453 = vadd.f32 %v5353, %v5421
        %v5454 = vadd.f32 %v5354, %v5422
        %v5455 = vadd.f32 %v5355, %v5423
        %v5456 = vadd.f32 %v5356, %v5424
        %v5458 = vlaneseq
        %v5459 = vshrl.u32 %v5458, 7
        %v5460 = vsub.s32 0, %v5459
        %v5461 = vrot.slane %v517, %v5460
        %v5463 = vadd.f32 %v5425, %v5461
        %v5464 = vadd.f32 %v5426, %v5461
        %v5465 = vadd.f32 %v5427, %v5461
        %v5466 = vadd.f32 %v5428, %v5461
        %v5467 = vadd.f32 %v5429, %v5461
        %v5468 = vadd.f32 %v5430, %v5461
        %v5469 = vadd.f32 %v5431, %v5461
        %v5470 = vadd.f32 %v5432, %v5461
        %v5471 = vadd.f32 %v5433, %v5461
        %v5472 = vadd.f32 %v5434, %v5461
        %v5473 = vadd.f32 %v5435, %v5461
        %v5474 = vadd.f32 %v5436, %v5461
        %v5475 = vadd.f32 %v5437, %v5461
        %v5476 = vadd.f32 %v5438, %v5461
        %v5477 = vadd.f32 %v5439, %v5461
        %v5478 = vadd.f32 %v5440, %v5461
        %v5479 = vadd.f32 %v5441, %v5461
        %v5480 = vadd.f32 %v5442, %v5461
        %v5481 = vadd.f32 %v5443, %v5461
        %v5482 = vadd.f32 %v5444, %v5461
        %v5483 = vadd.f32 %v5445, %v5461
        %v5484 = vadd.f32 %v5446, %v5461
        %v5485 = vadd.f32 %v5447, %v5461
        %v5486 = vadd.f32 %v5448, %v5461
        %v5487 = vadd.f32 %v5449, %v5461
        %v5488 = vadd.f32 %v5450, %v5461
        %v5489 = vadd.f32 %v5451, %v5461
        %v5490 = vadd.f32 %v5452, %v5461
        %v5491 = vadd.f32 %v5453, %v5461
        %v5492 = vadd.f32 %v5454, %v5461
        %v5493 = vadd.f32 %v5455, %v5461
        %v5494 = vadd.f32 %v5456, %v5461
        %v5495 = vpack.c.bf16 %v5464, %v5463
        %v5496 = vpack.c.bf16 %v5466, %v5465
        %v5497 = vpack.c.bf16 %v5468, %v5467
        %v5498 = vpack.c.bf16 %v5470, %v5469
        %v5499 = vpack.c.bf16 %v5472, %v5471
        %v5500 = vpack.c.bf16 %v5474, %v5473
        %v5501 = vpack.c.bf16 %v5476, %v5475
        %v5502 = vpack.c.bf16 %v5478, %v5477
        %v5503 = vpack.c.bf16 %v5480, %v5479
        %v5504 = vpack.c.bf16 %v5482, %v5481
        %v5505 = vpack.c.bf16 %v5484, %v5483
        %v5506 = vpack.c.bf16 %v5486, %v5485
        %v5507 = vpack.c.bf16 %v5488, %v5487
        %v5508 = vpack.c.bf16 %v5490, %v5489
        %v5509 = vpack.c.bf16 %v5492, %v5491
        %v5510 = vpack.c.bf16 %v5494, %v5493
        %v5512 = vlaneseq
        %v5513 = vshrl.u32 %v5512, 7
        %v5514 = vsub.s32 0, %v5513
        %v5515 = vrot.slane %v534, %v5514
        %v5533 = vunpack.c.l.b16 %v518
        %v5534 = vunpack.c.l.b16 %v519
        %v5535 = vunpack.c.l.b16 %v520
        %v5536 = vunpack.c.l.b16 %v521
        %v5537 = vunpack.c.l.b16 %v522
        %v5538 = vunpack.c.l.b16 %v523
        %v5539 = vunpack.c.l.b16 %v524
        %v5540 = vunpack.c.l.b16 %v525
        %v5541 = vunpack.c.l.b16 %v526
        %v5542 = vunpack.c.l.b16 %v527
        %v5543 = vunpack.c.l.b16 %v528
        %v5544 = vunpack.c.l.b16 %v529
        %v5545 = vunpack.c.l.b16 %v530
        %v5546 = vunpack.c.l.b16 %v531
        %v5547 = vunpack.c.l.b16 %v532
        %v5548 = vunpack.c.l.b16 %v533
        %v5549 = vpack.c.b16 %v5534, %v5533
        %v5550 = vpack.c.b16 %v5536, %v5535
        %v5551 = vpack.c.b16 %v5538, %v5537
        %v5552 = vpack.c.b16 %v5540, %v5539
        %v5553 = vpack.c.b16 %v5542, %v5541
        %v5554 = vpack.c.b16 %v5544, %v5543
        %v5555 = vpack.c.b16 %v5546, %v5545
        %v5556 = vpack.c.b16 %v5548, %v5547
        %5565 = vmatprep.subr.bf16.mxu0 0
        %5566 = vmatpush1.bf16.msra.mxu0 %v5549
        %5567 = vmatprep.subr.bf16.mxu0 0
        %5568 = vmatpush1.bf16.msra.mxu0 %v5550
        %5569 = vmatprep.subr.bf16.mxu0 0
        %5570 = vmatpush1.bf16.msra.mxu0 %v5551
        %5571 = vmatprep.subr.bf16.mxu0 0
        %5572 = vmatpush1.bf16.msra.mxu0 %v5552
        %5573 = vmatprep.subr.bf16.mxu0 0
        %5574 = vmatpush1.bf16.msra.mxu0 %v5553
        %5575 = vmatprep.subr.bf16.mxu0 0
        %5576 = vmatpush1.bf16.msra.mxu0 %v5554
        %5577 = vmatprep.subr.bf16.mxu0 0
        %5578 = vmatpush1.bf16.msra.mxu0 %v5555
        %5579 = vmatprep.subr.bf16.mxu0 0
        %5580 = vmatpush1.bf16.msra.mxu0 %v5556
        %5581 = vmatprep.subr.bf16.mxu0 0
        %5582 = vmatpush1.bf16.msra.mxu0 0
        %5583 = vmatprep.subr.bf16.mxu0 0
        %5584 = vmatpush1.bf16.msra.mxu0 0
        %5585 = vmatprep.subr.bf16.mxu0 0
        %5586 = vmatpush1.bf16.msra.mxu0 0
        %5587 = vmatprep.subr.bf16.mxu0 0
        %5588 = vmatpush1.bf16.msra.mxu0 0
        %5589 = vmatprep.subr.bf16.mxu0 0
        %5590 = vmatpush1.bf16.msra.mxu0 0
        %5591 = vmatprep.subr.bf16.mxu0 0
        %5592 = vmatpush1.bf16.msra.mxu0 0
        %5593 = vmatprep.subr.bf16.mxu0 0
        %5594 = vmatpush1.bf16.msra.mxu0 0
        %5595 = vmatprep.subr.bf16.mxu0 0
        %5596 = vmatpush1.bf16.msra.mxu0 0
        %5597 = vmatprep.mubr.bf16.mxu0 0
        %5598 = vmatmul.mubr.bf16.gmra.mrb[0].mxu0 %v5495
        %v5599 = vpop.f32.mrb[0].mxu0
        %v5600 = vadd.f32 %v5515, %v5599
        %v5601 = vpop.f32.mrb[0].mxu0
        %v5602 = vpop.f32.mrb[0].mxu0
        %v5603 = vadd.f32 %v5515, %v5602
        %v5604 = vpop.f32.mrb[0].mxu0
        %5605 = vmatprep.mubr.bf16.mxu0 0
        %5606 = vmatmul.mubr.bf16.gmra.mrb[0].mxu0 %v5496
        %v5607 = vpop.f32.mrb[0].mxu0
        %v5608 = vadd.f32 %v5515, %v5607
        %v5609 = vpop.f32.mrb[0].mxu0
        %v5610 = vpop.f32.mrb[0].mxu0
        %v5611 = vadd.f32 %v5515, %v5610
        %v5612 = vpop.f32.mrb[0].mxu0
        %5613 = vmatprep.mubr.bf16.mxu0 0
        %5614 = vmatmul.mubr.bf16.gmra.mrb[0].mxu0 %v5497
        %v5615 = vpop.f32.mrb[0].mxu0
        %v5616 = vadd.f32 %v5515, %v5615
        %v5617 = vpop.f32.mrb[0].mxu0
        %v5618 = vpop.f32.mrb[0].mxu0
        %v5619 = vadd.f32 %v5515, %v5618
        %v5620 = vpop.f32.mrb[0].mxu0
        %5621 = vmatprep.mubr.bf16.mxu0 0
        %5622 = vmatmul.mubr.bf16.gmra.mrb[0].mxu0 %v5498
        %v5623 = vpop.f32.mrb[0].mxu0
        %v5624 = vadd.f32 %v5515, %v5623
        %v5625 = vpop.f32.mrb[0].mxu0
        %v5626 = vpop.f32.mrb[0].mxu0
        %v5627 = vadd.f32 %v5515, %v5626
        %v5628 = vpop.f32.mrb[0].mxu0
        %5629 = vmatprep.mubr.bf16.mxu0 0
        %5630 = vmatmul.mubr.bf16.gmra.mrb[0].mxu0 %v5499
        %v5631 = vpop.f32.mrb[0].mxu0
        %v5632 = vadd.f32 %v5515, %v5631
        %v5633 = vpop.f32.mrb[0].mxu0
        %v5634 = vpop.f32.mrb[0].mxu0
        %v5635 = vadd.f32 %v5515, %v5634
        %v5636 = vpop.f32.mrb[0].mxu0
        %5637 = vmatprep.mubr.bf16.mxu0 0
        %5638 = vmatmul.mubr.bf16.gmra.mrb[0].mxu0 %v5500
        %v5639 = vpop.f32.mrb[0].mxu0
        %v5640 = vadd.f32 %v5515, %v5639
        %v5641 = vpop.f32.mrb[0].mxu0
        %v5642 = vpop.f32.mrb[0].mxu0
        %v5643 = vadd.f32 %v5515, %v5642
        %v5644 = vpop.f32.mrb[0].mxu0
        %5645 = vmatprep.mubr.bf16.mxu0 0
        %5646 = vmatmul.mubr.bf16.gmra.mrb[0].mxu0 %v5501
        %v5647 = vpop.f32.mrb[0].mxu0
        %v5648 = vadd.f32 %v5515, %v5647
        %v5649 = vpop.f32.mrb[0].mxu0
        %v5650 = vpop.f32.mrb[0].mxu0
        %v5651 = vadd.f32 %v5515, %v5650
        %v5652 = vpop.f32.mrb[0].mxu0
        %5653 = vmatprep.mubr.bf16.mxu0 0
        %5654 = vmatmul.mubr.bf16.gmra.mrb[0].mxu0 %v5502
        %v5655 = vpop.f32.mrb[0].mxu0
        %v5656 = vadd.f32 %v5515, %v5655
        %v5657 = vpop.f32.mrb[0].mxu0
        %v5658 = vpop.f32.mrb[0].mxu0
        %v5659 = vadd.f32 %v5515, %v5658
        %v5660 = vpop.f32.mrb[0].mxu0
        %5661 = vmatprep.mubr.bf16.mxu0 0
        %5662 = vmatmul.mubr.bf16.gmra.mrb[0].mxu0 %v5503
        %v5663 = vpop.f32.mrb[0].mxu0
        %v5664 = vadd.f32 %v5515, %v5663
        %v5665 = vpop.f32.mrb[0].mxu0
        %v5666 = vpop.f32.mrb[0].mxu0
        %v5667 = vadd.f32 %v5515, %v5666
        %v5668 = vpop.f32.mrb[0].mxu0
        %5669 = vmatprep.mubr.bf16.mxu0 0
        %5670 = vmatmul.mubr.bf16.gmra.mrb[0].mxu0 %v5504
        %v5671 = vpop.f32.mrb[0].mxu0
        %v5672 = vadd.f32 %v5515, %v5671
        %v5673 = vpop.f32.mrb[0].mxu0
        %v5674 = vpop.f32.mrb[0].mxu0
        %v5675 = vadd.f32 %v5515, %v5674
        %v5676 = vpop.f32.mrb[0].mxu0
        %5677 = vmatprep.mubr.bf16.mxu0 0
        %5678 = vmatmul.mubr.bf16.gmra.mrb[0].mxu0 %v5505
        %v5679 = vpop.f32.mrb[0].mxu0
        %v5680 = vadd.f32 %v5515, %v5679
        %v5681 = vpop.f32.mrb[0].mxu0
        %v5682 = vpop.f32.mrb[0].mxu0
        %v5683 = vadd.f32 %v5515, %v5682
        %v5684 = vpop.f32.mrb[0].mxu0
        %5685 = vmatprep.mubr.bf16.mxu0 0
        %5686 = vmatmul.mubr.bf16.gmra.mrb[0].mxu0 %v5506
        %v5687 = vpop.f32.mrb[0].mxu0
        %v5688 = vadd.f32 %v5515, %v5687
        %v5689 = vpop.f32.mrb[0].mxu0
        %v5690 = vpop.f32.mrb[0].mxu0
        %v5691 = vadd.f32 %v5515, %v5690
        %v5692 = vpop.f32.mrb[0].mxu0
        %5693 = vmatprep.mubr.bf16.mxu0 0
        %5694 = vmatmul.mubr.bf16.gmra.mrb[0].mxu0 %v5507
        %v5695 = vpop.f32.mrb[0].mxu0
        %v5696 = vadd.f32 %v5515, %v5695
        %v5697 = vpop.f32.mrb[0].mxu0
        %v5698 = vpop.f32.mrb[0].mxu0
        %v5699 = vadd.f32 %v5515, %v5698
        %v5700 = vpop.f32.mrb[0].mxu0
        %5701 = vmatprep.mubr.bf16.mxu0 0
        %5702 = vmatmul.mubr.bf16.gmra.mrb[0].mxu0 %v5508
        %v5703 = vpop.f32.mrb[0].mxu0
        %v5704 = vadd.f32 %v5515, %v5703
        %v5705 = vpop.f32.mrb[0].mxu0
        %v5706 = vpop.f32.mrb[0].mxu0
        %v5707 = vadd.f32 %v5515, %v5706
        %v5708 = vpop.f32.mrb[0].mxu0
        %5709 = vmatprep.mubr.bf16.mxu0 0
        %5710 = vmatmul.mubr.bf16.gmra.mrb[0].mxu0 %v5509
        %v5711 = vpop.f32.mrb[0].mxu0
        %v5712 = vadd.f32 %v5515, %v5711
        %v5713 = vpop.f32.mrb[0].mxu0
        %v5714 = vpop.f32.mrb[0].mxu0
        %v5715 = vadd.f32 %v5515, %v5714
        %v5716 = vpop.f32.mrb[0].mxu0
        %5717 = vmatprep.mubr.bf16.mxu0 0
        %5718 = vmatmul.mubr.bf16.gmra.mrb[0].mxu0 %v5510
        %v5719 = vpop.f32.mrb[0].mxu0
        %v5720 = vadd.f32 %v5515, %v5719
        %v5721 = vpop.f32.mrb[0].mxu0
        %v5722 = vpop.f32.mrb[0].mxu0
        %v5723 = vadd.f32 %v5515, %v5722
        %v5724 = vpop.f32.mrb[0].mxu0
        %5725 = vdwg.mxu0
        %v5726 = vmul.f32 %v5600, 0.5
        %v5727 = vmul.f32 %v5603, 0.5
        %v5728 = vmul.f32 %v5608, 0.5
        %v5729 = vmul.f32 %v5611, 0.5
        %v5730 = vmul.f32 %v5616, 0.5
        %v5731 = vmul.f32 %v5619, 0.5
        %v5732 = vmul.f32 %v5624, 0.5
        %v5733 = vmul.f32 %v5627, 0.5
        %v5734 = vmul.f32 %v5632, 0.5
        %v5735 = vmul.f32 %v5635, 0.5
        %v5736 = vmul.f32 %v5640, 0.5
        %v5737 = vmul.f32 %v5643, 0.5
        %v5738 = vmul.f32 %v5648, 0.5
        %v5739 = vmul.f32 %v5651, 0.5
        %v5740 = vmul.f32 %v5656, 0.5
        %v5741 = vmul.f32 %v5659, 0.5
        %v5742 = vmul.f32 %v5664, 0.5
        %v5743 = vmul.f32 %v5667, 0.5
        %v5744 = vmul.f32 %v5672, 0.5
        %v5745 = vmul.f32 %v5675, 0.5
        %v5746 = vmul.f32 %v5680, 0.5
        %v5747 = vmul.f32 %v5683, 0.5
        %v5748 = vmul.f32 %v5688, 0.5
        %v5749 = vmul.f32 %v5691, 0.5
        %v5750 = vmul.f32 %v5696, 0.5
        %v5751 = vmul.f32 %v5699, 0.5
        %v5752 = vmul.f32 %v5704, 0.5
        %v5753 = vmul.f32 %v5707, 0.5
        %v5754 = vmul.f32 %v5712, 0.5
        %v5755 = vmul.f32 %v5715, 0.5
        %v5756 = vmul.f32 %v5720, 0.5
        %v5757 = vmul.f32 %v5723, 0.5
        %v5758 = vmul.f32 %v5600, 0.70710677
        %v5759 = vmul.f32 %v5603, 0.70710677
        %v5760 = vmul.f32 %v5608, 0.70710677
        %v5761 = vmul.f32 %v5611, 0.70710677
        %v5762 = vmul.f32 %v5616, 0.70710677
        %v5763 = vmul.f32 %v5619, 0.70710677
        %v5764 = vmul.f32 %v5624, 0.70710677
        %v5765 = vmul.f32 %v5627, 0.70710677
        %v5766 = vmul.f32 %v5632, 0.70710677
        %v5767 = vmul.f32 %v5635, 0.70710677
        %v5768 = vmul.f32 %v5640, 0.70710677
        %v5769 = vmul.f32 %v5643, 0.70710677
        %v5770 = vmul.f32 %v5648, 0.70710677
        %v5771 = vmul.f32 %v5651, 0.70710677
        %v5772 = vmul.f32 %v5656, 0.70710677
        %v5773 = vmul.f32 %v5659, 0.70710677
        %v5774 = vmul.f32 %v5664, 0.70710677
        %v5775 = vmul.f32 %v5667, 0.70710677
        %v5776 = vmul.f32 %v5672, 0.70710677
        %v5777 = vmul.f32 %v5675, 0.70710677
        %v5778 = vmul.f32 %v5680, 0.70710677
        %v5779 = vmul.f32 %v5683, 0.70710677
        %v5780 = vmul.f32 %v5688, 0.70710677
        %v5781 = vmul.f32 %v5691, 0.70710677
        %v5782 = vmul.f32 %v5696, 0.70710677
        %v5783 = vmul.f32 %v5699, 0.70710677
        %v5784 = vmul.f32 %v5704, 0.70710677
        %v5785 = vmul.f32 %v5707, 0.70710677
        %v5786 = vmul.f32 %v5712, 0.70710677
        %v5787 = vmul.f32 %v5715, 0.70710677
        %v5788 = vmul.f32 %v5720, 0.70710677
        %v5789 = vmul.f32 %v5723, 0.70710677
        %v5790 = verf.f32.pop %v5758
        %v5791 = verf.f32.pop %v5759
        %v5792 = verf.f32.pop %v5760
        %v5793 = verf.f32.pop %v5761
        %v5794 = verf.f32.pop %v5762
        %v5795 = verf.f32.pop %v5763
        %v5796 = verf.f32.pop %v5764
        %v5797 = verf.f32.pop %v5765
        %v5798 = verf.f32.pop %v5766
        %v5799 = verf.f32.pop %v5767
        %v5800 = verf.f32.pop %v5768
        %v5801 = verf.f32.pop %v5769
        %v5802 = verf.f32.pop %v5770
        %v5803 = verf.f32.pop %v5771
        %v5804 = verf.f32.pop %v5772
        %v5805 = verf.f32.pop %v5773
        %v5806 = verf.f32.pop %v5774
        %v5807 = verf.f32.pop %v5775
        %v5808 = verf.f32.pop %v5776
        %v5809 = verf.f32.pop %v5777
        %v5810 = verf.f32.pop %v5778
        %v5811 = verf.f32.pop %v5779
        %v5812 = verf.f32.pop %v5780
        %v5813 = verf.f32.pop %v5781
        %v5814 = verf.f32.pop %v5782
        %v5815 = verf.f32.pop %v5783
        %v5816 = verf.f32.pop %v5784
        %v5817 = verf.f32.pop %v5785
        %v5818 = verf.f32.pop %v5786
        %v5819 = verf.f32.pop %v5787
        %v5820 = verf.f32.pop %v5788
        %v5821 = verf.f32.pop %v5789
        %v5822 = vadd.f32 %v5790, 1.0
        %v5823 = vadd.f32 %v5791, 1.0
        %v5824 = vadd.f32 %v5792, 1.0
        %v5825 = vadd.f32 %v5793, 1.0
        %v5826 = vadd.f32 %v5794, 1.0
        %v5827 = vadd.f32 %v5795, 1.0
        %v5828 = vadd.f32 %v5796, 1.0
        %v5829 = vadd.f32 %v5797, 1.0
        %v5830 = vadd.f32 %v5798, 1.0
        %v5831 = vadd.f32 %v5799, 1.0
        %v5832 = vadd.f32 %v5800, 1.0
        %v5833 = vadd.f32 %v5801, 1.0
        %v5834 = vadd.f32 %v5802, 1.0
        %v5835 = vadd.f32 %v5803, 1.0
        %v5836 = vadd.f32 %v5804, 1.0
        %v5837 = vadd.f32 %v5805, 1.0
        %v5838 = vadd.f32 %v5806, 1.0
        %v5839 = vadd.f32 %v5807, 1.0
        %v5840 = vadd.f32 %v5808, 1.0
        %v5841 = vadd.f32 %v5809, 1.0
        %v5842 = vadd.f32 %v5810, 1.0
        %v5843 = vadd.f32 %v5811, 1.0
        %v5844 = vadd.f32 %v5812, 1.0
        %v5845 = vadd.f32 %v5813, 1.0
        %v5846 = vadd.f32 %v5814, 1.0
        %v5847 = vadd.f32 %v5815, 1.0
        %v5848 = vadd.f32 %v5816, 1.0
        %v5849 = vadd.f32 %v5817, 1.0
        %v5850 = vadd.f32 %v5818, 1.0
        %v5851 = vadd.f32 %v5819, 1.0
        %v5852 = vadd.f32 %v5820, 1.0
        %v5853 = vadd.f32 %v5821, 1.0
        %v5854 = vmul.f32 %v5726, %v5822
        %v5855 = vmul.f32 %v5727, %v5823
        %v5856 = vmul.f32 %v5728, %v5824
        %v5857 = vmul.f32 %v5729, %v5825
        %v5858 = vmul.f32 %v5730, %v5826
        %v5859 = vmul.f32 %v5731, %v5827
        %v5860 = vmul.f32 %v5732, %v5828
        %v5861 = vmul.f32 %v5733, %v5829
        %v5862 = vmul.f32 %v5734, %v5830
        %v5863 = vmul.f32 %v5735, %v5831
        %v5864 = vmul.f32 %v5736, %v5832
        %v5865 = vmul.f32 %v5737, %v5833
        %v5866 = vmul.f32 %v5738, %v5834
        %v5867 = vmul.f32 %v5739, %v5835
        %v5868 = vmul.f32 %v5740, %v5836
        %v5869 = vmul.f32 %v5741, %v5837
        %v5870 = vmul.f32 %v5742, %v5838
        %v5871 = vmul.f32 %v5743, %v5839
        %v5872 = vmul.f32 %v5744, %v5840
        %v5873 = vmul.f32 %v5745, %v5841
        %v5874 = vmul.f32 %v5746, %v5842
        %v5875 = vmul.f32 %v5747, %v5843
        %v5876 = vmul.f32 %v5748, %v5844
        %v5877 = vmul.f32 %v5749, %v5845
        %v5878 = vmul.f32 %v5750, %v5846
        %v5879 = vmul.f32 %v5751, %v5847
        %v5880 = vmul.f32 %v5752, %v5848
        %v5881 = vmul.f32 %v5753, %v5849
        %v5882 = vmul.f32 %v5754, %v5850
        %v5883 = vmul.f32 %v5755, %v5851
        %v5884 = vmul.f32 %v5756, %v5852
        %v5885 = vmul.f32 %v5757, %v5853
        %v5886 = vpack.c.bf16 %v5855, %v5854
        %v5887 = vpack.c.bf16 %v5857, %v5856
        %v5888 = vpack.c.bf16 %v5859, %v5858
        %v5889 = vpack.c.bf16 %v5861, %v5860
        %v5890 = vpack.c.bf16 %v5863, %v5862
        %v5891 = vpack.c.bf16 %v5865, %v5864
        %v5892 = vpack.c.bf16 %v5867, %v5866
        %v5893 = vpack.c.bf16 %v5869, %v5868
        %v5894 = vpack.c.bf16 %v5871, %v5870
        %v5895 = vpack.c.bf16 %v5873, %v5872
        %v5896 = vpack.c.bf16 %v5875, %v5874
        %v5897 = vpack.c.bf16 %v5877, %v5876
        %v5898 = vpack.c.bf16 %v5879, %v5878
        %v5899 = vpack.c.bf16 %v5881, %v5880
        %v5900 = vpack.c.bf16 %v5883, %v5882
        %v5901 = vpack.c.bf16 %v5885, %v5884
        %v5903 = vlaneseq
        %v5904 = vshrl.u32 %v5903, 7
        %v5905 = vsub.s32 0, %v5904
        %v5906 = vrot.slane %v551, %v5905
        %v5924 = vunpack.c.l.b16 %v535
        %v5925 = vunpack.c.l.b16 %v536
        %v5926 = vunpack.c.l.b16 %v537
        %v5927 = vunpack.c.l.b16 %v538
        %v5928 = vunpack.c.l.b16 %v539
        %v5929 = vunpack.c.l.b16 %v540
        %v5930 = vunpack.c.l.b16 %v541
        %v5931 = vunpack.c.l.b16 %v542
        %v5932 = vunpack.c.l.b16 %v543
        %v5933 = vunpack.c.l.b16 %v544
        %v5934 = vunpack.c.l.b16 %v545
        %v5935 = vunpack.c.l.b16 %v546
        %v5936 = vunpack.c.l.b16 %v547
        %v5937 = vunpack.c.l.b16 %v548
        %v5938 = vunpack.c.l.b16 %v549
        %v5939 = vunpack.c.l.b16 %v550
        %v5940 = vpack.c.b16 %v5925, %v5924
        %v5941 = vpack.c.b16 %v5927, %v5926
        %v5942 = vpack.c.b16 %v5929, %v5928
        %v5943 = vpack.c.b16 %v5931, %v5930
        %v5944 = vpack.c.b16 %v5933, %v5932
        %v5945 = vpack.c.b16 %v5935, %v5934
        %v5946 = vpack.c.b16 %v5937, %v5936
        %v5947 = vpack.c.b16 %v5939, %v5938
        %5956 = vmatprep.subr.bf16.mxu0 0
        %5957 = vmatpush1.bf16.msra.mxu0 %v5940
        %5958 = vmatprep.subr.bf16.mxu0 0
        %5959 = vmatpush1.bf16.msra.mxu0 %v5941
        %5960 = vmatprep.subr.bf16.mxu0 0
        %5961 = vmatpush1.bf16.msra.mxu0 %v5942
        %5962 = vmatprep.subr.bf16.mxu0 0
        %5963 = vmatpush1.bf16.msra.mxu0 %v5943
        %5964 = vmatprep.subr.bf16.mxu0 0
        %5965 = vmatpush1.bf16.msra.mxu0 %v5944
        %5966 = vmatprep.subr.bf16.mxu0 0
        %5967 = vmatpush1.bf16.msra.mxu0 %v5945
        %5968 = vmatprep.subr.bf16.mxu0 0
        %5969 = vmatpush1.bf16.msra.mxu0 %v5946
        %5970 = vmatprep.subr.bf16.mxu0 0
        %5971 = vmatpush1.bf16.msra.mxu0 %v5947
        %5972 = vmatprep.subr.bf16.mxu0 0
        %5973 = vmatpush1.bf16.msra.mxu0 0
        %5974 = vmatprep.subr.bf16.mxu0 0
        %5975 = vmatpush1.bf16.msra.mxu0 0
        %5976 = vmatprep.subr.bf16.mxu0 0
        %5977 = vmatpush1.bf16.msra.mxu0 0
        %5978 = vmatprep.subr.bf16.mxu0 0
        %5979 = vmatpush1.bf16.msra.mxu0 0
        %5980 = vmatprep.subr.bf16.mxu0 0
        %5981 = vmatpush1.bf16.msra.mxu0 0
        %5982 = vmatprep.subr.bf16.mxu0 0
        %5983 = vmatpush1.bf16.msra.mxu0 0
        %5984 = vmatprep.subr.bf16.mxu0 0
        %5985 = vmatpush1.bf16.msra.mxu0 0
        %5986 = vmatprep.subr.bf16.mxu0 0
        %5987 = vmatpush1.bf16.msra.mxu0 0
        %5988 = vmatprep.mubr.bf16.mxu0 0
        %5989 = vmatmul.mubr.bf16.gmra.mrb[0].mxu0 %v5886
        %v5990 = vpop.f32.mrb[0].mxu0
        %v5991 = vadd.f32 %v5906, %v5990
        %v5992 = vpop.f32.mrb[0].mxu0
        %v5993 = vpop.f32.mrb[0].mxu0
        %v5994 = vadd.f32 %v5906, %v5993
        %v5995 = vpop.f32.mrb[0].mxu0
        %5996 = vmatprep.mubr.bf16.mxu0 0
        %5997 = vmatmul.mubr.bf16.gmra.mrb[0].mxu0 %v5887
        %v5998 = vpop.f32.mrb[0].mxu0
        %v5999 = vadd.f32 %v5906, %v5998
        %v6000 = vpop.f32.mrb[0].mxu0
        %v6001 = vpop.f32.mrb[0].mxu0
        %v6002 = vadd.f32 %v5906, %v6001
        %v6003 = vpop.f32.mrb[0].mxu0
        %6004 = vmatprep.mubr.bf16.mxu0 0
        %6005 = vmatmul.mubr.bf16.gmra.mrb[0].mxu0 %v5888
        %v6006 = vpop.f32.mrb[0].mxu0
        %v6007 = vadd.f32 %v5906, %v6006
        %v6008 = vpop.f32.mrb[0].mxu0
        %v6009 = vpop.f32.mrb[0].mxu0
        %v6010 = vadd.f32 %v5906, %v6009
        %v6011 = vpop.f32.mrb[0].mxu0
        %6012 = vmatprep.mubr.bf16.mxu0 0
        %6013 = vmatmul.mubr.bf16.gmra.mrb[0].mxu0 %v5889
        %v6014 = vpop.f32.mrb[0].mxu0
        %v6015 = vadd.f32 %v5906, %v6014
        %v6016 = vpop.f32.mrb[0].mxu0
        %v6017 = vpop.f32.mrb[0].mxu0
        %v6018 = vadd.f32 %v5906, %v6017
        %v6019 = vpop.f32.mrb[0].mxu0
        %6020 = vmatprep.mubr.bf16.mxu0 0
        %6021 = vmatmul.mubr.bf16.gmra.mrb[0].mxu0 %v5890
        %v6022 = vpop.f32.mrb[0].mxu0
        %v6023 = vadd.f32 %v5906, %v6022
        %v6024 = vpop.f32.mrb[0].mxu0
        %v6025 = vpop.f32.mrb[0].mxu0
        %v6026 = vadd.f32 %v5906, %v6025
        %v6027 = vpop.f32.mrb[0].mxu0
        %6028 = vmatprep.mubr.bf16.mxu0 0
        %6029 = vmatmul.mubr.bf16.gmra.mrb[0].mxu0 %v5891
        %v6030 = vpop.f32.mrb[0].mxu0
        %v6031 = vadd.f32 %v5906, %v6030
        %v6032 = vpop.f32.mrb[0].mxu0
        %v6033 = vpop.f32.mrb[0].mxu0
        %v6034 = vadd.f32 %v5906, %v6033
        %v6035 = vpop.f32.mrb[0].mxu0
        %6036 = vmatprep.mubr.bf16.mxu0 0
        %6037 = vmatmul.mubr.bf16.gmra.mrb[0].mxu0 %v5892
        %v6038 = vpop.f32.mrb[0].mxu0
        %v6039 = vadd.f32 %v5906, %v6038
        %v6040 = vpop.f32.mrb[0].mxu0
        %v6041 = vpop.f32.mrb[0].mxu0
        %v6042 = vadd.f32 %v5906, %v6041
        %v6043 = vpop.f32.mrb[0].mxu0
        %6044 = vmatprep.mubr.bf16.mxu0 0
        %6045 = vmatmul.mubr.bf16.gmra.mrb[0].mxu0 %v5893
        %v6046 = vpop.f32.mrb[0].mxu0
        %v6047 = vadd.f32 %v5906, %v6046
        %v6048 = vpop.f32.mrb[0].mxu0
        %v6049 = vpop.f32.mrb[0].mxu0
        %v6050 = vadd.f32 %v5906, %v6049
        %v6051 = vpop.f32.mrb[0].mxu0
        %6052 = vmatprep.mubr.bf16.mxu0 0
        %6053 = vmatmul.mubr.bf16.gmra.mrb[0].mxu0 %v5894
        %v6054 = vpop.f32.mrb[0].mxu0
        %v6055 = vadd.f32 %v5906, %v6054
        %v6056 = vpop.f32.mrb[0].mxu0
        %v6057 = vpop.f32.mrb[0].mxu0
        %v6058 = vadd.f32 %v5906, %v6057
        %v6059 = vpop.f32.mrb[0].mxu0
        %6060 = vmatprep.mubr.bf16.mxu0 0
        %6061 = vmatmul.mubr.bf16.gmra.mrb[0].mxu0 %v5895
        %v6062 = vpop.f32.mrb[0].mxu0
        %v6063 = vadd.f32 %v5906, %v6062
        %v6064 = vpop.f32.mrb[0].mxu0
        %v6065 = vpop.f32.mrb[0].mxu0
        %v6066 = vadd.f32 %v5906, %v6065
        %v6067 = vpop.f32.mrb[0].mxu0
        %6068 = vmatprep.mubr.bf16.mxu0 0
        %6069 = vmatmul.mubr.bf16.gmra.mrb[0].mxu0 %v5896
        %v6070 = vpop.f32.mrb[0].mxu0
        %v6071 = vadd.f32 %v5906, %v6070
        %v6072 = vpop.f32.mrb[0].mxu0
        %v6073 = vpop.f32.mrb[0].mxu0
        %v6074 = vadd.f32 %v5906, %v6073
        %v6075 = vpop.f32.mrb[0].mxu0
        %6076 = vmatprep.mubr.bf16.mxu0 0
        %6077 = vmatmul.mubr.bf16.gmra.mrb[0].mxu0 %v5897
        %v6078 = vpop.f32.mrb[0].mxu0
        %v6079 = vadd.f32 %v5906, %v6078
        %v6080 = vpop.f32.mrb[0].mxu0
        %v6081 = vpop.f32.mrb[0].mxu0
        %v6082 = vadd.f32 %v5906, %v6081
        %v6083 = vpop.f32.mrb[0].mxu0
        %6084 = vmatprep.mubr.bf16.mxu0 0
        %6085 = vmatmul.mubr.bf16.gmra.mrb[0].mxu0 %v5898
        %v6086 = vpop.f32.mrb[0].mxu0
        %v6087 = vadd.f32 %v5906, %v6086
        %v6088 = vpop.f32.mrb[0].mxu0
        %v6089 = vpop.f32.mrb[0].mxu0
        %v6090 = vadd.f32 %v5906, %v6089
        %v6091 = vpop.f32.mrb[0].mxu0
        %6092 = vmatprep.mubr.bf16.mxu0 0
        %6093 = vmatmul.mubr.bf16.gmra.mrb[0].mxu0 %v5899
        %v6094 = vpop.f32.mrb[0].mxu0
        %v6095 = vadd.f32 %v5906, %v6094
        %v6096 = vpop.f32.mrb[0].mxu0
        %v6097 = vpop.f32.mrb[0].mxu0
        %v6098 = vadd.f32 %v5906, %v6097
        %v6099 = vpop.f32.mrb[0].mxu0
        %6100 = vmatprep.mubr.bf16.mxu0 0
        %6101 = vmatmul.mubr.bf16.gmra.mrb[0].mxu0 %v5900
        %v6102 = vpop.f32.mrb[0].mxu0
        %v6103 = vadd.f32 %v5906, %v6102
        %v6104 = vpop.f32.mrb[0].mxu0
        %v6105 = vpop.f32.mrb[0].mxu0
        %v6106 = vadd.f32 %v5906, %v6105
        %v6107 = vpop.f32.mrb[0].mxu0
        %6108 = vmatprep.mubr.bf16.mxu0 0
        %6109 = vmatmul.mubr.bf16.gmra.mrb[0].mxu0 %v5901
        %v6110 = vpop.f32.mrb[0].mxu0
        %v6111 = vadd.f32 %v5906, %v6110
        %v6112 = vpop.f32.mrb[0].mxu0
        %v6113 = vpop.f32.mrb[0].mxu0
        %v6114 = vadd.f32 %v5906, %v6113
        %v6115 = vpop.f32.mrb[0].mxu0
        %6116 = vdwg.mxu0
        %v6117 = vld [vmem:[%s323] sm:$0xff]
        %v6118 = vld [vmem:[%s323 + $0x8] sm:$0xff]
        %v6119 = vld [vmem:[%s323 + $0x10] sm:$0xff]
        %v6120 = vld [vmem:[%s323 + $0x18] sm:$0xff]
        %v6121 = vld [vmem:[%s323 + $0x20] sm:$0xff]
        %v6122 = vld [vmem:[%s323 + $0x28] sm:$0xff]
        %v6123 = vld [vmem:[%s323 + $0x30] sm:$0xff]
        %v6124 = vld [vmem:[%s323 + $0x38] sm:$0xff]
        %v6125 = vld [vmem:[%s323 + $0x40] sm:$0xff]
        %v6126 = vld [vmem:[%s323 + $0x48] sm:$0xff]
        %v6127 = vld [vmem:[%s323 + $0x50] sm:$0xff]
        %v6128 = vld [vmem:[%s323 + $0x58] sm:$0xff]
        %v6129 = vld [vmem:[%s323 + $0x60] sm:$0xff]
        %v6130 = vld [vmem:[%s323 + $0x68] sm:$0xff]
        %v6131 = vld [vmem:[%s323 + $0x70] sm:$0xff]
        %v6132 = vld [vmem:[%s323 + $0x78] sm:$0xff]
        %v6133 = vld [vmem:[%s323 + $0x80] sm:$0xff]
        %v6134 = vld [vmem:[%s323 + $0x88] sm:$0xff]
        %v6135 = vld [vmem:[%s323 + $0x90] sm:$0xff]
        %v6136 = vld [vmem:[%s323 + $0x98] sm:$0xff]
        %v6137 = vld [vmem:[%s323 + $0xa0] sm:$0xff]
        %v6138 = vld [vmem:[%s323 + $0xa8] sm:$0xff]
        %v6139 = vld [vmem:[%s323 + $0xb0] sm:$0xff]
        %v6140 = vld [vmem:[%s323 + $0xb8] sm:$0xff]
        %v6141 = vld [vmem:[%s323 + $0xc0] sm:$0xff]
        %v6142 = vld [vmem:[%s323 + $0xc8] sm:$0xff]
        %v6143 = vld [vmem:[%s323 + $0xd0] sm:$0xff]
        %v6144 = vld [vmem:[%s323 + $0xd8] sm:$0xff]
        %v6145 = vld [vmem:[%s323 + $0xe0] sm:$0xff]
        %v6146 = vld [vmem:[%s323 + $0xe8] sm:$0xff]
        %v6147 = vld [vmem:[%s323 + $0xf0] sm:$0xff]
        %v6148 = vld [vmem:[%s323 + $0xf8] sm:$0xff]
        %v6149 = vadd.f32 %v5991, %v6117
        %v6150 = vadd.f32 %v5994, %v6118
        %v6151 = vadd.f32 %v5999, %v6119
        %v6152 = vadd.f32 %v6002, %v6120
        %v6153 = vadd.f32 %v6007, %v6121
        %v6154 = vadd.f32 %v6010, %v6122
        %v6155 = vadd.f32 %v6015, %v6123
        %v6156 = vadd.f32 %v6018, %v6124
        %v6157 = vadd.f32 %v6023, %v6125
        %v6158 = vadd.f32 %v6026, %v6126
        %v6159 = vadd.f32 %v6031, %v6127
        %v6160 = vadd.f32 %v6034, %v6128
        %v6161 = vadd.f32 %v6039, %v6129
        %v6162 = vadd.f32 %v6042, %v6130
        %v6163 = vadd.f32 %v6047, %v6131
        %v6164 = vadd.f32 %v6050, %v6132
        %v6165 = vadd.f32 %v6055, %v6133
        %v6166 = vadd.f32 %v6058, %v6134
        %v6167 = vadd.f32 %v6063, %v6135
        %v6168 = vadd.f32 %v6066, %v6136
        %v6169 = vadd.f32 %v6071, %v6137
        %v6170 = vadd.f32 %v6074, %v6138
        %v6171 = vadd.f32 %v6079, %v6139
        %v6172 = vadd.f32 %v6082, %v6140
        %v6173 = vadd.f32 %v6087, %v6141
        %v6174 = vadd.f32 %v6090, %v6142
        %v6175 = vadd.f32 %v6095, %v6143
        %v6176 = vadd.f32 %v6098, %v6144
        %v6177 = vadd.f32 %v6103, %v6145
        %v6178 = vadd.f32 %v6106, %v6146
        %v6179 = vadd.f32 %v6111, %v6147
        %v6180 = vadd.f32 %v6114, %v6148
        %6181 = vst [vmem:[%s377] sm:$0xff] %v6149
        %6182 = vst [vmem:[%s377 + $0x8] sm:$0xff] %v6150
        %6183 = vst [vmem:[%s377 + $0x10] sm:$0xff] %v6151
        %6184 = vst [vmem:[%s377 + $0x18] sm:$0xff] %v6152
        %6185 = vst [vmem:[%s377 + $0x20] sm:$0xff] %v6153
        %6186 = vst [vmem:[%s377 + $0x28] sm:$0xff] %v6154
        %6187 = vst [vmem:[%s377 + $0x30] sm:$0xff] %v6155
        %6188 = vst [vmem:[%s377 + $0x38] sm:$0xff] %v6156
        %6189 = vst [vmem:[%s377 + $0x40] sm:$0xff] %v6157
        %6190 = vst [vmem:[%s377 + $0x48] sm:$0xff] %v6158
        %6191 = vst [vmem:[%s377 + $0x50] sm:$0xff] %v6159
        %6192 = vst [vmem:[%s377 + $0x58] sm:$0xff] %v6160
        %6193 = vst [vmem:[%s377 + $0x60] sm:$0xff] %v6161
        %6194 = vst [vmem:[%s377 + $0x68] sm:$0xff] %v6162
        %6195 = vst [vmem:[%s377 + $0x70] sm:$0xff] %v6163
        %6196 = vst [vmem:[%s377 + $0x78] sm:$0xff] %v6164
        %6197 = vst [vmem:[%s377 + $0x80] sm:$0xff] %v6165
        %6198 = vst [vmem:[%s377 + $0x88] sm:$0xff] %v6166
        %6199 = vst [vmem:[%s377 + $0x90] sm:$0xff] %v6167
        %6200 = vst [vmem:[%s377 + $0x98] sm:$0xff] %v6168
        %6201 = vst [vmem:[%s377 + $0xa0] sm:$0xff] %v6169
        %6202 = vst [vmem:[%s377 + $0xa8] sm:$0xff] %v6170
        %6203 = vst [vmem:[%s377 + $0xb0] sm:$0xff] %v6171
        %6204 = vst [vmem:[%s377 + $0xb8] sm:$0xff] %v6172
        %6205 = vst [vmem:[%s377 + $0xc0] sm:$0xff] %v6173
        %6206 = vst [vmem:[%s377 + $0xc8] sm:$0xff] %v6174
        %6207 = vst [vmem:[%s377 + $0xd0] sm:$0xff] %v6175
        %6208 = vst [vmem:[%s377 + $0xd8] sm:$0xff] %v6176
        %6209 = vst [vmem:[%s377 + $0xe0] sm:$0xff] %v6177
        %6210 = vst [vmem:[%s377 + $0xe8] sm:$0xff] %v6178
        %6211 = vst [vmem:[%s377 + $0xf0] sm:$0xff] %v6179
        %6212 = vst [vmem:[%s377 + $0xf8] sm:$0xff] %v6180
        %s6213 = sand.u32 %s187, 1
        %s6214 = scalar_lea.sflag [#allocation5], %s6213
        %s6215 = sand.u32 %s187, 1
        %s6216 = smul.addr %s6215, 256
        %s6217 = scalar_lea.vmem [#allocation15], %s6216
        // Predicated region
        $region77: #{tpu_custom_call.1} parent=47 // pred_check
          %p6218 = pneg %p197
        $region78: #{tpu_custom_call.1} parent=47 // pred_check_branch
          %6220 = sbr.rel (%p6218) target = $region80
        $region79: #{tpu_custom_call.1} parent=47 // pred_region
          %s6222 = ssub.s32 4096, 4096
          %6223 = vsyncadd %s6214, %s6222
          %s6224 = smul.addr %s27, 32
          %s6225 = smul.addr %s6224, 128
          %s6226 = scalar_lea.hbm %s7, %s6225
          %s6227 = sshll.u32 %s6217, 4
          %s6228 = int_to_ptr.vmem [resolvable:$true] %s6227
          %6233 = dma.vmem_to_hbm [thread:$0]  %s6228, 4096, %s6226, %s6214, 128, 128, 8
        $region80: #{tpu_custom_call.1} parent=47 // pred_fallthru
          _
      $region48: #{tpu_custom_call.1} parent=5 // pred_fallthru
        _
      %p6234 = scmp.le.s32.totalorder 2, %s22
      // Predicated region
      $region81: #{tpu_custom_call.1} parent=5 // pred_check
        %p6235 = pneg %p6234
      $region82: #{tpu_custom_call.1} parent=5 // pred_check_branch
        %6237 = sbr.rel (%p6235) target = $region84
      $region83: #{tpu_custom_call.1} parent=5 // pred_region
        %s6238 = ssub.s32 %s22, 2
        // Predicated region
        $region85: #{tpu_custom_call.1} parent=83 // pred_check
          %p6239 = pneg %p203
        $region86: #{tpu_custom_call.1} parent=83 // pred_check_branch
          %6241 = sbr.rel (%p6239) target = $region88
        $region87: #{tpu_custom_call.1} parent=83 // pred_region
          %s6242 = sand.u32 %s188, 1
          %s6243 = scalar_lea.sflag [#allocation5], %s6242
          %s6244 = sand.u32 %s188, 1
          %s6245 = smul.addr %s6244, 256
          %s6246 = scalar_lea.vmem [#allocation15], %s6245
          %6247 = dma.done %s6243, 4096
        $region88: #{tpu_custom_call.1} parent=83 // pred_fallthru
          _
      $region84: #{tpu_custom_call.1} parent=5 // pred_fallthru
        _
    $region6: #{tpu_custom_call.1} parent=1 // loop_footer
      %s26 = sadd.s32 1, %s22
    $region7: #{tpu_custom_call.1} parent=1 // loop_footer_branch
      %21 = sbr.rel target = $region3
    $region8: #{tpu_custom_call.1} parent=1 // loop_exit
      _
    %6248 = vsyncpa [#allocation4], 1
    %s6249 = scalar_lea.sflag [#allocation4], 1
    %6250 = vsyncpa %s6249, 1
    %6251 = vsyncpa [#allocation7], 1
    %6252 = vsyncpa [#allocation10], 1
    %6253 = vsyncpa [#allocation13], 1
    %6254 = vsyncpa [#allocation5], 1
    %s6255 = scalar_lea.sflag [#allocation5], 1
    %6256 = vsyncpa %s6255, 1

</llo_original>
